<compile_context>
chip_gen: v6e
topology: v6e:2x2x1
jax: 0.10.0
libtpu: 0.0.40
codegen_flags: <defaults>
</compile_context>

<pallas_src>
import numpy as np
import jax
import jax.numpy as jnp
from jax.experimental import pallas as pl
from jax.experimental.pallas import tpu as pltpu

# ---- static sizes (small but consistent with the module's forward) ----
NUM_VOCAB   = 50
NUM_CLASSES = 9
B           = 2
SEQ_LEN     = 64                            # input token sequence length
EMB         = 128                           # embedding dim == conv in_channels
C_OUT       = 128                           # conv out_channels
K           = 5                             # conv kernel size
STRIDE      = 2
L1          = (SEQ_LEN - K) // STRIDE + 1   # 30 : Conv1d output length
POOL_K      = 3
L2          = (L1 - POOL_K) // POOL_K + 1   # 10 : MaxPool1d output length (LSTM T)
H           = 256                           # LSTM hidden size
FC1         = 256
LANE        = 128                           # fc2 output padded to full lane width
ROWS        = L2 * B                        # 20 valid (time, batch) rows
ROWS_PAD    = 32                            # per-pool-offset block padded to 32 rows
                                            # (multiple of 8 f32 / 16 bf16 sublanes)


def _lrelu(x):
    # nn.LeakyReLU default negative_slope = 0.01
    return jnp.where(x >= 0, x, 0.01 * x)


def cnn_lstm_kernel(patches_ref, wcol_ref, bconv_ref,
                    wih_ref, bf_ref, bb_ref,
                    whh_hbm_ref, w1_hbm_ref, w2_hbm_ref,
                    b1_ref, b2_ref,
                    out_ref,
                    gxs_ref, whh_vmem, w1_vmem, w2_vmem, dma_sems):
    # ---- Kick off weight DMAs (HBM -> VMEM) so they overlap the conv and
    #      input-projection matmuls; waited on right before they are needed.
    whh_cp = pltpu.make_async_copy(whh_hbm_ref, whh_vmem, dma_sems.at[0])
    w1_cp  = pltpu.make_async_copy(w1_hbm_ref,  w1_vmem,  dma_sems.at[1])
    w2_cp  = pltpu.make_async_copy(w2_hbm_ref,  w2_vmem,  dma_sems.at[2])
    whh_cp.start()
    w1_cp.start()
    w2_cp.start()

    # ---- Conv1d(128->128,k=5,s=2) as one flattened im2col matmul:
    #      (POOL_K*ROWS_PAD, K*EMB) @ (K*EMB, C_OUT) ; row = p*ROWS_PAD + t*B + b
    conv = jnp.dot(patches_ref[...], wcol_ref[...],
                   preferred_element_type=jnp.float32) + bconv_ref[...]
    conv = _lrelu(conv)                                        # (96, 128) f32

    # ---- MaxPool1d(kernel=3, stride=3): max over three 8-aligned row blocks.
    pooled = jnp.maximum(jnp.maximum(conv[0:ROWS_PAD, :],
                                     conv[ROWS_PAD:2 * ROWS_PAD, :]),
                         conv[2 * ROWS_PAD:3 * ROWS_PAD, :])   # (32, 128), row=t*B+b

    # TODO(synk): Dropout(0.5) layers are identity here (eval/inference mode).

    # ---- Hoisted LSTM input projections (both directions, one matmul) ----
    gx = jnp.dot(pooled.astype(jnp.bfloat16), wih_ref[...],
                 preferred_element_type=jnp.float32)            # (32, 8H) f32
    gxf = gx[:, 0:4 * H] + bf_ref[...]                          # (32, 4H)
    gxb = gx[:, 4 * H:8 * H] + bb_ref[...]                      # (32, 4H)

    # One-time reorder into per-step, direction-stacked, tile-aligned scratch:
    #   gxs[t, 0:B ] = forward  gate inputs at time t
    #   gxs[t, B:2B] = backward gate inputs at time L2-1-t
    # (misaligned sublane slices happen here once, OFF the serial chain)
    for t in range(L2):
        gxs_ref[t] = jnp.concatenate(
            [gxf[t * B:(t + 1) * B, :],
             gxb[(L2 - 1 - t) * B:(L2 - t) * B, :]], axis=0)    # (2B, 4H)

    # ---- Serial recurrence: both directions fused in one matmul per step ----
    whh_cp.wait()                                               # whh_cat now in VMEM

    row_is_fwd = jax.lax.broadcasted_iota(jnp.int32, (2 * B, 4 * H), 0) < B

    hs = jnp.zeros((2 * B, H), jnp.float32)                     # [h_f ; h_b]
    cs = jnp.zeros((2 * B, H), jnp.float32)                     # [c_f ; c_b]
    for t in range(L2):                                         # fully unrolled (L2=10)
        g_hh = jnp.dot(hs.astype(jnp.bfloat16), whh_vmem[...],
                       preferred_element_type=jnp.float32)      # (2B, 8H)
        # rows 0:B use the fwd weight block (cols 0:4H), rows B:2B the bwd block
        g = gxs_ref[t] + jnp.where(row_is_fwd,
                                   g_hh[:, 0:4 * H], g_hh[:, 4 * H:8 * H])
        i  = jax.nn.sigmoid(g[:, 0 * H:1 * H])
        f  = jax.nn.sigmoid(g[:, 1 * H:2 * H])
        gg = jnp.tanh(      g[:, 2 * H:3 * H])
        o  = jax.nn.sigmoid(g[:, 3 * H:4 * H])
        cs = f * cs + i * gg
        hs = o * jnp.tanh(cs)

    # ---- FC head, both batch rows at once: cat([h_fwd, h_bwd], -1) -> fc ----
    w1_cp.wait()
    w2_cp.wait()
    h_cat = jnp.concatenate([hs[0:B, :], hs[B:2 * B, :]], axis=-1)   # (B, 2H)
    f1 = _lrelu(jnp.dot(h_cat.astype(jnp.bfloat16), w1_vmem[...],
                        preferred_element_type=jnp.float32) + b1_ref[...])
    out_ref[...] = jnp.dot(f1.astype(jnp.bfloat16), w2_vmem[...],
                           preferred_element_type=jnp.float32) + b2_ref[...]


@jax.jit
def forward(tokens, params):
    (emb_tbl, conv_w, conv_b, wih_f, whh_f, bih_f, bhh_f,
     wih_b, whh_b, bih_b, bhh_b, fc1_w, fc1_b, fc2_w, fc2_b) = params

    # Embedding lookup (glue, plain gather)
    emb = emb_tbl[tokens]                                       # (B, SEQ_LEN, EMB)

    # im2col for Conv1d(k=5, stride=2); rows ordered (pool_offset p, time t, batch b)
    # with each pool-offset block zero-padded from 20 to 32 rows so the in-kernel
    # MaxPool slices are sublane-aligned and the bf16 conv LHS is full tiles.
    idx = STRIDE * jnp.arange(L1)[:, None] + jnp.arange(K)[None, :]   # (L1, K)
    patches = emb[:, idx, :]                                    # (B, L1, K, EMB)
    patches = patches.reshape(B, L2, POOL_K, K * EMB)
    patches = jnp.transpose(patches, (2, 1, 0, 3))              # (POOL_K, L2, B, K*EMB)
    patches = patches.reshape(POOL_K, ROWS, K * EMB)
    patches = jnp.pad(patches, ((0, 0), (0, ROWS_PAD - ROWS), (0, 0)))
    patches = patches.reshape(POOL_K * ROWS_PAD, K * EMB)       # row = p*32 + t*B + b

    # Conv weight (C_OUT, EMB, K) -> (K*EMB, C_OUT) matching (k, ci) patch order
    wcol = jnp.transpose(conv_w, (2, 1, 0)).reshape(K * EMB, C_OUT)

    # Concatenated weights for both LSTM directions
    wih_cat = jnp.concatenate([wih_f.T, wih_b.T], axis=1)       # (EMB, 8H)
    whh_cat = jnp.concatenate([whh_f.T, whh_b.T], axis=1)       # (H,   8H)

    # Pad fc2 to 128 output lanes (sliced back below) to avoid lane-sparse MXU
    # columns and masked partial stores.
    w2p = jnp.zeros((FC1, LANE), jnp.float32).at[:, :NUM_CLASSES].set(fc2_w.T)
    b2p = jnp.zeros((1, LANE), jnp.float32).at[:, :NUM_CLASSES].set(fc2_b)

    bf16 = jnp.bfloat16
    args = (patches.astype(bf16), wcol.astype(bf16), conv_b.reshape(1, C_OUT),
            wih_cat.astype(bf16),
            (bih_f + bhh_f).reshape(1, 4 * H), (bih_b + bhh_b).reshape(1, 4 * H),
            whh_cat.astype(bf16),                 # -> HBM, async-copied in-kernel
            fc1_w.T.astype(bf16),                 # -> HBM, async-copied in-kernel
            w2p.astype(bf16),                     # -> HBM, async-copied in-kernel
            fc1_b.reshape(1, FC1), b2p)

    vmem = pl.BlockSpec(memory_space=pltpu.MemorySpace.VMEM)
    hbm  = pl.BlockSpec(memory_space=pl.ANY)
    in_specs = [vmem, vmem, vmem, vmem, vmem, vmem, hbm, hbm, hbm, vmem, vmem]

    out = pl.pallas_call(
        cnn_lstm_kernel,
        out_shape=jax.ShapeDtypeStruct((B, LANE), jnp.float32),
        in_specs=in_specs,
        out_specs=vmem,
        scratch_shapes=[
            pltpu.VMEM((L2, 2 * B, 4 * H), jnp.float32),   # per-step stacked gate inputs
            pltpu.VMEM((H, 8 * H), jnp.bfloat16),          # whh_cat (DMA target)
            pltpu.VMEM((2 * H, FC1), jnp.bfloat16),        # fc1 weight (DMA target)
            pltpu.VMEM((FC1, LANE), jnp.bfloat16),         # fc2 weight (DMA target)
            pltpu.SemaphoreType.DMA((3,)),
        ],
    )(*args)
    return out[:, :NUM_CLASSES]


def init_params(key):
    ks = jax.random.split(key, 15)

    def nrm(k, shape, scale):
        return scale * jax.random.normal(k, shape, jnp.float32)

    emb_tbl = nrm(ks[0], (NUM_VOCAB, EMB), 0.1)
    conv_w  = nrm(ks[1], (C_OUT, EMB, K), 0.05)     # PyTorch Conv1d weight layout
    conv_b  = nrm(ks[2], (C_OUT,), 0.05)
    wih_f   = nrm(ks[3], (4 * H, EMB), 0.05)        # PyTorch LSTM weight_ih_l0
    whh_f   = nrm(ks[4], (4 * H, H), 0.05)
    bih_f   = nrm(ks[5], (4 * H,), 0.05)
    bhh_f   = nrm(ks[6], (4 * H,), 0.05)
    wih_b   = nrm(ks[7], (4 * H, EMB), 0.05)        # *_reverse
    whh_b   = nrm(ks[8], (4 * H, H), 0.05)
    bih_b   = nrm(ks[9], (4 * H,), 0.05)
    bhh_b   = nrm(ks[10], (4 * H,), 0.05)
    fc1_w   = nrm(ks[11], (FC1, 2 * H), 0.05)       # PyTorch Linear weight layout
    fc1_b   = nrm(ks[12], (FC1,), 0.05)
    fc2_w   = nrm(ks[13], (NUM_CLASSES, FC1), 0.05)
    fc2_b   = nrm(ks[14], (NUM_CLASSES,), 0.05)
    return (emb_tbl, conv_w, conv_b, wih_f, whh_f, bih_f, bhh_f,
            wih_b, whh_b, bih_b, bhh_b, fc1_w, fc1_b, fc2_w, fc2_b)


def reference(tokens, params):
    """Pure-JAX (f32) re-implementation of the PyTorch forward (eval mode)."""
    (emb_tbl, conv_w, conv_b, wih_f, whh_f, bih_f, bhh_f,
     wih_b, whh_b, bih_b, bhh_b, fc1_w, fc1_b, fc2_w, fc2_b) = params
    emb = emb_tbl[tokens]                                       # (B, L, EMB)
    x = jnp.transpose(emb, (0, 2, 1))                           # NCW
    out = jax.lax.conv_general_dilated(
        x, conv_w, window_strides=(STRIDE,), padding='VALID',
        dimension_numbers=('NCH', 'OIH', 'NCH'))
    out = out + conv_b[None, :, None]
    out = jnp.where(out >= 0, out, 0.01 * out)
    out = jax.lax.reduce_window(out, -jnp.inf, jax.lax.max,
                                (1, 1, POOL_K), (1, 1, POOL_K), 'VALID')
    seq = jnp.transpose(out, (0, 2, 1))                         # (B, L2, C_OUT)

    def cell(x_t, h, c, wih, whh, bias):
        g = x_t @ wih.T + h @ whh.T + bias
        i = jax.nn.sigmoid(g[:, :H])
        f = jax.nn.sigmoid(g[:, H:2 * H])
        gg = jnp.tanh(g[:, 2 * H:3 * H])
        o = jax.nn.sigmoid(g[:, 3 * H:])
        c = f * c + i * gg
        return o * jnp.tanh(c), c

    h_f = jnp.zeros((B, H)); c_f = jnp.zeros((B, H))
    for t in range(L2):
        h_f, c_f = cell(seq[:, t, :], h_f, c_f, wih_f, whh_f, bih_f + bhh_f)
    h_b = jnp.zeros((B, H)); c_b = jnp.zeros((B, H))
    for t in reversed(range(L2)):
        h_b, c_b = cell(seq[:, t, :], h_b, c_b, wih_b, whh_b, bih_b + bhh_b)
    hcat = jnp.concatenate([h_f, h_b], axis=-1)
    f1 = hcat @ fc1_w.T + fc1_b
    f1 = jnp.where(f1 >= 0, f1, 0.01 * f1)
    return f1 @ fc2_w.T + fc2_b


if __name__ == "__main__":
    key = jax.random.PRNGKey(0)
    k_tok, k_par = jax.random.split(key)
    tokens = jax.random.randint(k_tok, (B, SEQ_LEN), 0, NUM_VOCAB, dtype=jnp.int32)
    params = init_params(k_par)

    out = forward(tokens, params)
    out = jax.block_until_ready(out)
    assert out.shape == (B, NUM_CLASSES)

    ref = reference(tokens, params)
    np.testing.assert_allclose(np.asarray(out), np.asarray(ref),
                               rtol=5e-2, atol=5e-2)
    print("KERNEL_OK")
</pallas_src>

<mosaic_0001>
module attributes {stable_mosaic.version = 11 : i64} {
  func.func @cnn_lstm_kernel(%arg0: memref<96x640xbf16, #tpu.memory_space<vmem>>, %arg1: memref<640x128xbf16, #tpu.memory_space<vmem>>, %arg2: memref<1x128xf32, #tpu.memory_space<vmem>>, %arg3: memref<128x2048xbf16, #tpu.memory_space<vmem>>, %arg4: memref<1x1024xf32, #tpu.memory_space<vmem>>, %arg5: memref<1x1024xf32, #tpu.memory_space<vmem>>, %arg6: memref<256x2048xbf16, #tpu.memory_space<any>>, %arg7: memref<512x256xbf16, #tpu.memory_space<any>>, %arg8: memref<256x128xbf16, #tpu.memory_space<any>>, %arg9: memref<1x256xf32, #tpu.memory_space<vmem>>, %arg10: memref<1x128xf32, #tpu.memory_space<vmem>>, %arg11: memref<2x128xf32, #tpu.memory_space<vmem>>, %arg12: memref<10x4x1024xf32, #tpu.memory_space<vmem>>, %arg13: memref<256x2048xbf16, #tpu.memory_space<vmem>>, %arg14: memref<512x256xbf16, #tpu.memory_space<vmem>>, %arg15: memref<256x128xbf16, #tpu.memory_space<vmem>>, %arg16: memref<3x!tpu.dma_semaphore, #tpu.memory_space<semaphore_mem>>) attributes {dimension_semantics = [], scalar_prefetch = 0 : i64, scratch_operands = 5 : i64, tpu.core_type = #tpu.core_type<tc>} {
    %c0_i32 = arith.constant 0 : i32
    %0 = tpu.memref_slice %arg16[%c0_i32] : memref<3x!tpu.dma_semaphore, #tpu.memory_space<semaphore_mem>> -> memref<1x!tpu.dma_semaphore, #tpu.memory_space<semaphore_mem>>
    %1 = tpu.memref_squeeze %0 : memref<1x!tpu.dma_semaphore, #tpu.memory_space<semaphore_mem>> -> memref<!tpu.dma_semaphore, #tpu.memory_space<semaphore_mem>>
    tpu.enqueue_dma source(%arg6 : memref<256x2048xbf16, #tpu.memory_space<any>>) target(%arg13 : memref<256x2048xbf16, #tpu.memory_space<vmem>>) target_semaphore(%1 : memref<!tpu.dma_semaphore, #tpu.memory_space<semaphore_mem>>)
    %c1_i32 = arith.constant 1 : i32
    %2 = tpu.memref_slice %arg16[%c1_i32] : memref<3x!tpu.dma_semaphore, #tpu.memory_space<semaphore_mem>> -> memref<1x!tpu.dma_semaphore, #tpu.memory_space<semaphore_mem>>
    %3 = tpu.memref_squeeze %2 : memref<1x!tpu.dma_semaphore, #tpu.memory_space<semaphore_mem>> -> memref<!tpu.dma_semaphore, #tpu.memory_space<semaphore_mem>>
    tpu.enqueue_dma source(%arg7 : memref<512x256xbf16, #tpu.memory_space<any>>) target(%arg14 : memref<512x256xbf16, #tpu.memory_space<vmem>>) target_semaphore(%3 : memref<!tpu.dma_semaphore, #tpu.memory_space<semaphore_mem>>)
    %c2_i32 = arith.constant 2 : i32
    %4 = tpu.memref_slice %arg16[%c2_i32] : memref<3x!tpu.dma_semaphore, #tpu.memory_space<semaphore_mem>> -> memref<1x!tpu.dma_semaphore, #tpu.memory_space<semaphore_mem>>
    %5 = tpu.memref_squeeze %4 : memref<1x!tpu.dma_semaphore, #tpu.memory_space<semaphore_mem>> -> memref<!tpu.dma_semaphore, #tpu.memory_space<semaphore_mem>>
    tpu.enqueue_dma source(%arg8 : memref<256x128xbf16, #tpu.memory_space<any>>) target(%arg15 : memref<256x128xbf16, #tpu.memory_space<vmem>>) target_semaphore(%5 : memref<!tpu.dma_semaphore, #tpu.memory_space<semaphore_mem>>)
    %c0 = arith.constant 0 : index
    %c0_0 = arith.constant 0 : index
    %6 = vector.load %arg0[%c0, %c0_0] : memref<96x640xbf16, #tpu.memory_space<vmem>>, vector<96x640xbf16>
    %c0_1 = arith.constant 0 : index
    %c0_2 = arith.constant 0 : index
    %7 = vector.load %arg1[%c0_1, %c0_2] : memref<640x128xbf16, #tpu.memory_space<vmem>>, vector<640x128xbf16>
    %cst = arith.constant dense<0.000000e+00> : vector<96x128xf32>
    %8 = tpu.matmul %6, %7, %cst {dimension_numbers = #tpu.dot_dimension_numbers<[1], [0], [0], [1], [0, 0, 1, 1], [], []>} : vector<96x640xbf16>, vector<640x128xbf16>, vector<96x128xf32> -> vector<96x128xf32>
    %c0_3 = arith.constant 0 : index
    %c0_4 = arith.constant 0 : index
    %9 = vector.load %arg2[%c0_3, %c0_4] : memref<1x128xf32, #tpu.memory_space<vmem>>, vector<1x128xf32>
    %10 = vector.broadcast %9 : vector<1x128xf32> to vector<96x128xf32>
    %11 = arith.addf %8, %10 : vector<96x128xf32>
    %cst_5 = arith.constant 0.000000e+00 : f32
    %12 = vector.broadcast %cst_5 : f32 to vector<96x128xf32>
    %13 = arith.cmpf oge, %11, %12 : vector<96x128xf32>
    %cst_6 = arith.constant 0.00999999977 : f32
    %14 = vector.broadcast %cst_6 : f32 to vector<96x128xf32>
    %15 = arith.mulf %14, %11 : vector<96x128xf32>
    %16 = arith.select %13, %11, %15 : vector<96x128xi1>, vector<96x128xf32>
    %17 = vector.extract_strided_slice %16 {offsets = [0, 0], sizes = [32, 128], strides = [1, 1]} : vector<96x128xf32> to vector<32x128xf32>
    %18 = vector.extract_strided_slice %16 {offsets = [32, 0], sizes = [32, 128], strides = [1, 1]} : vector<96x128xf32> to vector<32x128xf32>
    %19 = arith.maximumf %17, %18 : vector<32x128xf32>
    %20 = vector.extract_strided_slice %16 {offsets = [64, 0], sizes = [32, 128], strides = [1, 1]} : vector<96x128xf32> to vector<32x128xf32>
    %21 = arith.maximumf %19, %20 : vector<32x128xf32>
    %22 = arith.truncf %21 : vector<32x128xf32> to vector<32x128xbf16>
    %c0_7 = arith.constant 0 : index
    %c0_8 = arith.constant 0 : index
    %23 = vector.load %arg3[%c0_7, %c0_8] : memref<128x2048xbf16, #tpu.memory_space<vmem>>, vector<128x2048xbf16>
    %cst_9 = arith.constant dense<0.000000e+00> : vector<32x2048xf32>
    %24 = tpu.matmul %22, %23, %cst_9 {dimension_numbers = #tpu.dot_dimension_numbers<[1], [0], [0], [1], [0, 0, 1, 1], [], []>} : vector<32x128xbf16>, vector<128x2048xbf16>, vector<32x2048xf32> -> vector<32x2048xf32>
    %25 = vector.extract_strided_slice %24 {offsets = [0, 0], sizes = [32, 1024], strides = [1, 1]} : vector<32x2048xf32> to vector<32x1024xf32>
    %c0_10 = arith.constant 0 : index
    %c0_11 = arith.constant 0 : index
    %26 = vector.load %arg4[%c0_10, %c0_11] : memref<1x1024xf32, #tpu.memory_space<vmem>>, vector<1x1024xf32>
    %27 = vector.broadcast %26 : vector<1x1024xf32> to vector<32x1024xf32>
    %28 = arith.addf %25, %27 : vector<32x1024xf32>
    %29 = vector.extract_strided_slice %24 {offsets = [0, 1024], sizes = [32, 1024], strides = [1, 1]} : vector<32x2048xf32> to vector<32x1024xf32>
    %c0_12 = arith.constant 0 : index
    %c0_13 = arith.constant 0 : index
    %30 = vector.load %arg5[%c0_12, %c0_13] : memref<1x1024xf32, #tpu.memory_space<vmem>>, vector<1x1024xf32>
    %31 = vector.broadcast %30 : vector<1x1024xf32> to vector<32x1024xf32>
    %32 = arith.addf %29, %31 : vector<32x1024xf32>
    %33 = vector.extract_strided_slice %28 {offsets = [0, 0], sizes = [2, 1024], strides = [1, 1]} : vector<32x1024xf32> to vector<2x1024xf32>
    %34 = vector.extract_strided_slice %32 {offsets = [18, 0], sizes = [2, 1024], strides = [1, 1]} : vector<32x1024xf32> to vector<2x1024xf32>
    %35 = tpu.concatenate %33, %34 in 0 : vector<2x1024xf32>, vector<2x1024xf32> -> vector<4x1024xf32>
    %c0_14 = arith.constant 0 : index
    %c0_15 = arith.constant 0 : index
    %c0_16 = arith.constant 0 : index
    %36 = vector.load %arg12[%c0_14, %c0_15, %c0_16] : memref<10x4x1024xf32, #tpu.memory_space<vmem>>, vector<1x4x1024xf32>
    %37 = vector.shape_cast %36 : vector<1x4x1024xf32> to vector<4x1024xf32>
    %38 = vector.shape_cast %35 : vector<4x1024xf32> to vector<1x4x1024xf32>
    tpu.vector_store %arg12[%c0_14, %c0_15, %c0_16], %38 {strides = array<i32>} : memref<10x4x1024xf32, #tpu.memory_space<vmem>>, vector<1x4x1024xf32>,
    %39 = vector.extract_strided_slice %28 {offsets = [2, 0], sizes = [2, 1024], strides = [1, 1]} : vector<32x1024xf32> to vector<2x1024xf32>
    %40 = vector.extract_strided_slice %32 {offsets = [16, 0], sizes = [2, 1024], strides = [1, 1]} : vector<32x1024xf32> to vector<2x1024xf32>
    %41 = tpu.concatenate %39, %40 in 0 : vector<2x1024xf32>, vector<2x1024xf32> -> vector<4x1024xf32>
    %c1 = arith.constant 1 : index
    %c0_17 = arith.constant 0 : index
    %c0_18 = arith.constant 0 : index
    %42 = vector.load %arg12[%c1, %c0_17, %c0_18] : memref<10x4x1024xf32, #tpu.memory_space<vmem>>, vector<1x4x1024xf32>
    %43 = vector.shape_cast %42 : vector<1x4x1024xf32> to vector<4x1024xf32>
    %44 = vector.shape_cast %41 : vector<4x1024xf32> to vector<1x4x1024xf32>
    tpu.vector_store %arg12[%c1, %c0_17, %c0_18], %44 {strides = array<i32>} : memref<10x4x1024xf32, #tpu.memory_space<vmem>>, vector<1x4x1024xf32>,
    %45 = vector.extract_strided_slice %28 {offsets = [4, 0], sizes = [2, 1024], strides = [1, 1]} : vector<32x1024xf32> to vector<2x1024xf32>
    %46 = vector.extract_strided_slice %32 {offsets = [14, 0], sizes = [2, 1024], strides = [1, 1]} : vector<32x1024xf32> to vector<2x1024xf32>
    %47 = tpu.concatenate %45, %46 in 0 : vector<2x1024xf32>, vector<2x1024xf32> -> vector<4x1024xf32>
    %c2 = arith.constant 2 : index
    %c0_19 = arith.constant 0 : index
    %c0_20 = arith.constant 0 : index
    %48 = vector.load %arg12[%c2, %c0_19, %c0_20] : memref<10x4x1024xf32, #tpu.memory_space<vmem>>, vector<1x4x1024xf32>
    %49 = vector.shape_cast %48 : vector<1x4x1024xf32> to vector<4x1024xf32>
    %50 = vector.shape_cast %47 : vector<4x1024xf32> to vector<1x4x1024xf32>
    tpu.vector_store %arg12[%c2, %c0_19, %c0_20], %50 {strides = array<i32>} : memref<10x4x1024xf32, #tpu.memory_space<vmem>>, vector<1x4x1024xf32>,
    %51 = vector.extract_strided_slice %28 {offsets = [6, 0], sizes = [2, 1024], strides = [1, 1]} : vector<32x1024xf32> to vector<2x1024xf32>
    %52 = vector.extract_strided_slice %32 {offsets = [12, 0], sizes = [2, 1024], strides = [1, 1]} : vector<32x1024xf32> to vector<2x1024xf32>
    %53 = tpu.concatenate %51, %52 in 0 : vector<2x1024xf32>, vector<2x1024xf32> -> vector<4x1024xf32>
    %c3 = arith.constant 3 : index
    %c0_21 = arith.constant 0 : index
    %c0_22 = arith.constant 0 : index
    %54 = vector.load %arg12[%c3, %c0_21, %c0_22] : memref<10x4x1024xf32, #tpu.memory_space<vmem>>, vector<1x4x1024xf32>
    %55 = vector.shape_cast %54 : vector<1x4x1024xf32> to vector<4x1024xf32>
    %56 = vector.shape_cast %53 : vector<4x1024xf32> to vector<1x4x1024xf32>
    tpu.vector_store %arg12[%c3, %c0_21, %c0_22], %56 {strides = array<i32>} : memref<10x4x1024xf32, #tpu.memory_space<vmem>>, vector<1x4x1024xf32>,
    %57 = vector.extract_strided_slice %28 {offsets = [8, 0], sizes = [2, 1024], strides = [1, 1]} : vector<32x1024xf32> to vector<2x1024xf32>
    %58 = vector.extract_strided_slice %32 {offsets = [10, 0], sizes = [2, 1024], strides = [1, 1]} : vector<32x1024xf32> to vector<2x1024xf32>
    %59 = tpu.concatenate %57, %58 in 0 : vector<2x1024xf32>, vector<2x1024xf32> -> vector<4x1024xf32>
    %c4 = arith.constant 4 : index
    %c0_23 = arith.constant 0 : index
    %c0_24 = arith.constant 0 : index
    %60 = vector.load %arg12[%c4, %c0_23, %c0_24] : memref<10x4x1024xf32, #tpu.memory_space<vmem>>, vector<1x4x1024xf32>
    %61 = vector.shape_cast %60 : vector<1x4x1024xf32> to vector<4x1024xf32>
    %62 = vector.shape_cast %59 : vector<4x1024xf32> to vector<1x4x1024xf32>
    tpu.vector_store %arg12[%c4, %c0_23, %c0_24], %62 {strides = array<i32>} : memref<10x4x1024xf32, #tpu.memory_space<vmem>>, vector<1x4x1024xf32>,
    %63 = vector.extract_strided_slice %28 {offsets = [10, 0], sizes = [2, 1024], strides = [1, 1]} : vector<32x1024xf32> to vector<2x1024xf32>
    %64 = vector.extract_strided_slice %32 {offsets = [8, 0], sizes = [2, 1024], strides = [1, 1]} : vector<32x1024xf32> to vector<2x1024xf32>
    %65 = tpu.concatenate %63, %64 in 0 : vector<2x1024xf32>, vector<2x1024xf32> -> vector<4x1024xf32>
    %c5 = arith.constant 5 : index
    %c0_25 = arith.constant 0 : index
    %c0_26 = arith.constant 0 : index
    %66 = vector.load %arg12[%c5, %c0_25, %c0_26] : memref<10x4x1024xf32, #tpu.memory_space<vmem>>, vector<1x4x1024xf32>
    %67 = vector.shape_cast %66 : vector<1x4x1024xf32> to vector<4x1024xf32>
    %68 = vector.shape_cast %65 : vector<4x1024xf32> to vector<1x4x1024xf32>
    tpu.vector_store %arg12[%c5, %c0_25, %c0_26], %68 {strides = array<i32>} : memref<10x4x1024xf32, #tpu.memory_space<vmem>>, vector<1x4x1024xf32>,
    %69 = vector.extract_strided_slice %28 {offsets = [12, 0], sizes = [2, 1024], strides = [1, 1]} : vector<32x1024xf32> to vector<2x1024xf32>
    %70 = vector.extract_strided_slice %32 {offsets = [6, 0], sizes = [2, 1024], strides = [1, 1]} : vector<32x1024xf32> to vector<2x1024xf32>
    %71 = tpu.concatenate %69, %70 in 0 : vector<2x1024xf32>, vector<2x1024xf32> -> vector<4x1024xf32>
    %c6 = arith.constant 6 : index
    %c0_27 = arith.constant 0 : index
    %c0_28 = arith.constant 0 : index
    %72 = vector.load %arg12[%c6, %c0_27, %c0_28] : memref<10x4x1024xf32, #tpu.memory_space<vmem>>, vector<1x4x1024xf32>
    %73 = vector.shape_cast %72 : vector<1x4x1024xf32> to vector<4x1024xf32>
    %74 = vector.shape_cast %71 : vector<4x1024xf32> to vector<1x4x1024xf32>
    tpu.vector_store %arg12[%c6, %c0_27, %c0_28], %74 {strides = array<i32>} : memref<10x4x1024xf32, #tpu.memory_space<vmem>>, vector<1x4x1024xf32>,
    %75 = vector.extract_strided_slice %28 {offsets = [14, 0], sizes = [2, 1024], strides = [1, 1]} : vector<32x1024xf32> to vector<2x1024xf32>
    %76 = vector.extract_strided_slice %32 {offsets = [4, 0], sizes = [2, 1024], strides = [1, 1]} : vector<32x1024xf32> to vector<2x1024xf32>
    %77 = tpu.concatenate %75, %76 in 0 : vector<2x1024xf32>, vector<2x1024xf32> -> vector<4x1024xf32>
    %c7 = arith.constant 7 : index
    %c0_29 = arith.constant 0 : index
    %c0_30 = arith.constant 0 : index
    %78 = vector.load %arg12[%c7, %c0_29, %c0_30] : memref<10x4x1024xf32, #tpu.memory_space<vmem>>, vector<1x4x1024xf32>
    %79 = vector.shape_cast %78 : vector<1x4x1024xf32> to vector<4x1024xf32>
    %80 = vector.shape_cast %77 : vector<4x1024xf32> to vector<1x4x1024xf32>
    tpu.vector_store %arg12[%c7, %c0_29, %c0_30], %80 {strides = array<i32>} : memref<10x4x1024xf32, #tpu.memory_space<vmem>>, vector<1x4x1024xf32>,
    %81 = vector.extract_strided_slice %28 {offsets = [16, 0], sizes = [2, 1024], strides = [1, 1]} : vector<32x1024xf32> to vector<2x1024xf32>
    %82 = vector.extract_strided_slice %32 {offsets = [2, 0], sizes = [2, 1024], strides = [1, 1]} : vector<32x1024xf32> to vector<2x1024xf32>
    %83 = tpu.concatenate %81, %82 in 0 : vector<2x1024xf32>, vector<2x1024xf32> -> vector<4x1024xf32>
    %c8 = arith.constant 8 : index
    %c0_31 = arith.constant 0 : index
    %c0_32 = arith.constant 0 : index
    %84 = vector.load %arg12[%c8, %c0_31, %c0_32] : memref<10x4x1024xf32, #tpu.memory_space<vmem>>, vector<1x4x1024xf32>
    %85 = vector.shape_cast %84 : vector<1x4x1024xf32> to vector<4x1024xf32>
    %86 = vector.shape_cast %83 : vector<4x1024xf32> to vector<1x4x1024xf32>
    tpu.vector_store %arg12[%c8, %c0_31, %c0_32], %86 {strides = array<i32>} : memref<10x4x1024xf32, #tpu.memory_space<vmem>>, vector<1x4x1024xf32>,
    %87 = vector.extract_strided_slice %28 {offsets = [18, 0], sizes = [2, 1024], strides = [1, 1]} : vector<32x1024xf32> to vector<2x1024xf32>
    %88 = vector.extract_strided_slice %32 {offsets = [0, 0], sizes = [2, 1024], strides = [1, 1]} : vector<32x1024xf32> to vector<2x1024xf32>
    %89 = tpu.concatenate %87, %88 in 0 : vector<2x1024xf32>, vector<2x1024xf32> -> vector<4x1024xf32>
    %c9 = arith.constant 9 : index
    %c0_33 = arith.constant 0 : index
    %c0_34 = arith.constant 0 : index
    %90 = vector.load %arg12[%c9, %c0_33, %c0_34] : memref<10x4x1024xf32, #tpu.memory_space<vmem>>, vector<1x4x1024xf32>
    %91 = vector.shape_cast %90 : vector<1x4x1024xf32> to vector<4x1024xf32>
    %92 = vector.shape_cast %89 : vector<4x1024xf32> to vector<1x4x1024xf32>
    tpu.vector_store %arg12[%c9, %c0_33, %c0_34], %92 {strides = array<i32>} : memref<10x4x1024xf32, #tpu.memory_space<vmem>>, vector<1x4x1024xf32>,
    %c0_i32_35 = arith.constant 0 : i32
    %93 = tpu.memref_slice %arg16[%c0_i32_35] : memref<3x!tpu.dma_semaphore, #tpu.memory_space<semaphore_mem>> -> memref<1x!tpu.dma_semaphore, #tpu.memory_space<semaphore_mem>>
    %94 = tpu.memref_squeeze %93 : memref<1x!tpu.dma_semaphore, #tpu.memory_space<semaphore_mem>> -> memref<!tpu.dma_semaphore, #tpu.memory_space<semaphore_mem>>
    tpu.wait_dma2 semaphore(%94 : memref<!tpu.dma_semaphore, #tpu.memory_space<semaphore_mem>>) src(%arg6 : memref<256x2048xbf16, #tpu.memory_space<any>>) dst(%arg13 : memref<256x2048xbf16, #tpu.memory_space<vmem>>)
    %95 = tpu.iota {dimensions = array<i32: 0>} : vector<4x1024xi32>
    %c2_i32_36 = arith.constant 2 : i32
    %96 = vector.broadcast %c2_i32_36 : i32 to vector<4x1024xi32>
    %97 = arith.cmpi slt, %95, %96 : vector<4x1024xi32>
    %cst_37 = arith.constant 0.000000e+00 : f32
    %98 = vector.broadcast %cst_37 : f32 to vector<4x256xf32>
    %cst_38 = arith.constant 0.000000e+00 : f32
    %99 = vector.broadcast %cst_38 : f32 to vector<4x256xf32>
    %100 = arith.truncf %98 : vector<4x256xf32> to vector<4x256xbf16>
    %c0_39 = arith.constant 0 : index
    %c0_40 = arith.constant 0 : index
    %101 = vector.load %arg13[%c0_39, %c0_40] : memref<256x2048xbf16, #tpu.memory_space<vmem>>, vector<256x2048xbf16>
    %cst_41 = arith.constant dense<0.000000e+00> : vector<4x2048xf32>
    %102 = tpu.matmul %100, %101, %cst_41 {dimension_numbers = #tpu.dot_dimension_numbers<[1], [0], [0], [1], [0, 0, 1, 1], [], []>} : vector<4x256xbf16>, vector<256x2048xbf16>, vector<4x2048xf32> -> vector<4x2048xf32>
    %c0_42 = arith.constant 0 : index
    %c0_43 = arith.constant 0 : index
    %c0_44 = arith.constant 0 : index
    %103 = vector.load %arg12[%c0_42, %c0_43, %c0_44] : memref<10x4x1024xf32, #tpu.memory_space<vmem>>, vector<1x4x1024xf32>
    %104 = vector.shape_cast %103 : vector<1x4x1024xf32> to vector<4x1024xf32>
    %105 = vector.extract_strided_slice %102 {offsets = [0, 0], sizes = [4, 1024], strides = [1, 1]} : vector<4x2048xf32> to vector<4x1024xf32>
    %106 = vector.extract_strided_slice %102 {offsets = [0, 1024], sizes = [4, 1024], strides = [1, 1]} : vector<4x2048xf32> to vector<4x1024xf32>
    %107 = arith.select %97, %105, %106 : vector<4x1024xi1>, vector<4x1024xf32>
    %108 = arith.addf %104, %107 : vector<4x1024xf32>
    %109 = vector.extract_strided_slice %108 {offsets = [0, 0], sizes = [4, 256], strides = [1, 1]} : vector<4x1024xf32> to vector<4x256xf32>
    %110 = arith.negf %109 : vector<4x256xf32>
    %111 = math.exp %110 : vector<4x256xf32>
    %cst_45 = arith.constant 1.000000e+00 : f32
    %112 = vector.broadcast %cst_45 : f32 to vector<4x256xf32>
    %113 = arith.addf %112, %111 : vector<4x256xf32>
    %114 = arith.divf %112, %113 : vector<4x256xf32>
    %115 = vector.extract_strided_slice %108 {offsets = [0, 256], sizes = [4, 256], strides = [1, 1]} : vector<4x1024xf32> to vector<4x256xf32>
    %116 = arith.negf %115 : vector<4x256xf32>
    %117 = math.exp %116 : vector<4x256xf32>
    %cst_46 = arith.constant 1.000000e+00 : f32
    %118 = vector.broadcast %cst_46 : f32 to vector<4x256xf32>
    %119 = arith.addf %118, %117 : vector<4x256xf32>
    %120 = arith.divf %118, %119 : vector<4x256xf32>
    %121 = vector.extract_strided_slice %108 {offsets = [0, 512], sizes = [4, 256], strides = [1, 1]} : vector<4x1024xf32> to vector<4x256xf32>
    %122 = math.tanh %121 : vector<4x256xf32>
    %123 = vector.extract_strided_slice %108 {offsets = [0, 768], sizes = [4, 256], strides = [1, 1]} : vector<4x1024xf32> to vector<4x256xf32>
    %124 = arith.negf %123 : vector<4x256xf32>
    %125 = math.exp %124 : vector<4x256xf32>
    %cst_47 = arith.constant 1.000000e+00 : f32
    %126 = vector.broadcast %cst_47 : f32 to vector<4x256xf32>
    %127 = arith.addf %126, %125 : vector<4x256xf32>
    %128 = arith.divf %126, %127 : vector<4x256xf32>
    %129 = arith.mulf %120, %99 : vector<4x256xf32>
    %130 = arith.mulf %114, %122 : vector<4x256xf32>
    %131 = arith.addf %129, %130 : vector<4x256xf32>
    %132 = math.tanh %131 : vector<4x256xf32>
    %133 = arith.mulf %128, %132 : vector<4x256xf32>
    %134 = arith.truncf %133 : vector<4x256xf32> to vector<4x256xbf16>
    %c0_48 = arith.constant 0 : index
    %c0_49 = arith.constant 0 : index
    %135 = vector.load %arg13[%c0_48, %c0_49] : memref<256x2048xbf16, #tpu.memory_space<vmem>>, vector<256x2048xbf16>
    %cst_50 = arith.constant dense<0.000000e+00> : vector<4x2048xf32>
    %136 = tpu.matmul %134, %135, %cst_50 {dimension_numbers = #tpu.dot_dimension_numbers<[1], [0], [0], [1], [0, 0, 1, 1], [], []>} : vector<4x256xbf16>, vector<256x2048xbf16>, vector<4x2048xf32> -> vector<4x2048xf32>
    %c1_51 = arith.constant 1 : index
    %c0_52 = arith.constant 0 : index
    %c0_53 = arith.constant 0 : index
    %137 = vector.load %arg12[%c1_51, %c0_52, %c0_53] : memref<10x4x1024xf32, #tpu.memory_space<vmem>>, vector<1x4x1024xf32>
    %138 = vector.shape_cast %137 : vector<1x4x1024xf32> to vector<4x1024xf32>
    %139 = vector.extract_strided_slice %136 {offsets = [0, 0], sizes = [4, 1024], strides = [1, 1]} : vector<4x2048xf32> to vector<4x1024xf32>
    %140 = vector.extract_strided_slice %136 {offsets = [0, 1024], sizes = [4, 1024], strides = [1, 1]} : vector<4x2048xf32> to vector<4x1024xf32>
    %141 = arith.select %97, %139, %140 : vector<4x1024xi1>, vector<4x1024xf32>
    %142 = arith.addf %138, %141 : vector<4x1024xf32>
    %143 = vector.extract_strided_slice %142 {offsets = [0, 0], sizes = [4, 256], strides = [1, 1]} : vector<4x1024xf32> to vector<4x256xf32>
    %144 = arith.negf %143 : vector<4x256xf32>
    %145 = math.exp %144 : vector<4x256xf32>
    %cst_54 = arith.constant 1.000000e+00 : f32
    %146 = vector.broadcast %cst_54 : f32 to vector<4x256xf32>
    %147 = arith.addf %146, %145 : vector<4x256xf32>
    %148 = arith.divf %146, %147 : vector<4x256xf32>
    %149 = vector.extract_strided_slice %142 {offsets = [0, 256], sizes = [4, 256], strides = [1, 1]} : vector<4x1024xf32> to vector<4x256xf32>
    %150 = arith.negf %149 : vector<4x256xf32>
    %151 = math.exp %150 : vector<4x256xf32>
    %cst_55 = arith.constant 1.000000e+00 : f32
    %152 = vector.broadcast %cst_55 : f32 to vector<4x256xf32>
    %153 = arith.addf %152, %151 : vector<4x256xf32>
    %154 = arith.divf %152, %153 : vector<4x256xf32>
    %155 = vector.extract_strided_slice %142 {offsets = [0, 512], sizes = [4, 256], strides = [1, 1]} : vector<4x1024xf32> to vector<4x256xf32>
    %156 = math.tanh %155 : vector<4x256xf32>
    %157 = vector.extract_strided_slice %142 {offsets = [0, 768], sizes = [4, 256], strides = [1, 1]} : vector<4x1024xf32> to vector<4x256xf32>
    %158 = arith.negf %157 : vector<4x256xf32>
    %159 = math.exp %158 : vector<4x256xf32>
    %cst_56 = arith.constant 1.000000e+00 : f32
    %160 = vector.broadcast %cst_56 : f32 to vector<4x256xf32>
    %161 = arith.addf %160, %159 : vector<4x256xf32>
    %162 = arith.divf %160, %161 : vector<4x256xf32>
    %163 = arith.mulf %154, %131 : vector<4x256xf32>
    %164 = arith.mulf %148, %156 : vector<4x256xf32>
    %165 = arith.addf %163, %164 : vector<4x256xf32>
    %166 = math.tanh %165 : vector<4x256xf32>
    %167 = arith.mulf %162, %166 : vector<4x256xf32>
    %168 = arith.truncf %167 : vector<4x256xf32> to vector<4x256xbf16>
    %c0_57 = arith.constant 0 : index
    %c0_58 = arith.constant 0 : index
    %169 = vector.load %arg13[%c0_57, %c0_58] : memref<256x2048xbf16, #tpu.memory_space<vmem>>, vector<256x2048xbf16>
    %cst_59 = arith.constant dense<0.000000e+00> : vector<4x2048xf32>
    %170 = tpu.matmul %168, %169, %cst_59 {dimension_numbers = #tpu.dot_dimension_numbers<[1], [0], [0], [1], [0, 0, 1, 1], [], []>} : vector<4x256xbf16>, vector<256x2048xbf16>, vector<4x2048xf32> -> vector<4x2048xf32>
    %c2_60 = arith.constant 2 : index
    %c0_61 = arith.constant 0 : index
    %c0_62 = arith.constant 0 : index
    %171 = vector.load %arg12[%c2_60, %c0_61, %c0_62] : memref<10x4x1024xf32, #tpu.memory_space<vmem>>, vector<1x4x1024xf32>
    %172 = vector.shape_cast %171 : vector<1x4x1024xf32> to vector<4x1024xf32>
    %173 = vector.extract_strided_slice %170 {offsets = [0, 0], sizes = [4, 1024], strides = [1, 1]} : vector<4x2048xf32> to vector<4x1024xf32>
    %174 = vector.extract_strided_slice %170 {offsets = [0, 1024], sizes = [4, 1024], strides = [1, 1]} : vector<4x2048xf32> to vector<4x1024xf32>
    %175 = arith.select %97, %173, %174 : vector<4x1024xi1>, vector<4x1024xf32>
    %176 = arith.addf %172, %175 : vector<4x1024xf32>
    %177 = vector.extract_strided_slice %176 {offsets = [0, 0], sizes = [4, 256], strides = [1, 1]} : vector<4x1024xf32> to vector<4x256xf32>
    %178 = arith.negf %177 : vector<4x256xf32>
    %179 = math.exp %178 : vector<4x256xf32>
    %cst_63 = arith.constant 1.000000e+00 : f32
    %180 = vector.broadcast %cst_63 : f32 to vector<4x256xf32>
    %181 = arith.addf %180, %179 : vector<4x256xf32>
    %182 = arith.divf %180, %181 : vector<4x256xf32>
    %183 = vector.extract_strided_slice %176 {offsets = [0, 256], sizes = [4, 256], strides = [1, 1]} : vector<4x1024xf32> to vector<4x256xf32>
    %184 = arith.negf %183 : vector<4x256xf32>
    %185 = math.exp %184 : vector<4x256xf32>
    %cst_64 = arith.constant 1.000000e+00 : f32
    %186 = vector.broadcast %cst_64 : f32 to vector<4x256xf32>
    %187 = arith.addf %186, %185 : vector<4x256xf32>
    %188 = arith.divf %186, %187 : vector<4x256xf32>
    %189 = vector.extract_strided_slice %176 {offsets = [0, 512], sizes = [4, 256], strides = [1, 1]} : vector<4x1024xf32> to vector<4x256xf32>
    %190 = math.tanh %189 : vector<4x256xf32>
    %191 = vector.extract_strided_slice %176 {offsets = [0, 768], sizes = [4, 256], strides = [1, 1]} : vector<4x1024xf32> to vector<4x256xf32>
    %192 = arith.negf %191 : vector<4x256xf32>
    %193 = math.exp %192 : vector<4x256xf32>
    %cst_65 = arith.constant 1.000000e+00 : f32
    %194 = vector.broadcast %cst_65 : f32 to vector<4x256xf32>
    %195 = arith.addf %194, %193 : vector<4x256xf32>
    %196 = arith.divf %194, %195 : vector<4x256xf32>
    %197 = arith.mulf %188, %165 : vector<4x256xf32>
    %198 = arith.mulf %182, %190 : vector<4x256xf32>
    %199 = arith.addf %197, %198 : vector<4x256xf32>
    %200 = math.tanh %199 : vector<4x256xf32>
    %201 = arith.mulf %196, %200 : vector<4x256xf32>
    %202 = arith.truncf %201 : vector<4x256xf32> to vector<4x256xbf16>
    %c0_66 = arith.constant 0 : index
    %c0_67 = arith.constant 0 : index
    %203 = vector.load %arg13[%c0_66, %c0_67] : memref<256x2048xbf16, #tpu.memory_space<vmem>>, vector<256x2048xbf16>
    %cst_68 = arith.constant dense<0.000000e+00> : vector<4x2048xf32>
    %204 = tpu.matmul %202, %203, %cst_68 {dimension_numbers = #tpu.dot_dimension_numbers<[1], [0], [0], [1], [0, 0, 1, 1], [], []>} : vector<4x256xbf16>, vector<256x2048xbf16>, vector<4x2048xf32> -> vector<4x2048xf32>
    %c3_69 = arith.constant 3 : index
    %c0_70 = arith.constant 0 : index
    %c0_71 = arith.constant 0 : index
    %205 = vector.load %arg12[%c3_69, %c0_70, %c0_71] : memref<10x4x1024xf32, #tpu.memory_space<vmem>>, vector<1x4x1024xf32>
    %206 = vector.shape_cast %205 : vector<1x4x1024xf32> to vector<4x1024xf32>
    %207 = vector.extract_strided_slice %204 {offsets = [0, 0], sizes = [4, 1024], strides = [1, 1]} : vector<4x2048xf32> to vector<4x1024xf32>
    %208 = vector.extract_strided_slice %204 {offsets = [0, 1024], sizes = [4, 1024], strides = [1, 1]} : vector<4x2048xf32> to vector<4x1024xf32>
    %209 = arith.select %97, %207, %208 : vector<4x1024xi1>, vector<4x1024xf32>
    %210 = arith.addf %206, %209 : vector<4x1024xf32>
    %211 = vector.extract_strided_slice %210 {offsets = [0, 0], sizes = [4, 256], strides = [1, 1]} : vector<4x1024xf32> to vector<4x256xf32>
    %212 = arith.negf %211 : vector<4x256xf32>
    %213 = math.exp %212 : vector<4x256xf32>
    %cst_72 = arith.constant 1.000000e+00 : f32
    %214 = vector.broadcast %cst_72 : f32 to vector<4x256xf32>
    %215 = arith.addf %214, %213 : vector<4x256xf32>
    %216 = arith.divf %214, %215 : vector<4x256xf32>
    %217 = vector.extract_strided_slice %210 {offsets = [0, 256], sizes = [4, 256], strides = [1, 1]} : vector<4x1024xf32> to vector<4x256xf32>
    %218 = arith.negf %217 : vector<4x256xf32>
    %219 = math.exp %218 : vector<4x256xf32>
    %cst_73 = arith.constant 1.000000e+00 : f32
    %220 = vector.broadcast %cst_73 : f32 to vector<4x256xf32>
    %221 = arith.addf %220, %219 : vector<4x256xf32>
    %222 = arith.divf %220, %221 : vector<4x256xf32>
    %223 = vector.extract_strided_slice %210 {offsets = [0, 512], sizes = [4, 256], strides = [1, 1]} : vector<4x1024xf32> to vector<4x256xf32>
    %224 = math.tanh %223 : vector<4x256xf32>
    %225 = vector.extract_strided_slice %210 {offsets = [0, 768], sizes = [4, 256], strides = [1, 1]} : vector<4x1024xf32> to vector<4x256xf32>
    %226 = arith.negf %225 : vector<4x256xf32>
    %227 = math.exp %226 : vector<4x256xf32>
    %cst_74 = arith.constant 1.000000e+00 : f32
    %228 = vector.broadcast %cst_74 : f32 to vector<4x256xf32>
    %229 = arith.addf %228, %227 : vector<4x256xf32>
    %230 = arith.divf %228, %229 : vector<4x256xf32>
    %231 = arith.mulf %222, %199 : vector<4x256xf32>
    %232 = arith.mulf %216, %224 : vector<4x256xf32>
    %233 = arith.addf %231, %232 : vector<4x256xf32>
    %234 = math.tanh %233 : vector<4x256xf32>
    %235 = arith.mulf %230, %234 : vector<4x256xf32>
    %236 = arith.truncf %235 : vector<4x256xf32> to vector<4x256xbf16>
    %c0_75 = arith.constant 0 : index
    %c0_76 = arith.constant 0 : index
    %237 = vector.load %arg13[%c0_75, %c0_76] : memref<256x2048xbf16, #tpu.memory_space<vmem>>, vector<256x2048xbf16>
    %cst_77 = arith.constant dense<0.000000e+00> : vector<4x2048xf32>
    %238 = tpu.matmul %236, %237, %cst_77 {dimension_numbers = #tpu.dot_dimension_numbers<[1], [0], [0], [1], [0, 0, 1, 1], [], []>} : vector<4x256xbf16>, vector<256x2048xbf16>, vector<4x2048xf32> -> vector<4x2048xf32>
    %c4_78 = arith.constant 4 : index
    %c0_79 = arith.constant 0 : index
    %c0_80 = arith.constant 0 : index
    %239 = vector.load %arg12[%c4_78, %c0_79, %c0_80] : memref<10x4x1024xf32, #tpu.memory_space<vmem>>, vector<1x4x1024xf32>
    %240 = vector.shape_cast %239 : vector<1x4x1024xf32> to vector<4x1024xf32>
    %241 = vector.extract_strided_slice %238 {offsets = [0, 0], sizes = [4, 1024], strides = [1, 1]} : vector<4x2048xf32> to vector<4x1024xf32>
    %242 = vector.extract_strided_slice %238 {offsets = [0, 1024], sizes = [4, 1024], strides = [1, 1]} : vector<4x2048xf32> to vector<4x1024xf32>
    %243 = arith.select %97, %241, %242 : vector<4x1024xi1>, vector<4x1024xf32>
    %244 = arith.addf %240, %243 : vector<4x1024xf32>
    %245 = vector.extract_strided_slice %244 {offsets = [0, 0], sizes = [4, 256], strides = [1, 1]} : vector<4x1024xf32> to vector<4x256xf32>
    %246 = arith.negf %245 : vector<4x256xf32>
    %247 = math.exp %246 : vector<4x256xf32>
    %cst_81 = arith.constant 1.000000e+00 : f32
    %248 = vector.broadcast %cst_81 : f32 to vector<4x256xf32>
    %249 = arith.addf %248, %247 : vector<4x256xf32>
    %250 = arith.divf %248, %249 : vector<4x256xf32>
    %251 = vector.extract_strided_slice %244 {offsets = [0, 256], sizes = [4, 256], strides = [1, 1]} : vector<4x1024xf32> to vector<4x256xf32>
    %252 = arith.negf %251 : vector<4x256xf32>
    %253 = math.exp %252 : vector<4x256xf32>
    %cst_82 = arith.constant 1.000000e+00 : f32
    %254 = vector.broadcast %cst_82 : f32 to vector<4x256xf32>
    %255 = arith.addf %254, %253 : vector<4x256xf32>
    %256 = arith.divf %254, %255 : vector<4x256xf32>
    %257 = vector.extract_strided_slice %244 {offsets = [0, 512], sizes = [4, 256], strides = [1, 1]} : vector<4x1024xf32> to vector<4x256xf32>
    %258 = math.tanh %257 : vector<4x256xf32>
    %259 = vector.extract_strided_slice %244 {offsets = [0, 768], sizes = [4, 256], strides = [1, 1]} : vector<4x1024xf32> to vector<4x256xf32>
    %260 = arith.negf %259 : vector<4x256xf32>
    %261 = math.exp %260 : vector<4x256xf32>
    %cst_83 = arith.constant 1.000000e+00 : f32
    %262 = vector.broadcast %cst_83 : f32 to vector<4x256xf32>
    %263 = arith.addf %262, %261 : vector<4x256xf32>
    %264 = arith.divf %262, %263 : vector<4x256xf32>
    %265 = arith.mulf %256, %233 : vector<4x256xf32>
    %266 = arith.mulf %250, %258 : vector<4x256xf32>
    %267 = arith.addf %265, %266 : vector<4x256xf32>
    %268 = math.tanh %267 : vector<4x256xf32>
    %269 = arith.mulf %264, %268 : vector<4x256xf32>
    %270 = arith.truncf %269 : vector<4x256xf32> to vector<4x256xbf16>
    %c0_84 = arith.constant 0 : index
    %c0_85 = arith.constant 0 : index
    %271 = vector.load %arg13[%c0_84, %c0_85] : memref<256x2048xbf16, #tpu.memory_space<vmem>>, vector<256x2048xbf16>
    %cst_86 = arith.constant dense<0.000000e+00> : vector<4x2048xf32>
    %272 = tpu.matmul %270, %271, %cst_86 {dimension_numbers = #tpu.dot_dimension_numbers<[1], [0], [0], [1], [0, 0, 1, 1], [], []>} : vector<4x256xbf16>, vector<256x2048xbf16>, vector<4x2048xf32> -> vector<4x2048xf32>
    %c5_87 = arith.constant 5 : index
    %c0_88 = arith.constant 0 : index
    %c0_89 = arith.constant 0 : index
    %273 = vector.load %arg12[%c5_87, %c0_88, %c0_89] : memref<10x4x1024xf32, #tpu.memory_space<vmem>>, vector<1x4x1024xf32>
    %274 = vector.shape_cast %273 : vector<1x4x1024xf32> to vector<4x1024xf32>
    %275 = vector.extract_strided_slice %272 {offsets = [0, 0], sizes = [4, 1024], strides = [1, 1]} : vector<4x2048xf32> to vector<4x1024xf32>
    %276 = vector.extract_strided_slice %272 {offsets = [0, 1024], sizes = [4, 1024], strides = [1, 1]} : vector<4x2048xf32> to vector<4x1024xf32>
    %277 = arith.select %97, %275, %276 : vector<4x1024xi1>, vector<4x1024xf32>
    %278 = arith.addf %274, %277 : vector<4x1024xf32>
    %279 = vector.extract_strided_slice %278 {offsets = [0, 0], sizes = [4, 256], strides = [1, 1]} : vector<4x1024xf32> to vector<4x256xf32>
    %280 = arith.negf %279 : vector<4x256xf32>
    %281 = math.exp %280 : vector<4x256xf32>
    %cst_90 = arith.constant 1.000000e+00 : f32
    %282 = vector.broadcast %cst_90 : f32 to vector<4x256xf32>
    %283 = arith.addf %282, %281 : vector<4x256xf32>
    %284 = arith.divf %282, %283 : vector<4x256xf32>
    %285 = vector.extract_strided_slice %278 {offsets = [0, 256], sizes = [4, 256], strides = [1, 1]} : vector<4x1024xf32> to vector<4x256xf32>
    %286 = arith.negf %285 : vector<4x256xf32>
    %287 = math.exp %286 : vector<4x256xf32>
    %cst_91 = arith.constant 1.000000e+00 : f32
    %288 = vector.broadcast %cst_91 : f32 to vector<4x256xf32>
    %289 = arith.addf %288, %287 : vector<4x256xf32>
    %290 = arith.divf %288, %289 : vector<4x256xf32>
    %291 = vector.extract_strided_slice %278 {offsets = [0, 512], sizes = [4, 256], strides = [1, 1]} : vector<4x1024xf32> to vector<4x256xf32>
    %292 = math.tanh %291 : vector<4x256xf32>
    %293 = vector.extract_strided_slice %278 {offsets = [0, 768], sizes = [4, 256], strides = [1, 1]} : vector<4x1024xf32> to vector<4x256xf32>
    %294 = arith.negf %293 : vector<4x256xf32>
    %295 = math.exp %294 : vector<4x256xf32>
    %cst_92 = arith.constant 1.000000e+00 : f32
    %296 = vector.broadcast %cst_92 : f32 to vector<4x256xf32>
    %297 = arith.addf %296, %295 : vector<4x256xf32>
    %298 = arith.divf %296, %297 : vector<4x256xf32>
    %299 = arith.mulf %290, %267 : vector<4x256xf32>
    %300 = arith.mulf %284, %292 : vector<4x256xf32>
    %301 = arith.addf %299, %300 : vector<4x256xf32>
    %302 = math.tanh %301 : vector<4x256xf32>
    %303 = arith.mulf %298, %302 : vector<4x256xf32>
    %304 = arith.truncf %303 : vector<4x256xf32> to vector<4x256xbf16>
    %c0_93 = arith.constant 0 : index
    %c0_94 = arith.constant 0 : index
    %305 = vector.load %arg13[%c0_93, %c0_94] : memref<256x2048xbf16, #tpu.memory_space<vmem>>, vector<256x2048xbf16>
    %cst_95 = arith.constant dense<0.000000e+00> : vector<4x2048xf32>
    %306 = tpu.matmul %304, %305, %cst_95 {dimension_numbers = #tpu.dot_dimension_numbers<[1], [0], [0], [1], [0, 0, 1, 1], [], []>} : vector<4x256xbf16>, vector<256x2048xbf16>, vector<4x2048xf32> -> vector<4x2048xf32>
    %c6_96 = arith.constant 6 : index
    %c0_97 = arith.constant 0 : index
    %c0_98 = arith.constant 0 : index
    %307 = vector.load %arg12[%c6_96, %c0_97, %c0_98] : memref<10x4x1024xf32, #tpu.memory_space<vmem>>, vector<1x4x1024xf32>
    %308 = vector.shape_cast %307 : vector<1x4x1024xf32> to vector<4x1024xf32>
    %309 = vector.extract_strided_slice %306 {offsets = [0, 0], sizes = [4, 1024], strides = [1, 1]} : vector<4x2048xf32> to vector<4x1024xf32>
    %310 = vector.extract_strided_slice %306 {offsets = [0, 1024], sizes = [4, 1024], strides = [1, 1]} : vector<4x2048xf32> to vector<4x1024xf32>
    %311 = arith.select %97, %309, %310 : vector<4x1024xi1>, vector<4x1024xf32>
    %312 = arith.addf %308, %311 : vector<4x1024xf32>
    %313 = vector.extract_strided_slice %312 {offsets = [0, 0], sizes = [4, 256], strides = [1, 1]} : vector<4x1024xf32> to vector<4x256xf32>
    %314 = arith.negf %313 : vector<4x256xf32>
    %315 = math.exp %314 : vector<4x256xf32>
    %cst_99 = arith.constant 1.000000e+00 : f32
    %316 = vector.broadcast %cst_99 : f32 to vector<4x256xf32>
    %317 = arith.addf %316, %315 : vector<4x256xf32>
    %318 = arith.divf %316, %317 : vector<4x256xf32>
    %319 = vector.extract_strided_slice %312 {offsets = [0, 256], sizes = [4, 256], strides = [1, 1]} : vector<4x1024xf32> to vector<4x256xf32>
    %320 = arith.negf %319 : vector<4x256xf32>
    %321 = math.exp %320 : vector<4x256xf32>
    %cst_100 = arith.constant 1.000000e+00 : f32
    %322 = vector.broadcast %cst_100 : f32 to vector<4x256xf32>
    %323 = arith.addf %322, %321 : vector<4x256xf32>
    %324 = arith.divf %322, %323 : vector<4x256xf32>
    %325 = vector.extract_strided_slice %312 {offsets = [0, 512], sizes = [4, 256], strides = [1, 1]} : vector<4x1024xf32> to vector<4x256xf32>
    %326 = math.tanh %325 : vector<4x256xf32>
    %327 = vector.extract_strided_slice %312 {offsets = [0, 768], sizes = [4, 256], strides = [1, 1]} : vector<4x1024xf32> to vector<4x256xf32>
    %328 = arith.negf %327 : vector<4x256xf32>
    %329 = math.exp %328 : vector<4x256xf32>
    %cst_101 = arith.constant 1.000000e+00 : f32
    %330 = vector.broadcast %cst_101 : f32 to vector<4x256xf32>
    %331 = arith.addf %330, %329 : vector<4x256xf32>
    %332 = arith.divf %330, %331 : vector<4x256xf32>
    %333 = arith.mulf %324, %301 : vector<4x256xf32>
    %334 = arith.mulf %318, %326 : vector<4x256xf32>
    %335 = arith.addf %333, %334 : vector<4x256xf32>
    %336 = math.tanh %335 : vector<4x256xf32>
    %337 = arith.mulf %332, %336 : vector<4x256xf32>
    %338 = arith.truncf %337 : vector<4x256xf32> to vector<4x256xbf16>
    %c0_102 = arith.constant 0 : index
    %c0_103 = arith.constant 0 : index
    %339 = vector.load %arg13[%c0_102, %c0_103] : memref<256x2048xbf16, #tpu.memory_space<vmem>>, vector<256x2048xbf16>
    %cst_104 = arith.constant dense<0.000000e+00> : vector<4x2048xf32>
    %340 = tpu.matmul %338, %339, %cst_104 {dimension_numbers = #tpu.dot_dimension_numbers<[1], [0], [0], [1], [0, 0, 1, 1], [], []>} : vector<4x256xbf16>, vector<256x2048xbf16>, vector<4x2048xf32> -> vector<4x2048xf32>
    %c7_105 = arith.constant 7 : index
    %c0_106 = arith.constant 0 : index
    %c0_107 = arith.constant 0 : index
    %341 = vector.load %arg12[%c7_105, %c0_106, %c0_107] : memref<10x4x1024xf32, #tpu.memory_space<vmem>>, vector<1x4x1024xf32>
    %342 = vector.shape_cast %341 : vector<1x4x1024xf32> to vector<4x1024xf32>
    %343 = vector.extract_strided_slice %340 {offsets = [0, 0], sizes = [4, 1024], strides = [1, 1]} : vector<4x2048xf32> to vector<4x1024xf32>
    %344 = vector.extract_strided_slice %340 {offsets = [0, 1024], sizes = [4, 1024], strides = [1, 1]} : vector<4x2048xf32> to vector<4x1024xf32>
    %345 = arith.select %97, %343, %344 : vector<4x1024xi1>, vector<4x1024xf32>
    %346 = arith.addf %342, %345 : vector<4x1024xf32>
    %347 = vector.extract_strided_slice %346 {offsets = [0, 0], sizes = [4, 256], strides = [1, 1]} : vector<4x1024xf32> to vector<4x256xf32>
    %348 = arith.negf %347 : vector<4x256xf32>
    %349 = math.exp %348 : vector<4x256xf32>
    %cst_108 = arith.constant 1.000000e+00 : f32
    %350 = vector.broadcast %cst_108 : f32 to vector<4x256xf32>
    %351 = arith.addf %350, %349 : vector<4x256xf32>
    %352 = arith.divf %350, %351 : vector<4x256xf32>
    %353 = vector.extract_strided_slice %346 {offsets = [0, 256], sizes = [4, 256], strides = [1, 1]} : vector<4x1024xf32> to vector<4x256xf32>
    %354 = arith.negf %353 : vector<4x256xf32>
    %355 = math.exp %354 : vector<4x256xf32>
    %cst_109 = arith.constant 1.000000e+00 : f32
    %356 = vector.broadcast %cst_109 : f32 to vector<4x256xf32>
    %357 = arith.addf %356, %355 : vector<4x256xf32>
    %358 = arith.divf %356, %357 : vector<4x256xf32>
    %359 = vector.extract_strided_slice %346 {offsets = [0, 512], sizes = [4, 256], strides = [1, 1]} : vector<4x1024xf32> to vector<4x256xf32>
    %360 = math.tanh %359 : vector<4x256xf32>
    %361 = vector.extract_strided_slice %346 {offsets = [0, 768], sizes = [4, 256], strides = [1, 1]} : vector<4x1024xf32> to vector<4x256xf32>
    %362 = arith.negf %361 : vector<4x256xf32>
    %363 = math.exp %362 : vector<4x256xf32>
    %cst_110 = arith.constant 1.000000e+00 : f32
    %364 = vector.broadcast %cst_110 : f32 to vector<4x256xf32>
    %365 = arith.addf %364, %363 : vector<4x256xf32>
    %366 = arith.divf %364, %365 : vector<4x256xf32>
    %367 = arith.mulf %358, %335 : vector<4x256xf32>
    %368 = arith.mulf %352, %360 : vector<4x256xf32>
    %369 = arith.addf %367, %368 : vector<4x256xf32>
    %370 = math.tanh %369 : vector<4x256xf32>
    %371 = arith.mulf %366, %370 : vector<4x256xf32>
    %372 = arith.truncf %371 : vector<4x256xf32> to vector<4x256xbf16>
    %c0_111 = arith.constant 0 : index
    %c0_112 = arith.constant 0 : index
    %373 = vector.load %arg13[%c0_111, %c0_112] : memref<256x2048xbf16, #tpu.memory_space<vmem>>, vector<256x2048xbf16>
    %cst_113 = arith.constant dense<0.000000e+00> : vector<4x2048xf32>
    %374 = tpu.matmul %372, %373, %cst_113 {dimension_numbers = #tpu.dot_dimension_numbers<[1], [0], [0], [1], [0, 0, 1, 1], [], []>} : vector<4x256xbf16>, vector<256x2048xbf16>, vector<4x2048xf32> -> vector<4x2048xf32>
    %c8_114 = arith.constant 8 : index
    %c0_115 = arith.constant 0 : index
    %c0_116 = arith.constant 0 : index
    %375 = vector.load %arg12[%c8_114, %c0_115, %c0_116] : memref<10x4x1024xf32, #tpu.memory_space<vmem>>, vector<1x4x1024xf32>
    %376 = vector.shape_cast %375 : vector<1x4x1024xf32> to vector<4x1024xf32>
    %377 = vector.extract_strided_slice %374 {offsets = [0, 0], sizes = [4, 1024], strides = [1, 1]} : vector<4x2048xf32> to vector<4x1024xf32>
    %378 = vector.extract_strided_slice %374 {offsets = [0, 1024], sizes = [4, 1024], strides = [1, 1]} : vector<4x2048xf32> to vector<4x1024xf32>
    %379 = arith.select %97, %377, %378 : vector<4x1024xi1>, vector<4x1024xf32>
    %380 = arith.addf %376, %379 : vector<4x1024xf32>
    %381 = vector.extract_strided_slice %380 {offsets = [0, 0], sizes = [4, 256], strides = [1, 1]} : vector<4x1024xf32> to vector<4x256xf32>
    %382 = arith.negf %381 : vector<4x256xf32>
    %383 = math.exp %382 : vector<4x256xf32>
    %cst_117 = arith.constant 1.000000e+00 : f32
    %384 = vector.broadcast %cst_117 : f32 to vector<4x256xf32>
    %385 = arith.addf %384, %383 : vector<4x256xf32>
    %386 = arith.divf %384, %385 : vector<4x256xf32>
    %387 = vector.extract_strided_slice %380 {offsets = [0, 256], sizes = [4, 256], strides = [1, 1]} : vector<4x1024xf32> to vector<4x256xf32>
    %388 = arith.negf %387 : vector<4x256xf32>
    %389 = math.exp %388 : vector<4x256xf32>
    %cst_118 = arith.constant 1.000000e+00 : f32
    %390 = vector.broadcast %cst_118 : f32 to vector<4x256xf32>
    %391 = arith.addf %390, %389 : vector<4x256xf32>
    %392 = arith.divf %390, %391 : vector<4x256xf32>
    %393 = vector.extract_strided_slice %380 {offsets = [0, 512], sizes = [4, 256], strides = [1, 1]} : vector<4x1024xf32> to vector<4x256xf32>
    %394 = math.tanh %393 : vector<4x256xf32>
    %395 = vector.extract_strided_slice %380 {offsets = [0, 768], sizes = [4, 256], strides = [1, 1]} : vector<4x1024xf32> to vector<4x256xf32>
    %396 = arith.negf %395 : vector<4x256xf32>
    %397 = math.exp %396 : vector<4x256xf32>
    %cst_119 = arith.constant 1.000000e+00 : f32
    %398 = vector.broadcast %cst_119 : f32 to vector<4x256xf32>
    %399 = arith.addf %398, %397 : vector<4x256xf32>
    %400 = arith.divf %398, %399 : vector<4x256xf32>
    %401 = arith.mulf %392, %369 : vector<4x256xf32>
    %402 = arith.mulf %386, %394 : vector<4x256xf32>
    %403 = arith.addf %401, %402 : vector<4x256xf32>
    %404 = math.tanh %403 : vector<4x256xf32>
    %405 = arith.mulf %400, %404 : vector<4x256xf32>
    %406 = arith.truncf %405 : vector<4x256xf32> to vector<4x256xbf16>
    %c0_120 = arith.constant 0 : index
    %c0_121 = arith.constant 0 : index
    %407 = vector.load %arg13[%c0_120, %c0_121] : memref<256x2048xbf16, #tpu.memory_space<vmem>>, vector<256x2048xbf16>
    %cst_122 = arith.constant dense<0.000000e+00> : vector<4x2048xf32>
    %408 = tpu.matmul %406, %407, %cst_122 {dimension_numbers = #tpu.dot_dimension_numbers<[1], [0], [0], [1], [0, 0, 1, 1], [], []>} : vector<4x256xbf16>, vector<256x2048xbf16>, vector<4x2048xf32> -> vector<4x2048xf32>
    %c9_123 = arith.constant 9 : index
    %c0_124 = arith.constant 0 : index
    %c0_125 = arith.constant 0 : index
    %409 = vector.load %arg12[%c9_123, %c0_124, %c0_125] : memref<10x4x1024xf32, #tpu.memory_space<vmem>>, vector<1x4x1024xf32>
    %410 = vector.shape_cast %409 : vector<1x4x1024xf32> to vector<4x1024xf32>
    %411 = vector.extract_strided_slice %408 {offsets = [0, 0], sizes = [4, 1024], strides = [1, 1]} : vector<4x2048xf32> to vector<4x1024xf32>
    %412 = vector.extract_strided_slice %408 {offsets = [0, 1024], sizes = [4, 1024], strides = [1, 1]} : vector<4x2048xf32> to vector<4x1024xf32>
    %413 = arith.select %97, %411, %412 : vector<4x1024xi1>, vector<4x1024xf32>
    %414 = arith.addf %410, %413 : vector<4x1024xf32>
    %415 = vector.extract_strided_slice %414 {offsets = [0, 0], sizes = [4, 256], strides = [1, 1]} : vector<4x1024xf32> to vector<4x256xf32>
    %416 = arith.negf %415 : vector<4x256xf32>
    %417 = math.exp %416 : vector<4x256xf32>
    %cst_126 = arith.constant 1.000000e+00 : f32
    %418 = vector.broadcast %cst_126 : f32 to vector<4x256xf32>
    %419 = arith.addf %418, %417 : vector<4x256xf32>
    %420 = arith.divf %418, %419 : vector<4x256xf32>
    %421 = vector.extract_strided_slice %414 {offsets = [0, 256], sizes = [4, 256], strides = [1, 1]} : vector<4x1024xf32> to vector<4x256xf32>
    %422 = arith.negf %421 : vector<4x256xf32>
    %423 = math.exp %422 : vector<4x256xf32>
    %cst_127 = arith.constant 1.000000e+00 : f32
    %424 = vector.broadcast %cst_127 : f32 to vector<4x256xf32>
    %425 = arith.addf %424, %423 : vector<4x256xf32>
    %426 = arith.divf %424, %425 : vector<4x256xf32>
    %427 = vector.extract_strided_slice %414 {offsets = [0, 512], sizes = [4, 256], strides = [1, 1]} : vector<4x1024xf32> to vector<4x256xf32>
    %428 = math.tanh %427 : vector<4x256xf32>
    %429 = vector.extract_strided_slice %414 {offsets = [0, 768], sizes = [4, 256], strides = [1, 1]} : vector<4x1024xf32> to vector<4x256xf32>
    %430 = arith.negf %429 : vector<4x256xf32>
    %431 = math.exp %430 : vector<4x256xf32>
    %cst_128 = arith.constant 1.000000e+00 : f32
    %432 = vector.broadcast %cst_128 : f32 to vector<4x256xf32>
    %433 = arith.addf %432, %431 : vector<4x256xf32>
    %434 = arith.divf %432, %433 : vector<4x256xf32>
    %435 = arith.mulf %426, %403 : vector<4x256xf32>
    %436 = arith.mulf %420, %428 : vector<4x256xf32>
    %437 = arith.addf %435, %436 : vector<4x256xf32>
    %438 = math.tanh %437 : vector<4x256xf32>
    %439 = arith.mulf %434, %438 : vector<4x256xf32>
    %c1_i32_129 = arith.constant 1 : i32
    %440 = tpu.memref_slice %arg16[%c1_i32_129] : memref<3x!tpu.dma_semaphore, #tpu.memory_space<semaphore_mem>> -> memref<1x!tpu.dma_semaphore, #tpu.memory_space<semaphore_mem>>
    %441 = tpu.memref_squeeze %440 : memref<1x!tpu.dma_semaphore, #tpu.memory_space<semaphore_mem>> -> memref<!tpu.dma_semaphore, #tpu.memory_space<semaphore_mem>>
    tpu.wait_dma2 semaphore(%441 : memref<!tpu.dma_semaphore, #tpu.memory_space<semaphore_mem>>) src(%arg7 : memref<512x256xbf16, #tpu.memory_space<any>>) dst(%arg14 : memref<512x256xbf16, #tpu.memory_space<vmem>>)
    %c2_i32_130 = arith.constant 2 : i32
    %442 = tpu.memref_slice %arg16[%c2_i32_130] : memref<3x!tpu.dma_semaphore, #tpu.memory_space<semaphore_mem>> -> memref<1x!tpu.dma_semaphore, #tpu.memory_space<semaphore_mem>>
    %443 = tpu.memref_squeeze %442 : memref<1x!tpu.dma_semaphore, #tpu.memory_space<semaphore_mem>> -> memref<!tpu.dma_semaphore, #tpu.memory_space<semaphore_mem>>
    tpu.wait_dma2 semaphore(%443 : memref<!tpu.dma_semaphore, #tpu.memory_space<semaphore_mem>>) src(%arg8 : memref<256x128xbf16, #tpu.memory_space<any>>) dst(%arg15 : memref<256x128xbf16, #tpu.memory_space<vmem>>)
    %444 = vector.extract_strided_slice %439 {offsets = [0, 0], sizes = [2, 256], strides = [1, 1]} : vector<4x256xf32> to vector<2x256xf32>
    %445 = vector.extract_strided_slice %439 {offsets = [2, 0], sizes = [2, 256], strides = [1, 1]} : vector<4x256xf32> to vector<2x256xf32>
    %446 = tpu.concatenate %444, %445 in 1 : vector<2x256xf32>, vector<2x256xf32> -> vector<2x512xf32>
    %447 = arith.truncf %446 : vector<2x512xf32> to vector<2x512xbf16>
    %c0_131 = arith.constant 0 : index
    %c0_132 = arith.constant 0 : index
    %448 = vector.load %arg14[%c0_131, %c0_132] : memref<512x256xbf16, #tpu.memory_space<vmem>>, vector<512x256xbf16>
    %cst_133 = arith.constant dense<0.000000e+00> : vector<2x256xf32>
    %449 = tpu.matmul %447, %448, %cst_133 {dimension_numbers = #tpu.dot_dimension_numbers<[1], [0], [0], [1], [0, 0, 1, 1], [], []>} : vector<2x512xbf16>, vector<512x256xbf16>, vector<2x256xf32> -> vector<2x256xf32>
    %c0_134 = arith.constant 0 : index
    %c0_135 = arith.constant 0 : index
    %450 = vector.load %arg9[%c0_134, %c0_135] : memref<1x256xf32, #tpu.memory_space<vmem>>, vector<1x256xf32>
    %451 = vector.broadcast %450 : vector<1x256xf32> to vector<2x256xf32>
    %452 = arith.addf %449, %451 : vector<2x256xf32>
    %cst_136 = arith.constant 0.000000e+00 : f32
    %453 = vector.broadcast %cst_136 : f32 to vector<2x256xf32>
    %454 = arith.cmpf oge, %452, %453 : vector<2x256xf32>
    %cst_137 = arith.constant 0.00999999977 : f32
    %455 = vector.broadcast %cst_137 : f32 to vector<2x256xf32>
    %456 = arith.mulf %455, %452 : vector<2x256xf32>
    %457 = arith.select %454, %452, %456 : vector<2x256xi1>, vector<2x256xf32>
    %458 = arith.truncf %457 : vector<2x256xf32> to vector<2x256xbf16>
    %c0_138 = arith.constant 0 : index
    %c0_139 = arith.constant 0 : index
    %459 = vector.load %arg15[%c0_138, %c0_139] : memref<256x128xbf16, #tpu.memory_space<vmem>>, vector<256x128xbf16>
    %cst_140 = arith.constant dense<0.000000e+00> : vector<2x128xf32>
    %460 = tpu.matmul %458, %459, %cst_140 {dimension_numbers = #tpu.dot_dimension_numbers<[1], [0], [0], [1], [0, 0, 1, 1], [], []>} : vector<2x256xbf16>, vector<256x128xbf16>, vector<2x128xf32> -> vector<2x128xf32>
    %c0_141 = arith.constant 0 : index
    %c0_142 = arith.constant 0 : index
    %461 = vector.load %arg10[%c0_141, %c0_142] : memref<1x128xf32, #tpu.memory_space<vmem>>, vector<1x128xf32>
    %462 = vector.broadcast %461 : vector<1x128xf32> to vector<2x128xf32>
    %463 = arith.addf %460, %462 : vector<2x128xf32>
    %c0_143 = arith.constant 0 : index
    %c0_144 = arith.constant 0 : index
    %464 = vector.load %arg11[%c0_143, %c0_144] : memref<2x128xf32, #tpu.memory_space<vmem>>, vector<2x128xf32>
    tpu.vector_store %arg11[%c0_143, %c0_144], %463 {strides = array<i32>} : memref<2x128xf32, #tpu.memory_space<vmem>>, vector<2x128xf32>,
    return
  }
}

</mosaic_0001>

<llo_original>
// kernel: forward.1
$region0: #{forward.1}
  #allocation0 [shape = 'u32[]', space=smem, size = 0x4, offset = 0x4, fixed_abs, tag = 'smem constant byte address 0x4 - core index']
  #allocation1 [shape = 'u32[144,128]{1,0:T(1,128)}', space=vmem, size = 0x12000, scoped, tag = 'internal scratch']
  #allocation2 [shape = 'f32[10,4,1024]{2,1,0:T(4,128)}', space=vmem, size = 0x28000, scoped, tag = 'scratch operand']
  #allocation3 [shape = 'bf16[256,2048]{1,0:T(8,128)(2,1)}', space=vmem, size = 0x100000, scoped, tag = 'scratch operand']
  #allocation4 [shape = 'bf16[512,256]{1,0:T(8,128)(2,1)}', space=vmem, size = 0x40000, scoped, tag = 'scratch operand']
  #allocation5 [shape = 'bf16[256,128]{1,0:T(8,128)(2,1)}', space=vmem, size = 0x10000, scoped, tag = 'scratch operand']
  #allocation6 [shape = 's32[3]{0}', space=sflag, size = 0xc, scoped, tag = 'scratch operand']
  #allocation9 [shape = 's32[]', space=sflag, size = 0x4, offset = 0, fixed_abs, tag = 'sflag constant byte address 0x0 - dummy sync flag']
  #allocation10 [shape = 's32[]', space=sflag, size = 0x4, offset = 0, fixed_abs, tag = 'sflag constant byte address 0x0 - dummy sync flag']
  #allocation11 [shape = 's32[]', space=sflag, size = 0x4, offset = 0, fixed_abs, tag = 'sflag constant byte address 0x0 - dummy sync flag']
  %s0 = inlined_call_operand.vmem [shape: bf16[96,640], index: 0, kind: input, shape index: {}]
  %s1 = inlined_call_operand.vmem [shape: bf16[640,128], index: 1, kind: input, shape index: {}]
  %s2 = inlined_call_operand.vmem [shape: f32[1,128], index: 2, kind: input, shape index: {}]
  %s3 = inlined_call_operand.vmem [shape: bf16[128,2048], index: 3, kind: input, shape index: {}]
  %s4 = inlined_call_operand.vmem [shape: f32[1,1024], index: 4, kind: input, shape index: {}]
  %s5 = inlined_call_operand.vmem [shape: f32[1,1024], index: 5, kind: input, shape index: {}]
  %s6 = inlined_call_operand.vmem [shape: bf16[256,2048], index: 6, kind: input, shape index: {}]
  %s7 = inlined_call_operand.vmem [shape: bf16[512,256], index: 7, kind: input, shape index: {}]
  %s8 = inlined_call_operand.vmem [shape: bf16[256,128], index: 8, kind: input, shape index: {}]
  %s9 = inlined_call_operand.vmem [shape: f32[1,256], index: 9, kind: input, shape index: {}]
  %s10 = inlined_call_operand.vmem [shape: f32[1,128], index: 10, kind: input, shape index: {}]
  %s11 = inlined_call_operand.hbm [shape: f32[2,128], index: 11, kind: output, shape index: {}]
  %s12 = sld [smem:[#allocation0]]
  $region144: #{forward.1} parent=0
    _
  %s14 = ssub.s32 1, %s12
  %s15 = scalar_select 0, %s14, %s12
  $region1: #{forward.1} parent=0
    #allocation7 [shape = 'u8[1024]{0}', space=vmem, size = 0x400, scoped, tag = 'output window, operand 0, single buffered']
    #allocation8 [shape = 's32[1]{0}', space=sflag, size = 0x4, scoped, tag = 'scoped memory for forward.1']
    %16 = vsyncpa [#allocation8], 0
    // Predicated region
    $region2: #{forward.1} parent=1 // pred_check
      _
    $region3: #{forward.1} parent=1 // pred_check_branch
      %18 = sbr.rel (0) target = $region5
    $region4: #{forward.1} parent=1 // pred_region
      _
    $region5: #{forward.1} parent=1 // pred_fallthru
      _
    // Predicated region
    $region6: #{forward.1} parent=1 // pred_check
      _
    $region7: #{forward.1} parent=1 // pred_check_branch
      %20 = sbr.rel (0) target = $region9
    $region8: #{forward.1} parent=1 // pred_region
      _
    $region9: #{forward.1} parent=1 // pred_fallthru
      _
    // Predicated region
    $region10: #{forward.1} parent=1 // pred_check
      _
    $region11: #{forward.1} parent=1 // pred_check_branch
      %22 = sbr.rel (0) target = $region13
    $region12: #{forward.1} parent=1 // pred_region
      _
    $region13: #{forward.1} parent=1 // pred_fallthru
      _
    // Predicated region
    $region14: #{forward.1} parent=1 // pred_check
      _
    $region15: #{forward.1} parent=1 // pred_check_branch
      %24 = sbr.rel (0) target = $region17
    $region16: #{forward.1} parent=1 // pred_region
      _
    $region17: #{forward.1} parent=1 // pred_fallthru
      _
    // Predicated region
    $region18: #{forward.1} parent=1 // pred_check
      _
    $region19: #{forward.1} parent=1 // pred_check_branch
      %26 = sbr.rel (0) target = $region21
    $region20: #{forward.1} parent=1 // pred_region
      _
    $region21: #{forward.1} parent=1 // pred_fallthru
      _
    // Predicated region
    $region22: #{forward.1} parent=1 // pred_check
      _
    $region23: #{forward.1} parent=1 // pred_check_branch
      %28 = sbr.rel (0) target = $region25
    $region24: #{forward.1} parent=1 // pred_region
      _
    $region25: #{forward.1} parent=1 // pred_fallthru
      _
    // Predicated region
    $region26: #{forward.1} parent=1 // pred_check
      _
    $region27: #{forward.1} parent=1 // pred_check_branch
      %30 = sbr.rel (0) target = $region29
    $region28: #{forward.1} parent=1 // pred_region
      _
    $region29: #{forward.1} parent=1 // pred_fallthru
      _
    // Predicated region
    $region30: #{forward.1} parent=1 // pred_check
      _
    $region31: #{forward.1} parent=1 // pred_check_branch
      %32 = sbr.rel (0) target = $region33
    $region32: #{forward.1} parent=1 // pred_region
      _
    $region33: #{forward.1} parent=1 // pred_fallthru
      _
    %p35 = scmp.lt.u32.totalorder 2048, 8
    %p36 = pneg %p35
    // Predicated region
    $region34: #{forward.1} parent=1 // pred_check
      _
    $region35: #{forward.1} parent=1 // pred_check_branch
      %38 = sbr.rel (%p35) target = $region37
    $region36: #{forward.1} parent=1 // pred_region
      %s54 = sand.u32 2048, 7
      %p55 = scmp.eq.s32.totalorder %s54, 0
      // Predicated region
      $region49: #{forward.1} parent=36 // pred_check
        %p56 = pneg %p55
      $region50: #{forward.1} parent=36 // pred_check_branch
        %58 = sbr.rel (%p56) target = $region52
      $region51: #{forward.1} parent=36 // pred_region
        loop: start=0, step=1, limit=1
        $region53: #{forward.1} parent=51 // loop_pre_header
          _
        $region54: #{forward.1} parent=51 // loop_header
          %s60 = sphi 0, %s64
          %p61 = scmp.ge.s32.totalorder %s60, 1
          %s65 = sphi %s6, %s6
          %s66 = sphi [#allocation3], [#allocation3]
        $region55: #{forward.1} parent=51 // loop_header_branch
          %63 = sbr.rel (%p61) target = $region59
        $region56: #{forward.1} parent=51 // loop_body
          %v67 = vld [vmem:[%s65] sm:$0xff]
          %68 = vst [vmem:[%s66] sm:$0xff] %v67
          %v69 = vld [vmem:[%s65 + $0x8] sm:$0xff]
          %70 = vst [vmem:[%s66 + $0x8] sm:$0xff] %v69
          %v71 = vld [vmem:[%s65 + $0x10] sm:$0xff]
          %72 = vst [vmem:[%s66 + $0x10] sm:$0xff] %v71
          %v73 = vld [vmem:[%s65 + $0x18] sm:$0xff]
          %74 = vst [vmem:[%s66 + $0x18] sm:$0xff] %v73
          %v75 = vld [vmem:[%s65 + $0x20] sm:$0xff]
          %76 = vst [vmem:[%s66 + $0x20] sm:$0xff] %v75
          %v77 = vld [vmem:[%s65 + $0x28] sm:$0xff]
          %78 = vst [vmem:[%s66 + $0x28] sm:$0xff] %v77
          %v79 = vld [vmem:[%s65 + $0x30] sm:$0xff]
          %80 = vst [vmem:[%s66 + $0x30] sm:$0xff] %v79
          %v81 = vld [vmem:[%s65 + $0x38] sm:$0xff]
          %82 = vst [vmem:[%s66 + $0x38] sm:$0xff] %v81
          %v83 = vld [vmem:[%s65 + $0x40] sm:$0xff]
          %84 = vst [vmem:[%s66 + $0x40] sm:$0xff] %v83
          %v85 = vld [vmem:[%s65 + $0x48] sm:$0xff]
          %86 = vst [vmem:[%s66 + $0x48] sm:$0xff] %v85
          %v87 = vld [vmem:[%s65 + $0x50] sm:$0xff]
          %88 = vst [vmem:[%s66 + $0x50] sm:$0xff] %v87
          %v89 = vld [vmem:[%s65 + $0x58] sm:$0xff]
          %90 = vst [vmem:[%s66 + $0x58] sm:$0xff] %v89
          %v91 = vld [vmem:[%s65 + $0x60] sm:$0xff]
          %92 = vst [vmem:[%s66 + $0x60] sm:$0xff] %v91
          %v93 = vld [vmem:[%s65 + $0x68] sm:$0xff]
          %94 = vst [vmem:[%s66 + $0x68] sm:$0xff] %v93
          %v95 = vld [vmem:[%s65 + $0x70] sm:$0xff]
          %96 = vst [vmem:[%s66 + $0x70] sm:$0xff] %v95
          %v97 = vld [vmem:[%s65 + $0x78] sm:$0xff]
          %98 = vst [vmem:[%s66 + $0x78] sm:$0xff] %v97
          %v99 = vld [vmem:[%s65 + $0x80] sm:$0xff]
          %100 = vst [vmem:[%s66 + $0x80] sm:$0xff] %v99
          %v101 = vld [vmem:[%s65 + $0x88] sm:$0xff]
          %102 = vst [vmem:[%s66 + $0x88] sm:$0xff] %v101
          %v103 = vld [vmem:[%s65 + $0x90] sm:$0xff]
          %104 = vst [vmem:[%s66 + $0x90] sm:$0xff] %v103
          %v105 = vld [vmem:[%s65 + $0x98] sm:$0xff]
          %106 = vst [vmem:[%s66 + $0x98] sm:$0xff] %v105
          %v107 = vld [vmem:[%s65 + $0xa0] sm:$0xff]
          %108 = vst [vmem:[%s66 + $0xa0] sm:$0xff] %v107
          %v109 = vld [vmem:[%s65 + $0xa8] sm:$0xff]
          %110 = vst [vmem:[%s66 + $0xa8] sm:$0xff] %v109
          %v111 = vld [vmem:[%s65 + $0xb0] sm:$0xff]
          %112 = vst [vmem:[%s66 + $0xb0] sm:$0xff] %v111
          %v113 = vld [vmem:[%s65 + $0xb8] sm:$0xff]
          %114 = vst [vmem:[%s66 + $0xb8] sm:$0xff] %v113
          %v115 = vld [vmem:[%s65 + $0xc0] sm:$0xff]
          %116 = vst [vmem:[%s66 + $0xc0] sm:$0xff] %v115
          %v117 = vld [vmem:[%s65 + $0xc8] sm:$0xff]
          %118 = vst [vmem:[%s66 + $0xc8] sm:$0xff] %v117
          %v119 = vld [vmem:[%s65 + $0xd0] sm:$0xff]
          %120 = vst [vmem:[%s66 + $0xd0] sm:$0xff] %v119
          %v121 = vld [vmem:[%s65 + $0xd8] sm:$0xff]
          %122 = vst [vmem:[%s66 + $0xd8] sm:$0xff] %v121
          %v123 = vld [vmem:[%s65 + $0xe0] sm:$0xff]
          %124 = vst [vmem:[%s66 + $0xe0] sm:$0xff] %v123
          %v125 = vld [vmem:[%s65 + $0xe8] sm:$0xff]
          %126 = vst [vmem:[%s66 + $0xe8] sm:$0xff] %v125
          %v127 = vld [vmem:[%s65 + $0xf0] sm:$0xff]
          %128 = vst [vmem:[%s66 + $0xf0] sm:$0xff] %v127
          %v129 = vld [vmem:[%s65 + $0xf8] sm:$0xff]
          %130 = vst [vmem:[%s66 + $0xf8] sm:$0xff] %v129
          %v131 = vld [vmem:[%s65 + $0x100] sm:$0xff]
          %132 = vst [vmem:[%s66 + $0x100] sm:$0xff] %v131
          %v133 = vld [vmem:[%s65 + $0x108] sm:$0xff]
          %134 = vst [vmem:[%s66 + $0x108] sm:$0xff] %v133
          %v135 = vld [vmem:[%s65 + $0x110] sm:$0xff]
          %136 = vst [vmem:[%s66 + $0x110] sm:$0xff] %v135
          %v137 = vld [vmem:[%s65 + $0x118] sm:$0xff]
          %138 = vst [vmem:[%s66 + $0x118] sm:$0xff] %v137
          %v139 = vld [vmem:[%s65 + $0x120] sm:$0xff]
          %140 = vst [vmem:[%s66 + $0x120] sm:$0xff] %v139
          %v141 = vld [vmem:[%s65 + $0x128] sm:$0xff]
          %142 = vst [vmem:[%s66 + $0x128] sm:$0xff] %v141
          %v143 = vld [vmem:[%s65 + $0x130] sm:$0xff]
          %144 = vst [vmem:[%s66 + $0x130] sm:$0xff] %v143
          %v145 = vld [vmem:[%s65 + $0x138] sm:$0xff]
          %146 = vst [vmem:[%s66 + $0x138] sm:$0xff] %v145
          %v147 = vld [vmem:[%s65 + $0x140] sm:$0xff]
          %148 = vst [vmem:[%s66 + $0x140] sm:$0xff] %v147
          %v149 = vld [vmem:[%s65 + $0x148] sm:$0xff]
          %150 = vst [vmem:[%s66 + $0x148] sm:$0xff] %v149
          %v151 = vld [vmem:[%s65 + $0x150] sm:$0xff]
          %152 = vst [vmem:[%s66 + $0x150] sm:$0xff] %v151
          %v153 = vld [vmem:[%s65 + $0x158] sm:$0xff]
          %154 = vst [vmem:[%s66 + $0x158] sm:$0xff] %v153
          %v155 = vld [vmem:[%s65 + $0x160] sm:$0xff]
          %156 = vst [vmem:[%s66 + $0x160] sm:$0xff] %v155
          %v157 = vld [vmem:[%s65 + $0x168] sm:$0xff]
          %158 = vst [vmem:[%s66 + $0x168] sm:$0xff] %v157
          %v159 = vld [vmem:[%s65 + $0x170] sm:$0xff]
          %160 = vst [vmem:[%s66 + $0x170] sm:$0xff] %v159
          %v161 = vld [vmem:[%s65 + $0x178] sm:$0xff]
          %162 = vst [vmem:[%s66 + $0x178] sm:$0xff] %v161
          %v163 = vld [vmem:[%s65 + $0x180] sm:$0xff]
          %164 = vst [vmem:[%s66 + $0x180] sm:$0xff] %v163
          %v165 = vld [vmem:[%s65 + $0x188] sm:$0xff]
          %166 = vst [vmem:[%s66 + $0x188] sm:$0xff] %v165
          %v167 = vld [vmem:[%s65 + $0x190] sm:$0xff]
          %168 = vst [vmem:[%s66 + $0x190] sm:$0xff] %v167
          %v169 = vld [vmem:[%s65 + $0x198] sm:$0xff]
          %170 = vst [vmem:[%s66 + $0x198] sm:$0xff] %v169
          %v171 = vld [vmem:[%s65 + $0x1a0] sm:$0xff]
          %172 = vst [vmem:[%s66 + $0x1a0] sm:$0xff] %v171
          %v173 = vld [vmem:[%s65 + $0x1a8] sm:$0xff]
          %174 = vst [vmem:[%s66 + $0x1a8] sm:$0xff] %v173
          %v175 = vld [vmem:[%s65 + $0x1b0] sm:$0xff]
          %176 = vst [vmem:[%s66 + $0x1b0] sm:$0xff] %v175
          %v177 = vld [vmem:[%s65 + $0x1b8] sm:$0xff]
          %178 = vst [vmem:[%s66 + $0x1b8] sm:$0xff] %v177
          %v179 = vld [vmem:[%s65 + $0x1c0] sm:$0xff]
          %180 = vst [vmem:[%s66 + $0x1c0] sm:$0xff] %v179
          %v181 = vld [vmem:[%s65 + $0x1c8] sm:$0xff]
          %182 = vst [vmem:[%s66 + $0x1c8] sm:$0xff] %v181
          %v183 = vld [vmem:[%s65 + $0x1d0] sm:$0xff]
          %184 = vst [vmem:[%s66 + $0x1d0] sm:$0xff] %v183
          %v185 = vld [vmem:[%s65 + $0x1d8] sm:$0xff]
          %186 = vst [vmem:[%s66 + $0x1d8] sm:$0xff] %v185
          %v187 = vld [vmem:[%s65 + $0x1e0] sm:$0xff]
          %188 = vst [vmem:[%s66 + $0x1e0] sm:$0xff] %v187
          %v189 = vld [vmem:[%s65 + $0x1e8] sm:$0xff]
          %190 = vst [vmem:[%s66 + $0x1e8] sm:$0xff] %v189
          %v191 = vld [vmem:[%s65 + $0x1f0] sm:$0xff]
          %192 = vst [vmem:[%s66 + $0x1f0] sm:$0xff] %v191
          %v193 = vld [vmem:[%s65 + $0x1f8] sm:$0xff]
          %194 = vst [vmem:[%s66 + $0x1f8] sm:$0xff] %v193
          %v195 = vld [vmem:[%s65 + $0x200] sm:$0xff]
          %196 = vst [vmem:[%s66 + $0x200] sm:$0xff] %v195
          %v197 = vld [vmem:[%s65 + $0x208] sm:$0xff]
          %198 = vst [vmem:[%s66 + $0x208] sm:$0xff] %v197
          %v199 = vld [vmem:[%s65 + $0x210] sm:$0xff]
          %200 = vst [vmem:[%s66 + $0x210] sm:$0xff] %v199
          %v201 = vld [vmem:[%s65 + $0x218] sm:$0xff]
          %202 = vst [vmem:[%s66 + $0x218] sm:$0xff] %v201
          %v203 = vld [vmem:[%s65 + $0x220] sm:$0xff]
          %204 = vst [vmem:[%s66 + $0x220] sm:$0xff] %v203
          %v205 = vld [vmem:[%s65 + $0x228] sm:$0xff]
          %206 = vst [vmem:[%s66 + $0x228] sm:$0xff] %v205
          %v207 = vld [vmem:[%s65 + $0x230] sm:$0xff]
          %208 = vst [vmem:[%s66 + $0x230] sm:$0xff] %v207
          %v209 = vld [vmem:[%s65 + $0x238] sm:$0xff]
          %210 = vst [vmem:[%s66 + $0x238] sm:$0xff] %v209
          %v211 = vld [vmem:[%s65 + $0x240] sm:$0xff]
          %212 = vst [vmem:[%s66 + $0x240] sm:$0xff] %v211
          %v213 = vld [vmem:[%s65 + $0x248] sm:$0xff]
          %214 = vst [vmem:[%s66 + $0x248] sm:$0xff] %v213
          %v215 = vld [vmem:[%s65 + $0x250] sm:$0xff]
          %216 = vst [vmem:[%s66 + $0x250] sm:$0xff] %v215
          %v217 = vld [vmem:[%s65 + $0x258] sm:$0xff]
          %218 = vst [vmem:[%s66 + $0x258] sm:$0xff] %v217
          %v219 = vld [vmem:[%s65 + $0x260] sm:$0xff]
          %220 = vst [vmem:[%s66 + $0x260] sm:$0xff] %v219
          %v221 = vld [vmem:[%s65 + $0x268] sm:$0xff]
          %222 = vst [vmem:[%s66 + $0x268] sm:$0xff] %v221
          %v223 = vld [vmem:[%s65 + $0x270] sm:$0xff]
          %224 = vst [vmem:[%s66 + $0x270] sm:$0xff] %v223
          %v225 = vld [vmem:[%s65 + $0x278] sm:$0xff]
          %226 = vst [vmem:[%s66 + $0x278] sm:$0xff] %v225
          %v227 = vld [vmem:[%s65 + $0x280] sm:$0xff]
          %228 = vst [vmem:[%s66 + $0x280] sm:$0xff] %v227
          %v229 = vld [vmem:[%s65 + $0x288] sm:$0xff]
          %230 = vst [vmem:[%s66 + $0x288] sm:$0xff] %v229
          %v231 = vld [vmem:[%s65 + $0x290] sm:$0xff]
          %232 = vst [vmem:[%s66 + $0x290] sm:$0xff] %v231
          %v233 = vld [vmem:[%s65 + $0x298] sm:$0xff]
          %234 = vst [vmem:[%s66 + $0x298] sm:$0xff] %v233
          %v235 = vld [vmem:[%s65 + $0x2a0] sm:$0xff]
          %236 = vst [vmem:[%s66 + $0x2a0] sm:$0xff] %v235
          %v237 = vld [vmem:[%s65 + $0x2a8] sm:$0xff]
          %238 = vst [vmem:[%s66 + $0x2a8] sm:$0xff] %v237
          %v239 = vld [vmem:[%s65 + $0x2b0] sm:$0xff]
          %240 = vst [vmem:[%s66 + $0x2b0] sm:$0xff] %v239
          %v241 = vld [vmem:[%s65 + $0x2b8] sm:$0xff]
          %242 = vst [vmem:[%s66 + $0x2b8] sm:$0xff] %v241
          %v243 = vld [vmem:[%s65 + $0x2c0] sm:$0xff]
          %244 = vst [vmem:[%s66 + $0x2c0] sm:$0xff] %v243
          %v245 = vld [vmem:[%s65 + $0x2c8] sm:$0xff]
          %246 = vst [vmem:[%s66 + $0x2c8] sm:$0xff] %v245
          %v247 = vld [vmem:[%s65 + $0x2d0] sm:$0xff]
          %248 = vst [vmem:[%s66 + $0x2d0] sm:$0xff] %v247
          %v249 = vld [vmem:[%s65 + $0x2d8] sm:$0xff]
          %250 = vst [vmem:[%s66 + $0x2d8] sm:$0xff] %v249
          %v251 = vld [vmem:[%s65 + $0x2e0] sm:$0xff]
          %252 = vst [vmem:[%s66 + $0x2e0] sm:$0xff] %v251
          %v253 = vld [vmem:[%s65 + $0x2e8] sm:$0xff]
          %254 = vst [vmem:[%s66 + $0x2e8] sm:$0xff] %v253
          %v255 = vld [vmem:[%s65 + $0x2f0] sm:$0xff]
          %256 = vst [vmem:[%s66 + $0x2f0] sm:$0xff] %v255
          %v257 = vld [vmem:[%s65 + $0x2f8] sm:$0xff]
          %258 = vst [vmem:[%s66 + $0x2f8] sm:$0xff] %v257
          %v259 = vld [vmem:[%s65 + $0x300] sm:$0xff]
          %260 = vst [vmem:[%s66 + $0x300] sm:$0xff] %v259
          %v261 = vld [vmem:[%s65 + $0x308] sm:$0xff]
          %262 = vst [vmem:[%s66 + $0x308] sm:$0xff] %v261
          %v263 = vld [vmem:[%s65 + $0x310] sm:$0xff]
          %264 = vst [vmem:[%s66 + $0x310] sm:$0xff] %v263
          %v265 = vld [vmem:[%s65 + $0x318] sm:$0xff]
          %266 = vst [vmem:[%s66 + $0x318] sm:$0xff] %v265
          %v267 = vld [vmem:[%s65 + $0x320] sm:$0xff]
          %268 = vst [vmem:[%s66 + $0x320] sm:$0xff] %v267
          %v269 = vld [vmem:[%s65 + $0x328] sm:$0xff]
          %270 = vst [vmem:[%s66 + $0x328] sm:$0xff] %v269
          %v271 = vld [vmem:[%s65 + $0x330] sm:$0xff]
          %272 = vst [vmem:[%s66 + $0x330] sm:$0xff] %v271
          %v273 = vld [vmem:[%s65 + $0x338] sm:$0xff]
          %274 = vst [vmem:[%s66 + $0x338] sm:$0xff] %v273
          %v275 = vld [vmem:[%s65 + $0x340] sm:$0xff]
          %276 = vst [vmem:[%s66 + $0x340] sm:$0xff] %v275
          %v277 = vld [vmem:[%s65 + $0x348] sm:$0xff]
          %278 = vst [vmem:[%s66 + $0x348] sm:$0xff] %v277
          %v279 = vld [vmem:[%s65 + $0x350] sm:$0xff]
          %280 = vst [vmem:[%s66 + $0x350] sm:$0xff] %v279
          %v281 = vld [vmem:[%s65 + $0x358] sm:$0xff]
          %282 = vst [vmem:[%s66 + $0x358] sm:$0xff] %v281
          %v283 = vld [vmem:[%s65 + $0x360] sm:$0xff]
          %284 = vst [vmem:[%s66 + $0x360] sm:$0xff] %v283
          %v285 = vld [vmem:[%s65 + $0x368] sm:$0xff]
          %286 = vst [vmem:[%s66 + $0x368] sm:$0xff] %v285
          %v287 = vld [vmem:[%s65 + $0x370] sm:$0xff]
          %288 = vst [vmem:[%s66 + $0x370] sm:$0xff] %v287
          %v289 = vld [vmem:[%s65 + $0x378] sm:$0xff]
          %290 = vst [vmem:[%s66 + $0x378] sm:$0xff] %v289
          %v291 = vld [vmem:[%s65 + $0x380] sm:$0xff]
          %292 = vst [vmem:[%s66 + $0x380] sm:$0xff] %v291
          %v293 = vld [vmem:[%s65 + $0x388] sm:$0xff]
          %294 = vst [vmem:[%s66 + $0x388] sm:$0xff] %v293
          %v295 = vld [vmem:[%s65 + $0x390] sm:$0xff]
          %296 = vst [vmem:[%s66 + $0x390] sm:$0xff] %v295
          %v297 = vld [vmem:[%s65 + $0x398] sm:$0xff]
          %298 = vst [vmem:[%s66 + $0x398] sm:$0xff] %v297
          %v299 = vld [vmem:[%s65 + $0x3a0] sm:$0xff]
          %300 = vst [vmem:[%s66 + $0x3a0] sm:$0xff] %v299
          %v301 = vld [vmem:[%s65 + $0x3a8] sm:$0xff]
          %302 = vst [vmem:[%s66 + $0x3a8] sm:$0xff] %v301
          %v303 = vld [vmem:[%s65 + $0x3b0] sm:$0xff]
          %304 = vst [vmem:[%s66 + $0x3b0] sm:$0xff] %v303
          %v305 = vld [vmem:[%s65 + $0x3b8] sm:$0xff]
          %306 = vst [vmem:[%s66 + $0x3b8] sm:$0xff] %v305
          %v307 = vld [vmem:[%s65 + $0x3c0] sm:$0xff]
          %308 = vst [vmem:[%s66 + $0x3c0] sm:$0xff] %v307
          %v309 = vld [vmem:[%s65 + $0x3c8] sm:$0xff]
          %310 = vst [vmem:[%s66 + $0x3c8] sm:$0xff] %v309
          %v311 = vld [vmem:[%s65 + $0x3d0] sm:$0xff]
          %312 = vst [vmem:[%s66 + $0x3d0] sm:$0xff] %v311
          %v313 = vld [vmem:[%s65 + $0x3d8] sm:$0xff]
          %314 = vst [vmem:[%s66 + $0x3d8] sm:$0xff] %v313
          %v315 = vld [vmem:[%s65 + $0x3e0] sm:$0xff]
          %316 = vst [vmem:[%s66 + $0x3e0] sm:$0xff] %v315
          %v317 = vld [vmem:[%s65 + $0x3e8] sm:$0xff]
          %318 = vst [vmem:[%s66 + $0x3e8] sm:$0xff] %v317
          %v319 = vld [vmem:[%s65 + $0x3f0] sm:$0xff]
          %320 = vst [vmem:[%s66 + $0x3f0] sm:$0xff] %v319
          %v321 = vld [vmem:[%s65 + $0x3f8] sm:$0xff]
          %322 = vst [vmem:[%s66 + $0x3f8] sm:$0xff] %v321
          %v323 = vld [vmem:[%s65 + $0x400] sm:$0xff]
          %324 = vst [vmem:[%s66 + $0x400] sm:$0xff] %v323
          %v325 = vld [vmem:[%s65 + $0x408] sm:$0xff]
          %326 = vst [vmem:[%s66 + $0x408] sm:$0xff] %v325
          %v327 = vld [vmem:[%s65 + $0x410] sm:$0xff]
          %328 = vst [vmem:[%s66 + $0x410] sm:$0xff] %v327
          %v329 = vld [vmem:[%s65 + $0x418] sm:$0xff]
          %330 = vst [vmem:[%s66 + $0x418] sm:$0xff] %v329
          %v331 = vld [vmem:[%s65 + $0x420] sm:$0xff]
          %332 = vst [vmem:[%s66 + $0x420] sm:$0xff] %v331
          %v333 = vld [vmem:[%s65 + $0x428] sm:$0xff]
          %334 = vst [vmem:[%s66 + $0x428] sm:$0xff] %v333
          %v335 = vld [vmem:[%s65 + $0x430] sm:$0xff]
          %336 = vst [vmem:[%s66 + $0x430] sm:$0xff] %v335
          %v337 = vld [vmem:[%s65 + $0x438] sm:$0xff]
          %338 = vst [vmem:[%s66 + $0x438] sm:$0xff] %v337
          %v339 = vld [vmem:[%s65 + $0x440] sm:$0xff]
          %340 = vst [vmem:[%s66 + $0x440] sm:$0xff] %v339
          %v341 = vld [vmem:[%s65 + $0x448] sm:$0xff]
          %342 = vst [vmem:[%s66 + $0x448] sm:$0xff] %v341
          %v343 = vld [vmem:[%s65 + $0x450] sm:$0xff]
          %344 = vst [vmem:[%s66 + $0x450] sm:$0xff] %v343
          %v345 = vld [vmem:[%s65 + $0x458] sm:$0xff]
          %346 = vst [vmem:[%s66 + $0x458] sm:$0xff] %v345
          %v347 = vld [vmem:[%s65 + $0x460] sm:$0xff]
          %348 = vst [vmem:[%s66 + $0x460] sm:$0xff] %v347
          %v349 = vld [vmem:[%s65 + $0x468] sm:$0xff]
          %350 = vst [vmem:[%s66 + $0x468] sm:$0xff] %v349
          %v351 = vld [vmem:[%s65 + $0x470] sm:$0xff]
          %352 = vst [vmem:[%s66 + $0x470] sm:$0xff] %v351
          %v353 = vld [vmem:[%s65 + $0x478] sm:$0xff]
          %354 = vst [vmem:[%s66 + $0x478] sm:$0xff] %v353
          %v355 = vld [vmem:[%s65 + $0x480] sm:$0xff]
          %356 = vst [vmem:[%s66 + $0x480] sm:$0xff] %v355
          %v357 = vld [vmem:[%s65 + $0x488] sm:$0xff]
          %358 = vst [vmem:[%s66 + $0x488] sm:$0xff] %v357
          %v359 = vld [vmem:[%s65 + $0x490] sm:$0xff]
          %360 = vst [vmem:[%s66 + $0x490] sm:$0xff] %v359
          %v361 = vld [vmem:[%s65 + $0x498] sm:$0xff]
          %362 = vst [vmem:[%s66 + $0x498] sm:$0xff] %v361
          %v363 = vld [vmem:[%s65 + $0x4a0] sm:$0xff]
          %364 = vst [vmem:[%s66 + $0x4a0] sm:$0xff] %v363
          %v365 = vld [vmem:[%s65 + $0x4a8] sm:$0xff]
          %366 = vst [vmem:[%s66 + $0x4a8] sm:$0xff] %v365
          %v367 = vld [vmem:[%s65 + $0x4b0] sm:$0xff]
          %368 = vst [vmem:[%s66 + $0x4b0] sm:$0xff] %v367
          %v369 = vld [vmem:[%s65 + $0x4b8] sm:$0xff]
          %370 = vst [vmem:[%s66 + $0x4b8] sm:$0xff] %v369
          %v371 = vld [vmem:[%s65 + $0x4c0] sm:$0xff]
          %372 = vst [vmem:[%s66 + $0x4c0] sm:$0xff] %v371
          %v373 = vld [vmem:[%s65 + $0x4c8] sm:$0xff]
          %374 = vst [vmem:[%s66 + $0x4c8] sm:$0xff] %v373
          %v375 = vld [vmem:[%s65 + $0x4d0] sm:$0xff]
          %376 = vst [vmem:[%s66 + $0x4d0] sm:$0xff] %v375
          %v377 = vld [vmem:[%s65 + $0x4d8] sm:$0xff]
          %378 = vst [vmem:[%s66 + $0x4d8] sm:$0xff] %v377
          %v379 = vld [vmem:[%s65 + $0x4e0] sm:$0xff]
          %380 = vst [vmem:[%s66 + $0x4e0] sm:$0xff] %v379
          %v381 = vld [vmem:[%s65 + $0x4e8] sm:$0xff]
          %382 = vst [vmem:[%s66 + $0x4e8] sm:$0xff] %v381
          %v383 = vld [vmem:[%s65 + $0x4f0] sm:$0xff]
          %384 = vst [vmem:[%s66 + $0x4f0] sm:$0xff] %v383
          %v385 = vld [vmem:[%s65 + $0x4f8] sm:$0xff]
          %386 = vst [vmem:[%s66 + $0x4f8] sm:$0xff] %v385
          %v387 = vld [vmem:[%s65 + $0x500] sm:$0xff]
          %388 = vst [vmem:[%s66 + $0x500] sm:$0xff] %v387
          %v389 = vld [vmem:[%s65 + $0x508] sm:$0xff]
          %390 = vst [vmem:[%s66 + $0x508] sm:$0xff] %v389
          %v391 = vld [vmem:[%s65 + $0x510] sm:$0xff]
          %392 = vst [vmem:[%s66 + $0x510] sm:$0xff] %v391
          %v393 = vld [vmem:[%s65 + $0x518] sm:$0xff]
          %394 = vst [vmem:[%s66 + $0x518] sm:$0xff] %v393
          %v395 = vld [vmem:[%s65 + $0x520] sm:$0xff]
          %396 = vst [vmem:[%s66 + $0x520] sm:$0xff] %v395
          %v397 = vld [vmem:[%s65 + $0x528] sm:$0xff]
          %398 = vst [vmem:[%s66 + $0x528] sm:$0xff] %v397
          %v399 = vld [vmem:[%s65 + $0x530] sm:$0xff]
          %400 = vst [vmem:[%s66 + $0x530] sm:$0xff] %v399
          %v401 = vld [vmem:[%s65 + $0x538] sm:$0xff]
          %402 = vst [vmem:[%s66 + $0x538] sm:$0xff] %v401
          %v403 = vld [vmem:[%s65 + $0x540] sm:$0xff]
          %404 = vst [vmem:[%s66 + $0x540] sm:$0xff] %v403
          %v405 = vld [vmem:[%s65 + $0x548] sm:$0xff]
          %406 = vst [vmem:[%s66 + $0x548] sm:$0xff] %v405
          %v407 = vld [vmem:[%s65 + $0x550] sm:$0xff]
          %408 = vst [vmem:[%s66 + $0x550] sm:$0xff] %v407
          %v409 = vld [vmem:[%s65 + $0x558] sm:$0xff]
          %410 = vst [vmem:[%s66 + $0x558] sm:$0xff] %v409
          %v411 = vld [vmem:[%s65 + $0x560] sm:$0xff]
          %412 = vst [vmem:[%s66 + $0x560] sm:$0xff] %v411
          %v413 = vld [vmem:[%s65 + $0x568] sm:$0xff]
          %414 = vst [vmem:[%s66 + $0x568] sm:$0xff] %v413
          %v415 = vld [vmem:[%s65 + $0x570] sm:$0xff]
          %416 = vst [vmem:[%s66 + $0x570] sm:$0xff] %v415
          %v417 = vld [vmem:[%s65 + $0x578] sm:$0xff]
          %418 = vst [vmem:[%s66 + $0x578] sm:$0xff] %v417
          %v419 = vld [vmem:[%s65 + $0x580] sm:$0xff]
          %420 = vst [vmem:[%s66 + $0x580] sm:$0xff] %v419
          %v421 = vld [vmem:[%s65 + $0x588] sm:$0xff]
          %422 = vst [vmem:[%s66 + $0x588] sm:$0xff] %v421
          %v423 = vld [vmem:[%s65 + $0x590] sm:$0xff]
          %424 = vst [vmem:[%s66 + $0x590] sm:$0xff] %v423
          %v425 = vld [vmem:[%s65 + $0x598] sm:$0xff]
          %426 = vst [vmem:[%s66 + $0x598] sm:$0xff] %v425
          %v427 = vld [vmem:[%s65 + $0x5a0] sm:$0xff]
          %428 = vst [vmem:[%s66 + $0x5a0] sm:$0xff] %v427
          %v429 = vld [vmem:[%s65 + $0x5a8] sm:$0xff]
          %430 = vst [vmem:[%s66 + $0x5a8] sm:$0xff] %v429
          %v431 = vld [vmem:[%s65 + $0x5b0] sm:$0xff]
          %432 = vst [vmem:[%s66 + $0x5b0] sm:$0xff] %v431
          %v433 = vld [vmem:[%s65 + $0x5b8] sm:$0xff]
          %434 = vst [vmem:[%s66 + $0x5b8] sm:$0xff] %v433
          %v435 = vld [vmem:[%s65 + $0x5c0] sm:$0xff]
          %436 = vst [vmem:[%s66 + $0x5c0] sm:$0xff] %v435
          %v437 = vld [vmem:[%s65 + $0x5c8] sm:$0xff]
          %438 = vst [vmem:[%s66 + $0x5c8] sm:$0xff] %v437
          %v439 = vld [vmem:[%s65 + $0x5d0] sm:$0xff]
          %440 = vst [vmem:[%s66 + $0x5d0] sm:$0xff] %v439
          %v441 = vld [vmem:[%s65 + $0x5d8] sm:$0xff]
          %442 = vst [vmem:[%s66 + $0x5d8] sm:$0xff] %v441
          %v443 = vld [vmem:[%s65 + $0x5e0] sm:$0xff]
          %444 = vst [vmem:[%s66 + $0x5e0] sm:$0xff] %v443
          %v445 = vld [vmem:[%s65 + $0x5e8] sm:$0xff]
          %446 = vst [vmem:[%s66 + $0x5e8] sm:$0xff] %v445
          %v447 = vld [vmem:[%s65 + $0x5f0] sm:$0xff]
          %448 = vst [vmem:[%s66 + $0x5f0] sm:$0xff] %v447
          %v449 = vld [vmem:[%s65 + $0x5f8] sm:$0xff]
          %450 = vst [vmem:[%s66 + $0x5f8] sm:$0xff] %v449
          %v451 = vld [vmem:[%s65 + $0x600] sm:$0xff]
          %452 = vst [vmem:[%s66 + $0x600] sm:$0xff] %v451
          %v453 = vld [vmem:[%s65 + $0x608] sm:$0xff]
          %454 = vst [vmem:[%s66 + $0x608] sm:$0xff] %v453
          %v455 = vld [vmem:[%s65 + $0x610] sm:$0xff]
          %456 = vst [vmem:[%s66 + $0x610] sm:$0xff] %v455
          %v457 = vld [vmem:[%s65 + $0x618] sm:$0xff]
          %458 = vst [vmem:[%s66 + $0x618] sm:$0xff] %v457
          %v459 = vld [vmem:[%s65 + $0x620] sm:$0xff]
          %460 = vst [vmem:[%s66 + $0x620] sm:$0xff] %v459
          %v461 = vld [vmem:[%s65 + $0x628] sm:$0xff]
          %462 = vst [vmem:[%s66 + $0x628] sm:$0xff] %v461
          %v463 = vld [vmem:[%s65 + $0x630] sm:$0xff]
          %464 = vst [vmem:[%s66 + $0x630] sm:$0xff] %v463
          %v465 = vld [vmem:[%s65 + $0x638] sm:$0xff]
          %466 = vst [vmem:[%s66 + $0x638] sm:$0xff] %v465
          %v467 = vld [vmem:[%s65 + $0x640] sm:$0xff]
          %468 = vst [vmem:[%s66 + $0x640] sm:$0xff] %v467
          %v469 = vld [vmem:[%s65 + $0x648] sm:$0xff]
          %470 = vst [vmem:[%s66 + $0x648] sm:$0xff] %v469
          %v471 = vld [vmem:[%s65 + $0x650] sm:$0xff]
          %472 = vst [vmem:[%s66 + $0x650] sm:$0xff] %v471
          %v473 = vld [vmem:[%s65 + $0x658] sm:$0xff]
          %474 = vst [vmem:[%s66 + $0x658] sm:$0xff] %v473
          %v475 = vld [vmem:[%s65 + $0x660] sm:$0xff]
          %476 = vst [vmem:[%s66 + $0x660] sm:$0xff] %v475
          %v477 = vld [vmem:[%s65 + $0x668] sm:$0xff]
          %478 = vst [vmem:[%s66 + $0x668] sm:$0xff] %v477
          %v479 = vld [vmem:[%s65 + $0x670] sm:$0xff]
          %480 = vst [vmem:[%s66 + $0x670] sm:$0xff] %v479
          %v481 = vld [vmem:[%s65 + $0x678] sm:$0xff]
          %482 = vst [vmem:[%s66 + $0x678] sm:$0xff] %v481
          %v483 = vld [vmem:[%s65 + $0x680] sm:$0xff]
          %484 = vst [vmem:[%s66 + $0x680] sm:$0xff] %v483
          %v485 = vld [vmem:[%s65 + $0x688] sm:$0xff]
          %486 = vst [vmem:[%s66 + $0x688] sm:$0xff] %v485
          %v487 = vld [vmem:[%s65 + $0x690] sm:$0xff]
          %488 = vst [vmem:[%s66 + $0x690] sm:$0xff] %v487
          %v489 = vld [vmem:[%s65 + $0x698] sm:$0xff]
          %490 = vst [vmem:[%s66 + $0x698] sm:$0xff] %v489
          %v491 = vld [vmem:[%s65 + $0x6a0] sm:$0xff]
          %492 = vst [vmem:[%s66 + $0x6a0] sm:$0xff] %v491
          %v493 = vld [vmem:[%s65 + $0x6a8] sm:$0xff]
          %494 = vst [vmem:[%s66 + $0x6a8] sm:$0xff] %v493
          %v495 = vld [vmem:[%s65 + $0x6b0] sm:$0xff]
          %496 = vst [vmem:[%s66 + $0x6b0] sm:$0xff] %v495
          %v497 = vld [vmem:[%s65 + $0x6b8] sm:$0xff]
          %498 = vst [vmem:[%s66 + $0x6b8] sm:$0xff] %v497
          %v499 = vld [vmem:[%s65 + $0x6c0] sm:$0xff]
          %500 = vst [vmem:[%s66 + $0x6c0] sm:$0xff] %v499
          %v501 = vld [vmem:[%s65 + $0x6c8] sm:$0xff]
          %502 = vst [vmem:[%s66 + $0x6c8] sm:$0xff] %v501
          %v503 = vld [vmem:[%s65 + $0x6d0] sm:$0xff]
          %504 = vst [vmem:[%s66 + $0x6d0] sm:$0xff] %v503
          %v505 = vld [vmem:[%s65 + $0x6d8] sm:$0xff]
          %506 = vst [vmem:[%s66 + $0x6d8] sm:$0xff] %v505
          %v507 = vld [vmem:[%s65 + $0x6e0] sm:$0xff]
          %508 = vst [vmem:[%s66 + $0x6e0] sm:$0xff] %v507
          %v509 = vld [vmem:[%s65 + $0x6e8] sm:$0xff]
          %510 = vst [vmem:[%s66 + $0x6e8] sm:$0xff] %v509
          %v511 = vld [vmem:[%s65 + $0x6f0] sm:$0xff]
          %512 = vst [vmem:[%s66 + $0x6f0] sm:$0xff] %v511
          %v513 = vld [vmem:[%s65 + $0x6f8] sm:$0xff]
          %514 = vst [vmem:[%s66 + $0x6f8] sm:$0xff] %v513
          %v515 = vld [vmem:[%s65 + $0x700] sm:$0xff]
          %516 = vst [vmem:[%s66 + $0x700] sm:$0xff] %v515
          %v517 = vld [vmem:[%s65 + $0x708] sm:$0xff]
          %518 = vst [vmem:[%s66 + $0x708] sm:$0xff] %v517
          %v519 = vld [vmem:[%s65 + $0x710] sm:$0xff]
          %520 = vst [vmem:[%s66 + $0x710] sm:$0xff] %v519
          %v521 = vld [vmem:[%s65 + $0x718] sm:$0xff]
          %522 = vst [vmem:[%s66 + $0x718] sm:$0xff] %v521
          %v523 = vld [vmem:[%s65 + $0x720] sm:$0xff]
          %524 = vst [vmem:[%s66 + $0x720] sm:$0xff] %v523
          %v525 = vld [vmem:[%s65 + $0x728] sm:$0xff]
          %526 = vst [vmem:[%s66 + $0x728] sm:$0xff] %v525
          %v527 = vld [vmem:[%s65 + $0x730] sm:$0xff]
          %528 = vst [vmem:[%s66 + $0x730] sm:$0xff] %v527
          %v529 = vld [vmem:[%s65 + $0x738] sm:$0xff]
          %530 = vst [vmem:[%s66 + $0x738] sm:$0xff] %v529
          %v531 = vld [vmem:[%s65 + $0x740] sm:$0xff]
          %532 = vst [vmem:[%s66 + $0x740] sm:$0xff] %v531
          %v533 = vld [vmem:[%s65 + $0x748] sm:$0xff]
          %534 = vst [vmem:[%s66 + $0x748] sm:$0xff] %v533
          %v535 = vld [vmem:[%s65 + $0x750] sm:$0xff]
          %536 = vst [vmem:[%s66 + $0x750] sm:$0xff] %v535
          %v537 = vld [vmem:[%s65 + $0x758] sm:$0xff]
          %538 = vst [vmem:[%s66 + $0x758] sm:$0xff] %v537
          %v539 = vld [vmem:[%s65 + $0x760] sm:$0xff]
          %540 = vst [vmem:[%s66 + $0x760] sm:$0xff] %v539
          %v541 = vld [vmem:[%s65 + $0x768] sm:$0xff]
          %542 = vst [vmem:[%s66 + $0x768] sm:$0xff] %v541
          %v543 = vld [vmem:[%s65 + $0x770] sm:$0xff]
          %544 = vst [vmem:[%s66 + $0x770] sm:$0xff] %v543
          %v545 = vld [vmem:[%s65 + $0x778] sm:$0xff]
          %546 = vst [vmem:[%s66 + $0x778] sm:$0xff] %v545
          %v547 = vld [vmem:[%s65 + $0x780] sm:$0xff]
          %548 = vst [vmem:[%s66 + $0x780] sm:$0xff] %v547
          %v549 = vld [vmem:[%s65 + $0x788] sm:$0xff]
          %550 = vst [vmem:[%s66 + $0x788] sm:$0xff] %v549
          %v551 = vld [vmem:[%s65 + $0x790] sm:$0xff]
          %552 = vst [vmem:[%s66 + $0x790] sm:$0xff] %v551
          %v553 = vld [vmem:[%s65 + $0x798] sm:$0xff]
          %554 = vst [vmem:[%s66 + $0x798] sm:$0xff] %v553
          %v555 = vld [vmem:[%s65 + $0x7a0] sm:$0xff]
          %556 = vst [vmem:[%s66 + $0x7a0] sm:$0xff] %v555
          %v557 = vld [vmem:[%s65 + $0x7a8] sm:$0xff]
          %558 = vst [vmem:[%s66 + $0x7a8] sm:$0xff] %v557
          %v559 = vld [vmem:[%s65 + $0x7b0] sm:$0xff]
          %560 = vst [vmem:[%s66 + $0x7b0] sm:$0xff] %v559
          %v561 = vld [vmem:[%s65 + $0x7b8] sm:$0xff]
          %562 = vst [vmem:[%s66 + $0x7b8] sm:$0xff] %v561
          %v563 = vld [vmem:[%s65 + $0x7c0] sm:$0xff]
          %564 = vst [vmem:[%s66 + $0x7c0] sm:$0xff] %v563
          %v565 = vld [vmem:[%s65 + $0x7c8] sm:$0xff]
          %566 = vst [vmem:[%s66 + $0x7c8] sm:$0xff] %v565
          %v567 = vld [vmem:[%s65 + $0x7d0] sm:$0xff]
          %568 = vst [vmem:[%s66 + $0x7d0] sm:$0xff] %v567
          %v569 = vld [vmem:[%s65 + $0x7d8] sm:$0xff]
          %570 = vst [vmem:[%s66 + $0x7d8] sm:$0xff] %v569
          %v571 = vld [vmem:[%s65 + $0x7e0] sm:$0xff]
          %572 = vst [vmem:[%s66 + $0x7e0] sm:$0xff] %v571
          %v573 = vld [vmem:[%s65 + $0x7e8] sm:$0xff]
          %574 = vst [vmem:[%s66 + $0x7e8] sm:$0xff] %v573
          %v575 = vld [vmem:[%s65 + $0x7f0] sm:$0xff]
          %576 = vst [vmem:[%s66 + $0x7f0] sm:$0xff] %v575
          %v577 = vld [vmem:[%s65 + $0x7f8] sm:$0xff]
          %578 = vst [vmem:[%s66 + $0x7f8] sm:$0xff] %v577
        $region57: #{forward.1} parent=51 // loop_footer
          %s64 = sadd.s32 1, %s60
        $region58: #{forward.1} parent=51 // loop_footer_branch
          %59 = sbr.rel target = $region54
        $region59: #{forward.1} parent=51 // loop_exit
          _
      $region52: #{forward.1} parent=36 // pred_fallthru
        _
      %p579 = pneg %p55
      // Predicated region
      $region60: #{forward.1} parent=36 // pred_check
        _
      $region61: #{forward.1} parent=36 // pred_check_branch
        %581 = sbr.rel (%p55) target = $region63
      $region62: #{forward.1} parent=36 // pred_region
        %s582 = sand.u32 2048, 7
      $region63: #{forward.1} parent=36 // pred_fallthru
        _
    $region37: #{forward.1} parent=1 // pred_fallthru
      _
    // Predicated region
    $region38: #{forward.1} parent=1 // pred_check
      %p39 = pneg %p35
    $region39: #{forward.1} parent=1 // pred_check_branch
      %41 = sbr.rel (%p39) target = $region41
    $region40: #{forward.1} parent=1 // pred_region
      %s42 = sshll.u32 1, 2048
      %s43 = ssub.s32 %s42, 1
      loop: start=0, step=1, limit=1
      $region42: #{forward.1} parent=40 // loop_pre_header
        _
      $region43: #{forward.1} parent=40 // loop_header
        %s45 = sphi 0, %s49
        %p46 = scmp.ge.s32.totalorder %s45, 1
        %s50 = sphi %s6, %s6
        %s51 = sphi [#allocation3], [#allocation3]
      $region44: #{forward.1} parent=40 // loop_header_branch
        %48 = sbr.rel (%p46) target = $region48
      $region45: #{forward.1} parent=40 // loop_body
        %v52 = vld [vmem:[%s50] sm:%s43]
        %53 = vst [vmem:[%s51] sm:%s43] %v52
      $region46: #{forward.1} parent=40 // loop_footer
        %s49 = sadd.s32 1, %s45
      $region47: #{forward.1} parent=40 // loop_footer_branch
        %44 = sbr.rel target = $region43
      $region48: #{forward.1} parent=40 // loop_exit
        _
    $region41: #{forward.1} parent=1 // pred_fallthru
      _
    // Predicated region
    $region64: #{forward.1} parent=1 // pred_check
      _
    $region65: #{forward.1} parent=1 // pred_check_branch
      %585 = sbr.rel (0) target = $region67
    $region66: #{forward.1} parent=1 // pred_region
      %586 = vsyncadd [#allocation6], 32768
    $region67: #{forward.1} parent=1 // pred_fallthru
      _
    %s587 = scalar_lea.sflag [#allocation6], 1
    %p589 = scmp.lt.u32.totalorder 512, 8
    %p590 = pneg %p589
    // Predicated region
    $region68: #{forward.1} parent=1 // pred_check
      _
    $region69: #{forward.1} parent=1 // pred_check_branch
      %592 = sbr.rel (%p589) target = $region71
    $region70: #{forward.1} parent=1 // pred_region
      %s608 = sand.u32 512, 7
      %p609 = scmp.eq.s32.totalorder %s608, 0
      // Predicated region
      $region83: #{forward.1} parent=70 // pred_check
        %p610 = pneg %p609
      $region84: #{forward.1} parent=70 // pred_check_branch
        %612 = sbr.rel (%p610) target = $region86
      $region85: #{forward.1} parent=70 // pred_region
        loop: start=0, step=1, limit=1
        $region87: #{forward.1} parent=85 // loop_pre_header
          _
        $region88: #{forward.1} parent=85 // loop_header
          %s614 = sphi 0, %s618
          %p615 = scmp.ge.s32.totalorder %s614, 1
          %s619 = sphi %s7, %s7
          %s620 = sphi [#allocation4], [#allocation4]
        $region89: #{forward.1} parent=85 // loop_header_branch
          %617 = sbr.rel (%p615) target = $region93
        $region90: #{forward.1} parent=85 // loop_body
          %v621 = vld [vmem:[%s619] sm:$0xff]
          %622 = vst [vmem:[%s620] sm:$0xff] %v621
          %v623 = vld [vmem:[%s619 + $0x8] sm:$0xff]
          %624 = vst [vmem:[%s620 + $0x8] sm:$0xff] %v623
          %v625 = vld [vmem:[%s619 + $0x10] sm:$0xff]
          %626 = vst [vmem:[%s620 + $0x10] sm:$0xff] %v625
          %v627 = vld [vmem:[%s619 + $0x18] sm:$0xff]
          %628 = vst [vmem:[%s620 + $0x18] sm:$0xff] %v627
          %v629 = vld [vmem:[%s619 + $0x20] sm:$0xff]
          %630 = vst [vmem:[%s620 + $0x20] sm:$0xff] %v629
          %v631 = vld [vmem:[%s619 + $0x28] sm:$0xff]
          %632 = vst [vmem:[%s620 + $0x28] sm:$0xff] %v631
          %v633 = vld [vmem:[%s619 + $0x30] sm:$0xff]
          %634 = vst [vmem:[%s620 + $0x30] sm:$0xff] %v633
          %v635 = vld [vmem:[%s619 + $0x38] sm:$0xff]
          %636 = vst [vmem:[%s620 + $0x38] sm:$0xff] %v635
          %v637 = vld [vmem:[%s619 + $0x40] sm:$0xff]
          %638 = vst [vmem:[%s620 + $0x40] sm:$0xff] %v637
          %v639 = vld [vmem:[%s619 + $0x48] sm:$0xff]
          %640 = vst [vmem:[%s620 + $0x48] sm:$0xff] %v639
          %v641 = vld [vmem:[%s619 + $0x50] sm:$0xff]
          %642 = vst [vmem:[%s620 + $0x50] sm:$0xff] %v641
          %v643 = vld [vmem:[%s619 + $0x58] sm:$0xff]
          %644 = vst [vmem:[%s620 + $0x58] sm:$0xff] %v643
          %v645 = vld [vmem:[%s619 + $0x60] sm:$0xff]
          %646 = vst [vmem:[%s620 + $0x60] sm:$0xff] %v645
          %v647 = vld [vmem:[%s619 + $0x68] sm:$0xff]
          %648 = vst [vmem:[%s620 + $0x68] sm:$0xff] %v647
          %v649 = vld [vmem:[%s619 + $0x70] sm:$0xff]
          %650 = vst [vmem:[%s620 + $0x70] sm:$0xff] %v649
          %v651 = vld [vmem:[%s619 + $0x78] sm:$0xff]
          %652 = vst [vmem:[%s620 + $0x78] sm:$0xff] %v651
          %v653 = vld [vmem:[%s619 + $0x80] sm:$0xff]
          %654 = vst [vmem:[%s620 + $0x80] sm:$0xff] %v653
          %v655 = vld [vmem:[%s619 + $0x88] sm:$0xff]
          %656 = vst [vmem:[%s620 + $0x88] sm:$0xff] %v655
          %v657 = vld [vmem:[%s619 + $0x90] sm:$0xff]
          %658 = vst [vmem:[%s620 + $0x90] sm:$0xff] %v657
          %v659 = vld [vmem:[%s619 + $0x98] sm:$0xff]
          %660 = vst [vmem:[%s620 + $0x98] sm:$0xff] %v659
          %v661 = vld [vmem:[%s619 + $0xa0] sm:$0xff]
          %662 = vst [vmem:[%s620 + $0xa0] sm:$0xff] %v661
          %v663 = vld [vmem:[%s619 + $0xa8] sm:$0xff]
          %664 = vst [vmem:[%s620 + $0xa8] sm:$0xff] %v663
          %v665 = vld [vmem:[%s619 + $0xb0] sm:$0xff]
          %666 = vst [vmem:[%s620 + $0xb0] sm:$0xff] %v665
          %v667 = vld [vmem:[%s619 + $0xb8] sm:$0xff]
          %668 = vst [vmem:[%s620 + $0xb8] sm:$0xff] %v667
          %v669 = vld [vmem:[%s619 + $0xc0] sm:$0xff]
          %670 = vst [vmem:[%s620 + $0xc0] sm:$0xff] %v669
          %v671 = vld [vmem:[%s619 + $0xc8] sm:$0xff]
          %672 = vst [vmem:[%s620 + $0xc8] sm:$0xff] %v671
          %v673 = vld [vmem:[%s619 + $0xd0] sm:$0xff]
          %674 = vst [vmem:[%s620 + $0xd0] sm:$0xff] %v673
          %v675 = vld [vmem:[%s619 + $0xd8] sm:$0xff]
          %676 = vst [vmem:[%s620 + $0xd8] sm:$0xff] %v675
          %v677 = vld [vmem:[%s619 + $0xe0] sm:$0xff]
          %678 = vst [vmem:[%s620 + $0xe0] sm:$0xff] %v677
          %v679 = vld [vmem:[%s619 + $0xe8] sm:$0xff]
          %680 = vst [vmem:[%s620 + $0xe8] sm:$0xff] %v679
          %v681 = vld [vmem:[%s619 + $0xf0] sm:$0xff]
          %682 = vst [vmem:[%s620 + $0xf0] sm:$0xff] %v681
          %v683 = vld [vmem:[%s619 + $0xf8] sm:$0xff]
          %684 = vst [vmem:[%s620 + $0xf8] sm:$0xff] %v683
          %v685 = vld [vmem:[%s619 + $0x100] sm:$0xff]
          %686 = vst [vmem:[%s620 + $0x100] sm:$0xff] %v685
          %v687 = vld [vmem:[%s619 + $0x108] sm:$0xff]
          %688 = vst [vmem:[%s620 + $0x108] sm:$0xff] %v687
          %v689 = vld [vmem:[%s619 + $0x110] sm:$0xff]
          %690 = vst [vmem:[%s620 + $0x110] sm:$0xff] %v689
          %v691 = vld [vmem:[%s619 + $0x118] sm:$0xff]
          %692 = vst [vmem:[%s620 + $0x118] sm:$0xff] %v691
          %v693 = vld [vmem:[%s619 + $0x120] sm:$0xff]
          %694 = vst [vmem:[%s620 + $0x120] sm:$0xff] %v693
          %v695 = vld [vmem:[%s619 + $0x128] sm:$0xff]
          %696 = vst [vmem:[%s620 + $0x128] sm:$0xff] %v695
          %v697 = vld [vmem:[%s619 + $0x130] sm:$0xff]
          %698 = vst [vmem:[%s620 + $0x130] sm:$0xff] %v697
          %v699 = vld [vmem:[%s619 + $0x138] sm:$0xff]
          %700 = vst [vmem:[%s620 + $0x138] sm:$0xff] %v699
          %v701 = vld [vmem:[%s619 + $0x140] sm:$0xff]
          %702 = vst [vmem:[%s620 + $0x140] sm:$0xff] %v701
          %v703 = vld [vmem:[%s619 + $0x148] sm:$0xff]
          %704 = vst [vmem:[%s620 + $0x148] sm:$0xff] %v703
          %v705 = vld [vmem:[%s619 + $0x150] sm:$0xff]
          %706 = vst [vmem:[%s620 + $0x150] sm:$0xff] %v705
          %v707 = vld [vmem:[%s619 + $0x158] sm:$0xff]
          %708 = vst [vmem:[%s620 + $0x158] sm:$0xff] %v707
          %v709 = vld [vmem:[%s619 + $0x160] sm:$0xff]
          %710 = vst [vmem:[%s620 + $0x160] sm:$0xff] %v709
          %v711 = vld [vmem:[%s619 + $0x168] sm:$0xff]
          %712 = vst [vmem:[%s620 + $0x168] sm:$0xff] %v711
          %v713 = vld [vmem:[%s619 + $0x170] sm:$0xff]
          %714 = vst [vmem:[%s620 + $0x170] sm:$0xff] %v713
          %v715 = vld [vmem:[%s619 + $0x178] sm:$0xff]
          %716 = vst [vmem:[%s620 + $0x178] sm:$0xff] %v715
          %v717 = vld [vmem:[%s619 + $0x180] sm:$0xff]
          %718 = vst [vmem:[%s620 + $0x180] sm:$0xff] %v717
          %v719 = vld [vmem:[%s619 + $0x188] sm:$0xff]
          %720 = vst [vmem:[%s620 + $0x188] sm:$0xff] %v719
          %v721 = vld [vmem:[%s619 + $0x190] sm:$0xff]
          %722 = vst [vmem:[%s620 + $0x190] sm:$0xff] %v721
          %v723 = vld [vmem:[%s619 + $0x198] sm:$0xff]
          %724 = vst [vmem:[%s620 + $0x198] sm:$0xff] %v723
          %v725 = vld [vmem:[%s619 + $0x1a0] sm:$0xff]
          %726 = vst [vmem:[%s620 + $0x1a0] sm:$0xff] %v725
          %v727 = vld [vmem:[%s619 + $0x1a8] sm:$0xff]
          %728 = vst [vmem:[%s620 + $0x1a8] sm:$0xff] %v727
          %v729 = vld [vmem:[%s619 + $0x1b0] sm:$0xff]
          %730 = vst [vmem:[%s620 + $0x1b0] sm:$0xff] %v729
          %v731 = vld [vmem:[%s619 + $0x1b8] sm:$0xff]
          %732 = vst [vmem:[%s620 + $0x1b8] sm:$0xff] %v731
          %v733 = vld [vmem:[%s619 + $0x1c0] sm:$0xff]
          %734 = vst [vmem:[%s620 + $0x1c0] sm:$0xff] %v733
          %v735 = vld [vmem:[%s619 + $0x1c8] sm:$0xff]
          %736 = vst [vmem:[%s620 + $0x1c8] sm:$0xff] %v735
          %v737 = vld [vmem:[%s619 + $0x1d0] sm:$0xff]
          %738 = vst [vmem:[%s620 + $0x1d0] sm:$0xff] %v737
          %v739 = vld [vmem:[%s619 + $0x1d8] sm:$0xff]
          %740 = vst [vmem:[%s620 + $0x1d8] sm:$0xff] %v739
          %v741 = vld [vmem:[%s619 + $0x1e0] sm:$0xff]
          %742 = vst [vmem:[%s620 + $0x1e0] sm:$0xff] %v741
          %v743 = vld [vmem:[%s619 + $0x1e8] sm:$0xff]
          %744 = vst [vmem:[%s620 + $0x1e8] sm:$0xff] %v743
          %v745 = vld [vmem:[%s619 + $0x1f0] sm:$0xff]
          %746 = vst [vmem:[%s620 + $0x1f0] sm:$0xff] %v745
          %v747 = vld [vmem:[%s619 + $0x1f8] sm:$0xff]
          %748 = vst [vmem:[%s620 + $0x1f8] sm:$0xff] %v747
        $region91: #{forward.1} parent=85 // loop_footer
          %s618 = sadd.s32 1, %s614
        $region92: #{forward.1} parent=85 // loop_footer_branch
          %613 = sbr.rel target = $region88
        $region93: #{forward.1} parent=85 // loop_exit
          _
      $region86: #{forward.1} parent=70 // pred_fallthru
        _
      %p749 = pneg %p609
      // Predicated region
      $region94: #{forward.1} parent=70 // pred_check
        _
      $region95: #{forward.1} parent=70 // pred_check_branch
        %751 = sbr.rel (%p609) target = $region97
      $region96: #{forward.1} parent=70 // pred_region
        %s752 = sand.u32 512, 7
      $region97: #{forward.1} parent=70 // pred_fallthru
        _
    $region71: #{forward.1} parent=1 // pred_fallthru
      _
    // Predicated region
    $region72: #{forward.1} parent=1 // pred_check
      %p593 = pneg %p589
    $region73: #{forward.1} parent=1 // pred_check_branch
      %595 = sbr.rel (%p593) target = $region75
    $region74: #{forward.1} parent=1 // pred_region
      %s596 = sshll.u32 1, 512
      %s597 = ssub.s32 %s596, 1
      loop: start=0, step=1, limit=1
      $region76: #{forward.1} parent=74 // loop_pre_header
        _
      $region77: #{forward.1} parent=74 // loop_header
        %s599 = sphi 0, %s603
        %p600 = scmp.ge.s32.totalorder %s599, 1
        %s604 = sphi %s7, %s7
        %s605 = sphi [#allocation4], [#allocation4]
      $region78: #{forward.1} parent=74 // loop_header_branch
        %602 = sbr.rel (%p600) target = $region82
      $region79: #{forward.1} parent=74 // loop_body
        %v606 = vld [vmem:[%s604] sm:%s597]
        %607 = vst [vmem:[%s605] sm:%s597] %v606
      $region80: #{forward.1} parent=74 // loop_footer
        %s603 = sadd.s32 1, %s599
      $region81: #{forward.1} parent=74 // loop_footer_branch
        %598 = sbr.rel target = $region77
      $region82: #{forward.1} parent=74 // loop_exit
        _
    $region75: #{forward.1} parent=1 // pred_fallthru
      _
    // Predicated region
    $region98: #{forward.1} parent=1 // pred_check
      _
    $region99: #{forward.1} parent=1 // pred_check_branch
      %755 = sbr.rel (0) target = $region101
    $region100: #{forward.1} parent=1 // pred_region
      %756 = vsyncadd %s587, 8192
    $region101: #{forward.1} parent=1 // pred_fallthru
      _
    %s757 = scalar_lea.sflag [#allocation6], 2
    %p759 = scmp.lt.u32.totalorder 128, 8
    %p760 = pneg %p759
    // Predicated region
    $region102: #{forward.1} parent=1 // pred_check
      _
    $region103: #{forward.1} parent=1 // pred_check_branch
      %762 = sbr.rel (%p759) target = $region105
    $region104: #{forward.1} parent=1 // pred_region
      %s778 = sand.u32 128, 7
      %p779 = scmp.eq.s32.totalorder %s778, 0
      // Predicated region
      $region117: #{forward.1} parent=104 // pred_check
        %p780 = pneg %p779
      $region118: #{forward.1} parent=104 // pred_check_branch
        %782 = sbr.rel (%p780) target = $region120
      $region119: #{forward.1} parent=104 // pred_region
        loop: start=0, step=1, limit=1
        $region121: #{forward.1} parent=119 // loop_pre_header
          _
        $region122: #{forward.1} parent=119 // loop_header
          %s784 = sphi 0, %s788
          %p785 = scmp.ge.s32.totalorder %s784, 1
          %s789 = sphi %s8, %s8
          %s790 = sphi [#allocation5], [#allocation5]
        $region123: #{forward.1} parent=119 // loop_header_branch
          %787 = sbr.rel (%p785) target = $region127
        $region124: #{forward.1} parent=119 // loop_body
          %v791 = vld [vmem:[%s789] sm:$0xff]
          %792 = vst [vmem:[%s790] sm:$0xff] %v791
          %v793 = vld [vmem:[%s789 + $0x8] sm:$0xff]
          %794 = vst [vmem:[%s790 + $0x8] sm:$0xff] %v793
          %v795 = vld [vmem:[%s789 + $0x10] sm:$0xff]
          %796 = vst [vmem:[%s790 + $0x10] sm:$0xff] %v795
          %v797 = vld [vmem:[%s789 + $0x18] sm:$0xff]
          %798 = vst [vmem:[%s790 + $0x18] sm:$0xff] %v797
          %v799 = vld [vmem:[%s789 + $0x20] sm:$0xff]
          %800 = vst [vmem:[%s790 + $0x20] sm:$0xff] %v799
          %v801 = vld [vmem:[%s789 + $0x28] sm:$0xff]
          %802 = vst [vmem:[%s790 + $0x28] sm:$0xff] %v801
          %v803 = vld [vmem:[%s789 + $0x30] sm:$0xff]
          %804 = vst [vmem:[%s790 + $0x30] sm:$0xff] %v803
          %v805 = vld [vmem:[%s789 + $0x38] sm:$0xff]
          %806 = vst [vmem:[%s790 + $0x38] sm:$0xff] %v805
          %v807 = vld [vmem:[%s789 + $0x40] sm:$0xff]
          %808 = vst [vmem:[%s790 + $0x40] sm:$0xff] %v807
          %v809 = vld [vmem:[%s789 + $0x48] sm:$0xff]
          %810 = vst [vmem:[%s790 + $0x48] sm:$0xff] %v809
          %v811 = vld [vmem:[%s789 + $0x50] sm:$0xff]
          %812 = vst [vmem:[%s790 + $0x50] sm:$0xff] %v811
          %v813 = vld [vmem:[%s789 + $0x58] sm:$0xff]
          %814 = vst [vmem:[%s790 + $0x58] sm:$0xff] %v813
          %v815 = vld [vmem:[%s789 + $0x60] sm:$0xff]
          %816 = vst [vmem:[%s790 + $0x60] sm:$0xff] %v815
          %v817 = vld [vmem:[%s789 + $0x68] sm:$0xff]
          %818 = vst [vmem:[%s790 + $0x68] sm:$0xff] %v817
          %v819 = vld [vmem:[%s789 + $0x70] sm:$0xff]
          %820 = vst [vmem:[%s790 + $0x70] sm:$0xff] %v819
          %v821 = vld [vmem:[%s789 + $0x78] sm:$0xff]
          %822 = vst [vmem:[%s790 + $0x78] sm:$0xff] %v821
        $region125: #{forward.1} parent=119 // loop_footer
          %s788 = sadd.s32 1, %s784
        $region126: #{forward.1} parent=119 // loop_footer_branch
          %783 = sbr.rel target = $region122
        $region127: #{forward.1} parent=119 // loop_exit
          _
      $region120: #{forward.1} parent=104 // pred_fallthru
        _
      %p823 = pneg %p779
      // Predicated region
      $region128: #{forward.1} parent=104 // pred_check
        _
      $region129: #{forward.1} parent=104 // pred_check_branch
        %825 = sbr.rel (%p779) target = $region131
      $region130: #{forward.1} parent=104 // pred_region
        %s826 = sand.u32 128, 7
      $region131: #{forward.1} parent=104 // pred_fallthru
        _
    $region105: #{forward.1} parent=1 // pred_fallthru
      _
    // Predicated region
    $region106: #{forward.1} parent=1 // pred_check
      %p763 = pneg %p759
    $region107: #{forward.1} parent=1 // pred_check_branch
      %765 = sbr.rel (%p763) target = $region109
    $region108: #{forward.1} parent=1 // pred_region
      %s766 = sshll.u32 1, 128
      %s767 = ssub.s32 %s766, 1
      loop: start=0, step=1, limit=1
      $region110: #{forward.1} parent=108 // loop_pre_header
        _
      $region111: #{forward.1} parent=108 // loop_header
        %s769 = sphi 0, %s773
        %p770 = scmp.ge.s32.totalorder %s769, 1
        %s774 = sphi %s8, %s8
        %s775 = sphi [#allocation5], [#allocation5]
      $region112: #{forward.1} parent=108 // loop_header_branch
        %772 = sbr.rel (%p770) target = $region116
      $region113: #{forward.1} parent=108 // loop_body
        %v776 = vld [vmem:[%s774] sm:%s767]
        %777 = vst [vmem:[%s775] sm:%s767] %v776
      $region114: #{forward.1} parent=108 // loop_footer
        %s773 = sadd.s32 1, %s769
      $region115: #{forward.1} parent=108 // loop_footer_branch
        %768 = sbr.rel target = $region111
      $region116: #{forward.1} parent=108 // loop_exit
        _
    $region109: #{forward.1} parent=1 // pred_fallthru
      _
    // Predicated region
    $region132: #{forward.1} parent=1 // pred_check
      _
    $region133: #{forward.1} parent=1 // pred_check_branch
      %829 = sbr.rel (0) target = $region135
    $region134: #{forward.1} parent=1 // pred_region
      %830 = vsyncadd %s757, 2048
    $region135: #{forward.1} parent=1 // pred_fallthru
      _
    %v831 = vld [vmem:[%s0] sm:$0xff]
    %v832 = vld [vmem:[%s0 + $0x8] sm:$0xff]
    %v833 = vld [vmem:[%s0 + $0x10] sm:$0xf]
    %v834 = vld [vmem:[%s0 + $0x14] sm:$0xff]
    %v835 = vld [vmem:[%s0 + $0x1c] sm:$0xff]
    %v836 = vld [vmem:[%s0 + $0x24] sm:$0xf]
    %v837 = vld [vmem:[%s0 + $0x28] sm:$0xff]
    %v838 = vld [vmem:[%s0 + $0x30] sm:$0xff]
    %v839 = vld [vmem:[%s0 + $0x38] sm:$0xf]
    %v840 = vld [vmem:[%s0 + $0x3c] sm:$0xff]
    %v841 = vld [vmem:[%s0 + $0x44] sm:$0xff]
    %v842 = vld [vmem:[%s0 + $0x4c] sm:$0xf]
    %v843 = vld [vmem:[%s0 + $0x50] sm:$0xff]
    %v844 = vld [vmem:[%s0 + $0x58] sm:$0xff]
    %v845 = vld [vmem:[%s0 + $0x60] sm:$0xf]
    %v846 = vld [vmem:[%s0 + $0x64] sm:$0xff]
    %v847 = vld [vmem:[%s0 + $0x6c] sm:$0xff]
    %v848 = vld [vmem:[%s0 + $0x74] sm:$0xf]
    %v849 = vld [vmem:[%s0 + $0x78] sm:$0xff]
    %v850 = vld [vmem:[%s0 + $0x80] sm:$0xff]
    %v851 = vld [vmem:[%s0 + $0x88] sm:$0xf]
    %v852 = vld [vmem:[%s0 + $0x8c] sm:$0xff]
    %v853 = vld [vmem:[%s0 + $0x94] sm:$0xff]
    %v854 = vld [vmem:[%s0 + $0x9c] sm:$0xf]
    %v855 = vld [vmem:[%s0 + $0xa0] sm:$0xff]
    %v856 = vld [vmem:[%s0 + $0xa8] sm:$0xff]
    %v857 = vld [vmem:[%s0 + $0xb0] sm:$0xf]
    %v858 = vld [vmem:[%s0 + $0xb4] sm:$0xff]
    %v859 = vld [vmem:[%s0 + $0xbc] sm:$0xff]
    %v860 = vld [vmem:[%s0 + $0xc4] sm:$0xf]
    %v861 = vld [vmem:[%s0 + $0xc8] sm:$0xff]
    %v862 = vld [vmem:[%s0 + $0xd0] sm:$0xff]
    %v863 = vld [vmem:[%s0 + $0xd8] sm:$0xf]
    %v864 = vld [vmem:[%s0 + $0xdc] sm:$0xff]
    %v865 = vld [vmem:[%s0 + $0xe4] sm:$0xff]
    %v866 = vld [vmem:[%s0 + $0xec] sm:$0xf]
    %v867 = vld [vmem:[%s1] sm:$0xf]
    %v868 = vld [vmem:[%s1 + $0x4] sm:$0xf]
    %v869 = vld [vmem:[%s1 + $0x8] sm:$0xf]
    %v870 = vld [vmem:[%s1 + $0xc] sm:$0xf]
    %v871 = vld [vmem:[%s1 + $0x10] sm:$0xf]
    %v872 = vld [vmem:[%s1 + $0x14] sm:$0xf]
    %v873 = vld [vmem:[%s1 + $0x18] sm:$0xf]
    %v874 = vld [vmem:[%s1 + $0x1c] sm:$0xf]
    %v875 = vld [vmem:[%s1 + $0x20] sm:$0xf]
    %v876 = vld [vmem:[%s1 + $0x24] sm:$0xf]
    %v877 = vld [vmem:[%s1 + $0x28] sm:$0xf]
    %v878 = vld [vmem:[%s1 + $0x2c] sm:$0xf]
    %v879 = vld [vmem:[%s1 + $0x30] sm:$0xf]
    %v880 = vld [vmem:[%s1 + $0x34] sm:$0xf]
    %v881 = vld [vmem:[%s1 + $0x38] sm:$0xf]
    %v882 = vld [vmem:[%s1 + $0x3c] sm:$0xf]
    %v883 = vld [vmem:[%s1 + $0x40] sm:$0xf]
    %v884 = vld [vmem:[%s1 + $0x44] sm:$0xf]
    %v885 = vld [vmem:[%s1 + $0x48] sm:$0xf]
    %v886 = vld [vmem:[%s1 + $0x4c] sm:$0xf]
    %v887 = vld [vmem:[%s1 + $0x50] sm:$0xf]
    %v888 = vld [vmem:[%s1 + $0x54] sm:$0xf]
    %v889 = vld [vmem:[%s1 + $0x58] sm:$0xf]
    %v890 = vld [vmem:[%s1 + $0x5c] sm:$0xf]
    %v891 = vld [vmem:[%s1 + $0x60] sm:$0xf]
    %v892 = vld [vmem:[%s1 + $0x64] sm:$0xf]
    %v893 = vld [vmem:[%s1 + $0x68] sm:$0xf]
    %v894 = vld [vmem:[%s1 + $0x6c] sm:$0xf]
    %v895 = vld [vmem:[%s1 + $0x70] sm:$0xf]
    %v896 = vld [vmem:[%s1 + $0x74] sm:$0xf]
    %v897 = vld [vmem:[%s1 + $0x78] sm:$0xf]
    %v898 = vld [vmem:[%s1 + $0x7c] sm:$0xf]
    %v899 = vld [vmem:[%s1 + $0x80] sm:$0xf]
    %v900 = vld [vmem:[%s1 + $0x84] sm:$0xf]
    %v901 = vld [vmem:[%s1 + $0x88] sm:$0xf]
    %v902 = vld [vmem:[%s1 + $0x8c] sm:$0xf]
    %v903 = vld [vmem:[%s1 + $0x90] sm:$0xf]
    %v904 = vld [vmem:[%s1 + $0x94] sm:$0xf]
    %v905 = vld [vmem:[%s1 + $0x98] sm:$0xf]
    %v906 = vld [vmem:[%s1 + $0x9c] sm:$0xf]
    %v907 = vld [vmem:[%s1 + $0xa0] sm:$0xf]
    %v908 = vld [vmem:[%s1 + $0xa4] sm:$0xf]
    %v909 = vld [vmem:[%s1 + $0xa8] sm:$0xf]
    %v910 = vld [vmem:[%s1 + $0xac] sm:$0xf]
    %v911 = vld [vmem:[%s1 + $0xb0] sm:$0xf]
    %v912 = vld [vmem:[%s1 + $0xb4] sm:$0xf]
    %v913 = vld [vmem:[%s1 + $0xb8] sm:$0xf]
    %v914 = vld [vmem:[%s1 + $0xbc] sm:$0xf]
    %v915 = vld [vmem:[%s1 + $0xc0] sm:$0xf]
    %v916 = vld [vmem:[%s1 + $0xc4] sm:$0xf]
    %v917 = vld [vmem:[%s1 + $0xc8] sm:$0xf]
    %v918 = vld [vmem:[%s1 + $0xcc] sm:$0xf]
    %v919 = vld [vmem:[%s1 + $0xd0] sm:$0xf]
    %v920 = vld [vmem:[%s1 + $0xd4] sm:$0xf]
    %v921 = vld [vmem:[%s1 + $0xd8] sm:$0xf]
    %v922 = vld [vmem:[%s1 + $0xdc] sm:$0xf]
    %v923 = vld [vmem:[%s1 + $0xe0] sm:$0xf]
    %v924 = vld [vmem:[%s1 + $0xe4] sm:$0xf]
    %v925 = vld [vmem:[%s1 + $0xe8] sm:$0xf]
    %v926 = vld [vmem:[%s1 + $0xec] sm:$0xf]
    %v927 = vld [vmem:[%s1 + $0xf0] sm:$0xf]
    %v928 = vld [vmem:[%s1 + $0xf4] sm:$0xf]
    %v929 = vld [vmem:[%s1 + $0xf8] sm:$0xf]
    %v930 = vld [vmem:[%s1 + $0xfc] sm:$0xf]
    %v931 = vld [vmem:[%s1 + $0x100] sm:$0xf]
    %v932 = vld [vmem:[%s1 + $0x104] sm:$0xf]
    %v933 = vld [vmem:[%s1 + $0x108] sm:$0xf]
    %v934 = vld [vmem:[%s1 + $0x10c] sm:$0xf]
    %v935 = vld [vmem:[%s1 + $0x110] sm:$0xf]
    %v936 = vld [vmem:[%s1 + $0x114] sm:$0xf]
    %v937 = vld [vmem:[%s1 + $0x118] sm:$0xf]
    %v938 = vld [vmem:[%s1 + $0x11c] sm:$0xf]
    %v939 = vld [vmem:[%s1 + $0x120] sm:$0xf]
    %v940 = vld [vmem:[%s1 + $0x124] sm:$0xf]
    %v941 = vld [vmem:[%s1 + $0x128] sm:$0xf]
    %v942 = vld [vmem:[%s1 + $0x12c] sm:$0xf]
    %v943 = vld [vmem:[%s1 + $0x130] sm:$0xf]
    %v944 = vld [vmem:[%s1 + $0x134] sm:$0xf]
    %v945 = vld [vmem:[%s1 + $0x138] sm:$0xf]
    %v946 = vld [vmem:[%s1 + $0x13c] sm:$0xf]
    %v947 = vld [vmem:[%s2] sm:$0x1]
    %v949 = vlaneseq
    %v950 = vshrl.u32 %v949, 7
    %v951 = vsub.s32 0, %v950
    %v952 = vrot.slane %v947, %v951
    %v990 = vunpack.c.l.b16 %v831
    %v991 = vunpack.c.h.b16 %v831
    %v992 = vunpack.c.l.b16 %v832
    %v993 = vunpack.c.h.b16 %v832
    %v994 = vunpack.c.l.b16 %v833
    %v995 = vunpack.c.l.b16 %v834
    %v996 = vunpack.c.h.b16 %v834
    %v997 = vunpack.c.l.b16 %v835
    %v998 = vunpack.c.h.b16 %v835
    %v999 = vunpack.c.l.b16 %v836
    %v1000 = vunpack.c.l.b16 %v837
    %v1001 = vunpack.c.h.b16 %v837
    %v1002 = vunpack.c.l.b16 %v838
    %v1003 = vunpack.c.h.b16 %v838
    %v1004 = vunpack.c.l.b16 %v839
    %v1005 = vunpack.c.l.b16 %v840
    %v1006 = vunpack.c.h.b16 %v840
    %v1007 = vunpack.c.l.b16 %v841
    %v1008 = vunpack.c.h.b16 %v841
    %v1009 = vunpack.c.l.b16 %v842
    %v1010 = vunpack.c.l.b16 %v843
    %v1011 = vunpack.c.h.b16 %v843
    %v1012 = vunpack.c.l.b16 %v844
    %v1013 = vunpack.c.h.b16 %v844
    %v1014 = vunpack.c.l.b16 %v845
    %v1015 = vunpack.c.l.b16 %v846
    %v1016 = vunpack.c.h.b16 %v846
    %v1017 = vunpack.c.l.b16 %v847
    %v1018 = vunpack.c.h.b16 %v847
    %v1019 = vunpack.c.l.b16 %v848
    %v1020 = vunpack.c.l.b16 %v849
    %v1021 = vunpack.c.h.b16 %v849
    %v1022 = vunpack.c.l.b16 %v850
    %v1023 = vunpack.c.h.b16 %v850
    %v1024 = vunpack.c.l.b16 %v851
    %v1025 = vunpack.c.l.b16 %v852
    %v1026 = vunpack.c.h.b16 %v852
    %v1027 = vunpack.c.l.b16 %v853
    %v1028 = vunpack.c.h.b16 %v853
    %v1029 = vunpack.c.l.b16 %v854
    %v1030 = vunpack.c.l.b16 %v855
    %v1031 = vunpack.c.h.b16 %v855
    %v1032 = vunpack.c.l.b16 %v856
    %v1033 = vunpack.c.h.b16 %v856
    %v1034 = vunpack.c.l.b16 %v857
    %v1035 = vunpack.c.l.b16 %v858
    %v1036 = vunpack.c.h.b16 %v858
    %v1037 = vunpack.c.l.b16 %v859
    %v1038 = vunpack.c.h.b16 %v859
    %v1039 = vunpack.c.l.b16 %v860
    %v1040 = vunpack.c.l.b16 %v861
    %v1041 = vunpack.c.h.b16 %v861
    %v1042 = vunpack.c.l.b16 %v862
    %v1043 = vunpack.c.h.b16 %v862
    %v1044 = vunpack.c.l.b16 %v863
    %v1045 = vunpack.c.l.b16 %v864
    %v1046 = vunpack.c.h.b16 %v864
    %v1047 = vunpack.c.l.b16 %v865
    %v1048 = vunpack.c.h.b16 %v865
    %v1049 = vunpack.c.l.b16 %v866
    %v1050 = vpack.c.b16 %v995, %v990
    %v1051 = vpack.c.b16 %v996, %v991
    %v1052 = vpack.c.b16 %v997, %v992
    %v1053 = vpack.c.b16 %v998, %v993
    %v1054 = vpack.c.b16 %v999, %v994
    %v1055 = vpack.c.b16 %v1005, %v1000
    %v1056 = vpack.c.b16 %v1006, %v1001
    %v1057 = vpack.c.b16 %v1007, %v1002
    %v1058 = vpack.c.b16 %v1008, %v1003
    %v1059 = vpack.c.b16 %v1009, %v1004
    %v1060 = vpack.c.b16 %v1015, %v1010
    %v1061 = vpack.c.b16 %v1016, %v1011
    %v1062 = vpack.c.b16 %v1017, %v1012
    %v1063 = vpack.c.b16 %v1018, %v1013
    %v1064 = vpack.c.b16 %v1019, %v1014
    %v1065 = vpack.c.b16 %v1025, %v1020
    %v1066 = vpack.c.b16 %v1026, %v1021
    %v1067 = vpack.c.b16 %v1027, %v1022
    %v1068 = vpack.c.b16 %v1028, %v1023
    %v1069 = vpack.c.b16 %v1029, %v1024
    %v1070 = vpack.c.b16 %v1035, %v1030
    %v1071 = vpack.c.b16 %v1036, %v1031
    %v1072 = vpack.c.b16 %v1037, %v1032
    %v1073 = vpack.c.b16 %v1038, %v1033
    %v1074 = vpack.c.b16 %v1039, %v1034
    %v1075 = vpack.c.b16 %v1045, %v1040
    %v1076 = vpack.c.b16 %v1046, %v1041
    %v1077 = vpack.c.b16 %v1047, %v1042
    %v1078 = vpack.c.b16 %v1048, %v1043
    %v1079 = vpack.c.b16 %v1049, %v1044
    %v1190 = vunpack.c.l.b16 %v867
    %v1191 = vunpack.c.l.b16 %v868
    %v1192 = vunpack.c.l.b16 %v869
    %v1193 = vunpack.c.l.b16 %v870
    %v1194 = vunpack.c.l.b16 %v871
    %v1195 = vunpack.c.l.b16 %v872
    %v1196 = vunpack.c.l.b16 %v873
    %v1197 = vunpack.c.l.b16 %v874
    %v1198 = vunpack.c.l.b16 %v875
    %v1199 = vunpack.c.l.b16 %v876
    %v1200 = vunpack.c.l.b16 %v877
    %v1201 = vunpack.c.l.b16 %v878
    %v1202 = vunpack.c.l.b16 %v879
    %v1203 = vunpack.c.l.b16 %v880
    %v1204 = vunpack.c.l.b16 %v881
    %v1205 = vunpack.c.l.b16 %v882
    %v1206 = vunpack.c.l.b16 %v883
    %v1207 = vunpack.c.l.b16 %v884
    %v1208 = vunpack.c.l.b16 %v885
    %v1209 = vunpack.c.l.b16 %v886
    %v1210 = vunpack.c.l.b16 %v887
    %v1211 = vunpack.c.l.b16 %v888
    %v1212 = vunpack.c.l.b16 %v889
    %v1213 = vunpack.c.l.b16 %v890
    %v1214 = vunpack.c.l.b16 %v891
    %v1215 = vunpack.c.l.b16 %v892
    %v1216 = vunpack.c.l.b16 %v893
    %v1217 = vunpack.c.l.b16 %v894
    %v1218 = vunpack.c.l.b16 %v895
    %v1219 = vunpack.c.l.b16 %v896
    %v1220 = vunpack.c.l.b16 %v897
    %v1221 = vunpack.c.l.b16 %v898
    %v1222 = vunpack.c.l.b16 %v899
    %v1223 = vunpack.c.l.b16 %v900
    %v1224 = vunpack.c.l.b16 %v901
    %v1225 = vunpack.c.l.b16 %v902
    %v1226 = vunpack.c.l.b16 %v903
    %v1227 = vunpack.c.l.b16 %v904
    %v1228 = vunpack.c.l.b16 %v905
    %v1229 = vunpack.c.l.b16 %v906
    %v1230 = vunpack.c.l.b16 %v907
    %v1231 = vunpack.c.l.b16 %v908
    %v1232 = vunpack.c.l.b16 %v909
    %v1233 = vunpack.c.l.b16 %v910
    %v1234 = vunpack.c.l.b16 %v911
    %v1235 = vunpack.c.l.b16 %v912
    %v1236 = vunpack.c.l.b16 %v913
    %v1237 = vunpack.c.l.b16 %v914
    %v1238 = vunpack.c.l.b16 %v915
    %v1239 = vunpack.c.l.b16 %v916
    %v1240 = vunpack.c.l.b16 %v917
    %v1241 = vunpack.c.l.b16 %v918
    %v1242 = vunpack.c.l.b16 %v919
    %v1243 = vunpack.c.l.b16 %v920
    %v1244 = vunpack.c.l.b16 %v921
    %v1245 = vunpack.c.l.b16 %v922
    %v1246 = vunpack.c.l.b16 %v923
    %v1247 = vunpack.c.l.b16 %v924
    %v1248 = vunpack.c.l.b16 %v925
    %v1249 = vunpack.c.l.b16 %v926
    %v1250 = vunpack.c.l.b16 %v927
    %v1251 = vunpack.c.l.b16 %v928
    %v1252 = vunpack.c.l.b16 %v929
    %v1253 = vunpack.c.l.b16 %v930
    %v1254 = vunpack.c.l.b16 %v931
    %v1255 = vunpack.c.l.b16 %v932
    %v1256 = vunpack.c.l.b16 %v933
    %v1257 = vunpack.c.l.b16 %v934
    %v1258 = vunpack.c.l.b16 %v935
    %v1259 = vunpack.c.l.b16 %v936
    %v1260 = vunpack.c.l.b16 %v937
    %v1261 = vunpack.c.l.b16 %v938
    %v1262 = vunpack.c.l.b16 %v939
    %v1263 = vunpack.c.l.b16 %v940
    %v1264 = vunpack.c.l.b16 %v941
    %v1265 = vunpack.c.l.b16 %v942
    %v1266 = vunpack.c.l.b16 %v943
    %v1267 = vunpack.c.l.b16 %v944
    %v1268 = vunpack.c.l.b16 %v945
    %v1269 = vunpack.c.l.b16 %v946
    %v1270 = vpack.c.b16 %v1191, %v1190
    %v1271 = vpack.c.b16 %v1193, %v1192
    %v1272 = vpack.c.b16 %v1195, %v1194
    %v1273 = vpack.c.b16 %v1197, %v1196
    %v1274 = vpack.c.b16 %v1199, %v1198
    %v1275 = vpack.c.b16 %v1201, %v1200
    %v1276 = vpack.c.b16 %v1203, %v1202
    %v1277 = vpack.c.b16 %v1205, %v1204
    %v1278 = vpack.c.b16 %v1207, %v1206
    %v1279 = vpack.c.b16 %v1209, %v1208
    %v1280 = vpack.c.b16 %v1211, %v1210
    %v1281 = vpack.c.b16 %v1213, %v1212
    %v1282 = vpack.c.b16 %v1215, %v1214
    %v1283 = vpack.c.b16 %v1217, %v1216
    %v1284 = vpack.c.b16 %v1219, %v1218
    %v1285 = vpack.c.b16 %v1221, %v1220
    %v1286 = vpack.c.b16 %v1223, %v1222
    %v1287 = vpack.c.b16 %v1225, %v1224
    %v1288 = vpack.c.b16 %v1227, %v1226
    %v1289 = vpack.c.b16 %v1229, %v1228
    %v1290 = vpack.c.b16 %v1231, %v1230
    %v1291 = vpack.c.b16 %v1233, %v1232
    %v1292 = vpack.c.b16 %v1235, %v1234
    %v1293 = vpack.c.b16 %v1237, %v1236
    %v1294 = vpack.c.b16 %v1239, %v1238
    %v1295 = vpack.c.b16 %v1241, %v1240
    %v1296 = vpack.c.b16 %v1243, %v1242
    %v1297 = vpack.c.b16 %v1245, %v1244
    %v1298 = vpack.c.b16 %v1247, %v1246
    %v1299 = vpack.c.b16 %v1249, %v1248
    %v1300 = vpack.c.b16 %v1251, %v1250
    %v1301 = vpack.c.b16 %v1253, %v1252
    %v1302 = vpack.c.b16 %v1255, %v1254
    %v1303 = vpack.c.b16 %v1257, %v1256
    %v1304 = vpack.c.b16 %v1259, %v1258
    %v1305 = vpack.c.b16 %v1261, %v1260
    %v1306 = vpack.c.b16 %v1263, %v1262
    %v1307 = vpack.c.b16 %v1265, %v1264
    %v1308 = vpack.c.b16 %v1267, %v1266
    %v1309 = vpack.c.b16 %v1269, %v1268
    %1350 = vmatprep.subr.bf16.mxu0 0
    %1351 = vmatpush1.bf16.msra.mxu0 %v1277
    %1352 = vmatprep.subr.bf16.mxu0 0
    %1353 = vmatpush1.bf16.msra.mxu0 %v1276
    %1354 = vmatprep.subr.bf16.mxu0 0
    %1355 = vmatpush1.bf16.msra.mxu0 %v1275
    %1356 = vmatprep.subr.bf16.mxu0 0
    %1357 = vmatpush1.bf16.msra.mxu0 %v1274
    %1358 = vmatprep.subr.bf16.mxu0 0
    %1359 = vmatpush1.bf16.msra.mxu0 %v1273
    %1360 = vmatprep.subr.bf16.mxu0 0
    %1361 = vmatpush1.bf16.msra.mxu0 %v1272
    %1362 = vmatprep.subr.bf16.mxu0 0
    %1363 = vmatpush1.bf16.msra.mxu0 %v1271
    %1364 = vmatprep.subr.bf16.mxu0 0
    %1365 = vmatpush1.bf16.msra.mxu0 %v1270
    %1366 = vmatprep.subr.bf16.mxu0 0
    %1367 = vmatpush2.bf16.msra.mxu0 %v1285
    %1368 = vmatprep.subr.bf16.mxu0 0
    %1369 = vmatpush2.bf16.msra.mxu0 %v1284
    %1370 = vmatprep.subr.bf16.mxu0 0
    %1371 = vmatpush2.bf16.msra.mxu0 %v1283
    %1372 = vmatprep.subr.bf16.mxu0 0
    %1373 = vmatpush2.bf16.msra.mxu0 %v1282
    %1374 = vmatprep.subr.bf16.mxu0 0
    %1375 = vmatpush2.bf16.msra.mxu0 %v1281
    %1376 = vmatprep.subr.bf16.mxu0 0
    %1377 = vmatpush2.bf16.msra.mxu0 %v1280
    %1378 = vmatprep.subr.bf16.mxu0 0
    %1379 = vmatpush2.bf16.msra.mxu0 %v1279
    %1380 = vmatprep.subr.bf16.mxu0 0
    %1381 = vmatpush2.bf16.msra.mxu0 %v1278
    %1382 = vmatprep.mubr.bf16.mxu0 %v1051
    %1383 = vmatmul.mubr.bf16.gmra.mxu0 %v1050
    %v1384 = vpop.f32.mrf.mxu0
    %v1385 = vadd.f32 %v952, %v1384
    %v1386 = vpop.f32.mrf.mxu0
    %v1387 = vpop.f32.mrf.mxu0
    %v1388 = vadd.f32 %v952, %v1387
    %v1389 = vpop.f32.mrf.mxu0
    %1390 = vmatprep.mubr.bf16.mxu0 %v1056
    %1391 = vmatmul.mubr.bf16.gmra.mxu0 %v1055
    %v1392 = vpop.f32.mrf.mxu0
    %v1393 = vadd.f32 %v952, %v1392
    %v1394 = vpop.f32.mrf.mxu0
    %v1395 = vpop.f32.mrf.mxu0
    %v1396 = vadd.f32 %v952, %v1395
    %v1397 = vpop.f32.mrf.mxu0
    %1398 = vmatprep.mubr.bf16.mxu0 %v1061
    %1399 = vmatmul.mubr.bf16.gmra.mxu0 %v1060
    %v1400 = vpop.f32.mrf.mxu0
    %v1401 = vadd.f32 %v952, %v1400
    %v1402 = vpop.f32.mrf.mxu0
    %v1403 = vpop.f32.mrf.mxu0
    %v1404 = vadd.f32 %v952, %v1403
    %v1405 = vpop.f32.mrf.mxu0
    %1406 = vmatprep.mubr.bf16.mxu0 %v1066
    %1407 = vmatmul.mubr.bf16.gmra.mxu0 %v1065
    %v1408 = vpop.f32.mrf.mxu0
    %v1409 = vadd.f32 %v952, %v1408
    %v1410 = vpop.f32.mrf.mxu0
    %v1411 = vpop.f32.mrf.mxu0
    %v1412 = vadd.f32 %v952, %v1411
    %v1413 = vpop.f32.mrf.mxu0
    %1414 = vmatprep.mubr.bf16.mxu0 %v1071
    %1415 = vmatmul.mubr.bf16.gmra.mxu0 %v1070
    %v1416 = vpop.f32.mrf.mxu0
    %v1417 = vadd.f32 %v952, %v1416
    %v1418 = vpop.f32.mrf.mxu0
    %v1419 = vpop.f32.mrf.mxu0
    %v1420 = vadd.f32 %v952, %v1419
    %v1421 = vpop.f32.mrf.mxu0
    %1422 = vmatprep.mubr.bf16.mxu0 %v1076
    %1423 = vmatmul.mubr.bf16.gmra.mxu0 %v1075
    %v1424 = vpop.f32.mrf.mxu0
    %v1425 = vadd.f32 %v952, %v1424
    %v1426 = vpop.f32.mrf.mxu0
    %v1427 = vpop.f32.mrf.mxu0
    %v1428 = vadd.f32 %v952, %v1427
    %v1429 = vpop.f32.mrf.mxu0
    %1430 = vdwg.mxu0
    %1431 = vmatprep.subr.bf16.mxu0 0
    %1432 = vmatpush1.bf16.msra.mxu0 %v1293
    %1433 = vmatprep.subr.bf16.mxu0 0
    %1434 = vmatpush1.bf16.msra.mxu0 %v1292
    %1435 = vmatprep.subr.bf16.mxu0 0
    %1436 = vmatpush1.bf16.msra.mxu0 %v1291
    %1437 = vmatprep.subr.bf16.mxu0 0
    %1438 = vmatpush1.bf16.msra.mxu0 %v1290
    %1439 = vmatprep.subr.bf16.mxu0 0
    %1440 = vmatpush1.bf16.msra.mxu0 %v1289
    %1441 = vmatprep.subr.bf16.mxu0 0
    %1442 = vmatpush1.bf16.msra.mxu0 %v1288
    %1443 = vmatprep.subr.bf16.mxu0 0
    %1444 = vmatpush1.bf16.msra.mxu0 %v1287
    %1445 = vmatprep.subr.bf16.mxu0 0
    %1446 = vmatpush1.bf16.msra.mxu0 %v1286
    %1447 = vmatprep.subr.bf16.mxu0 0
    %1448 = vmatpush2.bf16.msra.mxu0 %v1301
    %1449 = vmatprep.subr.bf16.mxu0 0
    %1450 = vmatpush2.bf16.msra.mxu0 %v1300
    %1451 = vmatprep.subr.bf16.mxu0 0
    %1452 = vmatpush2.bf16.msra.mxu0 %v1299
    %1453 = vmatprep.subr.bf16.mxu0 0
    %1454 = vmatpush2.bf16.msra.mxu0 %v1298
    %1455 = vmatprep.subr.bf16.mxu0 0
    %1456 = vmatpush2.bf16.msra.mxu0 %v1297
    %1457 = vmatprep.subr.bf16.mxu0 0
    %1458 = vmatpush2.bf16.msra.mxu0 %v1296
    %1459 = vmatprep.subr.bf16.mxu0 0
    %1460 = vmatpush2.bf16.msra.mxu0 %v1295
    %1461 = vmatprep.subr.bf16.mxu0 0
    %1462 = vmatpush2.bf16.msra.mxu0 %v1294
    %1463 = vmatprep.mubr.bf16.mxu0 %v1053
    %1464 = vmatmul.mubr.bf16.gmra.mxu0 %v1052
    %v1465 = vpop.f32.mrf.mxu0
    %v1466 = vadd.f32 %v1385, %v1465
    %v1467 = vpop.f32.mrf.mxu0
    %v1468 = vpop.f32.mrf.mxu0
    %v1469 = vadd.f32 %v1388, %v1468
    %v1470 = vpop.f32.mrf.mxu0
    %1471 = vmatprep.mubr.bf16.mxu0 %v1058
    %1472 = vmatmul.mubr.bf16.gmra.mxu0 %v1057
    %v1473 = vpop.f32.mrf.mxu0
    %v1474 = vadd.f32 %v1393, %v1473
    %v1475 = vpop.f32.mrf.mxu0
    %v1476 = vpop.f32.mrf.mxu0
    %v1477 = vadd.f32 %v1396, %v1476
    %v1478 = vpop.f32.mrf.mxu0
    %1479 = vmatprep.mubr.bf16.mxu0 %v1063
    %1480 = vmatmul.mubr.bf16.gmra.mxu0 %v1062
    %v1481 = vpop.f32.mrf.mxu0
    %v1482 = vadd.f32 %v1401, %v1481
    %v1483 = vpop.f32.mrf.mxu0
    %v1484 = vpop.f32.mrf.mxu0
    %v1485 = vadd.f32 %v1404, %v1484
    %v1486 = vpop.f32.mrf.mxu0
    %1487 = vmatprep.mubr.bf16.mxu0 %v1068
    %1488 = vmatmul.mubr.bf16.gmra.mxu0 %v1067
    %v1489 = vpop.f32.mrf.mxu0
    %v1490 = vadd.f32 %v1409, %v1489
    %v1491 = vpop.f32.mrf.mxu0
    %v1492 = vpop.f32.mrf.mxu0
    %v1493 = vadd.f32 %v1412, %v1492
    %v1494 = vpop.f32.mrf.mxu0
    %1495 = vmatprep.mubr.bf16.mxu0 %v1073
    %1496 = vmatmul.mubr.bf16.gmra.mxu0 %v1072
    %v1497 = vpop.f32.mrf.mxu0
    %v1498 = vadd.f32 %v1417, %v1497
    %v1499 = vpop.f32.mrf.mxu0
    %v1500 = vpop.f32.mrf.mxu0
    %v1501 = vadd.f32 %v1420, %v1500
    %v1502 = vpop.f32.mrf.mxu0
    %1503 = vmatprep.mubr.bf16.mxu0 %v1078
    %1504 = vmatmul.mubr.bf16.gmra.mxu0 %v1077
    %v1505 = vpop.f32.mrf.mxu0
    %v1506 = vadd.f32 %v1425, %v1505
    %v1507 = vpop.f32.mrf.mxu0
    %v1508 = vpop.f32.mrf.mxu0
    %v1509 = vadd.f32 %v1428, %v1508
    %v1510 = vpop.f32.mrf.mxu0
    %1511 = vdwg.mxu0
    %1512 = vmatprep.subr.bf16.mxu0 0
    %1513 = vmatpush1.bf16.msra.mxu0 %v1309
    %1514 = vmatprep.subr.bf16.mxu0 0
    %1515 = vmatpush1.bf16.msra.mxu0 %v1308
    %1516 = vmatprep.subr.bf16.mxu0 0
    %1517 = vmatpush1.bf16.msra.mxu0 %v1307
    %1518 = vmatprep.subr.bf16.mxu0 0
    %1519 = vmatpush1.bf16.msra.mxu0 %v1306
    %1520 = vmatprep.subr.bf16.mxu0 0
    %1521 = vmatpush1.bf16.msra.mxu0 %v1305
    %1522 = vmatprep.subr.bf16.mxu0 0
    %1523 = vmatpush1.bf16.msra.mxu0 %v1304
    %1524 = vmatprep.subr.bf16.mxu0 0
    %1525 = vmatpush1.bf16.msra.mxu0 %v1303
    %1526 = vmatprep.subr.bf16.mxu0 0
    %1527 = vmatpush1.bf16.msra.mxu0 %v1302
    %1528 = vmatprep.subr.bf16.mxu0 0
    %1529 = vmatpush2.bf16.msra.mxu0 0
    %1530 = vmatprep.subr.bf16.mxu0 0
    %1531 = vmatpush2.bf16.msra.mxu0 0
    %1532 = vmatprep.subr.bf16.mxu0 0
    %1533 = vmatpush2.bf16.msra.mxu0 0
    %1534 = vmatprep.subr.bf16.mxu0 0
    %1535 = vmatpush2.bf16.msra.mxu0 0
    %1536 = vmatprep.subr.bf16.mxu0 0
    %1537 = vmatpush2.bf16.msra.mxu0 0
    %1538 = vmatprep.subr.bf16.mxu0 0
    %1539 = vmatpush2.bf16.msra.mxu0 0
    %1540 = vmatprep.subr.bf16.mxu0 0
    %1541 = vmatpush2.bf16.msra.mxu0 0
    %1542 = vmatprep.subr.bf16.mxu0 0
    %1543 = vmatpush2.bf16.msra.mxu0 0
    %1544 = vmatprep.mubr.bf16.mxu0 0
    %1545 = vmatmul.mubr.bf16.gmra.mxu0 %v1054
    %v1546 = vpop.f32.mrf.mxu0
    %v1547 = vadd.f32 %v1466, %v1546
    %v1548 = vpop.f32.mrf.mxu0
    %v1549 = vpop.f32.mrf.mxu0
    %v1550 = vadd.f32 %v1469, %v1549
    %v1551 = vpop.f32.mrf.mxu0
    %1552 = vmatprep.mubr.bf16.mxu0 0
    %1553 = vmatmul.mubr.bf16.gmra.mxu0 %v1059
    %v1554 = vpop.f32.mrf.mxu0
    %v1555 = vadd.f32 %v1474, %v1554
    %v1556 = vpop.f32.mrf.mxu0
    %v1557 = vpop.f32.mrf.mxu0
    %v1558 = vadd.f32 %v1477, %v1557
    %v1559 = vpop.f32.mrf.mxu0
    %1560 = vmatprep.mubr.bf16.mxu0 0
    %1561 = vmatmul.mubr.bf16.gmra.mxu0 %v1064
    %v1562 = vpop.f32.mrf.mxu0
    %v1563 = vadd.f32 %v1482, %v1562
    %v1564 = vpop.f32.mrf.mxu0
    %v1565 = vpop.f32.mrf.mxu0
    %v1566 = vadd.f32 %v1485, %v1565
    %v1567 = vpop.f32.mrf.mxu0
    %1568 = vmatprep.mubr.bf16.mxu0 0
    %1569 = vmatmul.mubr.bf16.gmra.mxu0 %v1069
    %v1570 = vpop.f32.mrf.mxu0
    %v1571 = vadd.f32 %v1490, %v1570
    %v1572 = vpop.f32.mrf.mxu0
    %v1573 = vpop.f32.mrf.mxu0
    %v1574 = vadd.f32 %v1493, %v1573
    %v1575 = vpop.f32.mrf.mxu0
    %1576 = vmatprep.mubr.bf16.mxu0 0
    %1577 = vmatmul.mubr.bf16.gmra.mxu0 %v1074
    %v1578 = vpop.f32.mrf.mxu0
    %v1579 = vadd.f32 %v1498, %v1578
    %v1580 = vpop.f32.mrf.mxu0
    %v1581 = vpop.f32.mrf.mxu0
    %v1582 = vadd.f32 %v1501, %v1581
    %v1583 = vpop.f32.mrf.mxu0
    %1584 = vmatprep.mubr.bf16.mxu0 0
    %1585 = vmatmul.mubr.bf16.gmra.mxu0 %v1079
    %v1586 = vpop.f32.mrf.mxu0
    %v1587 = vadd.f32 %v1506, %v1586
    %v1588 = vpop.f32.mrf.mxu0
    %v1589 = vpop.f32.mrf.mxu0
    %v1590 = vadd.f32 %v1509, %v1589
    %v1591 = vpop.f32.mrf.mxu0
    %1592 = vdwg.mxu0
    %vm1593 = vcmp.ge.f32.partialorder %v1547, 0.0
    %vm1594 = vcmp.ge.f32.partialorder %v1550, 0.0
    %vm1595 = vcmp.ge.f32.partialorder %v1555, 0.0
    %vm1596 = vcmp.ge.f32.partialorder %v1558, 0.0
    %vm1597 = vcmp.ge.f32.partialorder %v1563, 0.0
    %vm1598 = vcmp.ge.f32.partialorder %v1566, 0.0
    %vm1599 = vcmp.ge.f32.partialorder %v1571, 0.0
    %vm1600 = vcmp.ge.f32.partialorder %v1574, 0.0
    %vm1601 = vcmp.ge.f32.partialorder %v1579, 0.0
    %vm1602 = vcmp.ge.f32.partialorder %v1582, 0.0
    %vm1603 = vcmp.ge.f32.partialorder %v1587, 0.0
    %vm1604 = vcmp.ge.f32.partialorder %v1590, 0.0
    %v1605 = vmul.f32 %v1547, 0.01
    %v1606 = vmul.f32 %v1550, 0.01
    %v1607 = vmul.f32 %v1555, 0.01
    %v1608 = vmul.f32 %v1558, 0.01
    %v1609 = vmul.f32 %v1563, 0.01
    %v1610 = vmul.f32 %v1566, 0.01
    %v1611 = vmul.f32 %v1571, 0.01
    %v1612 = vmul.f32 %v1574, 0.01
    %v1613 = vmul.f32 %v1579, 0.01
    %v1614 = vmul.f32 %v1582, 0.01
    %v1615 = vmul.f32 %v1587, 0.01
    %v1616 = vmul.f32 %v1590, 0.01
    %v1617 = vsel %vm1593, %v1547, %v1605
    %v1618 = vsel %vm1594, %v1550, %v1606
    %v1619 = vsel %vm1595, %v1555, %v1607
    %v1620 = vsel %vm1596, %v1558, %v1608
    %v1621 = vsel %vm1597, %v1563, %v1609
    %v1622 = vsel %vm1598, %v1566, %v1610
    %v1623 = vsel %vm1599, %v1571, %v1611
    %v1624 = vsel %vm1600, %v1574, %v1612
    %v1625 = vsel %vm1601, %v1579, %v1613
    %v1626 = vsel %vm1602, %v1582, %v1614
    %v1627 = vsel %vm1603, %v1587, %v1615
    %v1628 = vsel %vm1604, %v1590, %v1616
    %v1629 = vmax.f32 %v1617, %v1621
    %v1630 = vmax.f32 %v1618, %v1622
    %v1631 = vmax.f32 %v1619, %v1623
    %v1632 = vmax.f32 %v1620, %v1624
    %v1633 = vmax.f32 %v1629, %v1625
    %v1634 = vmax.f32 %v1630, %v1626
    %v1635 = vmax.f32 %v1631, %v1627
    %v1636 = vmax.f32 %v1632, %v1628
    %v1637 = vpack.c.bf16 %v1634, %v1633
    %v1638 = vpack.c.bf16 %v1636, %v1635
    %v1639 = vld [vmem:[%s3] sm:$0xff]
    %v1640 = vld [vmem:[%s3 + $0x8] sm:$0xff]
    %v1641 = vld [vmem:[%s3 + $0x10] sm:$0xff]
    %v1642 = vld [vmem:[%s3 + $0x18] sm:$0xff]
    %v1643 = vld [vmem:[%s3 + $0x20] sm:$0xff]
    %v1644 = vld [vmem:[%s3 + $0x28] sm:$0xff]
    %v1645 = vld [vmem:[%s3 + $0x30] sm:$0xff]
    %v1646 = vld [vmem:[%s3 + $0x38] sm:$0xff]
    %v1647 = vld [vmem:[%s3 + $0x40] sm:$0xff]
    %v1648 = vld [vmem:[%s3 + $0x48] sm:$0xff]
    %v1649 = vld [vmem:[%s3 + $0x50] sm:$0xff]
    %v1650 = vld [vmem:[%s3 + $0x58] sm:$0xff]
    %v1651 = vld [vmem:[%s3 + $0x60] sm:$0xff]
    %v1652 = vld [vmem:[%s3 + $0x68] sm:$0xff]
    %v1653 = vld [vmem:[%s3 + $0x70] sm:$0xff]
    %v1654 = vld [vmem:[%s3 + $0x78] sm:$0xff]
    %v1655 = vld [vmem:[%s3 + $0x80] sm:$0xff]
    %v1656 = vld [vmem:[%s3 + $0x88] sm:$0xff]
    %v1657 = vld [vmem:[%s3 + $0x90] sm:$0xff]
    %v1658 = vld [vmem:[%s3 + $0x98] sm:$0xff]
    %v1659 = vld [vmem:[%s3 + $0xa0] sm:$0xff]
    %v1660 = vld [vmem:[%s3 + $0xa8] sm:$0xff]
    %v1661 = vld [vmem:[%s3 + $0xb0] sm:$0xff]
    %v1662 = vld [vmem:[%s3 + $0xb8] sm:$0xff]
    %v1663 = vld [vmem:[%s3 + $0xc0] sm:$0xff]
    %v1664 = vld [vmem:[%s3 + $0xc8] sm:$0xff]
    %v1665 = vld [vmem:[%s3 + $0xd0] sm:$0xff]
    %v1666 = vld [vmem:[%s3 + $0xd8] sm:$0xff]
    %v1667 = vld [vmem:[%s3 + $0xe0] sm:$0xff]
    %v1668 = vld [vmem:[%s3 + $0xe8] sm:$0xff]
    %v1669 = vld [vmem:[%s3 + $0xf0] sm:$0xff]
    %v1670 = vld [vmem:[%s3 + $0xf8] sm:$0xff]
    %v1671 = vld [vmem:[%s3 + $0x100] sm:$0xff]
    %v1672 = vld [vmem:[%s3 + $0x108] sm:$0xff]
    %v1673 = vld [vmem:[%s3 + $0x110] sm:$0xff]
    %v1674 = vld [vmem:[%s3 + $0x118] sm:$0xff]
    %v1675 = vld [vmem:[%s3 + $0x120] sm:$0xff]
    %v1676 = vld [vmem:[%s3 + $0x128] sm:$0xff]
    %v1677 = vld [vmem:[%s3 + $0x130] sm:$0xff]
    %v1678 = vld [vmem:[%s3 + $0x138] sm:$0xff]
    %v1679 = vld [vmem:[%s3 + $0x140] sm:$0xff]
    %v1680 = vld [vmem:[%s3 + $0x148] sm:$0xff]
    %v1681 = vld [vmem:[%s3 + $0x150] sm:$0xff]
    %v1682 = vld [vmem:[%s3 + $0x158] sm:$0xff]
    %v1683 = vld [vmem:[%s3 + $0x160] sm:$0xff]
    %v1684 = vld [vmem:[%s3 + $0x168] sm:$0xff]
    %v1685 = vld [vmem:[%s3 + $0x170] sm:$0xff]
    %v1686 = vld [vmem:[%s3 + $0x178] sm:$0xff]
    %v1687 = vld [vmem:[%s3 + $0x180] sm:$0xff]
    %v1688 = vld [vmem:[%s3 + $0x188] sm:$0xff]
    %v1689 = vld [vmem:[%s3 + $0x190] sm:$0xff]
    %v1690 = vld [vmem:[%s3 + $0x198] sm:$0xff]
    %v1691 = vld [vmem:[%s3 + $0x1a0] sm:$0xff]
    %v1692 = vld [vmem:[%s3 + $0x1a8] sm:$0xff]
    %v1693 = vld [vmem:[%s3 + $0x1b0] sm:$0xff]
    %v1694 = vld [vmem:[%s3 + $0x1b8] sm:$0xff]
    %v1695 = vld [vmem:[%s3 + $0x1c0] sm:$0xff]
    %v1696 = vld [vmem:[%s3 + $0x1c8] sm:$0xff]
    %v1697 = vld [vmem:[%s3 + $0x1d0] sm:$0xff]
    %v1698 = vld [vmem:[%s3 + $0x1d8] sm:$0xff]
    %v1699 = vld [vmem:[%s3 + $0x1e0] sm:$0xff]
    %v1700 = vld [vmem:[%s3 + $0x1e8] sm:$0xff]
    %v1701 = vld [vmem:[%s3 + $0x1f0] sm:$0xff]
    %v1702 = vld [vmem:[%s3 + $0x1f8] sm:$0xff]
    %v1703 = vld [vmem:[%s3 + $0x200] sm:$0xff]
    %v1704 = vld [vmem:[%s3 + $0x208] sm:$0xff]
    %v1705 = vld [vmem:[%s3 + $0x210] sm:$0xff]
    %v1706 = vld [vmem:[%s3 + $0x218] sm:$0xff]
    %v1707 = vld [vmem:[%s3 + $0x220] sm:$0xff]
    %v1708 = vld [vmem:[%s3 + $0x228] sm:$0xff]
    %v1709 = vld [vmem:[%s3 + $0x230] sm:$0xff]
    %v1710 = vld [vmem:[%s3 + $0x238] sm:$0xff]
    %v1711 = vld [vmem:[%s3 + $0x240] sm:$0xff]
    %v1712 = vld [vmem:[%s3 + $0x248] sm:$0xff]
    %v1713 = vld [vmem:[%s3 + $0x250] sm:$0xff]
    %v1714 = vld [vmem:[%s3 + $0x258] sm:$0xff]
    %v1715 = vld [vmem:[%s3 + $0x260] sm:$0xff]
    %v1716 = vld [vmem:[%s3 + $0x268] sm:$0xff]
    %v1717 = vld [vmem:[%s3 + $0x270] sm:$0xff]
    %v1718 = vld [vmem:[%s3 + $0x278] sm:$0xff]
    %v1719 = vld [vmem:[%s3 + $0x280] sm:$0xff]
    %v1720 = vld [vmem:[%s3 + $0x288] sm:$0xff]
    %v1721 = vld [vmem:[%s3 + $0x290] sm:$0xff]
    %v1722 = vld [vmem:[%s3 + $0x298] sm:$0xff]
    %v1723 = vld [vmem:[%s3 + $0x2a0] sm:$0xff]
    %v1724 = vld [vmem:[%s3 + $0x2a8] sm:$0xff]
    %v1725 = vld [vmem:[%s3 + $0x2b0] sm:$0xff]
    %v1726 = vld [vmem:[%s3 + $0x2b8] sm:$0xff]
    %v1727 = vld [vmem:[%s3 + $0x2c0] sm:$0xff]
    %v1728 = vld [vmem:[%s3 + $0x2c8] sm:$0xff]
    %v1729 = vld [vmem:[%s3 + $0x2d0] sm:$0xff]
    %v1730 = vld [vmem:[%s3 + $0x2d8] sm:$0xff]
    %v1731 = vld [vmem:[%s3 + $0x2e0] sm:$0xff]
    %v1732 = vld [vmem:[%s3 + $0x2e8] sm:$0xff]
    %v1733 = vld [vmem:[%s3 + $0x2f0] sm:$0xff]
    %v1734 = vld [vmem:[%s3 + $0x2f8] sm:$0xff]
    %v1735 = vld [vmem:[%s3 + $0x300] sm:$0xff]
    %v1736 = vld [vmem:[%s3 + $0x308] sm:$0xff]
    %v1737 = vld [vmem:[%s3 + $0x310] sm:$0xff]
    %v1738 = vld [vmem:[%s3 + $0x318] sm:$0xff]
    %v1739 = vld [vmem:[%s3 + $0x320] sm:$0xff]
    %v1740 = vld [vmem:[%s3 + $0x328] sm:$0xff]
    %v1741 = vld [vmem:[%s3 + $0x330] sm:$0xff]
    %v1742 = vld [vmem:[%s3 + $0x338] sm:$0xff]
    %v1743 = vld [vmem:[%s3 + $0x340] sm:$0xff]
    %v1744 = vld [vmem:[%s3 + $0x348] sm:$0xff]
    %v1745 = vld [vmem:[%s3 + $0x350] sm:$0xff]
    %v1746 = vld [vmem:[%s3 + $0x358] sm:$0xff]
    %v1747 = vld [vmem:[%s3 + $0x360] sm:$0xff]
    %v1748 = vld [vmem:[%s3 + $0x368] sm:$0xff]
    %v1749 = vld [vmem:[%s3 + $0x370] sm:$0xff]
    %v1750 = vld [vmem:[%s3 + $0x378] sm:$0xff]
    %v1751 = vld [vmem:[%s3 + $0x380] sm:$0xff]
    %v1752 = vld [vmem:[%s3 + $0x388] sm:$0xff]
    %v1753 = vld [vmem:[%s3 + $0x390] sm:$0xff]
    %v1754 = vld [vmem:[%s3 + $0x398] sm:$0xff]
    %v1755 = vld [vmem:[%s3 + $0x3a0] sm:$0xff]
    %v1756 = vld [vmem:[%s3 + $0x3a8] sm:$0xff]
    %v1757 = vld [vmem:[%s3 + $0x3b0] sm:$0xff]
    %v1758 = vld [vmem:[%s3 + $0x3b8] sm:$0xff]
    %v1759 = vld [vmem:[%s3 + $0x3c0] sm:$0xff]
    %v1760 = vld [vmem:[%s3 + $0x3c8] sm:$0xff]
    %v1761 = vld [vmem:[%s3 + $0x3d0] sm:$0xff]
    %v1762 = vld [vmem:[%s3 + $0x3d8] sm:$0xff]
    %v1763 = vld [vmem:[%s3 + $0x3e0] sm:$0xff]
    %v1764 = vld [vmem:[%s3 + $0x3e8] sm:$0xff]
    %v1765 = vld [vmem:[%s3 + $0x3f0] sm:$0xff]
    %v1766 = vld [vmem:[%s3 + $0x3f8] sm:$0xff]
    %v1895 = vunpack.c.l.b16 %v1639
    %v1896 = vunpack.c.h.b16 %v1639
    %v1897 = vunpack.c.l.b16 %v1640
    %v1898 = vunpack.c.h.b16 %v1640
    %v1899 = vunpack.c.l.b16 %v1641
    %v1900 = vunpack.c.h.b16 %v1641
    %v1901 = vunpack.c.l.b16 %v1642
    %v1902 = vunpack.c.h.b16 %v1642
    %v1903 = vunpack.c.l.b16 %v1643
    %v1904 = vunpack.c.h.b16 %v1643
    %v1905 = vunpack.c.l.b16 %v1644
    %v1906 = vunpack.c.h.b16 %v1644
    %v1907 = vunpack.c.l.b16 %v1645
    %v1908 = vunpack.c.h.b16 %v1645
    %v1909 = vunpack.c.l.b16 %v1646
    %v1910 = vunpack.c.h.b16 %v1646
    %v1911 = vunpack.c.l.b16 %v1647
    %v1912 = vunpack.c.h.b16 %v1647
    %v1913 = vunpack.c.l.b16 %v1648
    %v1914 = vunpack.c.h.b16 %v1648
    %v1915 = vunpack.c.l.b16 %v1649
    %v1916 = vunpack.c.h.b16 %v1649
    %v1917 = vunpack.c.l.b16 %v1650
    %v1918 = vunpack.c.h.b16 %v1650
    %v1919 = vunpack.c.l.b16 %v1651
    %v1920 = vunpack.c.h.b16 %v1651
    %v1921 = vunpack.c.l.b16 %v1652
    %v1922 = vunpack.c.h.b16 %v1652
    %v1923 = vunpack.c.l.b16 %v1653
    %v1924 = vunpack.c.h.b16 %v1653
    %v1925 = vunpack.c.l.b16 %v1654
    %v1926 = vunpack.c.h.b16 %v1654
    %v1927 = vunpack.c.l.b16 %v1655
    %v1928 = vunpack.c.h.b16 %v1655
    %v1929 = vunpack.c.l.b16 %v1656
    %v1930 = vunpack.c.h.b16 %v1656
    %v1931 = vunpack.c.l.b16 %v1657
    %v1932 = vunpack.c.h.b16 %v1657
    %v1933 = vunpack.c.l.b16 %v1658
    %v1934 = vunpack.c.h.b16 %v1658
    %v1935 = vunpack.c.l.b16 %v1659
    %v1936 = vunpack.c.h.b16 %v1659
    %v1937 = vunpack.c.l.b16 %v1660
    %v1938 = vunpack.c.h.b16 %v1660
    %v1939 = vunpack.c.l.b16 %v1661
    %v1940 = vunpack.c.h.b16 %v1661
    %v1941 = vunpack.c.l.b16 %v1662
    %v1942 = vunpack.c.h.b16 %v1662
    %v1943 = vunpack.c.l.b16 %v1663
    %v1944 = vunpack.c.h.b16 %v1663
    %v1945 = vunpack.c.l.b16 %v1664
    %v1946 = vunpack.c.h.b16 %v1664
    %v1947 = vunpack.c.l.b16 %v1665
    %v1948 = vunpack.c.h.b16 %v1665
    %v1949 = vunpack.c.l.b16 %v1666
    %v1950 = vunpack.c.h.b16 %v1666
    %v1951 = vunpack.c.l.b16 %v1667
    %v1952 = vunpack.c.h.b16 %v1667
    %v1953 = vunpack.c.l.b16 %v1668
    %v1954 = vunpack.c.h.b16 %v1668
    %v1955 = vunpack.c.l.b16 %v1669
    %v1956 = vunpack.c.h.b16 %v1669
    %v1957 = vunpack.c.l.b16 %v1670
    %v1958 = vunpack.c.h.b16 %v1670
    %v1959 = vunpack.c.l.b16 %v1671
    %v1960 = vunpack.c.h.b16 %v1671
    %v1961 = vunpack.c.l.b16 %v1672
    %v1962 = vunpack.c.h.b16 %v1672
    %v1963 = vunpack.c.l.b16 %v1673
    %v1964 = vunpack.c.h.b16 %v1673
    %v1965 = vunpack.c.l.b16 %v1674
    %v1966 = vunpack.c.h.b16 %v1674
    %v1967 = vunpack.c.l.b16 %v1675
    %v1968 = vunpack.c.h.b16 %v1675
    %v1969 = vunpack.c.l.b16 %v1676
    %v1970 = vunpack.c.h.b16 %v1676
    %v1971 = vunpack.c.l.b16 %v1677
    %v1972 = vunpack.c.h.b16 %v1677
    %v1973 = vunpack.c.l.b16 %v1678
    %v1974 = vunpack.c.h.b16 %v1678
    %v1975 = vunpack.c.l.b16 %v1679
    %v1976 = vunpack.c.h.b16 %v1679
    %v1977 = vunpack.c.l.b16 %v1680
    %v1978 = vunpack.c.h.b16 %v1680
    %v1979 = vunpack.c.l.b16 %v1681
    %v1980 = vunpack.c.h.b16 %v1681
    %v1981 = vunpack.c.l.b16 %v1682
    %v1982 = vunpack.c.h.b16 %v1682
    %v1983 = vunpack.c.l.b16 %v1683
    %v1984 = vunpack.c.h.b16 %v1683
    %v1985 = vunpack.c.l.b16 %v1684
    %v1986 = vunpack.c.h.b16 %v1684
    %v1987 = vunpack.c.l.b16 %v1685
    %v1988 = vunpack.c.h.b16 %v1685
    %v1989 = vunpack.c.l.b16 %v1686
    %v1990 = vunpack.c.h.b16 %v1686
    %v1991 = vunpack.c.l.b16 %v1687
    %v1992 = vunpack.c.h.b16 %v1687
    %v1993 = vunpack.c.l.b16 %v1688
    %v1994 = vunpack.c.h.b16 %v1688
    %v1995 = vunpack.c.l.b16 %v1689
    %v1996 = vunpack.c.h.b16 %v1689
    %v1997 = vunpack.c.l.b16 %v1690
    %v1998 = vunpack.c.h.b16 %v1690
    %v1999 = vunpack.c.l.b16 %v1691
    %v2000 = vunpack.c.h.b16 %v1691
    %v2001 = vunpack.c.l.b16 %v1692
    %v2002 = vunpack.c.h.b16 %v1692
    %v2003 = vunpack.c.l.b16 %v1693
    %v2004 = vunpack.c.h.b16 %v1693
    %v2005 = vunpack.c.l.b16 %v1694
    %v2006 = vunpack.c.h.b16 %v1694
    %v2007 = vunpack.c.l.b16 %v1695
    %v2008 = vunpack.c.h.b16 %v1695
    %v2009 = vunpack.c.l.b16 %v1696
    %v2010 = vunpack.c.h.b16 %v1696
    %v2011 = vunpack.c.l.b16 %v1697
    %v2012 = vunpack.c.h.b16 %v1697
    %v2013 = vunpack.c.l.b16 %v1698
    %v2014 = vunpack.c.h.b16 %v1698
    %v2015 = vunpack.c.l.b16 %v1699
    %v2016 = vunpack.c.h.b16 %v1699
    %v2017 = vunpack.c.l.b16 %v1700
    %v2018 = vunpack.c.h.b16 %v1700
    %v2019 = vunpack.c.l.b16 %v1701
    %v2020 = vunpack.c.h.b16 %v1701
    %v2021 = vunpack.c.l.b16 %v1702
    %v2022 = vunpack.c.h.b16 %v1702
    %v2023 = vunpack.c.l.b16 %v1703
    %v2024 = vunpack.c.h.b16 %v1703
    %v2025 = vunpack.c.l.b16 %v1704
    %v2026 = vunpack.c.h.b16 %v1704
    %v2027 = vunpack.c.l.b16 %v1705
    %v2028 = vunpack.c.h.b16 %v1705
    %v2029 = vunpack.c.l.b16 %v1706
    %v2030 = vunpack.c.h.b16 %v1706
    %v2031 = vunpack.c.l.b16 %v1707
    %v2032 = vunpack.c.h.b16 %v1707
    %v2033 = vunpack.c.l.b16 %v1708
    %v2034 = vunpack.c.h.b16 %v1708
    %v2035 = vunpack.c.l.b16 %v1709
    %v2036 = vunpack.c.h.b16 %v1709
    %v2037 = vunpack.c.l.b16 %v1710
    %v2038 = vunpack.c.h.b16 %v1710
    %v2039 = vunpack.c.l.b16 %v1711
    %v2040 = vunpack.c.h.b16 %v1711
    %v2041 = vunpack.c.l.b16 %v1712
    %v2042 = vunpack.c.h.b16 %v1712
    %v2043 = vunpack.c.l.b16 %v1713
    %v2044 = vunpack.c.h.b16 %v1713
    %v2045 = vunpack.c.l.b16 %v1714
    %v2046 = vunpack.c.h.b16 %v1714
    %v2047 = vunpack.c.l.b16 %v1715
    %v2048 = vunpack.c.h.b16 %v1715
    %v2049 = vunpack.c.l.b16 %v1716
    %v2050 = vunpack.c.h.b16 %v1716
    %v2051 = vunpack.c.l.b16 %v1717
    %v2052 = vunpack.c.h.b16 %v1717
    %v2053 = vunpack.c.l.b16 %v1718
    %v2054 = vunpack.c.h.b16 %v1718
    %v2055 = vunpack.c.l.b16 %v1719
    %v2056 = vunpack.c.h.b16 %v1719
    %v2057 = vunpack.c.l.b16 %v1720
    %v2058 = vunpack.c.h.b16 %v1720
    %v2059 = vunpack.c.l.b16 %v1721
    %v2060 = vunpack.c.h.b16 %v1721
    %v2061 = vunpack.c.l.b16 %v1722
    %v2062 = vunpack.c.h.b16 %v1722
    %v2063 = vunpack.c.l.b16 %v1723
    %v2064 = vunpack.c.h.b16 %v1723
    %v2065 = vunpack.c.l.b16 %v1724
    %v2066 = vunpack.c.h.b16 %v1724
    %v2067 = vunpack.c.l.b16 %v1725
    %v2068 = vunpack.c.h.b16 %v1725
    %v2069 = vunpack.c.l.b16 %v1726
    %v2070 = vunpack.c.h.b16 %v1726
    %v2071 = vunpack.c.l.b16 %v1727
    %v2072 = vunpack.c.h.b16 %v1727
    %v2073 = vunpack.c.l.b16 %v1728
    %v2074 = vunpack.c.h.b16 %v1728
    %v2075 = vunpack.c.l.b16 %v1729
    %v2076 = vunpack.c.h.b16 %v1729
    %v2077 = vunpack.c.l.b16 %v1730
    %v2078 = vunpack.c.h.b16 %v1730
    %v2079 = vunpack.c.l.b16 %v1731
    %v2080 = vunpack.c.h.b16 %v1731
    %v2081 = vunpack.c.l.b16 %v1732
    %v2082 = vunpack.c.h.b16 %v1732
    %v2083 = vunpack.c.l.b16 %v1733
    %v2084 = vunpack.c.h.b16 %v1733
    %v2085 = vunpack.c.l.b16 %v1734
    %v2086 = vunpack.c.h.b16 %v1734
    %v2087 = vunpack.c.l.b16 %v1735
    %v2088 = vunpack.c.h.b16 %v1735
    %v2089 = vunpack.c.l.b16 %v1736
    %v2090 = vunpack.c.h.b16 %v1736
    %v2091 = vunpack.c.l.b16 %v1737
    %v2092 = vunpack.c.h.b16 %v1737
    %v2093 = vunpack.c.l.b16 %v1738
    %v2094 = vunpack.c.h.b16 %v1738
    %v2095 = vunpack.c.l.b16 %v1739
    %v2096 = vunpack.c.h.b16 %v1739
    %v2097 = vunpack.c.l.b16 %v1740
    %v2098 = vunpack.c.h.b16 %v1740
    %v2099 = vunpack.c.l.b16 %v1741
    %v2100 = vunpack.c.h.b16 %v1741
    %v2101 = vunpack.c.l.b16 %v1742
    %v2102 = vunpack.c.h.b16 %v1742
    %v2103 = vunpack.c.l.b16 %v1743
    %v2104 = vunpack.c.h.b16 %v1743
    %v2105 = vunpack.c.l.b16 %v1744
    %v2106 = vunpack.c.h.b16 %v1744
    %v2107 = vunpack.c.l.b16 %v1745
    %v2108 = vunpack.c.h.b16 %v1745
    %v2109 = vunpack.c.l.b16 %v1746
    %v2110 = vunpack.c.h.b16 %v1746
    %v2111 = vunpack.c.l.b16 %v1747
    %v2112 = vunpack.c.h.b16 %v1747
    %v2113 = vunpack.c.l.b16 %v1748
    %v2114 = vunpack.c.h.b16 %v1748
    %v2115 = vunpack.c.l.b16 %v1749
    %v2116 = vunpack.c.h.b16 %v1749
    %v2117 = vunpack.c.l.b16 %v1750
    %v2118 = vunpack.c.h.b16 %v1750
    %v2119 = vunpack.c.l.b16 %v1751
    %v2120 = vunpack.c.h.b16 %v1751
    %v2121 = vunpack.c.l.b16 %v1752
    %v2122 = vunpack.c.h.b16 %v1752
    %v2123 = vunpack.c.l.b16 %v1753
    %v2124 = vunpack.c.h.b16 %v1753
    %v2125 = vunpack.c.l.b16 %v1754
    %v2126 = vunpack.c.h.b16 %v1754
    %v2127 = vunpack.c.l.b16 %v1755
    %v2128 = vunpack.c.h.b16 %v1755
    %v2129 = vunpack.c.l.b16 %v1756
    %v2130 = vunpack.c.h.b16 %v1756
    %v2131 = vunpack.c.l.b16 %v1757
    %v2132 = vunpack.c.h.b16 %v1757
    %v2133 = vunpack.c.l.b16 %v1758
    %v2134 = vunpack.c.h.b16 %v1758
    %v2135 = vunpack.c.l.b16 %v1759
    %v2136 = vunpack.c.h.b16 %v1759
    %v2137 = vunpack.c.l.b16 %v1760
    %v2138 = vunpack.c.h.b16 %v1760
    %v2139 = vunpack.c.l.b16 %v1761
    %v2140 = vunpack.c.h.b16 %v1761
    %v2141 = vunpack.c.l.b16 %v1762
    %v2142 = vunpack.c.h.b16 %v1762
    %v2143 = vunpack.c.l.b16 %v1763
    %v2144 = vunpack.c.h.b16 %v1763
    %v2145 = vunpack.c.l.b16 %v1764
    %v2146 = vunpack.c.h.b16 %v1764
    %v2147 = vunpack.c.l.b16 %v1765
    %v2148 = vunpack.c.h.b16 %v1765
    %v2149 = vunpack.c.l.b16 %v1766
    %v2150 = vunpack.c.h.b16 %v1766
    %v2151 = vpack.c.b16 %v1911, %v1895
    %v2152 = vpack.c.b16 %v1912, %v1896
    %v2153 = vpack.c.b16 %v1913, %v1897
    %v2154 = vpack.c.b16 %v1914, %v1898
    %v2155 = vpack.c.b16 %v1915, %v1899
    %v2156 = vpack.c.b16 %v1916, %v1900
    %v2157 = vpack.c.b16 %v1917, %v1901
    %v2158 = vpack.c.b16 %v1918, %v1902
    %v2159 = vpack.c.b16 %v1919, %v1903
    %v2160 = vpack.c.b16 %v1920, %v1904
    %v2161 = vpack.c.b16 %v1921, %v1905
    %v2162 = vpack.c.b16 %v1922, %v1906
    %v2163 = vpack.c.b16 %v1923, %v1907
    %v2164 = vpack.c.b16 %v1924, %v1908
    %v2165 = vpack.c.b16 %v1925, %v1909
    %v2166 = vpack.c.b16 %v1926, %v1910
    %v2167 = vpack.c.b16 %v1943, %v1927
    %v2168 = vpack.c.b16 %v1944, %v1928
    %v2169 = vpack.c.b16 %v1945, %v1929
    %v2170 = vpack.c.b16 %v1946, %v1930
    %v2171 = vpack.c.b16 %v1947, %v1931
    %v2172 = vpack.c.b16 %v1948, %v1932
    %v2173 = vpack.c.b16 %v1949, %v1933
    %v2174 = vpack.c.b16 %v1950, %v1934
    %v2175 = vpack.c.b16 %v1951, %v1935
    %v2176 = vpack.c.b16 %v1952, %v1936
    %v2177 = vpack.c.b16 %v1953, %v1937
    %v2178 = vpack.c.b16 %v1954, %v1938
    %v2179 = vpack.c.b16 %v1955, %v1939
    %v2180 = vpack.c.b16 %v1956, %v1940
    %v2181 = vpack.c.b16 %v1957, %v1941
    %v2182 = vpack.c.b16 %v1958, %v1942
    %v2183 = vpack.c.b16 %v1975, %v1959
    %v2184 = vpack.c.b16 %v1976, %v1960
    %v2185 = vpack.c.b16 %v1977, %v1961
    %v2186 = vpack.c.b16 %v1978, %v1962
    %v2187 = vpack.c.b16 %v1979, %v1963
    %v2188 = vpack.c.b16 %v1980, %v1964
    %v2189 = vpack.c.b16 %v1981, %v1965
    %v2190 = vpack.c.b16 %v1982, %v1966
    %v2191 = vpack.c.b16 %v1983, %v1967
    %v2192 = vpack.c.b16 %v1984, %v1968
    %v2193 = vpack.c.b16 %v1985, %v1969
    %v2194 = vpack.c.b16 %v1986, %v1970
    %v2195 = vpack.c.b16 %v1987, %v1971
    %v2196 = vpack.c.b16 %v1988, %v1972
    %v2197 = vpack.c.b16 %v1989, %v1973
    %v2198 = vpack.c.b16 %v1990, %v1974
    %v2199 = vpack.c.b16 %v2007, %v1991
    %v2200 = vpack.c.b16 %v2008, %v1992
    %v2201 = vpack.c.b16 %v2009, %v1993
    %v2202 = vpack.c.b16 %v2010, %v1994
    %v2203 = vpack.c.b16 %v2011, %v1995
    %v2204 = vpack.c.b16 %v2012, %v1996
    %v2205 = vpack.c.b16 %v2013, %v1997
    %v2206 = vpack.c.b16 %v2014, %v1998
    %v2207 = vpack.c.b16 %v2015, %v1999
    %v2208 = vpack.c.b16 %v2016, %v2000
    %v2209 = vpack.c.b16 %v2017, %v2001
    %v2210 = vpack.c.b16 %v2018, %v2002
    %v2211 = vpack.c.b16 %v2019, %v2003
    %v2212 = vpack.c.b16 %v2020, %v2004
    %v2213 = vpack.c.b16 %v2021, %v2005
    %v2214 = vpack.c.b16 %v2022, %v2006
    %v2215 = vpack.c.b16 %v2039, %v2023
    %v2216 = vpack.c.b16 %v2040, %v2024
    %v2217 = vpack.c.b16 %v2041, %v2025
    %v2218 = vpack.c.b16 %v2042, %v2026
    %v2219 = vpack.c.b16 %v2043, %v2027
    %v2220 = vpack.c.b16 %v2044, %v2028
    %v2221 = vpack.c.b16 %v2045, %v2029
    %v2222 = vpack.c.b16 %v2046, %v2030
    %v2223 = vpack.c.b16 %v2047, %v2031
    %v2224 = vpack.c.b16 %v2048, %v2032
    %v2225 = vpack.c.b16 %v2049, %v2033
    %v2226 = vpack.c.b16 %v2050, %v2034
    %v2227 = vpack.c.b16 %v2051, %v2035
    %v2228 = vpack.c.b16 %v2052, %v2036
    %v2229 = vpack.c.b16 %v2053, %v2037
    %v2230 = vpack.c.b16 %v2054, %v2038
    %v2231 = vpack.c.b16 %v2071, %v2055
    %v2232 = vpack.c.b16 %v2072, %v2056
    %v2233 = vpack.c.b16 %v2073, %v2057
    %v2234 = vpack.c.b16 %v2074, %v2058
    %v2235 = vpack.c.b16 %v2075, %v2059
    %v2236 = vpack.c.b16 %v2076, %v2060
    %v2237 = vpack.c.b16 %v2077, %v2061
    %v2238 = vpack.c.b16 %v2078, %v2062
    %v2239 = vpack.c.b16 %v2079, %v2063
    %v2240 = vpack.c.b16 %v2080, %v2064
    %v2241 = vpack.c.b16 %v2081, %v2065
    %v2242 = vpack.c.b16 %v2082, %v2066
    %v2243 = vpack.c.b16 %v2083, %v2067
    %v2244 = vpack.c.b16 %v2084, %v2068
    %v2245 = vpack.c.b16 %v2085, %v2069
    %v2246 = vpack.c.b16 %v2086, %v2070
    %v2247 = vpack.c.b16 %v2103, %v2087
    %v2248 = vpack.c.b16 %v2104, %v2088
    %v2249 = vpack.c.b16 %v2105, %v2089
    %v2250 = vpack.c.b16 %v2106, %v2090
    %v2251 = vpack.c.b16 %v2107, %v2091
    %v2252 = vpack.c.b16 %v2108, %v2092
    %v2253 = vpack.c.b16 %v2109, %v2093
    %v2254 = vpack.c.b16 %v2110, %v2094
    %v2255 = vpack.c.b16 %v2111, %v2095
    %v2256 = vpack.c.b16 %v2112, %v2096
    %v2257 = vpack.c.b16 %v2113, %v2097
    %v2258 = vpack.c.b16 %v2114, %v2098
    %v2259 = vpack.c.b16 %v2115, %v2099
    %v2260 = vpack.c.b16 %v2116, %v2100
    %v2261 = vpack.c.b16 %v2117, %v2101
    %v2262 = vpack.c.b16 %v2118, %v2102
    %v2263 = vpack.c.b16 %v2135, %v2119
    %v2264 = vpack.c.b16 %v2136, %v2120
    %v2265 = vpack.c.b16 %v2137, %v2121
    %v2266 = vpack.c.b16 %v2138, %v2122
    %v2267 = vpack.c.b16 %v2139, %v2123
    %v2268 = vpack.c.b16 %v2140, %v2124
    %v2269 = vpack.c.b16 %v2141, %v2125
    %v2270 = vpack.c.b16 %v2142, %v2126
    %v2271 = vpack.c.b16 %v2143, %v2127
    %v2272 = vpack.c.b16 %v2144, %v2128
    %v2273 = vpack.c.b16 %v2145, %v2129
    %v2274 = vpack.c.b16 %v2146, %v2130
    %v2275 = vpack.c.b16 %v2147, %v2131
    %v2276 = vpack.c.b16 %v2148, %v2132
    %v2277 = vpack.c.b16 %v2149, %v2133
    %v2278 = vpack.c.b16 %v2150, %v2134
    %2407 = vmatprep.subr.bf16.mxu0 %v2264
    %2408 = vmatpush1.bf16.msra.mxu0 %v2263
    %2409 = vmatprep.subr.bf16.mxu0 %v2248
    %2410 = vmatpush1.bf16.msra.mxu0 %v2247
    %2411 = vmatprep.subr.bf16.mxu0 %v2232
    %2412 = vmatpush1.bf16.msra.mxu0 %v2231
    %2413 = vmatprep.subr.bf16.mxu0 %v2216
    %2414 = vmatpush1.bf16.msra.mxu0 %v2215
    %2415 = vmatprep.subr.bf16.mxu0 %v2200
    %2416 = vmatpush1.bf16.msra.mxu0 %v2199
    %2417 = vmatprep.subr.bf16.mxu0 %v2184
    %2418 = vmatpush1.bf16.msra.mxu0 %v2183
    %2419 = vmatprep.subr.bf16.mxu0 %v2168
    %2420 = vmatpush1.bf16.msra.mxu0 %v2167
    %2421 = vmatprep.subr.bf16.mxu0 %v2152
    %2422 = vmatpush1.bf16.msra.mxu0 %v2151
    %2423 = vmatprep.subr.bf16.mxu0 0
    %2424 = vmatpush2.bf16.msra.mxu0 0
    %2425 = vmatprep.subr.bf16.mxu0 0
    %2426 = vmatpush2.bf16.msra.mxu0 0
    %2427 = vmatprep.subr.bf16.mxu0 0
    %2428 = vmatpush2.bf16.msra.mxu0 0
    %2429 = vmatprep.subr.bf16.mxu0 0
    %2430 = vmatpush2.bf16.msra.mxu0 0
    %2431 = vmatprep.subr.bf16.mxu0 0
    %2432 = vmatpush2.bf16.msra.mxu0 0
    %2433 = vmatprep.subr.bf16.mxu0 0
    %2434 = vmatpush2.bf16.msra.mxu0 0
    %2435 = vmatprep.subr.bf16.mxu0 0
    %2436 = vmatpush2.bf16.msra.mxu0 0
    %2437 = vmatprep.subr.bf16.mxu0 0
    %2438 = vmatpush2.bf16.msra.mxu0 0
    %2439 = vmatprep.mubr.bf16.mxu0 0
    %2440 = vmatmul.mubr.bf16.gmra.mxu0 %v1637
    %v2441 = vpop.f32.mrf.mxu0
    %v2442 = vadd.f32 0.0, %v2441
    %v2443 = vpop.f32.mrf.mxu0
    %v2444 = vadd.f32 0.0, %v2443
    %v2445 = vpop.f32.mrf.mxu0
    %v2446 = vadd.f32 0.0, %v2445
    %v2447 = vpop.f32.mrf.mxu0
    %v2448 = vadd.f32 0.0, %v2447
    %2449 = vmatprep.mubr.bf16.mxu0 0
    %2450 = vmatmul.mubr.bf16.gmra.mxu0 %v1638
    %v2451 = vpop.f32.mrf.mxu0
    %v2452 = vadd.f32 0.0, %v2451
    %v2453 = vpop.f32.mrf.mxu0
    %v2454 = vadd.f32 0.0, %v2453
    %v2455 = vpop.f32.mrf.mxu0
    %v2456 = vpop.f32.mrf.mxu0
    %2457 = vdwg.mxu0
    %2458 = vmatprep.subr.bf16.mxu0 %v2266
    %2459 = vmatpush1.bf16.msra.mxu0 %v2265
    %2460 = vmatprep.subr.bf16.mxu0 %v2250
    %2461 = vmatpush1.bf16.msra.mxu0 %v2249
    %2462 = vmatprep.subr.bf16.mxu0 %v2234
    %2463 = vmatpush1.bf16.msra.mxu0 %v2233
    %2464 = vmatprep.subr.bf16.mxu0 %v2218
    %2465 = vmatpush1.bf16.msra.mxu0 %v2217
    %2466 = vmatprep.subr.bf16.mxu0 %v2202
    %2467 = vmatpush1.bf16.msra.mxu0 %v2201
    %2468 = vmatprep.subr.bf16.mxu0 %v2186
    %2469 = vmatpush1.bf16.msra.mxu0 %v2185
    %2470 = vmatprep.subr.bf16.mxu0 %v2170
    %2471 = vmatpush1.bf16.msra.mxu0 %v2169
    %2472 = vmatprep.subr.bf16.mxu0 %v2154
    %2473 = vmatpush1.bf16.msra.mxu0 %v2153
    %2474 = vmatprep.subr.bf16.mxu0 0
    %2475 = vmatpush2.bf16.msra.mxu0 0
    %2476 = vmatprep.subr.bf16.mxu0 0
    %2477 = vmatpush2.bf16.msra.mxu0 0
    %2478 = vmatprep.subr.bf16.mxu0 0
    %2479 = vmatpush2.bf16.msra.mxu0 0
    %2480 = vmatprep.subr.bf16.mxu0 0
    %2481 = vmatpush2.bf16.msra.mxu0 0
    %2482 = vmatprep.subr.bf16.mxu0 0
    %2483 = vmatpush2.bf16.msra.mxu0 0
    %2484 = vmatprep.subr.bf16.mxu0 0
    %2485 = vmatpush2.bf16.msra.mxu0 0
    %2486 = vmatprep.subr.bf16.mxu0 0
    %2487 = vmatpush2.bf16.msra.mxu0 0
    %2488 = vmatprep.subr.bf16.mxu0 0
    %2489 = vmatpush2.bf16.msra.mxu0 0
    %2490 = vmatprep.mubr.bf16.mxu0 0
    %2491 = vmatmul.mubr.bf16.gmra.mxu0 %v1637
    %v2492 = vpop.f32.mrf.mxu0
    %v2493 = vadd.f32 0.0, %v2492
    %v2494 = vpop.f32.mrf.mxu0
    %v2495 = vadd.f32 0.0, %v2494
    %v2496 = vpop.f32.mrf.mxu0
    %v2497 = vadd.f32 0.0, %v2496
    %v2498 = vpop.f32.mrf.mxu0
    %v2499 = vadd.f32 0.0, %v2498
    %2500 = vmatprep.mubr.bf16.mxu0 0
    %2501 = vmatmul.mubr.bf16.gmra.mxu0 %v1638
    %v2502 = vpop.f32.mrf.mxu0
    %v2503 = vadd.f32 0.0, %v2502
    %v2504 = vpop.f32.mrf.mxu0
    %v2505 = vadd.f32 0.0, %v2504
    %v2506 = vpop.f32.mrf.mxu0
    %v2507 = vpop.f32.mrf.mxu0
    %2508 = vdwg.mxu0
    %2509 = vmatprep.subr.bf16.mxu0 %v2268
    %2510 = vmatpush1.bf16.msra.mxu0 %v2267
    %2511 = vmatprep.subr.bf16.mxu0 %v2252
    %2512 = vmatpush1.bf16.msra.mxu0 %v2251
    %2513 = vmatprep.subr.bf16.mxu0 %v2236
    %2514 = vmatpush1.bf16.msra.mxu0 %v2235
    %2515 = vmatprep.subr.bf16.mxu0 %v2220
    %2516 = vmatpush1.bf16.msra.mxu0 %v2219
    %2517 = vmatprep.subr.bf16.mxu0 %v2204
    %2518 = vmatpush1.bf16.msra.mxu0 %v2203
    %2519 = vmatprep.subr.bf16.mxu0 %v2188
    %2520 = vmatpush1.bf16.msra.mxu0 %v2187
    %2521 = vmatprep.subr.bf16.mxu0 %v2172
    %2522 = vmatpush1.bf16.msra.mxu0 %v2171
    %2523 = vmatprep.subr.bf16.mxu0 %v2156
    %2524 = vmatpush1.bf16.msra.mxu0 %v2155
    %2525 = vmatprep.subr.bf16.mxu0 0
    %2526 = vmatpush2.bf16.msra.mxu0 0
    %2527 = vmatprep.subr.bf16.mxu0 0
    %2528 = vmatpush2.bf16.msra.mxu0 0
    %2529 = vmatprep.subr.bf16.mxu0 0
    %2530 = vmatpush2.bf16.msra.mxu0 0
    %2531 = vmatprep.subr.bf16.mxu0 0
    %2532 = vmatpush2.bf16.msra.mxu0 0
    %2533 = vmatprep.subr.bf16.mxu0 0
    %2534 = vmatpush2.bf16.msra.mxu0 0
    %2535 = vmatprep.subr.bf16.mxu0 0
    %2536 = vmatpush2.bf16.msra.mxu0 0
    %2537 = vmatprep.subr.bf16.mxu0 0
    %2538 = vmatpush2.bf16.msra.mxu0 0
    %2539 = vmatprep.subr.bf16.mxu0 0
    %2540 = vmatpush2.bf16.msra.mxu0 0
    %2541 = vmatprep.mubr.bf16.mxu0 0
    %2542 = vmatmul.mubr.bf16.gmra.mxu0 %v1637
    %v2543 = vpop.f32.mrf.mxu0
    %v2544 = vadd.f32 0.0, %v2543
    %v2545 = vpop.f32.mrf.mxu0
    %v2546 = vadd.f32 0.0, %v2545
    %v2547 = vpop.f32.mrf.mxu0
    %v2548 = vadd.f32 0.0, %v2547
    %v2549 = vpop.f32.mrf.mxu0
    %v2550 = vadd.f32 0.0, %v2549
    %2551 = vmatprep.mubr.bf16.mxu0 0
    %2552 = vmatmul.mubr.bf16.gmra.mxu0 %v1638
    %v2553 = vpop.f32.mrf.mxu0
    %v2554 = vadd.f32 0.0, %v2553
    %v2555 = vpop.f32.mrf.mxu0
    %v2556 = vadd.f32 0.0, %v2555
    %v2557 = vpop.f32.mrf.mxu0
    %v2558 = vpop.f32.mrf.mxu0
    %2559 = vdwg.mxu0
    %2560 = vmatprep.subr.bf16.mxu0 %v2270
    %2561 = vmatpush1.bf16.msra.mxu0 %v2269
    %2562 = vmatprep.subr.bf16.mxu0 %v2254
    %2563 = vmatpush1.bf16.msra.mxu0 %v2253
    %2564 = vmatprep.subr.bf16.mxu0 %v2238
    %2565 = vmatpush1.bf16.msra.mxu0 %v2237
    %2566 = vmatprep.subr.bf16.mxu0 %v2222
    %2567 = vmatpush1.bf16.msra.mxu0 %v2221
    %2568 = vmatprep.subr.bf16.mxu0 %v2206
    %2569 = vmatpush1.bf16.msra.mxu0 %v2205
    %2570 = vmatprep.subr.bf16.mxu0 %v2190
    %2571 = vmatpush1.bf16.msra.mxu0 %v2189
    %2572 = vmatprep.subr.bf16.mxu0 %v2174
    %2573 = vmatpush1.bf16.msra.mxu0 %v2173
    %2574 = vmatprep.subr.bf16.mxu0 %v2158
    %2575 = vmatpush1.bf16.msra.mxu0 %v2157
    %2576 = vmatprep.subr.bf16.mxu0 0
    %2577 = vmatpush2.bf16.msra.mxu0 0
    %2578 = vmatprep.subr.bf16.mxu0 0
    %2579 = vmatpush2.bf16.msra.mxu0 0
    %2580 = vmatprep.subr.bf16.mxu0 0
    %2581 = vmatpush2.bf16.msra.mxu0 0
    %2582 = vmatprep.subr.bf16.mxu0 0
    %2583 = vmatpush2.bf16.msra.mxu0 0
    %2584 = vmatprep.subr.bf16.mxu0 0
    %2585 = vmatpush2.bf16.msra.mxu0 0
    %2586 = vmatprep.subr.bf16.mxu0 0
    %2587 = vmatpush2.bf16.msra.mxu0 0
    %2588 = vmatprep.subr.bf16.mxu0 0
    %2589 = vmatpush2.bf16.msra.mxu0 0
    %2590 = vmatprep.subr.bf16.mxu0 0
    %2591 = vmatpush2.bf16.msra.mxu0 0
    %2592 = vmatprep.mubr.bf16.mxu0 0
    %2593 = vmatmul.mubr.bf16.gmra.mxu0 %v1637
    %v2594 = vpop.f32.mrf.mxu0
    %v2595 = vadd.f32 0.0, %v2594
    %v2596 = vpop.f32.mrf.mxu0
    %v2597 = vadd.f32 0.0, %v2596
    %v2598 = vpop.f32.mrf.mxu0
    %v2599 = vadd.f32 0.0, %v2598
    %v2600 = vpop.f32.mrf.mxu0
    %v2601 = vadd.f32 0.0, %v2600
    %2602 = vmatprep.mubr.bf16.mxu0 0
    %2603 = vmatmul.mubr.bf16.gmra.mxu0 %v1638
    %v2604 = vpop.f32.mrf.mxu0
    %v2605 = vadd.f32 0.0, %v2604
    %v2606 = vpop.f32.mrf.mxu0
    %v2607 = vadd.f32 0.0, %v2606
    %v2608 = vpop.f32.mrf.mxu0
    %v2609 = vpop.f32.mrf.mxu0
    %2610 = vdwg.mxu0
    %2611 = vmatprep.subr.bf16.mxu0 %v2272
    %2612 = vmatpush1.bf16.msra.mxu0 %v2271
    %2613 = vmatprep.subr.bf16.mxu0 %v2256
    %2614 = vmatpush1.bf16.msra.mxu0 %v2255
    %2615 = vmatprep.subr.bf16.mxu0 %v2240
    %2616 = vmatpush1.bf16.msra.mxu0 %v2239
    %2617 = vmatprep.subr.bf16.mxu0 %v2224
    %2618 = vmatpush1.bf16.msra.mxu0 %v2223
    %2619 = vmatprep.subr.bf16.mxu0 %v2208
    %2620 = vmatpush1.bf16.msra.mxu0 %v2207
    %2621 = vmatprep.subr.bf16.mxu0 %v2192
    %2622 = vmatpush1.bf16.msra.mxu0 %v2191
    %2623 = vmatprep.subr.bf16.mxu0 %v2176
    %2624 = vmatpush1.bf16.msra.mxu0 %v2175
    %2625 = vmatprep.subr.bf16.mxu0 %v2160
    %2626 = vmatpush1.bf16.msra.mxu0 %v2159
    %2627 = vmatprep.subr.bf16.mxu0 0
    %2628 = vmatpush2.bf16.msra.mxu0 0
    %2629 = vmatprep.subr.bf16.mxu0 0
    %2630 = vmatpush2.bf16.msra.mxu0 0
    %2631 = vmatprep.subr.bf16.mxu0 0
    %2632 = vmatpush2.bf16.msra.mxu0 0
    %2633 = vmatprep.subr.bf16.mxu0 0
    %2634 = vmatpush2.bf16.msra.mxu0 0
    %2635 = vmatprep.subr.bf16.mxu0 0
    %2636 = vmatpush2.bf16.msra.mxu0 0
    %2637 = vmatprep.subr.bf16.mxu0 0
    %2638 = vmatpush2.bf16.msra.mxu0 0
    %2639 = vmatprep.subr.bf16.mxu0 0
    %2640 = vmatpush2.bf16.msra.mxu0 0
    %2641 = vmatprep.subr.bf16.mxu0 0
    %2642 = vmatpush2.bf16.msra.mxu0 0
    %2643 = vmatprep.mubr.bf16.mxu0 0
    %2644 = vmatmul.mubr.bf16.gmra.mxu0 %v1637
    %v2645 = vpop.f32.mrf.mxu0
    %v2646 = vadd.f32 0.0, %v2645
    %v2647 = vpop.f32.mrf.mxu0
    %v2648 = vadd.f32 0.0, %v2647
    %v2649 = vpop.f32.mrf.mxu0
    %v2650 = vadd.f32 0.0, %v2649
    %v2651 = vpop.f32.mrf.mxu0
    %v2652 = vadd.f32 0.0, %v2651
    %2653 = vmatprep.mubr.bf16.mxu0 0
    %2654 = vmatmul.mubr.bf16.gmra.mxu0 %v1638
    %v2655 = vpop.f32.mrf.mxu0
    %v2656 = vadd.f32 0.0, %v2655
    %v2657 = vpop.f32.mrf.mxu0
    %v2658 = vadd.f32 0.0, %v2657
    %v2659 = vpop.f32.mrf.mxu0
    %v2660 = vpop.f32.mrf.mxu0
    %2661 = vdwg.mxu0
    %2662 = vmatprep.subr.bf16.mxu0 %v2274
    %2663 = vmatpush1.bf16.msra.mxu0 %v2273
    %2664 = vmatprep.subr.bf16.mxu0 %v2258
    %2665 = vmatpush1.bf16.msra.mxu0 %v2257
    %2666 = vmatprep.subr.bf16.mxu0 %v2242
    %2667 = vmatpush1.bf16.msra.mxu0 %v2241
    %2668 = vmatprep.subr.bf16.mxu0 %v2226
    %2669 = vmatpush1.bf16.msra.mxu0 %v2225
    %2670 = vmatprep.subr.bf16.mxu0 %v2210
    %2671 = vmatpush1.bf16.msra.mxu0 %v2209
    %2672 = vmatprep.subr.bf16.mxu0 %v2194
    %2673 = vmatpush1.bf16.msra.mxu0 %v2193
    %2674 = vmatprep.subr.bf16.mxu0 %v2178
    %2675 = vmatpush1.bf16.msra.mxu0 %v2177
    %2676 = vmatprep.subr.bf16.mxu0 %v2162
    %2677 = vmatpush1.bf16.msra.mxu0 %v2161
    %2678 = vmatprep.subr.bf16.mxu0 0
    %2679 = vmatpush2.bf16.msra.mxu0 0
    %2680 = vmatprep.subr.bf16.mxu0 0
    %2681 = vmatpush2.bf16.msra.mxu0 0
    %2682 = vmatprep.subr.bf16.mxu0 0
    %2683 = vmatpush2.bf16.msra.mxu0 0
    %2684 = vmatprep.subr.bf16.mxu0 0
    %2685 = vmatpush2.bf16.msra.mxu0 0
    %2686 = vmatprep.subr.bf16.mxu0 0
    %2687 = vmatpush2.bf16.msra.mxu0 0
    %2688 = vmatprep.subr.bf16.mxu0 0
    %2689 = vmatpush2.bf16.msra.mxu0 0
    %2690 = vmatprep.subr.bf16.mxu0 0
    %2691 = vmatpush2.bf16.msra.mxu0 0
    %2692 = vmatprep.subr.bf16.mxu0 0
    %2693 = vmatpush2.bf16.msra.mxu0 0
    %2694 = vmatprep.mubr.bf16.mxu0 0
    %2695 = vmatmul.mubr.bf16.gmra.mxu0 %v1637
    %v2696 = vpop.f32.mrf.mxu0
    %v2697 = vadd.f32 0.0, %v2696
    %v2698 = vpop.f32.mrf.mxu0
    %v2699 = vadd.f32 0.0, %v2698
    %v2700 = vpop.f32.mrf.mxu0
    %v2701 = vadd.f32 0.0, %v2700
    %v2702 = vpop.f32.mrf.mxu0
    %v2703 = vadd.f32 0.0, %v2702
    %2704 = vmatprep.mubr.bf16.mxu0 0
    %2705 = vmatmul.mubr.bf16.gmra.mxu0 %v1638
    %v2706 = vpop.f32.mrf.mxu0
    %v2707 = vadd.f32 0.0, %v2706
    %v2708 = vpop.f32.mrf.mxu0
    %v2709 = vadd.f32 0.0, %v2708
    %v2710 = vpop.f32.mrf.mxu0
    %v2711 = vpop.f32.mrf.mxu0
    %2712 = vdwg.mxu0
    %2713 = vmatprep.subr.bf16.mxu0 %v2276
    %2714 = vmatpush1.bf16.msra.mxu0 %v2275
    %2715 = vmatprep.subr.bf16.mxu0 %v2260
    %2716 = vmatpush1.bf16.msra.mxu0 %v2259
    %2717 = vmatprep.subr.bf16.mxu0 %v2244
    %2718 = vmatpush1.bf16.msra.mxu0 %v2243
    %2719 = vmatprep.subr.bf16.mxu0 %v2228
    %2720 = vmatpush1.bf16.msra.mxu0 %v2227
    %2721 = vmatprep.subr.bf16.mxu0 %v2212
    %2722 = vmatpush1.bf16.msra.mxu0 %v2211
    %2723 = vmatprep.subr.bf16.mxu0 %v2196
    %2724 = vmatpush1.bf16.msra.mxu0 %v2195
    %2725 = vmatprep.subr.bf16.mxu0 %v2180
    %2726 = vmatpush1.bf16.msra.mxu0 %v2179
    %2727 = vmatprep.subr.bf16.mxu0 %v2164
    %2728 = vmatpush1.bf16.msra.mxu0 %v2163
    %2729 = vmatprep.subr.bf16.mxu0 0
    %2730 = vmatpush2.bf16.msra.mxu0 0
    %2731 = vmatprep.subr.bf16.mxu0 0
    %2732 = vmatpush2.bf16.msra.mxu0 0
    %2733 = vmatprep.subr.bf16.mxu0 0
    %2734 = vmatpush2.bf16.msra.mxu0 0
    %2735 = vmatprep.subr.bf16.mxu0 0
    %2736 = vmatpush2.bf16.msra.mxu0 0
    %2737 = vmatprep.subr.bf16.mxu0 0
    %2738 = vmatpush2.bf16.msra.mxu0 0
    %2739 = vmatprep.subr.bf16.mxu0 0
    %2740 = vmatpush2.bf16.msra.mxu0 0
    %2741 = vmatprep.subr.bf16.mxu0 0
    %2742 = vmatpush2.bf16.msra.mxu0 0
    %2743 = vmatprep.subr.bf16.mxu0 0
    %2744 = vmatpush2.bf16.msra.mxu0 0
    %2745 = vmatprep.mubr.bf16.mxu0 0
    %2746 = vmatmul.mubr.bf16.gmra.mxu0 %v1637
    %v2747 = vpop.f32.mrf.mxu0
    %v2748 = vadd.f32 0.0, %v2747
    %v2749 = vpop.f32.mrf.mxu0
    %v2750 = vadd.f32 0.0, %v2749
    %v2751 = vpop.f32.mrf.mxu0
    %v2752 = vadd.f32 0.0, %v2751
    %v2753 = vpop.f32.mrf.mxu0
    %v2754 = vadd.f32 0.0, %v2753
    %2755 = vmatprep.mubr.bf16.mxu0 0
    %2756 = vmatmul.mubr.bf16.gmra.mxu0 %v1638
    %v2757 = vpop.f32.mrf.mxu0
    %v2758 = vadd.f32 0.0, %v2757
    %v2759 = vpop.f32.mrf.mxu0
    %v2760 = vadd.f32 0.0, %v2759
    %v2761 = vpop.f32.mrf.mxu0
    %v2762 = vpop.f32.mrf.mxu0
    %2763 = vdwg.mxu0
    %2764 = vmatprep.subr.bf16.mxu0 %v2278
    %2765 = vmatpush1.bf16.msra.mxu0 %v2277
    %2766 = vmatprep.subr.bf16.mxu0 %v2262
    %2767 = vmatpush1.bf16.msra.mxu0 %v2261
    %2768 = vmatprep.subr.bf16.mxu0 %v2246
    %2769 = vmatpush1.bf16.msra.mxu0 %v2245
    %2770 = vmatprep.subr.bf16.mxu0 %v2230
    %2771 = vmatpush1.bf16.msra.mxu0 %v2229
    %2772 = vmatprep.subr.bf16.mxu0 %v2214
    %2773 = vmatpush1.bf16.msra.mxu0 %v2213
    %2774 = vmatprep.subr.bf16.mxu0 %v2198
    %2775 = vmatpush1.bf16.msra.mxu0 %v2197
    %2776 = vmatprep.subr.bf16.mxu0 %v2182
    %2777 = vmatpush1.bf16.msra.mxu0 %v2181
    %2778 = vmatprep.subr.bf16.mxu0 %v2166
    %2779 = vmatpush1.bf16.msra.mxu0 %v2165
    %2780 = vmatprep.subr.bf16.mxu0 0
    %2781 = vmatpush2.bf16.msra.mxu0 0
    %2782 = vmatprep.subr.bf16.mxu0 0
    %2783 = vmatpush2.bf16.msra.mxu0 0
    %2784 = vmatprep.subr.bf16.mxu0 0
    %2785 = vmatpush2.bf16.msra.mxu0 0
    %2786 = vmatprep.subr.bf16.mxu0 0
    %2787 = vmatpush2.bf16.msra.mxu0 0
    %2788 = vmatprep.subr.bf16.mxu0 0
    %2789 = vmatpush2.bf16.msra.mxu0 0
    %2790 = vmatprep.subr.bf16.mxu0 0
    %2791 = vmatpush2.bf16.msra.mxu0 0
    %2792 = vmatprep.subr.bf16.mxu0 0
    %2793 = vmatpush2.bf16.msra.mxu0 0
    %2794 = vmatprep.subr.bf16.mxu0 0
    %2795 = vmatpush2.bf16.msra.mxu0 0
    %2796 = vmatprep.mubr.bf16.mxu0 0
    %2797 = vmatmul.mubr.bf16.gmra.mxu0 %v1637
    %v2798 = vpop.f32.mrf.mxu0
    %v2799 = vadd.f32 0.0, %v2798
    %v2800 = vpop.f32.mrf.mxu0
    %v2801 = vadd.f32 0.0, %v2800
    %v2802 = vpop.f32.mrf.mxu0
    %v2803 = vadd.f32 0.0, %v2802
    %v2804 = vpop.f32.mrf.mxu0
    %v2805 = vadd.f32 0.0, %v2804
    %2806 = vmatprep.mubr.bf16.mxu0 0
    %2807 = vmatmul.mubr.bf16.gmra.mxu0 %v1638
    %v2808 = vpop.f32.mrf.mxu0
    %v2809 = vadd.f32 0.0, %v2808
    %v2810 = vpop.f32.mrf.mxu0
    %v2811 = vadd.f32 0.0, %v2810
    %v2812 = vpop.f32.mrf.mxu0
    %v2813 = vpop.f32.mrf.mxu0
    %2814 = vdwg.mxu0
    %v2815 = vld [vmem:[%s4] sm:$0xff]
    %v2817 = vlaneseq
    %v2818 = vshrl.u32 %v2817, 7
    %v2819 = vsub.s32 0, %v2818
    %v2820 = vrot.slane %v2815, %v2819
    %v2821 = vlaneseq
    %v2822 = vshrl.u32 %v2821, 7
    %v2823 = vsub.s32 1, %v2822
    %v2824 = vrot.slane %v2815, %v2823
    %v2825 = vlaneseq
    %v2826 = vshrl.u32 %v2825, 7
    %v2827 = vsub.s32 2, %v2826
    %v2828 = vrot.slane %v2815, %v2827
    %v2829 = vlaneseq
    %v2830 = vshrl.u32 %v2829, 7
    %v2831 = vsub.s32 3, %v2830
    %v2832 = vrot.slane %v2815, %v2831
    %v2833 = vlaneseq
    %v2834 = vshrl.u32 %v2833, 7
    %v2835 = vsub.s32 4, %v2834
    %v2836 = vrot.slane %v2815, %v2835
    %v2837 = vlaneseq
    %v2838 = vshrl.u32 %v2837, 7
    %v2839 = vsub.s32 5, %v2838
    %v2840 = vrot.slane %v2815, %v2839
    %v2841 = vlaneseq
    %v2842 = vshrl.u32 %v2841, 7
    %v2843 = vsub.s32 6, %v2842
    %v2844 = vrot.slane %v2815, %v2843
    %v2845 = vlaneseq
    %v2846 = vshrl.u32 %v2845, 7
    %v2847 = vsub.s32 7, %v2846
    %v2848 = vrot.slane %v2815, %v2847
    %v2857 = vadd.f32 %v2442, %v2820
    %v2858 = vadd.f32 %v2444, %v2824
    %v2859 = vadd.f32 %v2493, %v2828
    %v2860 = vadd.f32 %v2495, %v2832
    %v2861 = vadd.f32 %v2544, %v2836
    %v2862 = vadd.f32 %v2546, %v2840
    %v2863 = vadd.f32 %v2595, %v2844
    %v2864 = vadd.f32 %v2597, %v2848
    %v2865 = vadd.f32 %v2446, %v2820
    %v2866 = vadd.f32 %v2448, %v2824
    %v2867 = vadd.f32 %v2497, %v2828
    %v2868 = vadd.f32 %v2499, %v2832
    %v2869 = vadd.f32 %v2548, %v2836
    %v2870 = vadd.f32 %v2550, %v2840
    %v2871 = vadd.f32 %v2599, %v2844
    %v2872 = vadd.f32 %v2601, %v2848
    %v2873 = vadd.f32 %v2452, %v2820
    %v2874 = vadd.f32 %v2454, %v2824
    %v2875 = vadd.f32 %v2503, %v2828
    %v2876 = vadd.f32 %v2505, %v2832
    %v2877 = vadd.f32 %v2554, %v2836
    %v2878 = vadd.f32 %v2556, %v2840
    %v2879 = vadd.f32 %v2605, %v2844
    %v2880 = vadd.f32 %v2607, %v2848
    %v2881 = vld [vmem:[%s5] sm:$0xff]
    %v2883 = vlaneseq
    %v2884 = vshrl.u32 %v2883, 7
    %v2885 = vsub.s32 0, %v2884
    %v2886 = vrot.slane %v2881, %v2885
    %v2887 = vlaneseq
    %v2888 = vshrl.u32 %v2887, 7
    %v2889 = vsub.s32 1, %v2888
    %v2890 = vrot.slane %v2881, %v2889
    %v2891 = vlaneseq
    %v2892 = vshrl.u32 %v2891, 7
    %v2893 = vsub.s32 2, %v2892
    %v2894 = vrot.slane %v2881, %v2893
    %v2895 = vlaneseq
    %v2896 = vshrl.u32 %v2895, 7
    %v2897 = vsub.s32 3, %v2896
    %v2898 = vrot.slane %v2881, %v2897
    %v2899 = vlaneseq
    %v2900 = vshrl.u32 %v2899, 7
    %v2901 = vsub.s32 4, %v2900
    %v2902 = vrot.slane %v2881, %v2901
    %v2903 = vlaneseq
    %v2904 = vshrl.u32 %v2903, 7
    %v2905 = vsub.s32 5, %v2904
    %v2906 = vrot.slane %v2881, %v2905
    %v2907 = vlaneseq
    %v2908 = vshrl.u32 %v2907, 7
    %v2909 = vsub.s32 6, %v2908
    %v2910 = vrot.slane %v2881, %v2909
    %v2911 = vlaneseq
    %v2912 = vshrl.u32 %v2911, 7
    %v2913 = vsub.s32 7, %v2912
    %v2914 = vrot.slane %v2881, %v2913
    %v2923 = vadd.f32 %v2646, %v2886
    %v2924 = vadd.f32 %v2648, %v2890
    %v2925 = vadd.f32 %v2697, %v2894
    %v2926 = vadd.f32 %v2699, %v2898
    %v2927 = vadd.f32 %v2748, %v2902
    %v2928 = vadd.f32 %v2750, %v2906
    %v2929 = vadd.f32 %v2799, %v2910
    %v2930 = vadd.f32 %v2801, %v2914
    %v2931 = vadd.f32 %v2650, %v2886
    %v2932 = vadd.f32 %v2652, %v2890
    %v2933 = vadd.f32 %v2701, %v2894
    %v2934 = vadd.f32 %v2703, %v2898
    %v2935 = vadd.f32 %v2752, %v2902
    %v2936 = vadd.f32 %v2754, %v2906
    %v2937 = vadd.f32 %v2803, %v2910
    %v2938 = vadd.f32 %v2805, %v2914
    %v2939 = vadd.f32 %v2656, %v2886
    %v2940 = vadd.f32 %v2658, %v2890
    %v2941 = vadd.f32 %v2707, %v2894
    %v2942 = vadd.f32 %v2709, %v2898
    %v2943 = vadd.f32 %v2758, %v2902
    %v2944 = vadd.f32 %v2760, %v2906
    %v2945 = vadd.f32 %v2809, %v2910
    %v2946 = vadd.f32 %v2811, %v2914
    %vm2947 = vcmask 1041408
    %v2948 = vsel %vm2947, %v2857, %v2939
    %v2949 = vsel %vm2947, %v2858, %v2940
    %v2950 = vsel %vm2947, %v2859, %v2941
    %v2951 = vsel %vm2947, %v2860, %v2942
    %v2952 = vsel %vm2947, %v2861, %v2943
    %v2953 = vsel %vm2947, %v2862, %v2944
    %v2954 = vsel %vm2947, %v2863, %v2945
    %v2955 = vsel %vm2947, %v2864, %v2946
    %v2964 = vcombine.low %v2948, %v2949
    %v2965 = vcombine.low %v2950, %v2951
    %v2966 = vcombine.low %v2952, %v2953
    %v2967 = vcombine.low %v2954, %v2955
    %2972 = vst [vmem:[#allocation2] sm:$0xff] %v2964
    %2973 = vst [vmem:[#allocation2 + $0x8] sm:$0xff] %v2965
    %2974 = vst [vmem:[#allocation2 + $0x10] sm:$0xff] %v2966
    %2975 = vst [vmem:[#allocation2 + $0x18] sm:$0xff] %v2967
    %v2984 = vrot.slane %v2857, 2
    %v2985 = vrot.slane %v2858, 2
    %v2986 = vrot.slane %v2859, 2
    %v2987 = vrot.slane %v2860, 2
    %v2988 = vrot.slane %v2861, 2
    %v2989 = vrot.slane %v2862, 2
    %v2990 = vrot.slane %v2863, 2
    %v2991 = vrot.slane %v2864, 2
    %v3008 = vrot.slane %v2939, 6
    %v3009 = vrot.slane %v2940, 6
    %v3010 = vrot.slane %v2941, 6
    %v3011 = vrot.slane %v2942, 6
    %v3012 = vrot.slane %v2943, 6
    %v3013 = vrot.slane %v2944, 6
    %v3014 = vrot.slane %v2945, 6
    %v3015 = vrot.slane %v2946, 6
    %v3024 = vsel %vm2947, %v2984, %v3008
    %v3025 = vsel %vm2947, %v2985, %v3009
    %v3026 = vsel %vm2947, %v2986, %v3010
    %v3027 = vsel %vm2947, %v2987, %v3011
    %v3028 = vsel %vm2947, %v2988, %v3012
    %v3029 = vsel %vm2947, %v2989, %v3013
    %v3030 = vsel %vm2947, %v2990, %v3014
    %v3031 = vsel %vm2947, %v2991, %v3015
    %v3040 = vcombine.low %v3024, %v3025
    %v3041 = vcombine.low %v3026, %v3027
    %v3042 = vcombine.low %v3028, %v3029
    %v3043 = vcombine.low %v3030, %v3031
    %s3048 = scalar_lea.vmem [#allocation2], 32
    %3049 = vst [vmem:[%s3048] sm:$0xff] %v3040
    %3050 = vst [vmem:[%s3048 + $0x8] sm:$0xff] %v3041
    %3051 = vst [vmem:[%s3048 + $0x10] sm:$0xff] %v3042
    %3052 = vst [vmem:[%s3048 + $0x18] sm:$0xff] %v3043
    %v3053 = vrot.slane %v2857, 4
    %v3054 = vrot.slane %v2858, 4
    %v3055 = vrot.slane %v2859, 4
    %v3056 = vrot.slane %v2860, 4
    %v3057 = vrot.slane %v2861, 4
    %v3058 = vrot.slane %v2862, 4
    %v3059 = vrot.slane %v2863, 4
    %v3060 = vrot.slane %v2864, 4
    %v3077 = vrot.slane %v2931, 4
    %v3078 = vrot.slane %v2932, 4
    %v3079 = vrot.slane %v2933, 4
    %v3080 = vrot.slane %v2934, 4
    %v3081 = vrot.slane %v2935, 4
    %v3082 = vrot.slane %v2936, 4
    %v3083 = vrot.slane %v2937, 4
    %v3084 = vrot.slane %v2938, 4
    %v3093 = vsel %vm2947, %v3053, %v3077
    %v3094 = vsel %vm2947, %v3054, %v3078
    %v3095 = vsel %vm2947, %v3055, %v3079
    %v3096 = vsel %vm2947, %v3056, %v3080
    %v3097 = vsel %vm2947, %v3057, %v3081
    %v3098 = vsel %vm2947, %v3058, %v3082
    %v3099 = vsel %vm2947, %v3059, %v3083
    %v3100 = vsel %vm2947, %v3060, %v3084
    %v3109 = vcombine.low %v3093, %v3094
    %v3110 = vcombine.low %v3095, %v3096
    %v3111 = vcombine.low %v3097, %v3098
    %v3112 = vcombine.low %v3099, %v3100
    %s3117 = scalar_lea.vmem [#allocation2], 64
    %3118 = vst [vmem:[%s3117] sm:$0xff] %v3109
    %3119 = vst [vmem:[%s3117 + $0x8] sm:$0xff] %v3110
    %3120 = vst [vmem:[%s3117 + $0x10] sm:$0xff] %v3111
    %3121 = vst [vmem:[%s3117 + $0x18] sm:$0xff] %v3112
    %v3122 = vrot.slane %v2857, 6
    %v3123 = vrot.slane %v2858, 6
    %v3124 = vrot.slane %v2859, 6
    %v3125 = vrot.slane %v2860, 6
    %v3126 = vrot.slane %v2861, 6
    %v3127 = vrot.slane %v2862, 6
    %v3128 = vrot.slane %v2863, 6
    %v3129 = vrot.slane %v2864, 6
    %v3138 = vrot.slane %v2931, 2
    %v3139 = vrot.slane %v2932, 2
    %v3140 = vrot.slane %v2933, 2
    %v3141 = vrot.slane %v2934, 2
    %v3142 = vrot.slane %v2935, 2
    %v3143 = vrot.slane %v2936, 2
    %v3144 = vrot.slane %v2937, 2
    %v3145 = vrot.slane %v2938, 2
    %v3154 = vsel %vm2947, %v3122, %v3138
    %v3155 = vsel %vm2947, %v3123, %v3139
    %v3156 = vsel %vm2947, %v3124, %v3140
    %v3157 = vsel %vm2947, %v3125, %v3141
    %v3158 = vsel %vm2947, %v3126, %v3142
    %v3159 = vsel %vm2947, %v3127, %v3143
    %v3160 = vsel %vm2947, %v3128, %v3144
    %v3161 = vsel %vm2947, %v3129, %v3145
    %v3170 = vcombine.low %v3154, %v3155
    %v3171 = vcombine.low %v3156, %v3157
    %v3172 = vcombine.low %v3158, %v3159
    %v3173 = vcombine.low %v3160, %v3161
    %s3178 = scalar_lea.vmem [#allocation2], 96
    %3179 = vst [vmem:[%s3178] sm:$0xff] %v3170
    %3180 = vst [vmem:[%s3178 + $0x8] sm:$0xff] %v3171
    %3181 = vst [vmem:[%s3178 + $0x10] sm:$0xff] %v3172
    %3182 = vst [vmem:[%s3178 + $0x18] sm:$0xff] %v3173
    %v3183 = vsel %vm2947, %v2865, %v2931
    %v3184 = vsel %vm2947, %v2866, %v2932
    %v3185 = vsel %vm2947, %v2867, %v2933
    %v3186 = vsel %vm2947, %v2868, %v2934
    %v3187 = vsel %vm2947, %v2869, %v2935
    %v3188 = vsel %vm2947, %v2870, %v2936
    %v3189 = vsel %vm2947, %v2871, %v2937
    %v3190 = vsel %vm2947, %v2872, %v2938
    %v3199 = vcombine.low %v3183, %v3184
    %v3200 = vcombine.low %v3185, %v3186
    %v3201 = vcombine.low %v3187, %v3188
    %v3202 = vcombine.low %v3189, %v3190
    %s3207 = scalar_lea.vmem [#allocation2], 128
    %3208 = vst [vmem:[%s3207] sm:$0xff] %v3199
    %3209 = vst [vmem:[%s3207 + $0x8] sm:$0xff] %v3200
    %3210 = vst [vmem:[%s3207 + $0x10] sm:$0xff] %v3201
    %3211 = vst [vmem:[%s3207 + $0x18] sm:$0xff] %v3202
    %v3220 = vrot.slane %v2865, 2
    %v3221 = vrot.slane %v2866, 2
    %v3222 = vrot.slane %v2867, 2
    %v3223 = vrot.slane %v2868, 2
    %v3224 = vrot.slane %v2869, 2
    %v3225 = vrot.slane %v2870, 2
    %v3226 = vrot.slane %v2871, 2
    %v3227 = vrot.slane %v2872, 2
    %v3236 = vrot.slane %v2931, 6
    %v3237 = vrot.slane %v2932, 6
    %v3238 = vrot.slane %v2933, 6
    %v3239 = vrot.slane %v2934, 6
    %v3240 = vrot.slane %v2935, 6
    %v3241 = vrot.slane %v2936, 6
    %v3242 = vrot.slane %v2937, 6
    %v3243 = vrot.slane %v2938, 6
    %v3252 = vsel %vm2947, %v3220, %v3236
    %v3253 = vsel %vm2947, %v3221, %v3237
    %v3254 = vsel %vm2947, %v3222, %v3238
    %v3255 = vsel %vm2947, %v3223, %v3239
    %v3256 = vsel %vm2947, %v3224, %v3240
    %v3257 = vsel %vm2947, %v3225, %v3241
    %v3258 = vsel %vm2947, %v3226, %v3242
    %v3259 = vsel %vm2947, %v3227, %v3243
    %v3268 = vcombine.low %v3252, %v3253
    %v3269 = vcombine.low %v3254, %v3255
    %v3270 = vcombine.low %v3256, %v3257
    %v3271 = vcombine.low %v3258, %v3259
    %s3276 = scalar_lea.vmem [#allocation2], 160
    %3277 = vst [vmem:[%s3276] sm:$0xff] %v3268
    %3278 = vst [vmem:[%s3276 + $0x8] sm:$0xff] %v3269
    %3279 = vst [vmem:[%s3276 + $0x10] sm:$0xff] %v3270
    %3280 = vst [vmem:[%s3276 + $0x18] sm:$0xff] %v3271
    %v3281 = vrot.slane %v2865, 4
    %v3282 = vrot.slane %v2866, 4
    %v3283 = vrot.slane %v2867, 4
    %v3284 = vrot.slane %v2868, 4
    %v3285 = vrot.slane %v2869, 4
    %v3286 = vrot.slane %v2870, 4
    %v3287 = vrot.slane %v2871, 4
    %v3288 = vrot.slane %v2872, 4
    %v3305 = vrot.slane %v2923, 4
    %v3306 = vrot.slane %v2924, 4
    %v3307 = vrot.slane %v2925, 4
    %v3308 = vrot.slane %v2926, 4
    %v3309 = vrot.slane %v2927, 4
    %v3310 = vrot.slane %v2928, 4
    %v3311 = vrot.slane %v2929, 4
    %v3312 = vrot.slane %v2930, 4
    %v3321 = vsel %vm2947, %v3281, %v3305
    %v3322 = vsel %vm2947, %v3282, %v3306
    %v3323 = vsel %vm2947, %v3283, %v3307
    %v3324 = vsel %vm2947, %v3284, %v3308
    %v3325 = vsel %vm2947, %v3285, %v3309
    %v3326 = vsel %vm2947, %v3286, %v3310
    %v3327 = vsel %vm2947, %v3287, %v3311
    %v3328 = vsel %vm2947, %v3288, %v3312
    %v3337 = vcombine.low %v3321, %v3322
    %v3338 = vcombine.low %v3323, %v3324
    %v3339 = vcombine.low %v3325, %v3326
    %v3340 = vcombine.low %v3327, %v3328
    %s3345 = scalar_lea.vmem [#allocation2], 192
    %3346 = vst [vmem:[%s3345] sm:$0xff] %v3337
    %3347 = vst [vmem:[%s3345 + $0x8] sm:$0xff] %v3338
    %3348 = vst [vmem:[%s3345 + $0x10] sm:$0xff] %v3339
    %3349 = vst [vmem:[%s3345 + $0x18] sm:$0xff] %v3340
    %v3350 = vrot.slane %v2865, 6
    %v3351 = vrot.slane %v2866, 6
    %v3352 = vrot.slane %v2867, 6
    %v3353 = vrot.slane %v2868, 6
    %v3354 = vrot.slane %v2869, 6
    %v3355 = vrot.slane %v2870, 6
    %v3356 = vrot.slane %v2871, 6
    %v3357 = vrot.slane %v2872, 6
    %v3366 = vrot.slane %v2923, 2
    %v3367 = vrot.slane %v2924, 2
    %v3368 = vrot.slane %v2925, 2
    %v3369 = vrot.slane %v2926, 2
    %v3370 = vrot.slane %v2927, 2
    %v3371 = vrot.slane %v2928, 2
    %v3372 = vrot.slane %v2929, 2
    %v3373 = vrot.slane %v2930, 2
    %v3382 = vsel %vm2947, %v3350, %v3366
    %v3383 = vsel %vm2947, %v3351, %v3367
    %v3384 = vsel %vm2947, %v3352, %v3368
    %v3385 = vsel %vm2947, %v3353, %v3369
    %v3386 = vsel %vm2947, %v3354, %v3370
    %v3387 = vsel %vm2947, %v3355, %v3371
    %v3388 = vsel %vm2947, %v3356, %v3372
    %v3389 = vsel %vm2947, %v3357, %v3373
    %v3398 = vcombine.low %v3382, %v3383
    %v3399 = vcombine.low %v3384, %v3385
    %v3400 = vcombine.low %v3386, %v3387
    %v3401 = vcombine.low %v3388, %v3389
    %s3406 = scalar_lea.vmem [#allocation2], 224
    %3407 = vst [vmem:[%s3406] sm:$0xff] %v3398
    %3408 = vst [vmem:[%s3406 + $0x8] sm:$0xff] %v3399
    %3409 = vst [vmem:[%s3406 + $0x10] sm:$0xff] %v3400
    %3410 = vst [vmem:[%s3406 + $0x18] sm:$0xff] %v3401
    %v3411 = vsel %vm2947, %v2873, %v2923
    %v3412 = vsel %vm2947, %v2874, %v2924
    %v3413 = vsel %vm2947, %v2875, %v2925
    %v3414 = vsel %vm2947, %v2876, %v2926
    %v3415 = vsel %vm2947, %v2877, %v2927
    %v3416 = vsel %vm2947, %v2878, %v2928
    %v3417 = vsel %vm2947, %v2879, %v2929
    %v3418 = vsel %vm2947, %v2880, %v2930
    %v3427 = vcombine.low %v3411, %v3412
    %v3428 = vcombine.low %v3413, %v3414
    %v3429 = vcombine.low %v3415, %v3416
    %v3430 = vcombine.low %v3417, %v3418
    %s3435 = scalar_lea.vmem [#allocation2], 256
    %3436 = vst [vmem:[%s3435] sm:$0xff] %v3427
    %3437 = vst [vmem:[%s3435 + $0x8] sm:$0xff] %v3428
    %3438 = vst [vmem:[%s3435 + $0x10] sm:$0xff] %v3429
    %3439 = vst [vmem:[%s3435 + $0x18] sm:$0xff] %v3430
    %v3448 = vrot.slane %v2873, 2
    %v3449 = vrot.slane %v2874, 2
    %v3450 = vrot.slane %v2875, 2
    %v3451 = vrot.slane %v2876, 2
    %v3452 = vrot.slane %v2877, 2
    %v3453 = vrot.slane %v2878, 2
    %v3454 = vrot.slane %v2879, 2
    %v3455 = vrot.slane %v2880, 2
    %v3464 = vrot.slane %v2923, 6
    %v3465 = vrot.slane %v2924, 6
    %v3466 = vrot.slane %v2925, 6
    %v3467 = vrot.slane %v2926, 6
    %v3468 = vrot.slane %v2927, 6
    %v3469 = vrot.slane %v2928, 6
    %v3470 = vrot.slane %v2929, 6
    %v3471 = vrot.slane %v2930, 6
    %v3480 = vsel %vm2947, %v3448, %v3464
    %v3481 = vsel %vm2947, %v3449, %v3465
    %v3482 = vsel %vm2947, %v3450, %v3466
    %v3483 = vsel %vm2947, %v3451, %v3467
    %v3484 = vsel %vm2947, %v3452, %v3468
    %v3485 = vsel %vm2947, %v3453, %v3469
    %v3486 = vsel %vm2947, %v3454, %v3470
    %v3487 = vsel %vm2947, %v3455, %v3471
    %v3496 = vcombine.low %v3480, %v3481
    %v3497 = vcombine.low %v3482, %v3483
    %v3498 = vcombine.low %v3484, %v3485
    %v3499 = vcombine.low %v3486, %v3487
    %s3504 = scalar_lea.vmem [#allocation2], 288
    %3505 = vst [vmem:[%s3504] sm:$0xff] %v3496
    %3506 = vst [vmem:[%s3504 + $0x8] sm:$0xff] %v3497
    %3507 = vst [vmem:[%s3504 + $0x10] sm:$0xff] %v3498
    %3508 = vst [vmem:[%s3504 + $0x18] sm:$0xff] %v3499
    %s3509 = smul.u32 4, 32
    %s3510 = smul.u32 %s3509, 16
    %s3511 = sshll.u32 %s3510, 4
    %3512 = dma.done [#allocation6], %s3511
    %v3513 = vlaneseq
    %v3514 = vshrl.u32 %v3513, 7
    %vm3515 = vcmp.lt.s32.totalorder %v3514, 2
    %v3516 = vld [vmem:[#allocation3] sm:$0xff]
    %v3517 = vld [vmem:[#allocation3 + $0x8] sm:$0xff]
    %v3518 = vld [vmem:[#allocation3 + $0x10] sm:$0xff]
    %v3519 = vld [vmem:[#allocation3 + $0x18] sm:$0xff]
    %v3520 = vld [vmem:[#allocation3 + $0x20] sm:$0xff]
    %v3521 = vld [vmem:[#allocation3 + $0x28] sm:$0xff]
    %v3522 = vld [vmem:[#allocation3 + $0x30] sm:$0xff]
    %v3523 = vld [vmem:[#allocation3 + $0x38] sm:$0xff]
    %v3524 = vld [vmem:[#allocation3 + $0x40] sm:$0xff]
    %v3525 = vld [vmem:[#allocation3 + $0x48] sm:$0xff]
    %v3526 = vld [vmem:[#allocation3 + $0x50] sm:$0xff]
    %v3527 = vld [vmem:[#allocation3 + $0x58] sm:$0xff]
    %v3528 = vld [vmem:[#allocation3 + $0x60] sm:$0xff]
    %v3529 = vld [vmem:[#allocation3 + $0x68] sm:$0xff]
    %v3530 = vld [vmem:[#allocation3 + $0x70] sm:$0xff]
    %v3531 = vld [vmem:[#allocation3 + $0x78] sm:$0xff]
    %v3532 = vld [vmem:[#allocation3 + $0x80] sm:$0xff]
    %v3533 = vld [vmem:[#allocation3 + $0x88] sm:$0xff]
    %v3534 = vld [vmem:[#allocation3 + $0x90] sm:$0xff]
    %v3535 = vld [vmem:[#allocation3 + $0x98] sm:$0xff]
    %v3536 = vld [vmem:[#allocation3 + $0xa0] sm:$0xff]
    %v3537 = vld [vmem:[#allocation3 + $0xa8] sm:$0xff]
    %v3538 = vld [vmem:[#allocation3 + $0xb0] sm:$0xff]
    %v3539 = vld [vmem:[#allocation3 + $0xb8] sm:$0xff]
    %v3540 = vld [vmem:[#allocation3 + $0xc0] sm:$0xff]
    %v3541 = vld [vmem:[#allocation3 + $0xc8] sm:$0xff]
    %v3542 = vld [vmem:[#allocation3 + $0xd0] sm:$0xff]
    %v3543 = vld [vmem:[#allocation3 + $0xd8] sm:$0xff]
    %v3544 = vld [vmem:[#allocation3 + $0xe0] sm:$0xff]
    %v3545 = vld [vmem:[#allocation3 + $0xe8] sm:$0xff]
    %v3546 = vld [vmem:[#allocation3 + $0xf0] sm:$0xff]
    %v3547 = vld [vmem:[#allocation3 + $0xf8] sm:$0xff]
    %v3548 = vld [vmem:[#allocation3 + $0x100] sm:$0xff]
    %v3549 = vld [vmem:[#allocation3 + $0x108] sm:$0xff]
    %v3550 = vld [vmem:[#allocation3 + $0x110] sm:$0xff]
    %v3551 = vld [vmem:[#allocation3 + $0x118] sm:$0xff]
    %v3552 = vld [vmem:[#allocation3 + $0x120] sm:$0xff]
    %v3553 = vld [vmem:[#allocation3 + $0x128] sm:$0xff]
    %v3554 = vld [vmem:[#allocation3 + $0x130] sm:$0xff]
    %v3555 = vld [vmem:[#allocation3 + $0x138] sm:$0xff]
    %v3556 = vld [vmem:[#allocation3 + $0x140] sm:$0xff]
    %v3557 = vld [vmem:[#allocation3 + $0x148] sm:$0xff]
    %v3558 = vld [vmem:[#allocation3 + $0x150] sm:$0xff]
    %v3559 = vld [vmem:[#allocation3 + $0x158] sm:$0xff]
    %v3560 = vld [vmem:[#allocation3 + $0x160] sm:$0xff]
    %v3561 = vld [vmem:[#allocation3 + $0x168] sm:$0xff]
    %v3562 = vld [vmem:[#allocation3 + $0x170] sm:$0xff]
    %v3563 = vld [vmem:[#allocation3 + $0x178] sm:$0xff]
    %v3564 = vld [vmem:[#allocation3 + $0x180] sm:$0xff]
    %v3565 = vld [vmem:[#allocation3 + $0x188] sm:$0xff]
    %v3566 = vld [vmem:[#allocation3 + $0x190] sm:$0xff]
    %v3567 = vld [vmem:[#allocation3 + $0x198] sm:$0xff]
    %v3568 = vld [vmem:[#allocation3 + $0x1a0] sm:$0xff]
    %v3569 = vld [vmem:[#allocation3 + $0x1a8] sm:$0xff]
    %v3570 = vld [vmem:[#allocation3 + $0x1b0] sm:$0xff]
    %v3571 = vld [vmem:[#allocation3 + $0x1b8] sm:$0xff]
    %v3572 = vld [vmem:[#allocation3 + $0x1c0] sm:$0xff]
    %v3573 = vld [vmem:[#allocation3 + $0x1c8] sm:$0xff]
    %v3574 = vld [vmem:[#allocation3 + $0x1d0] sm:$0xff]
    %v3575 = vld [vmem:[#allocation3 + $0x1d8] sm:$0xff]
    %v3576 = vld [vmem:[#allocation3 + $0x1e0] sm:$0xff]
    %v3577 = vld [vmem:[#allocation3 + $0x1e8] sm:$0xff]
    %v3578 = vld [vmem:[#allocation3 + $0x1f0] sm:$0xff]
    %v3579 = vld [vmem:[#allocation3 + $0x1f8] sm:$0xff]
    %v3580 = vld [vmem:[#allocation3 + $0x200] sm:$0xff]
    %v3581 = vld [vmem:[#allocation3 + $0x208] sm:$0xff]
    %v3582 = vld [vmem:[#allocation3 + $0x210] sm:$0xff]
    %v3583 = vld [vmem:[#allocation3 + $0x218] sm:$0xff]
    %v3584 = vld [vmem:[#allocation3 + $0x220] sm:$0xff]
    %v3585 = vld [vmem:[#allocation3 + $0x228] sm:$0xff]
    %v3586 = vld [vmem:[#allocation3 + $0x230] sm:$0xff]
    %v3587 = vld [vmem:[#allocation3 + $0x238] sm:$0xff]
    %v3588 = vld [vmem:[#allocation3 + $0x240] sm:$0xff]
    %v3589 = vld [vmem:[#allocation3 + $0x248] sm:$0xff]
    %v3590 = vld [vmem:[#allocation3 + $0x250] sm:$0xff]
    %v3591 = vld [vmem:[#allocation3 + $0x258] sm:$0xff]
    %v3592 = vld [vmem:[#allocation3 + $0x260] sm:$0xff]
    %v3593 = vld [vmem:[#allocation3 + $0x268] sm:$0xff]
    %v3594 = vld [vmem:[#allocation3 + $0x270] sm:$0xff]
    %v3595 = vld [vmem:[#allocation3 + $0x278] sm:$0xff]
    %v3596 = vld [vmem:[#allocation3 + $0x280] sm:$0xff]
    %v3597 = vld [vmem:[#allocation3 + $0x288] sm:$0xff]
    %v3598 = vld [vmem:[#allocation3 + $0x290] sm:$0xff]
    %v3599 = vld [vmem:[#allocation3 + $0x298] sm:$0xff]
    %v3600 = vld [vmem:[#allocation3 + $0x2a0] sm:$0xff]
    %v3601 = vld [vmem:[#allocation3 + $0x2a8] sm:$0xff]
    %v3602 = vld [vmem:[#allocation3 + $0x2b0] sm:$0xff]
    %v3603 = vld [vmem:[#allocation3 + $0x2b8] sm:$0xff]
    %v3604 = vld [vmem:[#allocation3 + $0x2c0] sm:$0xff]
    %v3605 = vld [vmem:[#allocation3 + $0x2c8] sm:$0xff]
    %v3606 = vld [vmem:[#allocation3 + $0x2d0] sm:$0xff]
    %v3607 = vld [vmem:[#allocation3 + $0x2d8] sm:$0xff]
    %v3608 = vld [vmem:[#allocation3 + $0x2e0] sm:$0xff]
    %v3609 = vld [vmem:[#allocation3 + $0x2e8] sm:$0xff]
    %v3610 = vld [vmem:[#allocation3 + $0x2f0] sm:$0xff]
    %v3611 = vld [vmem:[#allocation3 + $0x2f8] sm:$0xff]
    %v3612 = vld [vmem:[#allocation3 + $0x300] sm:$0xff]
    %v3613 = vld [vmem:[#allocation3 + $0x308] sm:$0xff]
    %v3614 = vld [vmem:[#allocation3 + $0x310] sm:$0xff]
    %v3615 = vld [vmem:[#allocation3 + $0x318] sm:$0xff]
    %v3616 = vld [vmem:[#allocation3 + $0x320] sm:$0xff]
    %v3617 = vld [vmem:[#allocation3 + $0x328] sm:$0xff]
    %v3618 = vld [vmem:[#allocation3 + $0x330] sm:$0xff]
    %v3619 = vld [vmem:[#allocation3 + $0x338] sm:$0xff]
    %v3620 = vld [vmem:[#allocation3 + $0x340] sm:$0xff]
    %v3621 = vld [vmem:[#allocation3 + $0x348] sm:$0xff]
    %v3622 = vld [vmem:[#allocation3 + $0x350] sm:$0xff]
    %v3623 = vld [vmem:[#allocation3 + $0x358] sm:$0xff]
    %v3624 = vld [vmem:[#allocation3 + $0x360] sm:$0xff]
    %v3625 = vld [vmem:[#allocation3 + $0x368] sm:$0xff]
    %v3626 = vld [vmem:[#allocation3 + $0x370] sm:$0xff]
    %v3627 = vld [vmem:[#allocation3 + $0x378] sm:$0xff]
    %v3628 = vld [vmem:[#allocation3 + $0x380] sm:$0xff]
    %v3629 = vld [vmem:[#allocation3 + $0x388] sm:$0xff]
    %v3630 = vld [vmem:[#allocation3 + $0x390] sm:$0xff]
    %v3631 = vld [vmem:[#allocation3 + $0x398] sm:$0xff]
    %v3632 = vld [vmem:[#allocation3 + $0x3a0] sm:$0xff]
    %v3633 = vld [vmem:[#allocation3 + $0x3a8] sm:$0xff]
    %v3634 = vld [vmem:[#allocation3 + $0x3b0] sm:$0xff]
    %v3635 = vld [vmem:[#allocation3 + $0x3b8] sm:$0xff]
    %v3636 = vld [vmem:[#allocation3 + $0x3c0] sm:$0xff]
    %v3637 = vld [vmem:[#allocation3 + $0x3c8] sm:$0xff]
    %v3638 = vld [vmem:[#allocation3 + $0x3d0] sm:$0xff]
    %v3639 = vld [vmem:[#allocation3 + $0x3d8] sm:$0xff]
    %v3640 = vld [vmem:[#allocation3 + $0x3e0] sm:$0xff]
    %v3641 = vld [vmem:[#allocation3 + $0x3e8] sm:$0xff]
    %v3642 = vld [vmem:[#allocation3 + $0x3f0] sm:$0xff]
    %v3643 = vld [vmem:[#allocation3 + $0x3f8] sm:$0xff]
    %v3644 = vld [vmem:[#allocation3 + $0x400] sm:$0xff]
    %v3645 = vld [vmem:[#allocation3 + $0x408] sm:$0xff]
    %v3646 = vld [vmem:[#allocation3 + $0x410] sm:$0xff]
    %v3647 = vld [vmem:[#allocation3 + $0x418] sm:$0xff]
    %v3648 = vld [vmem:[#allocation3 + $0x420] sm:$0xff]
    %v3649 = vld [vmem:[#allocation3 + $0x428] sm:$0xff]
    %v3650 = vld [vmem:[#allocation3 + $0x430] sm:$0xff]
    %v3651 = vld [vmem:[#allocation3 + $0x438] sm:$0xff]
    %v3652 = vld [vmem:[#allocation3 + $0x440] sm:$0xff]
    %v3653 = vld [vmem:[#allocation3 + $0x448] sm:$0xff]
    %v3654 = vld [vmem:[#allocation3 + $0x450] sm:$0xff]
    %v3655 = vld [vmem:[#allocation3 + $0x458] sm:$0xff]
    %v3656 = vld [vmem:[#allocation3 + $0x460] sm:$0xff]
    %v3657 = vld [vmem:[#allocation3 + $0x468] sm:$0xff]
    %v3658 = vld [vmem:[#allocation3 + $0x470] sm:$0xff]
    %v3659 = vld [vmem:[#allocation3 + $0x478] sm:$0xff]
    %v3660 = vld [vmem:[#allocation3 + $0x480] sm:$0xff]
    %v3661 = vld [vmem:[#allocation3 + $0x488] sm:$0xff]
    %v3662 = vld [vmem:[#allocation3 + $0x490] sm:$0xff]
    %v3663 = vld [vmem:[#allocation3 + $0x498] sm:$0xff]
    %v3664 = vld [vmem:[#allocation3 + $0x4a0] sm:$0xff]
    %v3665 = vld [vmem:[#allocation3 + $0x4a8] sm:$0xff]
    %v3666 = vld [vmem:[#allocation3 + $0x4b0] sm:$0xff]
    %v3667 = vld [vmem:[#allocation3 + $0x4b8] sm:$0xff]
    %v3668 = vld [vmem:[#allocation3 + $0x4c0] sm:$0xff]
    %v3669 = vld [vmem:[#allocation3 + $0x4c8] sm:$0xff]
    %v3670 = vld [vmem:[#allocation3 + $0x4d0] sm:$0xff]
    %v3671 = vld [vmem:[#allocation3 + $0x4d8] sm:$0xff]
    %v3672 = vld [vmem:[#allocation3 + $0x4e0] sm:$0xff]
    %v3673 = vld [vmem:[#allocation3 + $0x4e8] sm:$0xff]
    %v3674 = vld [vmem:[#allocation3 + $0x4f0] sm:$0xff]
    %v3675 = vld [vmem:[#allocation3 + $0x4f8] sm:$0xff]
    %v3676 = vld [vmem:[#allocation3 + $0x500] sm:$0xff]
    %v3677 = vld [vmem:[#allocation3 + $0x508] sm:$0xff]
    %v3678 = vld [vmem:[#allocation3 + $0x510] sm:$0xff]
    %v3679 = vld [vmem:[#allocation3 + $0x518] sm:$0xff]
    %v3680 = vld [vmem:[#allocation3 + $0x520] sm:$0xff]
    %v3681 = vld [vmem:[#allocation3 + $0x528] sm:$0xff]
    %v3682 = vld [vmem:[#allocation3 + $0x530] sm:$0xff]
    %v3683 = vld [vmem:[#allocation3 + $0x538] sm:$0xff]
    %v3684 = vld [vmem:[#allocation3 + $0x540] sm:$0xff]
    %v3685 = vld [vmem:[#allocation3 + $0x548] sm:$0xff]
    %v3686 = vld [vmem:[#allocation3 + $0x550] sm:$0xff]
    %v3687 = vld [vmem:[#allocation3 + $0x558] sm:$0xff]
    %v3688 = vld [vmem:[#allocation3 + $0x560] sm:$0xff]
    %v3689 = vld [vmem:[#allocation3 + $0x568] sm:$0xff]
    %v3690 = vld [vmem:[#allocation3 + $0x570] sm:$0xff]
    %v3691 = vld [vmem:[#allocation3 + $0x578] sm:$0xff]
    %v3692 = vld [vmem:[#allocation3 + $0x580] sm:$0xff]
    %v3693 = vld [vmem:[#allocation3 + $0x588] sm:$0xff]
    %v3694 = vld [vmem:[#allocation3 + $0x590] sm:$0xff]
    %v3695 = vld [vmem:[#allocation3 + $0x598] sm:$0xff]
    %v3696 = vld [vmem:[#allocation3 + $0x5a0] sm:$0xff]
    %v3697 = vld [vmem:[#allocation3 + $0x5a8] sm:$0xff]
    %v3698 = vld [vmem:[#allocation3 + $0x5b0] sm:$0xff]
    %v3699 = vld [vmem:[#allocation3 + $0x5b8] sm:$0xff]
    %v3700 = vld [vmem:[#allocation3 + $0x5c0] sm:$0xff]
    %v3701 = vld [vmem:[#allocation3 + $0x5c8] sm:$0xff]
    %v3702 = vld [vmem:[#allocation3 + $0x5d0] sm:$0xff]
    %v3703 = vld [vmem:[#allocation3 + $0x5d8] sm:$0xff]
    %v3704 = vld [vmem:[#allocation3 + $0x5e0] sm:$0xff]
    %v3705 = vld [vmem:[#allocation3 + $0x5e8] sm:$0xff]
    %v3706 = vld [vmem:[#allocation3 + $0x5f0] sm:$0xff]
    %v3707 = vld [vmem:[#allocation3 + $0x5f8] sm:$0xff]
    %v3708 = vld [vmem:[#allocation3 + $0x600] sm:$0xff]
    %v3709 = vld [vmem:[#allocation3 + $0x608] sm:$0xff]
    %v3710 = vld [vmem:[#allocation3 + $0x610] sm:$0xff]
    %v3711 = vld [vmem:[#allocation3 + $0x618] sm:$0xff]
    %v3712 = vld [vmem:[#allocation3 + $0x620] sm:$0xff]
    %v3713 = vld [vmem:[#allocation3 + $0x628] sm:$0xff]
    %v3714 = vld [vmem:[#allocation3 + $0x630] sm:$0xff]
    %v3715 = vld [vmem:[#allocation3 + $0x638] sm:$0xff]
    %v3716 = vld [vmem:[#allocation3 + $0x640] sm:$0xff]
    %v3717 = vld [vmem:[#allocation3 + $0x648] sm:$0xff]
    %v3718 = vld [vmem:[#allocation3 + $0x650] sm:$0xff]
    %v3719 = vld [vmem:[#allocation3 + $0x658] sm:$0xff]
    %v3720 = vld [vmem:[#allocation3 + $0x660] sm:$0xff]
    %v3721 = vld [vmem:[#allocation3 + $0x668] sm:$0xff]
    %v3722 = vld [vmem:[#allocation3 + $0x670] sm:$0xff]
    %v3723 = vld [vmem:[#allocation3 + $0x678] sm:$0xff]
    %v3724 = vld [vmem:[#allocation3 + $0x680] sm:$0xff]
    %v3725 = vld [vmem:[#allocation3 + $0x688] sm:$0xff]
    %v3726 = vld [vmem:[#allocation3 + $0x690] sm:$0xff]
    %v3727 = vld [vmem:[#allocation3 + $0x698] sm:$0xff]
    %v3728 = vld [vmem:[#allocation3 + $0x6a0] sm:$0xff]
    %v3729 = vld [vmem:[#allocation3 + $0x6a8] sm:$0xff]
    %v3730 = vld [vmem:[#allocation3 + $0x6b0] sm:$0xff]
    %v3731 = vld [vmem:[#allocation3 + $0x6b8] sm:$0xff]
    %v3732 = vld [vmem:[#allocation3 + $0x6c0] sm:$0xff]
    %v3733 = vld [vmem:[#allocation3 + $0x6c8] sm:$0xff]
    %v3734 = vld [vmem:[#allocation3 + $0x6d0] sm:$0xff]
    %v3735 = vld [vmem:[#allocation3 + $0x6d8] sm:$0xff]
    %v3736 = vld [vmem:[#allocation3 + $0x6e0] sm:$0xff]
    %v3737 = vld [vmem:[#allocation3 + $0x6e8] sm:$0xff]
    %v3738 = vld [vmem:[#allocation3 + $0x6f0] sm:$0xff]
    %v3739 = vld [vmem:[#allocation3 + $0x6f8] sm:$0xff]
    %v3740 = vld [vmem:[#allocation3 + $0x700] sm:$0xff]
    %v3741 = vld [vmem:[#allocation3 + $0x708] sm:$0xff]
    %v3742 = vld [vmem:[#allocation3 + $0x710] sm:$0xff]
    %v3743 = vld [vmem:[#allocation3 + $0x718] sm:$0xff]
    %v3744 = vld [vmem:[#allocation3 + $0x720] sm:$0xff]
    %v3745 = vld [vmem:[#allocation3 + $0x728] sm:$0xff]
    %v3746 = vld [vmem:[#allocation3 + $0x730] sm:$0xff]
    %v3747 = vld [vmem:[#allocation3 + $0x738] sm:$0xff]
    %v3748 = vld [vmem:[#allocation3 + $0x740] sm:$0xff]
    %v3749 = vld [vmem:[#allocation3 + $0x748] sm:$0xff]
    %v3750 = vld [vmem:[#allocation3 + $0x750] sm:$0xff]
    %v3751 = vld [vmem:[#allocation3 + $0x758] sm:$0xff]
    %v3752 = vld [vmem:[#allocation3 + $0x760] sm:$0xff]
    %v3753 = vld [vmem:[#allocation3 + $0x768] sm:$0xff]
    %v3754 = vld [vmem:[#allocation3 + $0x770] sm:$0xff]
    %v3755 = vld [vmem:[#allocation3 + $0x778] sm:$0xff]
    %v3756 = vld [vmem:[#allocation3 + $0x780] sm:$0xff]
    %v3757 = vld [vmem:[#allocation3 + $0x788] sm:$0xff]
    %v3758 = vld [vmem:[#allocation3 + $0x790] sm:$0xff]
    %v3759 = vld [vmem:[#allocation3 + $0x798] sm:$0xff]
    %v3760 = vld [vmem:[#allocation3 + $0x7a0] sm:$0xff]
    %v3761 = vld [vmem:[#allocation3 + $0x7a8] sm:$0xff]
    %v3762 = vld [vmem:[#allocation3 + $0x7b0] sm:$0xff]
    %v3763 = vld [vmem:[#allocation3 + $0x7b8] sm:$0xff]
    %v3764 = vld [vmem:[#allocation3 + $0x7c0] sm:$0xff]
    %v3765 = vld [vmem:[#allocation3 + $0x7c8] sm:$0xff]
    %v3766 = vld [vmem:[#allocation3 + $0x7d0] sm:$0xff]
    %v3767 = vld [vmem:[#allocation3 + $0x7d8] sm:$0xff]
    %v3768 = vld [vmem:[#allocation3 + $0x7e0] sm:$0xff]
    %v3769 = vld [vmem:[#allocation3 + $0x7e8] sm:$0xff]
    %v3770 = vld [vmem:[#allocation3 + $0x7f0] sm:$0xff]
    %v3771 = vld [vmem:[#allocation3 + $0x7f8] sm:$0xff]
    %v4028 = vunpack.c.l.b16 %v3516
    %v4029 = vunpack.c.h.b16 %v3516
    %v4030 = vunpack.c.l.b16 %v3517
    %v4031 = vunpack.c.h.b16 %v3517
    %v4032 = vunpack.c.l.b16 %v3518
    %v4033 = vunpack.c.h.b16 %v3518
    %v4034 = vunpack.c.l.b16 %v3519
    %v4035 = vunpack.c.h.b16 %v3519
    %v4036 = vunpack.c.l.b16 %v3520
    %v4037 = vunpack.c.h.b16 %v3520
    %v4038 = vunpack.c.l.b16 %v3521
    %v4039 = vunpack.c.h.b16 %v3521
    %v4040 = vunpack.c.l.b16 %v3522
    %v4041 = vunpack.c.h.b16 %v3522
    %v4042 = vunpack.c.l.b16 %v3523
    %v4043 = vunpack.c.h.b16 %v3523
    %v4044 = vunpack.c.l.b16 %v3524
    %v4045 = vunpack.c.h.b16 %v3524
    %v4046 = vunpack.c.l.b16 %v3525
    %v4047 = vunpack.c.h.b16 %v3525
    %v4048 = vunpack.c.l.b16 %v3526
    %v4049 = vunpack.c.h.b16 %v3526
    %v4050 = vunpack.c.l.b16 %v3527
    %v4051 = vunpack.c.h.b16 %v3527
    %v4052 = vunpack.c.l.b16 %v3528
    %v4053 = vunpack.c.h.b16 %v3528
    %v4054 = vunpack.c.l.b16 %v3529
    %v4055 = vunpack.c.h.b16 %v3529
    %v4056 = vunpack.c.l.b16 %v3530
    %v4057 = vunpack.c.h.b16 %v3530
    %v4058 = vunpack.c.l.b16 %v3531
    %v4059 = vunpack.c.h.b16 %v3531
    %v4060 = vunpack.c.l.b16 %v3532
    %v4061 = vunpack.c.h.b16 %v3532
    %v4062 = vunpack.c.l.b16 %v3533
    %v4063 = vunpack.c.h.b16 %v3533
    %v4064 = vunpack.c.l.b16 %v3534
    %v4065 = vunpack.c.h.b16 %v3534
    %v4066 = vunpack.c.l.b16 %v3535
    %v4067 = vunpack.c.h.b16 %v3535
    %v4068 = vunpack.c.l.b16 %v3536
    %v4069 = vunpack.c.h.b16 %v3536
    %v4070 = vunpack.c.l.b16 %v3537
    %v4071 = vunpack.c.h.b16 %v3537
    %v4072 = vunpack.c.l.b16 %v3538
    %v4073 = vunpack.c.h.b16 %v3538
    %v4074 = vunpack.c.l.b16 %v3539
    %v4075 = vunpack.c.h.b16 %v3539
    %v4076 = vunpack.c.l.b16 %v3540
    %v4077 = vunpack.c.h.b16 %v3540
    %v4078 = vunpack.c.l.b16 %v3541
    %v4079 = vunpack.c.h.b16 %v3541
    %v4080 = vunpack.c.l.b16 %v3542
    %v4081 = vunpack.c.h.b16 %v3542
    %v4082 = vunpack.c.l.b16 %v3543
    %v4083 = vunpack.c.h.b16 %v3543
    %v4084 = vunpack.c.l.b16 %v3544
    %v4085 = vunpack.c.h.b16 %v3544
    %v4086 = vunpack.c.l.b16 %v3545
    %v4087 = vunpack.c.h.b16 %v3545
    %v4088 = vunpack.c.l.b16 %v3546
    %v4089 = vunpack.c.h.b16 %v3546
    %v4090 = vunpack.c.l.b16 %v3547
    %v4091 = vunpack.c.h.b16 %v3547
    %v4092 = vunpack.c.l.b16 %v3548
    %v4093 = vunpack.c.h.b16 %v3548
    %v4094 = vunpack.c.l.b16 %v3549
    %v4095 = vunpack.c.h.b16 %v3549
    %v4096 = vunpack.c.l.b16 %v3550
    %v4097 = vunpack.c.h.b16 %v3550
    %v4098 = vunpack.c.l.b16 %v3551
    %v4099 = vunpack.c.h.b16 %v3551
    %v4100 = vunpack.c.l.b16 %v3552
    %v4101 = vunpack.c.h.b16 %v3552
    %v4102 = vunpack.c.l.b16 %v3553
    %v4103 = vunpack.c.h.b16 %v3553
    %v4104 = vunpack.c.l.b16 %v3554
    %v4105 = vunpack.c.h.b16 %v3554
    %v4106 = vunpack.c.l.b16 %v3555
    %v4107 = vunpack.c.h.b16 %v3555
    %v4108 = vunpack.c.l.b16 %v3556
    %v4109 = vunpack.c.h.b16 %v3556
    %v4110 = vunpack.c.l.b16 %v3557
    %v4111 = vunpack.c.h.b16 %v3557
    %v4112 = vunpack.c.l.b16 %v3558
    %v4113 = vunpack.c.h.b16 %v3558
    %v4114 = vunpack.c.l.b16 %v3559
    %v4115 = vunpack.c.h.b16 %v3559
    %v4116 = vunpack.c.l.b16 %v3560
    %v4117 = vunpack.c.h.b16 %v3560
    %v4118 = vunpack.c.l.b16 %v3561
    %v4119 = vunpack.c.h.b16 %v3561
    %v4120 = vunpack.c.l.b16 %v3562
    %v4121 = vunpack.c.h.b16 %v3562
    %v4122 = vunpack.c.l.b16 %v3563
    %v4123 = vunpack.c.h.b16 %v3563
    %v4124 = vunpack.c.l.b16 %v3564
    %v4125 = vunpack.c.h.b16 %v3564
    %v4126 = vunpack.c.l.b16 %v3565
    %v4127 = vunpack.c.h.b16 %v3565
    %v4128 = vunpack.c.l.b16 %v3566
    %v4129 = vunpack.c.h.b16 %v3566
    %v4130 = vunpack.c.l.b16 %v3567
    %v4131 = vunpack.c.h.b16 %v3567
    %v4132 = vunpack.c.l.b16 %v3568
    %v4133 = vunpack.c.h.b16 %v3568
    %v4134 = vunpack.c.l.b16 %v3569
    %v4135 = vunpack.c.h.b16 %v3569
    %v4136 = vunpack.c.l.b16 %v3570
    %v4137 = vunpack.c.h.b16 %v3570
    %v4138 = vunpack.c.l.b16 %v3571
    %v4139 = vunpack.c.h.b16 %v3571
    %v4140 = vunpack.c.l.b16 %v3572
    %v4141 = vunpack.c.h.b16 %v3572
    %v4142 = vunpack.c.l.b16 %v3573
    %v4143 = vunpack.c.h.b16 %v3573
    %v4144 = vunpack.c.l.b16 %v3574
    %v4145 = vunpack.c.h.b16 %v3574
    %v4146 = vunpack.c.l.b16 %v3575
    %v4147 = vunpack.c.h.b16 %v3575
    %v4148 = vunpack.c.l.b16 %v3576
    %v4149 = vunpack.c.h.b16 %v3576
    %v4150 = vunpack.c.l.b16 %v3577
    %v4151 = vunpack.c.h.b16 %v3577
    %v4152 = vunpack.c.l.b16 %v3578
    %v4153 = vunpack.c.h.b16 %v3578
    %v4154 = vunpack.c.l.b16 %v3579
    %v4155 = vunpack.c.h.b16 %v3579
    %v4156 = vunpack.c.l.b16 %v3580
    %v4157 = vunpack.c.h.b16 %v3580
    %v4158 = vunpack.c.l.b16 %v3581
    %v4159 = vunpack.c.h.b16 %v3581
    %v4160 = vunpack.c.l.b16 %v3582
    %v4161 = vunpack.c.h.b16 %v3582
    %v4162 = vunpack.c.l.b16 %v3583
    %v4163 = vunpack.c.h.b16 %v3583
    %v4164 = vunpack.c.l.b16 %v3584
    %v4165 = vunpack.c.h.b16 %v3584
    %v4166 = vunpack.c.l.b16 %v3585
    %v4167 = vunpack.c.h.b16 %v3585
    %v4168 = vunpack.c.l.b16 %v3586
    %v4169 = vunpack.c.h.b16 %v3586
    %v4170 = vunpack.c.l.b16 %v3587
    %v4171 = vunpack.c.h.b16 %v3587
    %v4172 = vunpack.c.l.b16 %v3588
    %v4173 = vunpack.c.h.b16 %v3588
    %v4174 = vunpack.c.l.b16 %v3589
    %v4175 = vunpack.c.h.b16 %v3589
    %v4176 = vunpack.c.l.b16 %v3590
    %v4177 = vunpack.c.h.b16 %v3590
    %v4178 = vunpack.c.l.b16 %v3591
    %v4179 = vunpack.c.h.b16 %v3591
    %v4180 = vunpack.c.l.b16 %v3592
    %v4181 = vunpack.c.h.b16 %v3592
    %v4182 = vunpack.c.l.b16 %v3593
    %v4183 = vunpack.c.h.b16 %v3593
    %v4184 = vunpack.c.l.b16 %v3594
    %v4185 = vunpack.c.h.b16 %v3594
    %v4186 = vunpack.c.l.b16 %v3595
    %v4187 = vunpack.c.h.b16 %v3595
    %v4188 = vunpack.c.l.b16 %v3596
    %v4189 = vunpack.c.h.b16 %v3596
    %v4190 = vunpack.c.l.b16 %v3597
    %v4191 = vunpack.c.h.b16 %v3597
    %v4192 = vunpack.c.l.b16 %v3598
    %v4193 = vunpack.c.h.b16 %v3598
    %v4194 = vunpack.c.l.b16 %v3599
    %v4195 = vunpack.c.h.b16 %v3599
    %v4196 = vunpack.c.l.b16 %v3600
    %v4197 = vunpack.c.h.b16 %v3600
    %v4198 = vunpack.c.l.b16 %v3601
    %v4199 = vunpack.c.h.b16 %v3601
    %v4200 = vunpack.c.l.b16 %v3602
    %v4201 = vunpack.c.h.b16 %v3602
    %v4202 = vunpack.c.l.b16 %v3603
    %v4203 = vunpack.c.h.b16 %v3603
    %v4204 = vunpack.c.l.b16 %v3604
    %v4205 = vunpack.c.h.b16 %v3604
    %v4206 = vunpack.c.l.b16 %v3605
    %v4207 = vunpack.c.h.b16 %v3605
    %v4208 = vunpack.c.l.b16 %v3606
    %v4209 = vunpack.c.h.b16 %v3606
    %v4210 = vunpack.c.l.b16 %v3607
    %v4211 = vunpack.c.h.b16 %v3607
    %v4212 = vunpack.c.l.b16 %v3608
    %v4213 = vunpack.c.h.b16 %v3608
    %v4214 = vunpack.c.l.b16 %v3609
    %v4215 = vunpack.c.h.b16 %v3609
    %v4216 = vunpack.c.l.b16 %v3610
    %v4217 = vunpack.c.h.b16 %v3610
    %v4218 = vunpack.c.l.b16 %v3611
    %v4219 = vunpack.c.h.b16 %v3611
    %v4220 = vunpack.c.l.b16 %v3612
    %v4221 = vunpack.c.h.b16 %v3612
    %v4222 = vunpack.c.l.b16 %v3613
    %v4223 = vunpack.c.h.b16 %v3613
    %v4224 = vunpack.c.l.b16 %v3614
    %v4225 = vunpack.c.h.b16 %v3614
    %v4226 = vunpack.c.l.b16 %v3615
    %v4227 = vunpack.c.h.b16 %v3615
    %v4228 = vunpack.c.l.b16 %v3616
    %v4229 = vunpack.c.h.b16 %v3616
    %v4230 = vunpack.c.l.b16 %v3617
    %v4231 = vunpack.c.h.b16 %v3617
    %v4232 = vunpack.c.l.b16 %v3618
    %v4233 = vunpack.c.h.b16 %v3618
    %v4234 = vunpack.c.l.b16 %v3619
    %v4235 = vunpack.c.h.b16 %v3619
    %v4236 = vunpack.c.l.b16 %v3620
    %v4237 = vunpack.c.h.b16 %v3620
    %v4238 = vunpack.c.l.b16 %v3621
    %v4239 = vunpack.c.h.b16 %v3621
    %v4240 = vunpack.c.l.b16 %v3622
    %v4241 = vunpack.c.h.b16 %v3622
    %v4242 = vunpack.c.l.b16 %v3623
    %v4243 = vunpack.c.h.b16 %v3623
    %v4244 = vunpack.c.l.b16 %v3624
    %v4245 = vunpack.c.h.b16 %v3624
    %v4246 = vunpack.c.l.b16 %v3625
    %v4247 = vunpack.c.h.b16 %v3625
    %v4248 = vunpack.c.l.b16 %v3626
    %v4249 = vunpack.c.h.b16 %v3626
    %v4250 = vunpack.c.l.b16 %v3627
    %v4251 = vunpack.c.h.b16 %v3627
    %v4252 = vunpack.c.l.b16 %v3628
    %v4253 = vunpack.c.h.b16 %v3628
    %v4254 = vunpack.c.l.b16 %v3629
    %v4255 = vunpack.c.h.b16 %v3629
    %v4256 = vunpack.c.l.b16 %v3630
    %v4257 = vunpack.c.h.b16 %v3630
    %v4258 = vunpack.c.l.b16 %v3631
    %v4259 = vunpack.c.h.b16 %v3631
    %v4260 = vunpack.c.l.b16 %v3632
    %v4261 = vunpack.c.h.b16 %v3632
    %v4262 = vunpack.c.l.b16 %v3633
    %v4263 = vunpack.c.h.b16 %v3633
    %v4264 = vunpack.c.l.b16 %v3634
    %v4265 = vunpack.c.h.b16 %v3634
    %v4266 = vunpack.c.l.b16 %v3635
    %v4267 = vunpack.c.h.b16 %v3635
    %v4268 = vunpack.c.l.b16 %v3636
    %v4269 = vunpack.c.h.b16 %v3636
    %v4270 = vunpack.c.l.b16 %v3637
    %v4271 = vunpack.c.h.b16 %v3637
    %v4272 = vunpack.c.l.b16 %v3638
    %v4273 = vunpack.c.h.b16 %v3638
    %v4274 = vunpack.c.l.b16 %v3639
    %v4275 = vunpack.c.h.b16 %v3639
    %v4276 = vunpack.c.l.b16 %v3640
    %v4277 = vunpack.c.h.b16 %v3640
    %v4278 = vunpack.c.l.b16 %v3641
    %v4279 = vunpack.c.h.b16 %v3641
    %v4280 = vunpack.c.l.b16 %v3642
    %v4281 = vunpack.c.h.b16 %v3642
    %v4282 = vunpack.c.l.b16 %v3643
    %v4283 = vunpack.c.h.b16 %v3643
    %v4284 = vunpack.c.l.b16 %v3644
    %v4285 = vunpack.c.h.b16 %v3644
    %v4286 = vunpack.c.l.b16 %v3645
    %v4287 = vunpack.c.h.b16 %v3645
    %v4288 = vunpack.c.l.b16 %v3646
    %v4289 = vunpack.c.h.b16 %v3646
    %v4290 = vunpack.c.l.b16 %v3647
    %v4291 = vunpack.c.h.b16 %v3647
    %v4292 = vunpack.c.l.b16 %v3648
    %v4293 = vunpack.c.h.b16 %v3648
    %v4294 = vunpack.c.l.b16 %v3649
    %v4295 = vunpack.c.h.b16 %v3649
    %v4296 = vunpack.c.l.b16 %v3650
    %v4297 = vunpack.c.h.b16 %v3650
    %v4298 = vunpack.c.l.b16 %v3651
    %v4299 = vunpack.c.h.b16 %v3651
    %v4300 = vunpack.c.l.b16 %v3652
    %v4301 = vunpack.c.h.b16 %v3652
    %v4302 = vunpack.c.l.b16 %v3653
    %v4303 = vunpack.c.h.b16 %v3653
    %v4304 = vunpack.c.l.b16 %v3654
    %v4305 = vunpack.c.h.b16 %v3654
    %v4306 = vunpack.c.l.b16 %v3655
    %v4307 = vunpack.c.h.b16 %v3655
    %v4308 = vunpack.c.l.b16 %v3656
    %v4309 = vunpack.c.h.b16 %v3656
    %v4310 = vunpack.c.l.b16 %v3657
    %v4311 = vunpack.c.h.b16 %v3657
    %v4312 = vunpack.c.l.b16 %v3658
    %v4313 = vunpack.c.h.b16 %v3658
    %v4314 = vunpack.c.l.b16 %v3659
    %v4315 = vunpack.c.h.b16 %v3659
    %v4316 = vunpack.c.l.b16 %v3660
    %v4317 = vunpack.c.h.b16 %v3660
    %v4318 = vunpack.c.l.b16 %v3661
    %v4319 = vunpack.c.h.b16 %v3661
    %v4320 = vunpack.c.l.b16 %v3662
    %v4321 = vunpack.c.h.b16 %v3662
    %v4322 = vunpack.c.l.b16 %v3663
    %v4323 = vunpack.c.h.b16 %v3663
    %v4324 = vunpack.c.l.b16 %v3664
    %v4325 = vunpack.c.h.b16 %v3664
    %v4326 = vunpack.c.l.b16 %v3665
    %v4327 = vunpack.c.h.b16 %v3665
    %v4328 = vunpack.c.l.b16 %v3666
    %v4329 = vunpack.c.h.b16 %v3666
    %v4330 = vunpack.c.l.b16 %v3667
    %v4331 = vunpack.c.h.b16 %v3667
    %v4332 = vunpack.c.l.b16 %v3668
    %v4333 = vunpack.c.h.b16 %v3668
    %v4334 = vunpack.c.l.b16 %v3669
    %v4335 = vunpack.c.h.b16 %v3669
    %v4336 = vunpack.c.l.b16 %v3670
    %v4337 = vunpack.c.h.b16 %v3670
    %v4338 = vunpack.c.l.b16 %v3671
    %v4339 = vunpack.c.h.b16 %v3671
    %v4340 = vunpack.c.l.b16 %v3672
    %v4341 = vunpack.c.h.b16 %v3672
    %v4342 = vunpack.c.l.b16 %v3673
    %v4343 = vunpack.c.h.b16 %v3673
    %v4344 = vunpack.c.l.b16 %v3674
    %v4345 = vunpack.c.h.b16 %v3674
    %v4346 = vunpack.c.l.b16 %v3675
    %v4347 = vunpack.c.h.b16 %v3675
    %v4348 = vunpack.c.l.b16 %v3676
    %v4349 = vunpack.c.h.b16 %v3676
    %v4350 = vunpack.c.l.b16 %v3677
    %v4351 = vunpack.c.h.b16 %v3677
    %v4352 = vunpack.c.l.b16 %v3678
    %v4353 = vunpack.c.h.b16 %v3678
    %v4354 = vunpack.c.l.b16 %v3679
    %v4355 = vunpack.c.h.b16 %v3679
    %v4356 = vunpack.c.l.b16 %v3680
    %v4357 = vunpack.c.h.b16 %v3680
    %v4358 = vunpack.c.l.b16 %v3681
    %v4359 = vunpack.c.h.b16 %v3681
    %v4360 = vunpack.c.l.b16 %v3682
    %v4361 = vunpack.c.h.b16 %v3682
    %v4362 = vunpack.c.l.b16 %v3683
    %v4363 = vunpack.c.h.b16 %v3683
    %v4364 = vunpack.c.l.b16 %v3684
    %v4365 = vunpack.c.h.b16 %v3684
    %v4366 = vunpack.c.l.b16 %v3685
    %v4367 = vunpack.c.h.b16 %v3685
    %v4368 = vunpack.c.l.b16 %v3686
    %v4369 = vunpack.c.h.b16 %v3686
    %v4370 = vunpack.c.l.b16 %v3687
    %v4371 = vunpack.c.h.b16 %v3687
    %v4372 = vunpack.c.l.b16 %v3688
    %v4373 = vunpack.c.h.b16 %v3688
    %v4374 = vunpack.c.l.b16 %v3689
    %v4375 = vunpack.c.h.b16 %v3689
    %v4376 = vunpack.c.l.b16 %v3690
    %v4377 = vunpack.c.h.b16 %v3690
    %v4378 = vunpack.c.l.b16 %v3691
    %v4379 = vunpack.c.h.b16 %v3691
    %v4380 = vunpack.c.l.b16 %v3692
    %v4381 = vunpack.c.h.b16 %v3692
    %v4382 = vunpack.c.l.b16 %v3693
    %v4383 = vunpack.c.h.b16 %v3693
    %v4384 = vunpack.c.l.b16 %v3694
    %v4385 = vunpack.c.h.b16 %v3694
    %v4386 = vunpack.c.l.b16 %v3695
    %v4387 = vunpack.c.h.b16 %v3695
    %v4388 = vunpack.c.l.b16 %v3696
    %v4389 = vunpack.c.h.b16 %v3696
    %v4390 = vunpack.c.l.b16 %v3697
    %v4391 = vunpack.c.h.b16 %v3697
    %v4392 = vunpack.c.l.b16 %v3698
    %v4393 = vunpack.c.h.b16 %v3698
    %v4394 = vunpack.c.l.b16 %v3699
    %v4395 = vunpack.c.h.b16 %v3699
    %v4396 = vunpack.c.l.b16 %v3700
    %v4397 = vunpack.c.h.b16 %v3700
    %v4398 = vunpack.c.l.b16 %v3701
    %v4399 = vunpack.c.h.b16 %v3701
    %v4400 = vunpack.c.l.b16 %v3702
    %v4401 = vunpack.c.h.b16 %v3702
    %v4402 = vunpack.c.l.b16 %v3703
    %v4403 = vunpack.c.h.b16 %v3703
    %v4404 = vunpack.c.l.b16 %v3704
    %v4405 = vunpack.c.h.b16 %v3704
    %v4406 = vunpack.c.l.b16 %v3705
    %v4407 = vunpack.c.h.b16 %v3705
    %v4408 = vunpack.c.l.b16 %v3706
    %v4409 = vunpack.c.h.b16 %v3706
    %v4410 = vunpack.c.l.b16 %v3707
    %v4411 = vunpack.c.h.b16 %v3707
    %v4412 = vunpack.c.l.b16 %v3708
    %v4413 = vunpack.c.h.b16 %v3708
    %v4414 = vunpack.c.l.b16 %v3709
    %v4415 = vunpack.c.h.b16 %v3709
    %v4416 = vunpack.c.l.b16 %v3710
    %v4417 = vunpack.c.h.b16 %v3710
    %v4418 = vunpack.c.l.b16 %v3711
    %v4419 = vunpack.c.h.b16 %v3711
    %v4420 = vunpack.c.l.b16 %v3712
    %v4421 = vunpack.c.h.b16 %v3712
    %v4422 = vunpack.c.l.b16 %v3713
    %v4423 = vunpack.c.h.b16 %v3713
    %v4424 = vunpack.c.l.b16 %v3714
    %v4425 = vunpack.c.h.b16 %v3714
    %v4426 = vunpack.c.l.b16 %v3715
    %v4427 = vunpack.c.h.b16 %v3715
    %v4428 = vunpack.c.l.b16 %v3716
    %v4429 = vunpack.c.h.b16 %v3716
    %v4430 = vunpack.c.l.b16 %v3717
    %v4431 = vunpack.c.h.b16 %v3717
    %v4432 = vunpack.c.l.b16 %v3718
    %v4433 = vunpack.c.h.b16 %v3718
    %v4434 = vunpack.c.l.b16 %v3719
    %v4435 = vunpack.c.h.b16 %v3719
    %v4436 = vunpack.c.l.b16 %v3720
    %v4437 = vunpack.c.h.b16 %v3720
    %v4438 = vunpack.c.l.b16 %v3721
    %v4439 = vunpack.c.h.b16 %v3721
    %v4440 = vunpack.c.l.b16 %v3722
    %v4441 = vunpack.c.h.b16 %v3722
    %v4442 = vunpack.c.l.b16 %v3723
    %v4443 = vunpack.c.h.b16 %v3723
    %v4444 = vunpack.c.l.b16 %v3724
    %v4445 = vunpack.c.h.b16 %v3724
    %v4446 = vunpack.c.l.b16 %v3725
    %v4447 = vunpack.c.h.b16 %v3725
    %v4448 = vunpack.c.l.b16 %v3726
    %v4449 = vunpack.c.h.b16 %v3726
    %v4450 = vunpack.c.l.b16 %v3727
    %v4451 = vunpack.c.h.b16 %v3727
    %v4452 = vunpack.c.l.b16 %v3728
    %v4453 = vunpack.c.h.b16 %v3728
    %v4454 = vunpack.c.l.b16 %v3729
    %v4455 = vunpack.c.h.b16 %v3729
    %v4456 = vunpack.c.l.b16 %v3730
    %v4457 = vunpack.c.h.b16 %v3730
    %v4458 = vunpack.c.l.b16 %v3731
    %v4459 = vunpack.c.h.b16 %v3731
    %v4460 = vunpack.c.l.b16 %v3732
    %v4461 = vunpack.c.h.b16 %v3732
    %v4462 = vunpack.c.l.b16 %v3733
    %v4463 = vunpack.c.h.b16 %v3733
    %v4464 = vunpack.c.l.b16 %v3734
    %v4465 = vunpack.c.h.b16 %v3734
    %v4466 = vunpack.c.l.b16 %v3735
    %v4467 = vunpack.c.h.b16 %v3735
    %v4468 = vunpack.c.l.b16 %v3736
    %v4469 = vunpack.c.h.b16 %v3736
    %v4470 = vunpack.c.l.b16 %v3737
    %v4471 = vunpack.c.h.b16 %v3737
    %v4472 = vunpack.c.l.b16 %v3738
    %v4473 = vunpack.c.h.b16 %v3738
    %v4474 = vunpack.c.l.b16 %v3739
    %v4475 = vunpack.c.h.b16 %v3739
    %v4476 = vunpack.c.l.b16 %v3740
    %v4477 = vunpack.c.h.b16 %v3740
    %v4478 = vunpack.c.l.b16 %v3741
    %v4479 = vunpack.c.h.b16 %v3741
    %v4480 = vunpack.c.l.b16 %v3742
    %v4481 = vunpack.c.h.b16 %v3742
    %v4482 = vunpack.c.l.b16 %v3743
    %v4483 = vunpack.c.h.b16 %v3743
    %v4484 = vunpack.c.l.b16 %v3744
    %v4485 = vunpack.c.h.b16 %v3744
    %v4486 = vunpack.c.l.b16 %v3745
    %v4487 = vunpack.c.h.b16 %v3745
    %v4488 = vunpack.c.l.b16 %v3746
    %v4489 = vunpack.c.h.b16 %v3746
    %v4490 = vunpack.c.l.b16 %v3747
    %v4491 = vunpack.c.h.b16 %v3747
    %v4492 = vunpack.c.l.b16 %v3748
    %v4493 = vunpack.c.h.b16 %v3748
    %v4494 = vunpack.c.l.b16 %v3749
    %v4495 = vunpack.c.h.b16 %v3749
    %v4496 = vunpack.c.l.b16 %v3750
    %v4497 = vunpack.c.h.b16 %v3750
    %v4498 = vunpack.c.l.b16 %v3751
    %v4499 = vunpack.c.h.b16 %v3751
    %v4500 = vunpack.c.l.b16 %v3752
    %v4501 = vunpack.c.h.b16 %v3752
    %v4502 = vunpack.c.l.b16 %v3753
    %v4503 = vunpack.c.h.b16 %v3753
    %v4504 = vunpack.c.l.b16 %v3754
    %v4505 = vunpack.c.h.b16 %v3754
    %v4506 = vunpack.c.l.b16 %v3755
    %v4507 = vunpack.c.h.b16 %v3755
    %v4508 = vunpack.c.l.b16 %v3756
    %v4509 = vunpack.c.h.b16 %v3756
    %v4510 = vunpack.c.l.b16 %v3757
    %v4511 = vunpack.c.h.b16 %v3757
    %v4512 = vunpack.c.l.b16 %v3758
    %v4513 = vunpack.c.h.b16 %v3758
    %v4514 = vunpack.c.l.b16 %v3759
    %v4515 = vunpack.c.h.b16 %v3759
    %v4516 = vunpack.c.l.b16 %v3760
    %v4517 = vunpack.c.h.b16 %v3760
    %v4518 = vunpack.c.l.b16 %v3761
    %v4519 = vunpack.c.h.b16 %v3761
    %v4520 = vunpack.c.l.b16 %v3762
    %v4521 = vunpack.c.h.b16 %v3762
    %v4522 = vunpack.c.l.b16 %v3763
    %v4523 = vunpack.c.h.b16 %v3763
    %v4524 = vunpack.c.l.b16 %v3764
    %v4525 = vunpack.c.h.b16 %v3764
    %v4526 = vunpack.c.l.b16 %v3765
    %v4527 = vunpack.c.h.b16 %v3765
    %v4528 = vunpack.c.l.b16 %v3766
    %v4529 = vunpack.c.h.b16 %v3766
    %v4530 = vunpack.c.l.b16 %v3767
    %v4531 = vunpack.c.h.b16 %v3767
    %v4532 = vunpack.c.l.b16 %v3768
    %v4533 = vunpack.c.h.b16 %v3768
    %v4534 = vunpack.c.l.b16 %v3769
    %v4535 = vunpack.c.h.b16 %v3769
    %v4536 = vunpack.c.l.b16 %v3770
    %v4537 = vunpack.c.h.b16 %v3770
    %v4538 = vunpack.c.l.b16 %v3771
    %v4539 = vunpack.c.h.b16 %v3771
    %v4540 = vpack.c.b16 %v4044, %v4028
    %v4541 = vpack.c.b16 %v4045, %v4029
    %v4542 = vpack.c.b16 %v4046, %v4030
    %v4543 = vpack.c.b16 %v4047, %v4031
    %v4544 = vpack.c.b16 %v4048, %v4032
    %v4545 = vpack.c.b16 %v4049, %v4033
    %v4546 = vpack.c.b16 %v4050, %v4034
    %v4547 = vpack.c.b16 %v4051, %v4035
    %v4548 = vpack.c.b16 %v4052, %v4036
    %v4549 = vpack.c.b16 %v4053, %v4037
    %v4550 = vpack.c.b16 %v4054, %v4038
    %v4551 = vpack.c.b16 %v4055, %v4039
    %v4552 = vpack.c.b16 %v4056, %v4040
    %v4553 = vpack.c.b16 %v4057, %v4041
    %v4554 = vpack.c.b16 %v4058, %v4042
    %v4555 = vpack.c.b16 %v4059, %v4043
    %v4556 = vpack.c.b16 %v4076, %v4060
    %v4557 = vpack.c.b16 %v4077, %v4061
    %v4558 = vpack.c.b16 %v4078, %v4062
    %v4559 = vpack.c.b16 %v4079, %v4063
    %v4560 = vpack.c.b16 %v4080, %v4064
    %v4561 = vpack.c.b16 %v4081, %v4065
    %v4562 = vpack.c.b16 %v4082, %v4066
    %v4563 = vpack.c.b16 %v4083, %v4067
    %v4564 = vpack.c.b16 %v4084, %v4068
    %v4565 = vpack.c.b16 %v4085, %v4069
    %v4566 = vpack.c.b16 %v4086, %v4070
    %v4567 = vpack.c.b16 %v4087, %v4071
    %v4568 = vpack.c.b16 %v4088, %v4072
    %v4569 = vpack.c.b16 %v4089, %v4073
    %v4570 = vpack.c.b16 %v4090, %v4074
    %v4571 = vpack.c.b16 %v4091, %v4075
    %v4572 = vpack.c.b16 %v4108, %v4092
    %v4573 = vpack.c.b16 %v4109, %v4093
    %v4574 = vpack.c.b16 %v4110, %v4094
    %v4575 = vpack.c.b16 %v4111, %v4095
    %v4576 = vpack.c.b16 %v4112, %v4096
    %v4577 = vpack.c.b16 %v4113, %v4097
    %v4578 = vpack.c.b16 %v4114, %v4098
    %v4579 = vpack.c.b16 %v4115, %v4099
    %v4580 = vpack.c.b16 %v4116, %v4100
    %v4581 = vpack.c.b16 %v4117, %v4101
    %v4582 = vpack.c.b16 %v4118, %v4102
    %v4583 = vpack.c.b16 %v4119, %v4103
    %v4584 = vpack.c.b16 %v4120, %v4104
    %v4585 = vpack.c.b16 %v4121, %v4105
    %v4586 = vpack.c.b16 %v4122, %v4106
    %v4587 = vpack.c.b16 %v4123, %v4107
    %v4588 = vpack.c.b16 %v4140, %v4124
    %v4589 = vpack.c.b16 %v4141, %v4125
    %v4590 = vpack.c.b16 %v4142, %v4126
    %v4591 = vpack.c.b16 %v4143, %v4127
    %v4592 = vpack.c.b16 %v4144, %v4128
    %v4593 = vpack.c.b16 %v4145, %v4129
    %v4594 = vpack.c.b16 %v4146, %v4130
    %v4595 = vpack.c.b16 %v4147, %v4131
    %v4596 = vpack.c.b16 %v4148, %v4132
    %v4597 = vpack.c.b16 %v4149, %v4133
    %v4598 = vpack.c.b16 %v4150, %v4134
    %v4599 = vpack.c.b16 %v4151, %v4135
    %v4600 = vpack.c.b16 %v4152, %v4136
    %v4601 = vpack.c.b16 %v4153, %v4137
    %v4602 = vpack.c.b16 %v4154, %v4138
    %v4603 = vpack.c.b16 %v4155, %v4139
    %v4604 = vpack.c.b16 %v4172, %v4156
    %v4605 = vpack.c.b16 %v4173, %v4157
    %v4606 = vpack.c.b16 %v4174, %v4158
    %v4607 = vpack.c.b16 %v4175, %v4159
    %v4608 = vpack.c.b16 %v4176, %v4160
    %v4609 = vpack.c.b16 %v4177, %v4161
    %v4610 = vpack.c.b16 %v4178, %v4162
    %v4611 = vpack.c.b16 %v4179, %v4163
    %v4612 = vpack.c.b16 %v4180, %v4164
    %v4613 = vpack.c.b16 %v4181, %v4165
    %v4614 = vpack.c.b16 %v4182, %v4166
    %v4615 = vpack.c.b16 %v4183, %v4167
    %v4616 = vpack.c.b16 %v4184, %v4168
    %v4617 = vpack.c.b16 %v4185, %v4169
    %v4618 = vpack.c.b16 %v4186, %v4170
    %v4619 = vpack.c.b16 %v4187, %v4171
    %v4620 = vpack.c.b16 %v4204, %v4188
    %v4621 = vpack.c.b16 %v4205, %v4189
    %v4622 = vpack.c.b16 %v4206, %v4190
    %v4623 = vpack.c.b16 %v4207, %v4191
    %v4624 = vpack.c.b16 %v4208, %v4192
    %v4625 = vpack.c.b16 %v4209, %v4193
    %v4626 = vpack.c.b16 %v4210, %v4194
    %v4627 = vpack.c.b16 %v4211, %v4195
    %v4628 = vpack.c.b16 %v4212, %v4196
    %v4629 = vpack.c.b16 %v4213, %v4197
    %v4630 = vpack.c.b16 %v4214, %v4198
    %v4631 = vpack.c.b16 %v4215, %v4199
    %v4632 = vpack.c.b16 %v4216, %v4200
    %v4633 = vpack.c.b16 %v4217, %v4201
    %v4634 = vpack.c.b16 %v4218, %v4202
    %v4635 = vpack.c.b16 %v4219, %v4203
    %v4636 = vpack.c.b16 %v4236, %v4220
    %v4637 = vpack.c.b16 %v4237, %v4221
    %v4638 = vpack.c.b16 %v4238, %v4222
    %v4639 = vpack.c.b16 %v4239, %v4223
    %v4640 = vpack.c.b16 %v4240, %v4224
    %v4641 = vpack.c.b16 %v4241, %v4225
    %v4642 = vpack.c.b16 %v4242, %v4226
    %v4643 = vpack.c.b16 %v4243, %v4227
    %v4644 = vpack.c.b16 %v4244, %v4228
    %v4645 = vpack.c.b16 %v4245, %v4229
    %v4646 = vpack.c.b16 %v4246, %v4230
    %v4647 = vpack.c.b16 %v4247, %v4231
    %v4648 = vpack.c.b16 %v4248, %v4232
    %v4649 = vpack.c.b16 %v4249, %v4233
    %v4650 = vpack.c.b16 %v4250, %v4234
    %v4651 = vpack.c.b16 %v4251, %v4235
    %v4652 = vpack.c.b16 %v4268, %v4252
    %v4653 = vpack.c.b16 %v4269, %v4253
    %v4654 = vpack.c.b16 %v4270, %v4254
    %v4655 = vpack.c.b16 %v4271, %v4255
    %v4656 = vpack.c.b16 %v4272, %v4256
    %v4657 = vpack.c.b16 %v4273, %v4257
    %v4658 = vpack.c.b16 %v4274, %v4258
    %v4659 = vpack.c.b16 %v4275, %v4259
    %v4660 = vpack.c.b16 %v4276, %v4260
    %v4661 = vpack.c.b16 %v4277, %v4261
    %v4662 = vpack.c.b16 %v4278, %v4262
    %v4663 = vpack.c.b16 %v4279, %v4263
    %v4664 = vpack.c.b16 %v4280, %v4264
    %v4665 = vpack.c.b16 %v4281, %v4265
    %v4666 = vpack.c.b16 %v4282, %v4266
    %v4667 = vpack.c.b16 %v4283, %v4267
    %v4668 = vpack.c.b16 %v4300, %v4284
    %v4669 = vpack.c.b16 %v4301, %v4285
    %v4670 = vpack.c.b16 %v4302, %v4286
    %v4671 = vpack.c.b16 %v4303, %v4287
    %v4672 = vpack.c.b16 %v4304, %v4288
    %v4673 = vpack.c.b16 %v4305, %v4289
    %v4674 = vpack.c.b16 %v4306, %v4290
    %v4675 = vpack.c.b16 %v4307, %v4291
    %v4676 = vpack.c.b16 %v4308, %v4292
    %v4677 = vpack.c.b16 %v4309, %v4293
    %v4678 = vpack.c.b16 %v4310, %v4294
    %v4679 = vpack.c.b16 %v4311, %v4295
    %v4680 = vpack.c.b16 %v4312, %v4296
    %v4681 = vpack.c.b16 %v4313, %v4297
    %v4682 = vpack.c.b16 %v4314, %v4298
    %v4683 = vpack.c.b16 %v4315, %v4299
    %v4684 = vpack.c.b16 %v4332, %v4316
    %v4685 = vpack.c.b16 %v4333, %v4317
    %v4686 = vpack.c.b16 %v4334, %v4318
    %v4687 = vpack.c.b16 %v4335, %v4319
    %v4688 = vpack.c.b16 %v4336, %v4320
    %v4689 = vpack.c.b16 %v4337, %v4321
    %v4690 = vpack.c.b16 %v4338, %v4322
    %v4691 = vpack.c.b16 %v4339, %v4323
    %v4692 = vpack.c.b16 %v4340, %v4324
    %v4693 = vpack.c.b16 %v4341, %v4325
    %v4694 = vpack.c.b16 %v4342, %v4326
    %v4695 = vpack.c.b16 %v4343, %v4327
    %v4696 = vpack.c.b16 %v4344, %v4328
    %v4697 = vpack.c.b16 %v4345, %v4329
    %v4698 = vpack.c.b16 %v4346, %v4330
    %v4699 = vpack.c.b16 %v4347, %v4331
    %v4700 = vpack.c.b16 %v4364, %v4348
    %v4701 = vpack.c.b16 %v4365, %v4349
    %v4702 = vpack.c.b16 %v4366, %v4350
    %v4703 = vpack.c.b16 %v4367, %v4351
    %v4704 = vpack.c.b16 %v4368, %v4352
    %v4705 = vpack.c.b16 %v4369, %v4353
    %v4706 = vpack.c.b16 %v4370, %v4354
    %v4707 = vpack.c.b16 %v4371, %v4355
    %v4708 = vpack.c.b16 %v4372, %v4356
    %v4709 = vpack.c.b16 %v4373, %v4357
    %v4710 = vpack.c.b16 %v4374, %v4358
    %v4711 = vpack.c.b16 %v4375, %v4359
    %v4712 = vpack.c.b16 %v4376, %v4360
    %v4713 = vpack.c.b16 %v4377, %v4361
    %v4714 = vpack.c.b16 %v4378, %v4362
    %v4715 = vpack.c.b16 %v4379, %v4363
    %v4716 = vpack.c.b16 %v4396, %v4380
    %v4717 = vpack.c.b16 %v4397, %v4381
    %v4718 = vpack.c.b16 %v4398, %v4382
    %v4719 = vpack.c.b16 %v4399, %v4383
    %v4720 = vpack.c.b16 %v4400, %v4384
    %v4721 = vpack.c.b16 %v4401, %v4385
    %v4722 = vpack.c.b16 %v4402, %v4386
    %v4723 = vpack.c.b16 %v4403, %v4387
    %v4724 = vpack.c.b16 %v4404, %v4388
    %v4725 = vpack.c.b16 %v4405, %v4389
    %v4726 = vpack.c.b16 %v4406, %v4390
    %v4727 = vpack.c.b16 %v4407, %v4391
    %v4728 = vpack.c.b16 %v4408, %v4392
    %v4729 = vpack.c.b16 %v4409, %v4393
    %v4730 = vpack.c.b16 %v4410, %v4394
    %v4731 = vpack.c.b16 %v4411, %v4395
    %v4732 = vpack.c.b16 %v4428, %v4412
    %v4733 = vpack.c.b16 %v4429, %v4413
    %v4734 = vpack.c.b16 %v4430, %v4414
    %v4735 = vpack.c.b16 %v4431, %v4415
    %v4736 = vpack.c.b16 %v4432, %v4416
    %v4737 = vpack.c.b16 %v4433, %v4417
    %v4738 = vpack.c.b16 %v4434, %v4418
    %v4739 = vpack.c.b16 %v4435, %v4419
    %v4740 = vpack.c.b16 %v4436, %v4420
    %v4741 = vpack.c.b16 %v4437, %v4421
    %v4742 = vpack.c.b16 %v4438, %v4422
    %v4743 = vpack.c.b16 %v4439, %v4423
    %v4744 = vpack.c.b16 %v4440, %v4424
    %v4745 = vpack.c.b16 %v4441, %v4425
    %v4746 = vpack.c.b16 %v4442, %v4426
    %v4747 = vpack.c.b16 %v4443, %v4427
    %v4748 = vpack.c.b16 %v4460, %v4444
    %v4749 = vpack.c.b16 %v4461, %v4445
    %v4750 = vpack.c.b16 %v4462, %v4446
    %v4751 = vpack.c.b16 %v4463, %v4447
    %v4752 = vpack.c.b16 %v4464, %v4448
    %v4753 = vpack.c.b16 %v4465, %v4449
    %v4754 = vpack.c.b16 %v4466, %v4450
    %v4755 = vpack.c.b16 %v4467, %v4451
    %v4756 = vpack.c.b16 %v4468, %v4452
    %v4757 = vpack.c.b16 %v4469, %v4453
    %v4758 = vpack.c.b16 %v4470, %v4454
    %v4759 = vpack.c.b16 %v4471, %v4455
    %v4760 = vpack.c.b16 %v4472, %v4456
    %v4761 = vpack.c.b16 %v4473, %v4457
    %v4762 = vpack.c.b16 %v4474, %v4458
    %v4763 = vpack.c.b16 %v4475, %v4459
    %v4764 = vpack.c.b16 %v4492, %v4476
    %v4765 = vpack.c.b16 %v4493, %v4477
    %v4766 = vpack.c.b16 %v4494, %v4478
    %v4767 = vpack.c.b16 %v4495, %v4479
    %v4768 = vpack.c.b16 %v4496, %v4480
    %v4769 = vpack.c.b16 %v4497, %v4481
    %v4770 = vpack.c.b16 %v4498, %v4482
    %v4771 = vpack.c.b16 %v4499, %v4483
    %v4772 = vpack.c.b16 %v4500, %v4484
    %v4773 = vpack.c.b16 %v4501, %v4485
    %v4774 = vpack.c.b16 %v4502, %v4486
    %v4775 = vpack.c.b16 %v4503, %v4487
    %v4776 = vpack.c.b16 %v4504, %v4488
    %v4777 = vpack.c.b16 %v4505, %v4489
    %v4778 = vpack.c.b16 %v4506, %v4490
    %v4779 = vpack.c.b16 %v4507, %v4491
    %v4780 = vpack.c.b16 %v4524, %v4508
    %v4781 = vpack.c.b16 %v4525, %v4509
    %v4782 = vpack.c.b16 %v4526, %v4510
    %v4783 = vpack.c.b16 %v4527, %v4511
    %v4784 = vpack.c.b16 %v4528, %v4512
    %v4785 = vpack.c.b16 %v4529, %v4513
    %v4786 = vpack.c.b16 %v4530, %v4514
    %v4787 = vpack.c.b16 %v4531, %v4515
    %v4788 = vpack.c.b16 %v4532, %v4516
    %v4789 = vpack.c.b16 %v4533, %v4517
    %v4790 = vpack.c.b16 %v4534, %v4518
    %v4791 = vpack.c.b16 %v4535, %v4519
    %v4792 = vpack.c.b16 %v4536, %v4520
    %v4793 = vpack.c.b16 %v4537, %v4521
    %v4794 = vpack.c.b16 %v4538, %v4522
    %v4795 = vpack.c.b16 %v4539, %v4523
    %5052 = vmatprep.subr.bf16.mxu0 %v4653
    %5053 = vmatpush1.bf16.msra.mxu0 %v4652
    %5054 = vmatprep.subr.bf16.mxu0 %v4637
    %5055 = vmatpush1.bf16.msra.mxu0 %v4636
    %5056 = vmatprep.subr.bf16.mxu0 %v4621
    %5057 = vmatpush1.bf16.msra.mxu0 %v4620
    %5058 = vmatprep.subr.bf16.mxu0 %v4605
    %5059 = vmatpush1.bf16.msra.mxu0 %v4604
    %5060 = vmatprep.subr.bf16.mxu0 %v4589
    %5061 = vmatpush1.bf16.msra.mxu0 %v4588
    %5062 = vmatprep.subr.bf16.mxu0 %v4573
    %5063 = vmatpush1.bf16.msra.mxu0 %v4572
    %5064 = vmatprep.subr.bf16.mxu0 %v4557
    %5065 = vmatpush1.bf16.msra.mxu0 %v4556
    %5066 = vmatprep.subr.bf16.mxu0 %v4541
    %5067 = vmatpush1.bf16.msra.mxu0 %v4540
    %5068 = vmatprep.subr.bf16.mxu0 %v4781
    %5069 = vmatpush2.bf16.msra.mxu0 %v4780
    %5070 = vmatprep.subr.bf16.mxu0 %v4765
    %5071 = vmatpush2.bf16.msra.mxu0 %v4764
    %5072 = vmatprep.subr.bf16.mxu0 %v4749
    %5073 = vmatpush2.bf16.msra.mxu0 %v4748
    %5074 = vmatprep.subr.bf16.mxu0 %v4733
    %5075 = vmatpush2.bf16.msra.mxu0 %v4732
    %5076 = vmatprep.subr.bf16.mxu0 %v4717
    %5077 = vmatpush2.bf16.msra.mxu0 %v4716
    %5078 = vmatprep.subr.bf16.mxu0 %v4701
    %5079 = vmatpush2.bf16.msra.mxu0 %v4700
    %5080 = vmatprep.subr.bf16.mxu0 %v4685
    %5081 = vmatpush2.bf16.msra.mxu0 %v4684
    %5082 = vmatprep.subr.bf16.mxu0 %v4669
    %5083 = vmatpush2.bf16.msra.mxu0 %v4668
    %5084 = vmatprep.mubr.bf16.mxu0 0
    %5085 = vmatmul.mubr.bf16.gmra.mxu0 0
    %v5086 = vpop.f32.mrf.mxu0
    %v5087 = vadd.f32 0.0, %v5086
    %v5088 = vpop.f32.mrf.mxu0
    %v5089 = vadd.f32 0.0, %v5088
    %v5090 = vpop.f32.mrf.mxu0
    %v5091 = vpop.f32.mrf.mxu0
    %5092 = vdwg.mxu0
    %5093 = vmatprep.subr.bf16.mxu0 %v4655
    %5094 = vmatpush1.bf16.msra.mxu0 %v4654
    %5095 = vmatprep.subr.bf16.mxu0 %v4639
    %5096 = vmatpush1.bf16.msra.mxu0 %v4638
    %5097 = vmatprep.subr.bf16.mxu0 %v4623
    %5098 = vmatpush1.bf16.msra.mxu0 %v4622
    %5099 = vmatprep.subr.bf16.mxu0 %v4607
    %5100 = vmatpush1.bf16.msra.mxu0 %v4606
    %5101 = vmatprep.subr.bf16.mxu0 %v4591
    %5102 = vmatpush1.bf16.msra.mxu0 %v4590
    %5103 = vmatprep.subr.bf16.mxu0 %v4575
    %5104 = vmatpush1.bf16.msra.mxu0 %v4574
    %5105 = vmatprep.subr.bf16.mxu0 %v4559
    %5106 = vmatpush1.bf16.msra.mxu0 %v4558
    %5107 = vmatprep.subr.bf16.mxu0 %v4543
    %5108 = vmatpush1.bf16.msra.mxu0 %v4542
    %5109 = vmatprep.subr.bf16.mxu0 %v4783
    %5110 = vmatpush2.bf16.msra.mxu0 %v4782
    %5111 = vmatprep.subr.bf16.mxu0 %v4767
    %5112 = vmatpush2.bf16.msra.mxu0 %v4766
    %5113 = vmatprep.subr.bf16.mxu0 %v4751
    %5114 = vmatpush2.bf16.msra.mxu0 %v4750
    %5115 = vmatprep.subr.bf16.mxu0 %v4735
    %5116 = vmatpush2.bf16.msra.mxu0 %v4734
    %5117 = vmatprep.subr.bf16.mxu0 %v4719
    %5118 = vmatpush2.bf16.msra.mxu0 %v4718
    %5119 = vmatprep.subr.bf16.mxu0 %v4703
    %5120 = vmatpush2.bf16.msra.mxu0 %v4702
    %5121 = vmatprep.subr.bf16.mxu0 %v4687
    %5122 = vmatpush2.bf16.msra.mxu0 %v4686
    %5123 = vmatprep.subr.bf16.mxu0 %v4671
    %5124 = vmatpush2.bf16.msra.mxu0 %v4670
    %5125 = vmatprep.mubr.bf16.mxu0 0
    %5126 = vmatmul.mubr.bf16.gmra.mxu0 0
    %v5127 = vpop.f32.mrf.mxu0
    %v5128 = vadd.f32 0.0, %v5127
    %v5129 = vpop.f32.mrf.mxu0
    %v5130 = vadd.f32 0.0, %v5129
    %v5131 = vpop.f32.mrf.mxu0
    %v5132 = vpop.f32.mrf.mxu0
    %5133 = vdwg.mxu0
    %5134 = vmatprep.subr.bf16.mxu0 %v4657
    %5135 = vmatpush1.bf16.msra.mxu0 %v4656
    %5136 = vmatprep.subr.bf16.mxu0 %v4641
    %5137 = vmatpush1.bf16.msra.mxu0 %v4640
    %5138 = vmatprep.subr.bf16.mxu0 %v4625
    %5139 = vmatpush1.bf16.msra.mxu0 %v4624
    %5140 = vmatprep.subr.bf16.mxu0 %v4609
    %5141 = vmatpush1.bf16.msra.mxu0 %v4608
    %5142 = vmatprep.subr.bf16.mxu0 %v4593
    %5143 = vmatpush1.bf16.msra.mxu0 %v4592
    %5144 = vmatprep.subr.bf16.mxu0 %v4577
    %5145 = vmatpush1.bf16.msra.mxu0 %v4576
    %5146 = vmatprep.subr.bf16.mxu0 %v4561
    %5147 = vmatpush1.bf16.msra.mxu0 %v4560
    %5148 = vmatprep.subr.bf16.mxu0 %v4545
    %5149 = vmatpush1.bf16.msra.mxu0 %v4544
    %5150 = vmatprep.subr.bf16.mxu0 %v4785
    %5151 = vmatpush2.bf16.msra.mxu0 %v4784
    %5152 = vmatprep.subr.bf16.mxu0 %v4769
    %5153 = vmatpush2.bf16.msra.mxu0 %v4768
    %5154 = vmatprep.subr.bf16.mxu0 %v4753
    %5155 = vmatpush2.bf16.msra.mxu0 %v4752
    %5156 = vmatprep.subr.bf16.mxu0 %v4737
    %5157 = vmatpush2.bf16.msra.mxu0 %v4736
    %5158 = vmatprep.subr.bf16.mxu0 %v4721
    %5159 = vmatpush2.bf16.msra.mxu0 %v4720
    %5160 = vmatprep.subr.bf16.mxu0 %v4705
    %5161 = vmatpush2.bf16.msra.mxu0 %v4704
    %5162 = vmatprep.subr.bf16.mxu0 %v4689
    %5163 = vmatpush2.bf16.msra.mxu0 %v4688
    %5164 = vmatprep.subr.bf16.mxu0 %v4673
    %5165 = vmatpush2.bf16.msra.mxu0 %v4672
    %5166 = vmatprep.mubr.bf16.mxu0 0
    %5167 = vmatmul.mubr.bf16.gmra.mxu0 0
    %v5168 = vpop.f32.mrf.mxu0
    %v5169 = vadd.f32 0.0, %v5168
    %v5170 = vpop.f32.mrf.mxu0
    %v5171 = vadd.f32 0.0, %v5170
    %v5172 = vpop.f32.mrf.mxu0
    %v5173 = vpop.f32.mrf.mxu0
    %5174 = vdwg.mxu0
    %5175 = vmatprep.subr.bf16.mxu0 %v4659
    %5176 = vmatpush1.bf16.msra.mxu0 %v4658
    %5177 = vmatprep.subr.bf16.mxu0 %v4643
    %5178 = vmatpush1.bf16.msra.mxu0 %v4642
    %5179 = vmatprep.subr.bf16.mxu0 %v4627
    %5180 = vmatpush1.bf16.msra.mxu0 %v4626
    %5181 = vmatprep.subr.bf16.mxu0 %v4611
    %5182 = vmatpush1.bf16.msra.mxu0 %v4610
    %5183 = vmatprep.subr.bf16.mxu0 %v4595
    %5184 = vmatpush1.bf16.msra.mxu0 %v4594
    %5185 = vmatprep.subr.bf16.mxu0 %v4579
    %5186 = vmatpush1.bf16.msra.mxu0 %v4578
    %5187 = vmatprep.subr.bf16.mxu0 %v4563
    %5188 = vmatpush1.bf16.msra.mxu0 %v4562
    %5189 = vmatprep.subr.bf16.mxu0 %v4547
    %5190 = vmatpush1.bf16.msra.mxu0 %v4546
    %5191 = vmatprep.subr.bf16.mxu0 %v4787
    %5192 = vmatpush2.bf16.msra.mxu0 %v4786
    %5193 = vmatprep.subr.bf16.mxu0 %v4771
    %5194 = vmatpush2.bf16.msra.mxu0 %v4770
    %5195 = vmatprep.subr.bf16.mxu0 %v4755
    %5196 = vmatpush2.bf16.msra.mxu0 %v4754
    %5197 = vmatprep.subr.bf16.mxu0 %v4739
    %5198 = vmatpush2.bf16.msra.mxu0 %v4738
    %5199 = vmatprep.subr.bf16.mxu0 %v4723
    %5200 = vmatpush2.bf16.msra.mxu0 %v4722
    %5201 = vmatprep.subr.bf16.mxu0 %v4707
    %5202 = vmatpush2.bf16.msra.mxu0 %v4706
    %5203 = vmatprep.subr.bf16.mxu0 %v4691
    %5204 = vmatpush2.bf16.msra.mxu0 %v4690
    %5205 = vmatprep.subr.bf16.mxu0 %v4675
    %5206 = vmatpush2.bf16.msra.mxu0 %v4674
    %5207 = vmatprep.mubr.bf16.mxu0 0
    %5208 = vmatmul.mubr.bf16.gmra.mxu0 0
    %v5209 = vpop.f32.mrf.mxu0
    %v5210 = vadd.f32 0.0, %v5209
    %v5211 = vpop.f32.mrf.mxu0
    %v5212 = vadd.f32 0.0, %v5211
    %v5213 = vpop.f32.mrf.mxu0
    %v5214 = vpop.f32.mrf.mxu0
    %5215 = vdwg.mxu0
    %5216 = vmatprep.subr.bf16.mxu0 %v4661
    %5217 = vmatpush1.bf16.msra.mxu0 %v4660
    %5218 = vmatprep.subr.bf16.mxu0 %v4645
    %5219 = vmatpush1.bf16.msra.mxu0 %v4644
    %5220 = vmatprep.subr.bf16.mxu0 %v4629
    %5221 = vmatpush1.bf16.msra.mxu0 %v4628
    %5222 = vmatprep.subr.bf16.mxu0 %v4613
    %5223 = vmatpush1.bf16.msra.mxu0 %v4612
    %5224 = vmatprep.subr.bf16.mxu0 %v4597
    %5225 = vmatpush1.bf16.msra.mxu0 %v4596
    %5226 = vmatprep.subr.bf16.mxu0 %v4581
    %5227 = vmatpush1.bf16.msra.mxu0 %v4580
    %5228 = vmatprep.subr.bf16.mxu0 %v4565
    %5229 = vmatpush1.bf16.msra.mxu0 %v4564
    %5230 = vmatprep.subr.bf16.mxu0 %v4549
    %5231 = vmatpush1.bf16.msra.mxu0 %v4548
    %5232 = vmatprep.subr.bf16.mxu0 %v4789
    %5233 = vmatpush2.bf16.msra.mxu0 %v4788
    %5234 = vmatprep.subr.bf16.mxu0 %v4773
    %5235 = vmatpush2.bf16.msra.mxu0 %v4772
    %5236 = vmatprep.subr.bf16.mxu0 %v4757
    %5237 = vmatpush2.bf16.msra.mxu0 %v4756
    %5238 = vmatprep.subr.bf16.mxu0 %v4741
    %5239 = vmatpush2.bf16.msra.mxu0 %v4740
    %5240 = vmatprep.subr.bf16.mxu0 %v4725
    %5241 = vmatpush2.bf16.msra.mxu0 %v4724
    %5242 = vmatprep.subr.bf16.mxu0 %v4709
    %5243 = vmatpush2.bf16.msra.mxu0 %v4708
    %5244 = vmatprep.subr.bf16.mxu0 %v4693
    %5245 = vmatpush2.bf16.msra.mxu0 %v4692
    %5246 = vmatprep.subr.bf16.mxu0 %v4677
    %5247 = vmatpush2.bf16.msra.mxu0 %v4676
    %5248 = vmatprep.mubr.bf16.mxu0 0
    %5249 = vmatmul.mubr.bf16.gmra.mxu0 0
    %v5250 = vpop.f32.mrf.mxu0
    %v5251 = vadd.f32 0.0, %v5250
    %v5252 = vpop.f32.mrf.mxu0
    %v5253 = vadd.f32 0.0, %v5252
    %v5254 = vpop.f32.mrf.mxu0
    %v5255 = vpop.f32.mrf.mxu0
    %5256 = vdwg.mxu0
    %5257 = vmatprep.subr.bf16.mxu0 %v4663
    %5258 = vmatpush1.bf16.msra.mxu0 %v4662
    %5259 = vmatprep.subr.bf16.mxu0 %v4647
    %5260 = vmatpush1.bf16.msra.mxu0 %v4646
    %5261 = vmatprep.subr.bf16.mxu0 %v4631
    %5262 = vmatpush1.bf16.msra.mxu0 %v4630
    %5263 = vmatprep.subr.bf16.mxu0 %v4615
    %5264 = vmatpush1.bf16.msra.mxu0 %v4614
    %5265 = vmatprep.subr.bf16.mxu0 %v4599
    %5266 = vmatpush1.bf16.msra.mxu0 %v4598
    %5267 = vmatprep.subr.bf16.mxu0 %v4583
    %5268 = vmatpush1.bf16.msra.mxu0 %v4582
    %5269 = vmatprep.subr.bf16.mxu0 %v4567
    %5270 = vmatpush1.bf16.msra.mxu0 %v4566
    %5271 = vmatprep.subr.bf16.mxu0 %v4551
    %5272 = vmatpush1.bf16.msra.mxu0 %v4550
    %5273 = vmatprep.subr.bf16.mxu0 %v4791
    %5274 = vmatpush2.bf16.msra.mxu0 %v4790
    %5275 = vmatprep.subr.bf16.mxu0 %v4775
    %5276 = vmatpush2.bf16.msra.mxu0 %v4774
    %5277 = vmatprep.subr.bf16.mxu0 %v4759
    %5278 = vmatpush2.bf16.msra.mxu0 %v4758
    %5279 = vmatprep.subr.bf16.mxu0 %v4743
    %5280 = vmatpush2.bf16.msra.mxu0 %v4742
    %5281 = vmatprep.subr.bf16.mxu0 %v4727
    %5282 = vmatpush2.bf16.msra.mxu0 %v4726
    %5283 = vmatprep.subr.bf16.mxu0 %v4711
    %5284 = vmatpush2.bf16.msra.mxu0 %v4710
    %5285 = vmatprep.subr.bf16.mxu0 %v4695
    %5286 = vmatpush2.bf16.msra.mxu0 %v4694
    %5287 = vmatprep.subr.bf16.mxu0 %v4679
    %5288 = vmatpush2.bf16.msra.mxu0 %v4678
    %5289 = vmatprep.mubr.bf16.mxu0 0
    %5290 = vmatmul.mubr.bf16.gmra.mxu0 0
    %v5291 = vpop.f32.mrf.mxu0
    %v5292 = vadd.f32 0.0, %v5291
    %v5293 = vpop.f32.mrf.mxu0
    %v5294 = vadd.f32 0.0, %v5293
    %v5295 = vpop.f32.mrf.mxu0
    %v5296 = vpop.f32.mrf.mxu0
    %5297 = vdwg.mxu0
    %5298 = vmatprep.subr.bf16.mxu0 %v4665
    %5299 = vmatpush1.bf16.msra.mxu0 %v4664
    %5300 = vmatprep.subr.bf16.mxu0 %v4649
    %5301 = vmatpush1.bf16.msra.mxu0 %v4648
    %5302 = vmatprep.subr.bf16.mxu0 %v4633
    %5303 = vmatpush1.bf16.msra.mxu0 %v4632
    %5304 = vmatprep.subr.bf16.mxu0 %v4617
    %5305 = vmatpush1.bf16.msra.mxu0 %v4616
    %5306 = vmatprep.subr.bf16.mxu0 %v4601
    %5307 = vmatpush1.bf16.msra.mxu0 %v4600
    %5308 = vmatprep.subr.bf16.mxu0 %v4585
    %5309 = vmatpush1.bf16.msra.mxu0 %v4584
    %5310 = vmatprep.subr.bf16.mxu0 %v4569
    %5311 = vmatpush1.bf16.msra.mxu0 %v4568
    %5312 = vmatprep.subr.bf16.mxu0 %v4553
    %5313 = vmatpush1.bf16.msra.mxu0 %v4552
    %5314 = vmatprep.subr.bf16.mxu0 %v4793
    %5315 = vmatpush2.bf16.msra.mxu0 %v4792
    %5316 = vmatprep.subr.bf16.mxu0 %v4777
    %5317 = vmatpush2.bf16.msra.mxu0 %v4776
    %5318 = vmatprep.subr.bf16.mxu0 %v4761
    %5319 = vmatpush2.bf16.msra.mxu0 %v4760
    %5320 = vmatprep.subr.bf16.mxu0 %v4745
    %5321 = vmatpush2.bf16.msra.mxu0 %v4744
    %5322 = vmatprep.subr.bf16.mxu0 %v4729
    %5323 = vmatpush2.bf16.msra.mxu0 %v4728
    %5324 = vmatprep.subr.bf16.mxu0 %v4713
    %5325 = vmatpush2.bf16.msra.mxu0 %v4712
    %5326 = vmatprep.subr.bf16.mxu0 %v4697
    %5327 = vmatpush2.bf16.msra.mxu0 %v4696
    %5328 = vmatprep.subr.bf16.mxu0 %v4681
    %5329 = vmatpush2.bf16.msra.mxu0 %v4680
    %5330 = vmatprep.mubr.bf16.mxu0 0
    %5331 = vmatmul.mubr.bf16.gmra.mxu0 0
    %v5332 = vpop.f32.mrf.mxu0
    %v5333 = vadd.f32 0.0, %v5332
    %v5334 = vpop.f32.mrf.mxu0
    %v5335 = vadd.f32 0.0, %v5334
    %v5336 = vpop.f32.mrf.mxu0
    %v5337 = vpop.f32.mrf.mxu0
    %5338 = vdwg.mxu0
    %5339 = vmatprep.subr.bf16.mxu0 %v4667
    %5340 = vmatpush1.bf16.msra.mxu0 %v4666
    %5341 = vmatprep.subr.bf16.mxu0 %v4651
    %5342 = vmatpush1.bf16.msra.mxu0 %v4650
    %5343 = vmatprep.subr.bf16.mxu0 %v4635
    %5344 = vmatpush1.bf16.msra.mxu0 %v4634
    %5345 = vmatprep.subr.bf16.mxu0 %v4619
    %5346 = vmatpush1.bf16.msra.mxu0 %v4618
    %5347 = vmatprep.subr.bf16.mxu0 %v4603
    %5348 = vmatpush1.bf16.msra.mxu0 %v4602
    %5349 = vmatprep.subr.bf16.mxu0 %v4587
    %5350 = vmatpush1.bf16.msra.mxu0 %v4586
    %5351 = vmatprep.subr.bf16.mxu0 %v4571
    %5352 = vmatpush1.bf16.msra.mxu0 %v4570
    %5353 = vmatprep.subr.bf16.mxu0 %v4555
    %5354 = vmatpush1.bf16.msra.mxu0 %v4554
    %5355 = vmatprep.subr.bf16.mxu0 %v4795
    %5356 = vmatpush2.bf16.msra.mxu0 %v4794
    %5357 = vmatprep.subr.bf16.mxu0 %v4779
    %5358 = vmatpush2.bf16.msra.mxu0 %v4778
    %5359 = vmatprep.subr.bf16.mxu0 %v4763
    %5360 = vmatpush2.bf16.msra.mxu0 %v4762
    %5361 = vmatprep.subr.bf16.mxu0 %v4747
    %5362 = vmatpush2.bf16.msra.mxu0 %v4746
    %5363 = vmatprep.subr.bf16.mxu0 %v4731
    %5364 = vmatpush2.bf16.msra.mxu0 %v4730
    %5365 = vmatprep.subr.bf16.mxu0 %v4715
    %5366 = vmatpush2.bf16.msra.mxu0 %v4714
    %5367 = vmatprep.subr.bf16.mxu0 %v4699
    %5368 = vmatpush2.bf16.msra.mxu0 %v4698
    %5369 = vmatprep.subr.bf16.mxu0 %v4683
    %5370 = vmatpush2.bf16.msra.mxu0 %v4682
    %5371 = vmatprep.mubr.bf16.mxu0 0
    %5372 = vmatmul.mubr.bf16.gmra.mxu0 0
    %v5373 = vpop.f32.mrf.mxu0
    %v5374 = vadd.f32 0.0, %v5373
    %v5375 = vpop.f32.mrf.mxu0
    %v5376 = vadd.f32 0.0, %v5375
    %v5377 = vpop.f32.mrf.mxu0
    %v5378 = vpop.f32.mrf.mxu0
    %5379 = vdwg.mxu0
    %v5380 = vld [vmem:[#allocation2] sm:$0xff]
    %v5381 = vld [vmem:[#allocation2 + $0x8] sm:$0xff]
    %v5382 = vld [vmem:[#allocation2 + $0x10] sm:$0xff]
    %v5383 = vld [vmem:[#allocation2 + $0x18] sm:$0xff]
    %v5384 = vsel %vm3515, %v5087, %v5251
    %v5385 = vsel %vm3515, %v5089, %v5253
    %v5386 = vsel %vm3515, %v5128, %v5292
    %v5387 = vsel %vm3515, %v5130, %v5294
    %v5388 = vsel %vm3515, %v5169, %v5333
    %v5389 = vsel %vm3515, %v5171, %v5335
    %v5390 = vsel %vm3515, %v5210, %v5374
    %v5391 = vsel %vm3515, %v5212, %v5376
    %v5400 = vcombine.low %v5384, %v5385
    %v5401 = vcombine.low %v5386, %v5387
    %v5402 = vcombine.low %v5388, %v5389
    %v5403 = vcombine.low %v5390, %v5391
    %v5408 = vadd.f32 %v5380, %v5400
    %v5409 = vadd.f32 %v5381, %v5401
    %v5410 = vadd.f32 %v5382, %v5402
    %v5411 = vadd.f32 %v5383, %v5403
    %v5412 = vxor.u32 %v5408, 2147483648
    %v5413 = vmul.f32 %v5412, 1.442695
    %v5414 = vpow.pop %v5413
    %v5415 = vadd.f32 %v5414, 1.0
    %v5416 = vrcp.pop %v5415
    %v5417 = vmul.f32 1.0, %v5416
    %v5418 = vxor.u32 %v5409, 2147483648
    %v5419 = vmul.f32 %v5418, 1.442695
    %v5420 = vpow.pop %v5419
    %v5421 = vadd.f32 %v5420, 1.0
    %v5422 = vrcp.pop %v5421
    %v5423 = vmul.f32 1.0, %v5422
    %v5424 = vtanh.pop %v5410
    %v5425 = vxor.u32 %v5411, 2147483648
    %v5426 = vmul.f32 %v5425, 1.442695
    %v5427 = vpow.pop %v5426
    %v5428 = vadd.f32 %v5427, 1.0
    %v5429 = vrcp.pop %v5428
    %v5430 = vmul.f32 1.0, %v5429
    %v5431 = vmul.f32 %v5423, 0.0
    %v5432 = vmul.f32 %v5417, %v5424
    %v5433 = vadd.f32 %v5431, %v5432
    %v5434 = vtanh.pop %v5433
    %v5435 = vmul.f32 %v5430, %v5434
    %v5437 = vcombine.high %v5435, %v5435
    %v5439 = vpack.c.bf16 %v5435, %v5435
    %v5440 = vpack.c.bf16 %v5437, %v5437
    %5441 = vmatprep.subr.bf16.mxu0 %v4653
    %5442 = vmatpush1.bf16.msra.mxu0 %v4652
    %5443 = vmatprep.subr.bf16.mxu0 %v4637
    %5444 = vmatpush1.bf16.msra.mxu0 %v4636
    %5445 = vmatprep.subr.bf16.mxu0 %v4621
    %5446 = vmatpush1.bf16.msra.mxu0 %v4620
    %5447 = vmatprep.subr.bf16.mxu0 %v4605
    %5448 = vmatpush1.bf16.msra.mxu0 %v4604
    %5449 = vmatprep.subr.bf16.mxu0 %v4589
    %5450 = vmatpush1.bf16.msra.mxu0 %v4588
    %5451 = vmatprep.subr.bf16.mxu0 %v4573
    %5452 = vmatpush1.bf16.msra.mxu0 %v4572
    %5453 = vmatprep.subr.bf16.mxu0 %v4557
    %5454 = vmatpush1.bf16.msra.mxu0 %v4556
    %5455 = vmatprep.subr.bf16.mxu0 %v4541
    %5456 = vmatpush1.bf16.msra.mxu0 %v4540
    %5457 = vmatprep.subr.bf16.mxu0 %v4781
    %5458 = vmatpush2.bf16.msra.mxu0 %v4780
    %5459 = vmatprep.subr.bf16.mxu0 %v4765
    %5460 = vmatpush2.bf16.msra.mxu0 %v4764
    %5461 = vmatprep.subr.bf16.mxu0 %v4749
    %5462 = vmatpush2.bf16.msra.mxu0 %v4748
    %5463 = vmatprep.subr.bf16.mxu0 %v4733
    %5464 = vmatpush2.bf16.msra.mxu0 %v4732
    %5465 = vmatprep.subr.bf16.mxu0 %v4717
    %5466 = vmatpush2.bf16.msra.mxu0 %v4716
    %5467 = vmatprep.subr.bf16.mxu0 %v4701
    %5468 = vmatpush2.bf16.msra.mxu0 %v4700
    %5469 = vmatprep.subr.bf16.mxu0 %v4685
    %5470 = vmatpush2.bf16.msra.mxu0 %v4684
    %5471 = vmatprep.subr.bf16.mxu0 %v4669
    %5472 = vmatpush2.bf16.msra.mxu0 %v4668
    %5473 = vmatprep.mubr.bf16.mxu0 %v5440
    %5474 = vmatmul.mubr.bf16.gmra.mxu0 %v5439
    %v5475 = vpop.f32.mrf.mxu0
    %v5476 = vadd.f32 0.0, %v5475
    %v5477 = vpop.f32.mrf.mxu0
    %v5478 = vadd.f32 0.0, %v5477
    %v5479 = vpop.f32.mrf.mxu0
    %v5480 = vpop.f32.mrf.mxu0
    %5481 = vdwg.mxu0
    %5482 = vmatprep.subr.bf16.mxu0 %v4655
    %5483 = vmatpush1.bf16.msra.mxu0 %v4654
    %5484 = vmatprep.subr.bf16.mxu0 %v4639
    %5485 = vmatpush1.bf16.msra.mxu0 %v4638
    %5486 = vmatprep.subr.bf16.mxu0 %v4623
    %5487 = vmatpush1.bf16.msra.mxu0 %v4622
    %5488 = vmatprep.subr.bf16.mxu0 %v4607
    %5489 = vmatpush1.bf16.msra.mxu0 %v4606
    %5490 = vmatprep.subr.bf16.mxu0 %v4591
    %5491 = vmatpush1.bf16.msra.mxu0 %v4590
    %5492 = vmatprep.subr.bf16.mxu0 %v4575
    %5493 = vmatpush1.bf16.msra.mxu0 %v4574
    %5494 = vmatprep.subr.bf16.mxu0 %v4559
    %5495 = vmatpush1.bf16.msra.mxu0 %v4558
    %5496 = vmatprep.subr.bf16.mxu0 %v4543
    %5497 = vmatpush1.bf16.msra.mxu0 %v4542
    %5498 = vmatprep.subr.bf16.mxu0 %v4783
    %5499 = vmatpush2.bf16.msra.mxu0 %v4782
    %5500 = vmatprep.subr.bf16.mxu0 %v4767
    %5501 = vmatpush2.bf16.msra.mxu0 %v4766
    %5502 = vmatprep.subr.bf16.mxu0 %v4751
    %5503 = vmatpush2.bf16.msra.mxu0 %v4750
    %5504 = vmatprep.subr.bf16.mxu0 %v4735
    %5505 = vmatpush2.bf16.msra.mxu0 %v4734
    %5506 = vmatprep.subr.bf16.mxu0 %v4719
    %5507 = vmatpush2.bf16.msra.mxu0 %v4718
    %5508 = vmatprep.subr.bf16.mxu0 %v4703
    %5509 = vmatpush2.bf16.msra.mxu0 %v4702
    %5510 = vmatprep.subr.bf16.mxu0 %v4687
    %5511 = vmatpush2.bf16.msra.mxu0 %v4686
    %5512 = vmatprep.subr.bf16.mxu0 %v4671
    %5513 = vmatpush2.bf16.msra.mxu0 %v4670
    %5514 = vmatprep.mubr.bf16.mxu0 %v5440
    %5515 = vmatmul.mubr.bf16.gmra.mxu0 %v5439
    %v5516 = vpop.f32.mrf.mxu0
    %v5517 = vadd.f32 0.0, %v5516
    %v5518 = vpop.f32.mrf.mxu0
    %v5519 = vadd.f32 0.0, %v5518
    %v5520 = vpop.f32.mrf.mxu0
    %v5521 = vpop.f32.mrf.mxu0
    %5522 = vdwg.mxu0
    %5523 = vmatprep.subr.bf16.mxu0 %v4657
    %5524 = vmatpush1.bf16.msra.mxu0 %v4656
    %5525 = vmatprep.subr.bf16.mxu0 %v4641
    %5526 = vmatpush1.bf16.msra.mxu0 %v4640
    %5527 = vmatprep.subr.bf16.mxu0 %v4625
    %5528 = vmatpush1.bf16.msra.mxu0 %v4624
    %5529 = vmatprep.subr.bf16.mxu0 %v4609
    %5530 = vmatpush1.bf16.msra.mxu0 %v4608
    %5531 = vmatprep.subr.bf16.mxu0 %v4593
    %5532 = vmatpush1.bf16.msra.mxu0 %v4592
    %5533 = vmatprep.subr.bf16.mxu0 %v4577
    %5534 = vmatpush1.bf16.msra.mxu0 %v4576
    %5535 = vmatprep.subr.bf16.mxu0 %v4561
    %5536 = vmatpush1.bf16.msra.mxu0 %v4560
    %5537 = vmatprep.subr.bf16.mxu0 %v4545
    %5538 = vmatpush1.bf16.msra.mxu0 %v4544
    %5539 = vmatprep.subr.bf16.mxu0 %v4785
    %5540 = vmatpush2.bf16.msra.mxu0 %v4784
    %5541 = vmatprep.subr.bf16.mxu0 %v4769
    %5542 = vmatpush2.bf16.msra.mxu0 %v4768
    %5543 = vmatprep.subr.bf16.mxu0 %v4753
    %5544 = vmatpush2.bf16.msra.mxu0 %v4752
    %5545 = vmatprep.subr.bf16.mxu0 %v4737
    %5546 = vmatpush2.bf16.msra.mxu0 %v4736
    %5547 = vmatprep.subr.bf16.mxu0 %v4721
    %5548 = vmatpush2.bf16.msra.mxu0 %v4720
    %5549 = vmatprep.subr.bf16.mxu0 %v4705
    %5550 = vmatpush2.bf16.msra.mxu0 %v4704
    %5551 = vmatprep.subr.bf16.mxu0 %v4689
    %5552 = vmatpush2.bf16.msra.mxu0 %v4688
    %5553 = vmatprep.subr.bf16.mxu0 %v4673
    %5554 = vmatpush2.bf16.msra.mxu0 %v4672
    %5555 = vmatprep.mubr.bf16.mxu0 %v5440
    %5556 = vmatmul.mubr.bf16.gmra.mxu0 %v5439
    %v5557 = vpop.f32.mrf.mxu0
    %v5558 = vadd.f32 0.0, %v5557
    %v5559 = vpop.f32.mrf.mxu0
    %v5560 = vadd.f32 0.0, %v5559
    %v5561 = vpop.f32.mrf.mxu0
    %v5562 = vpop.f32.mrf.mxu0
    %5563 = vdwg.mxu0
    %5564 = vmatprep.subr.bf16.mxu0 %v4659
    %5565 = vmatpush1.bf16.msra.mxu0 %v4658
    %5566 = vmatprep.subr.bf16.mxu0 %v4643
    %5567 = vmatpush1.bf16.msra.mxu0 %v4642
    %5568 = vmatprep.subr.bf16.mxu0 %v4627
    %5569 = vmatpush1.bf16.msra.mxu0 %v4626
    %5570 = vmatprep.subr.bf16.mxu0 %v4611
    %5571 = vmatpush1.bf16.msra.mxu0 %v4610
    %5572 = vmatprep.subr.bf16.mxu0 %v4595
    %5573 = vmatpush1.bf16.msra.mxu0 %v4594
    %5574 = vmatprep.subr.bf16.mxu0 %v4579
    %5575 = vmatpush1.bf16.msra.mxu0 %v4578
    %5576 = vmatprep.subr.bf16.mxu0 %v4563
    %5577 = vmatpush1.bf16.msra.mxu0 %v4562
    %5578 = vmatprep.subr.bf16.mxu0 %v4547
    %5579 = vmatpush1.bf16.msra.mxu0 %v4546
    %5580 = vmatprep.subr.bf16.mxu0 %v4787
    %5581 = vmatpush2.bf16.msra.mxu0 %v4786
    %5582 = vmatprep.subr.bf16.mxu0 %v4771
    %5583 = vmatpush2.bf16.msra.mxu0 %v4770
    %5584 = vmatprep.subr.bf16.mxu0 %v4755
    %5585 = vmatpush2.bf16.msra.mxu0 %v4754
    %5586 = vmatprep.subr.bf16.mxu0 %v4739
    %5587 = vmatpush2.bf16.msra.mxu0 %v4738
    %5588 = vmatprep.subr.bf16.mxu0 %v4723
    %5589 = vmatpush2.bf16.msra.mxu0 %v4722
    %5590 = vmatprep.subr.bf16.mxu0 %v4707
    %5591 = vmatpush2.bf16.msra.mxu0 %v4706
    %5592 = vmatprep.subr.bf16.mxu0 %v4691
    %5593 = vmatpush2.bf16.msra.mxu0 %v4690
    %5594 = vmatprep.subr.bf16.mxu0 %v4675
    %5595 = vmatpush2.bf16.msra.mxu0 %v4674
    %5596 = vmatprep.mubr.bf16.mxu0 %v5440
    %5597 = vmatmul.mubr.bf16.gmra.mxu0 %v5439
    %v5598 = vpop.f32.mrf.mxu0
    %v5599 = vadd.f32 0.0, %v5598
    %v5600 = vpop.f32.mrf.mxu0
    %v5601 = vadd.f32 0.0, %v5600
    %v5602 = vpop.f32.mrf.mxu0
    %v5603 = vpop.f32.mrf.mxu0
    %5604 = vdwg.mxu0
    %5605 = vmatprep.subr.bf16.mxu0 %v4661
    %5606 = vmatpush1.bf16.msra.mxu0 %v4660
    %5607 = vmatprep.subr.bf16.mxu0 %v4645
    %5608 = vmatpush1.bf16.msra.mxu0 %v4644
    %5609 = vmatprep.subr.bf16.mxu0 %v4629
    %5610 = vmatpush1.bf16.msra.mxu0 %v4628
    %5611 = vmatprep.subr.bf16.mxu0 %v4613
    %5612 = vmatpush1.bf16.msra.mxu0 %v4612
    %5613 = vmatprep.subr.bf16.mxu0 %v4597
    %5614 = vmatpush1.bf16.msra.mxu0 %v4596
    %5615 = vmatprep.subr.bf16.mxu0 %v4581
    %5616 = vmatpush1.bf16.msra.mxu0 %v4580
    %5617 = vmatprep.subr.bf16.mxu0 %v4565
    %5618 = vmatpush1.bf16.msra.mxu0 %v4564
    %5619 = vmatprep.subr.bf16.mxu0 %v4549
    %5620 = vmatpush1.bf16.msra.mxu0 %v4548
    %5621 = vmatprep.subr.bf16.mxu0 %v4789
    %5622 = vmatpush2.bf16.msra.mxu0 %v4788
    %5623 = vmatprep.subr.bf16.mxu0 %v4773
    %5624 = vmatpush2.bf16.msra.mxu0 %v4772
    %5625 = vmatprep.subr.bf16.mxu0 %v4757
    %5626 = vmatpush2.bf16.msra.mxu0 %v4756
    %5627 = vmatprep.subr.bf16.mxu0 %v4741
    %5628 = vmatpush2.bf16.msra.mxu0 %v4740
    %5629 = vmatprep.subr.bf16.mxu0 %v4725
    %5630 = vmatpush2.bf16.msra.mxu0 %v4724
    %5631 = vmatprep.subr.bf16.mxu0 %v4709
    %5632 = vmatpush2.bf16.msra.mxu0 %v4708
    %5633 = vmatprep.subr.bf16.mxu0 %v4693
    %5634 = vmatpush2.bf16.msra.mxu0 %v4692
    %5635 = vmatprep.subr.bf16.mxu0 %v4677
    %5636 = vmatpush2.bf16.msra.mxu0 %v4676
    %5637 = vmatprep.mubr.bf16.mxu0 %v5440
    %5638 = vmatmul.mubr.bf16.gmra.mxu0 %v5439
    %v5639 = vpop.f32.mrf.mxu0
    %v5640 = vadd.f32 0.0, %v5639
    %v5641 = vpop.f32.mrf.mxu0
    %v5642 = vadd.f32 0.0, %v5641
    %v5643 = vpop.f32.mrf.mxu0
    %v5644 = vpop.f32.mrf.mxu0
    %5645 = vdwg.mxu0
    %5646 = vmatprep.subr.bf16.mxu0 %v4663
    %5647 = vmatpush1.bf16.msra.mxu0 %v4662
    %5648 = vmatprep.subr.bf16.mxu0 %v4647
    %5649 = vmatpush1.bf16.msra.mxu0 %v4646
    %5650 = vmatprep.subr.bf16.mxu0 %v4631
    %5651 = vmatpush1.bf16.msra.mxu0 %v4630
    %5652 = vmatprep.subr.bf16.mxu0 %v4615
    %5653 = vmatpush1.bf16.msra.mxu0 %v4614
    %5654 = vmatprep.subr.bf16.mxu0 %v4599
    %5655 = vmatpush1.bf16.msra.mxu0 %v4598
    %5656 = vmatprep.subr.bf16.mxu0 %v4583
    %5657 = vmatpush1.bf16.msra.mxu0 %v4582
    %5658 = vmatprep.subr.bf16.mxu0 %v4567
    %5659 = vmatpush1.bf16.msra.mxu0 %v4566
    %5660 = vmatprep.subr.bf16.mxu0 %v4551
    %5661 = vmatpush1.bf16.msra.mxu0 %v4550
    %5662 = vmatprep.subr.bf16.mxu0 %v4791
    %5663 = vmatpush2.bf16.msra.mxu0 %v4790
    %5664 = vmatprep.subr.bf16.mxu0 %v4775
    %5665 = vmatpush2.bf16.msra.mxu0 %v4774
    %5666 = vmatprep.subr.bf16.mxu0 %v4759
    %5667 = vmatpush2.bf16.msra.mxu0 %v4758
    %5668 = vmatprep.subr.bf16.mxu0 %v4743
    %5669 = vmatpush2.bf16.msra.mxu0 %v4742
    %5670 = vmatprep.subr.bf16.mxu0 %v4727
    %5671 = vmatpush2.bf16.msra.mxu0 %v4726
    %5672 = vmatprep.subr.bf16.mxu0 %v4711
    %5673 = vmatpush2.bf16.msra.mxu0 %v4710
    %5674 = vmatprep.subr.bf16.mxu0 %v4695
    %5675 = vmatpush2.bf16.msra.mxu0 %v4694
    %5676 = vmatprep.subr.bf16.mxu0 %v4679
    %5677 = vmatpush2.bf16.msra.mxu0 %v4678
    %5678 = vmatprep.mubr.bf16.mxu0 %v5440
    %5679 = vmatmul.mubr.bf16.gmra.mxu0 %v5439
    %v5680 = vpop.f32.mrf.mxu0
    %v5681 = vadd.f32 0.0, %v5680
    %v5682 = vpop.f32.mrf.mxu0
    %v5683 = vadd.f32 0.0, %v5682
    %v5684 = vpop.f32.mrf.mxu0
    %v5685 = vpop.f32.mrf.mxu0
    %5686 = vdwg.mxu0
    %5687 = vmatprep.subr.bf16.mxu0 %v4665
    %5688 = vmatpush1.bf16.msra.mxu0 %v4664
    %5689 = vmatprep.subr.bf16.mxu0 %v4649
    %5690 = vmatpush1.bf16.msra.mxu0 %v4648
    %5691 = vmatprep.subr.bf16.mxu0 %v4633
    %5692 = vmatpush1.bf16.msra.mxu0 %v4632
    %5693 = vmatprep.subr.bf16.mxu0 %v4617
    %5694 = vmatpush1.bf16.msra.mxu0 %v4616
    %5695 = vmatprep.subr.bf16.mxu0 %v4601
    %5696 = vmatpush1.bf16.msra.mxu0 %v4600
    %5697 = vmatprep.subr.bf16.mxu0 %v4585
    %5698 = vmatpush1.bf16.msra.mxu0 %v4584
    %5699 = vmatprep.subr.bf16.mxu0 %v4569
    %5700 = vmatpush1.bf16.msra.mxu0 %v4568
    %5701 = vmatprep.subr.bf16.mxu0 %v4553
    %5702 = vmatpush1.bf16.msra.mxu0 %v4552
    %5703 = vmatprep.subr.bf16.mxu0 %v4793
    %5704 = vmatpush2.bf16.msra.mxu0 %v4792
    %5705 = vmatprep.subr.bf16.mxu0 %v4777
    %5706 = vmatpush2.bf16.msra.mxu0 %v4776
    %5707 = vmatprep.subr.bf16.mxu0 %v4761
    %5708 = vmatpush2.bf16.msra.mxu0 %v4760
    %5709 = vmatprep.subr.bf16.mxu0 %v4745
    %5710 = vmatpush2.bf16.msra.mxu0 %v4744
    %5711 = vmatprep.subr.bf16.mxu0 %v4729
    %5712 = vmatpush2.bf16.msra.mxu0 %v4728
    %5713 = vmatprep.subr.bf16.mxu0 %v4713
    %5714 = vmatpush2.bf16.msra.mxu0 %v4712
    %5715 = vmatprep.subr.bf16.mxu0 %v4697
    %5716 = vmatpush2.bf16.msra.mxu0 %v4696
    %5717 = vmatprep.subr.bf16.mxu0 %v4681
    %5718 = vmatpush2.bf16.msra.mxu0 %v4680
    %5719 = vmatprep.mubr.bf16.mxu0 %v5440
    %5720 = vmatmul.mubr.bf16.gmra.mxu0 %v5439
    %v5721 = vpop.f32.mrf.mxu0
    %v5722 = vadd.f32 0.0, %v5721
    %v5723 = vpop.f32.mrf.mxu0
    %v5724 = vadd.f32 0.0, %v5723
    %v5725 = vpop.f32.mrf.mxu0
    %v5726 = vpop.f32.mrf.mxu0
    %5727 = vdwg.mxu0
    %5728 = vmatprep.subr.bf16.mxu0 %v4667
    %5729 = vmatpush1.bf16.msra.mxu0 %v4666
    %5730 = vmatprep.subr.bf16.mxu0 %v4651
    %5731 = vmatpush1.bf16.msra.mxu0 %v4650
    %5732 = vmatprep.subr.bf16.mxu0 %v4635
    %5733 = vmatpush1.bf16.msra.mxu0 %v4634
    %5734 = vmatprep.subr.bf16.mxu0 %v4619
    %5735 = vmatpush1.bf16.msra.mxu0 %v4618
    %5736 = vmatprep.subr.bf16.mxu0 %v4603
    %5737 = vmatpush1.bf16.msra.mxu0 %v4602
    %5738 = vmatprep.subr.bf16.mxu0 %v4587
    %5739 = vmatpush1.bf16.msra.mxu0 %v4586
    %5740 = vmatprep.subr.bf16.mxu0 %v4571
    %5741 = vmatpush1.bf16.msra.mxu0 %v4570
    %5742 = vmatprep.subr.bf16.mxu0 %v4555
    %5743 = vmatpush1.bf16.msra.mxu0 %v4554
    %5744 = vmatprep.subr.bf16.mxu0 %v4795
    %5745 = vmatpush2.bf16.msra.mxu0 %v4794
    %5746 = vmatprep.subr.bf16.mxu0 %v4779
    %5747 = vmatpush2.bf16.msra.mxu0 %v4778
    %5748 = vmatprep.subr.bf16.mxu0 %v4763
    %5749 = vmatpush2.bf16.msra.mxu0 %v4762
    %5750 = vmatprep.subr.bf16.mxu0 %v4747
    %5751 = vmatpush2.bf16.msra.mxu0 %v4746
    %5752 = vmatprep.subr.bf16.mxu0 %v4731
    %5753 = vmatpush2.bf16.msra.mxu0 %v4730
    %5754 = vmatprep.subr.bf16.mxu0 %v4715
    %5755 = vmatpush2.bf16.msra.mxu0 %v4714
    %5756 = vmatprep.subr.bf16.mxu0 %v4699
    %5757 = vmatpush2.bf16.msra.mxu0 %v4698
    %5758 = vmatprep.subr.bf16.mxu0 %v4683
    %5759 = vmatpush2.bf16.msra.mxu0 %v4682
    %5760 = vmatprep.mubr.bf16.mxu0 %v5440
    %5761 = vmatmul.mubr.bf16.gmra.mxu0 %v5439
    %v5762 = vpop.f32.mrf.mxu0
    %v5763 = vadd.f32 0.0, %v5762
    %v5764 = vpop.f32.mrf.mxu0
    %v5765 = vadd.f32 0.0, %v5764
    %v5766 = vpop.f32.mrf.mxu0
    %v5767 = vpop.f32.mrf.mxu0
    %5768 = vdwg.mxu0
    %v5769 = vld [vmem:[%s3048] sm:$0xff]
    %v5770 = vld [vmem:[%s3048 + $0x8] sm:$0xff]
    %v5771 = vld [vmem:[%s3048 + $0x10] sm:$0xff]
    %v5772 = vld [vmem:[%s3048 + $0x18] sm:$0xff]
    %v5773 = vsel %vm3515, %v5476, %v5640
    %v5774 = vsel %vm3515, %v5478, %v5642
    %v5775 = vsel %vm3515, %v5517, %v5681
    %v5776 = vsel %vm3515, %v5519, %v5683
    %v5777 = vsel %vm3515, %v5558, %v5722
    %v5778 = vsel %vm3515, %v5560, %v5724
    %v5779 = vsel %vm3515, %v5599, %v5763
    %v5780 = vsel %vm3515, %v5601, %v5765
    %v5789 = vcombine.low %v5773, %v5774
    %v5790 = vcombine.low %v5775, %v5776
    %v5791 = vcombine.low %v5777, %v5778
    %v5792 = vcombine.low %v5779, %v5780
    %v5797 = vadd.f32 %v5769, %v5789
    %v5798 = vadd.f32 %v5770, %v5790
    %v5799 = vadd.f32 %v5771, %v5791
    %v5800 = vadd.f32 %v5772, %v5792
    %v5801 = vxor.u32 %v5797, 2147483648
    %v5802 = vmul.f32 %v5801, 1.442695
    %v5803 = vpow.pop %v5802
    %v5804 = vadd.f32 %v5803, 1.0
    %v5805 = vrcp.pop %v5804
    %v5806 = vmul.f32 1.0, %v5805
    %v5807 = vxor.u32 %v5798, 2147483648
    %v5808 = vmul.f32 %v5807, 1.442695
    %v5809 = vpow.pop %v5808
    %v5810 = vadd.f32 %v5809, 1.0
    %v5811 = vrcp.pop %v5810
    %v5812 = vmul.f32 1.0, %v5811
    %v5813 = vtanh.pop %v5799
    %v5814 = vxor.u32 %v5800, 2147483648
    %v5815 = vmul.f32 %v5814, 1.442695
    %v5816 = vpow.pop %v5815
    %v5817 = vadd.f32 %v5816, 1.0
    %v5818 = vrcp.pop %v5817
    %v5819 = vmul.f32 1.0, %v5818
    %v5820 = vmul.f32 %v5812, %v5433
    %v5821 = vmul.f32 %v5806, %v5813
    %v5822 = vadd.f32 %v5820, %v5821
    %v5823 = vtanh.pop %v5822
    %v5824 = vmul.f32 %v5819, %v5823
    %v5826 = vcombine.high %v5824, %v5824
    %v5828 = vpack.c.bf16 %v5824, %v5824
    %v5829 = vpack.c.bf16 %v5826, %v5826
    %5830 = vmatprep.subr.bf16.mxu0 %v4653
    %5831 = vmatpush1.bf16.msra.mxu0 %v4652
    %5832 = vmatprep.subr.bf16.mxu0 %v4637
    %5833 = vmatpush1.bf16.msra.mxu0 %v4636
    %5834 = vmatprep.subr.bf16.mxu0 %v4621
    %5835 = vmatpush1.bf16.msra.mxu0 %v4620
    %5836 = vmatprep.subr.bf16.mxu0 %v4605
    %5837 = vmatpush1.bf16.msra.mxu0 %v4604
    %5838 = vmatprep.subr.bf16.mxu0 %v4589
    %5839 = vmatpush1.bf16.msra.mxu0 %v4588
    %5840 = vmatprep.subr.bf16.mxu0 %v4573
    %5841 = vmatpush1.bf16.msra.mxu0 %v4572
    %5842 = vmatprep.subr.bf16.mxu0 %v4557
    %5843 = vmatpush1.bf16.msra.mxu0 %v4556
    %5844 = vmatprep.subr.bf16.mxu0 %v4541
    %5845 = vmatpush1.bf16.msra.mxu0 %v4540
    %5846 = vmatprep.subr.bf16.mxu0 %v4781
    %5847 = vmatpush2.bf16.msra.mxu0 %v4780
    %5848 = vmatprep.subr.bf16.mxu0 %v4765
    %5849 = vmatpush2.bf16.msra.mxu0 %v4764
    %5850 = vmatprep.subr.bf16.mxu0 %v4749
    %5851 = vmatpush2.bf16.msra.mxu0 %v4748
    %5852 = vmatprep.subr.bf16.mxu0 %v4733
    %5853 = vmatpush2.bf16.msra.mxu0 %v4732
    %5854 = vmatprep.subr.bf16.mxu0 %v4717
    %5855 = vmatpush2.bf16.msra.mxu0 %v4716
    %5856 = vmatprep.subr.bf16.mxu0 %v4701
    %5857 = vmatpush2.bf16.msra.mxu0 %v4700
    %5858 = vmatprep.subr.bf16.mxu0 %v4685
    %5859 = vmatpush2.bf16.msra.mxu0 %v4684
    %5860 = vmatprep.subr.bf16.mxu0 %v4669
    %5861 = vmatpush2.bf16.msra.mxu0 %v4668
    %5862 = vmatprep.mubr.bf16.mxu0 %v5829
    %5863 = vmatmul.mubr.bf16.gmra.mxu0 %v5828
    %v5864 = vpop.f32.mrf.mxu0
    %v5865 = vadd.f32 0.0, %v5864
    %v5866 = vpop.f32.mrf.mxu0
    %v5867 = vadd.f32 0.0, %v5866
    %v5868 = vpop.f32.mrf.mxu0
    %v5869 = vpop.f32.mrf.mxu0
    %5870 = vdwg.mxu0
    %5871 = vmatprep.subr.bf16.mxu0 %v4655
    %5872 = vmatpush1.bf16.msra.mxu0 %v4654
    %5873 = vmatprep.subr.bf16.mxu0 %v4639
    %5874 = vmatpush1.bf16.msra.mxu0 %v4638
    %5875 = vmatprep.subr.bf16.mxu0 %v4623
    %5876 = vmatpush1.bf16.msra.mxu0 %v4622
    %5877 = vmatprep.subr.bf16.mxu0 %v4607
    %5878 = vmatpush1.bf16.msra.mxu0 %v4606
    %5879 = vmatprep.subr.bf16.mxu0 %v4591
    %5880 = vmatpush1.bf16.msra.mxu0 %v4590
    %5881 = vmatprep.subr.bf16.mxu0 %v4575
    %5882 = vmatpush1.bf16.msra.mxu0 %v4574
    %5883 = vmatprep.subr.bf16.mxu0 %v4559
    %5884 = vmatpush1.bf16.msra.mxu0 %v4558
    %5885 = vmatprep.subr.bf16.mxu0 %v4543
    %5886 = vmatpush1.bf16.msra.mxu0 %v4542
    %5887 = vmatprep.subr.bf16.mxu0 %v4783
    %5888 = vmatpush2.bf16.msra.mxu0 %v4782
    %5889 = vmatprep.subr.bf16.mxu0 %v4767
    %5890 = vmatpush2.bf16.msra.mxu0 %v4766
    %5891 = vmatprep.subr.bf16.mxu0 %v4751
    %5892 = vmatpush2.bf16.msra.mxu0 %v4750
    %5893 = vmatprep.subr.bf16.mxu0 %v4735
    %5894 = vmatpush2.bf16.msra.mxu0 %v4734
    %5895 = vmatprep.subr.bf16.mxu0 %v4719
    %5896 = vmatpush2.bf16.msra.mxu0 %v4718
    %5897 = vmatprep.subr.bf16.mxu0 %v4703
    %5898 = vmatpush2.bf16.msra.mxu0 %v4702
    %5899 = vmatprep.subr.bf16.mxu0 %v4687
    %5900 = vmatpush2.bf16.msra.mxu0 %v4686
    %5901 = vmatprep.subr.bf16.mxu0 %v4671
    %5902 = vmatpush2.bf16.msra.mxu0 %v4670
    %5903 = vmatprep.mubr.bf16.mxu0 %v5829
    %5904 = vmatmul.mubr.bf16.gmra.mxu0 %v5828
    %v5905 = vpop.f32.mrf.mxu0
    %v5906 = vadd.f32 0.0, %v5905
    %v5907 = vpop.f32.mrf.mxu0
    %v5908 = vadd.f32 0.0, %v5907
    %v5909 = vpop.f32.mrf.mxu0
    %v5910 = vpop.f32.mrf.mxu0
    %5911 = vdwg.mxu0
    %5912 = vmatprep.subr.bf16.mxu0 %v4657
    %5913 = vmatpush1.bf16.msra.mxu0 %v4656
    %5914 = vmatprep.subr.bf16.mxu0 %v4641
    %5915 = vmatpush1.bf16.msra.mxu0 %v4640
    %5916 = vmatprep.subr.bf16.mxu0 %v4625
    %5917 = vmatpush1.bf16.msra.mxu0 %v4624
    %5918 = vmatprep.subr.bf16.mxu0 %v4609
    %5919 = vmatpush1.bf16.msra.mxu0 %v4608
    %5920 = vmatprep.subr.bf16.mxu0 %v4593
    %5921 = vmatpush1.bf16.msra.mxu0 %v4592
    %5922 = vmatprep.subr.bf16.mxu0 %v4577
    %5923 = vmatpush1.bf16.msra.mxu0 %v4576
    %5924 = vmatprep.subr.bf16.mxu0 %v4561
    %5925 = vmatpush1.bf16.msra.mxu0 %v4560
    %5926 = vmatprep.subr.bf16.mxu0 %v4545
    %5927 = vmatpush1.bf16.msra.mxu0 %v4544
    %5928 = vmatprep.subr.bf16.mxu0 %v4785
    %5929 = vmatpush2.bf16.msra.mxu0 %v4784
    %5930 = vmatprep.subr.bf16.mxu0 %v4769
    %5931 = vmatpush2.bf16.msra.mxu0 %v4768
    %5932 = vmatprep.subr.bf16.mxu0 %v4753
    %5933 = vmatpush2.bf16.msra.mxu0 %v4752
    %5934 = vmatprep.subr.bf16.mxu0 %v4737
    %5935 = vmatpush2.bf16.msra.mxu0 %v4736
    %5936 = vmatprep.subr.bf16.mxu0 %v4721
    %5937 = vmatpush2.bf16.msra.mxu0 %v4720
    %5938 = vmatprep.subr.bf16.mxu0 %v4705
    %5939 = vmatpush2.bf16.msra.mxu0 %v4704
    %5940 = vmatprep.subr.bf16.mxu0 %v4689
    %5941 = vmatpush2.bf16.msra.mxu0 %v4688
    %5942 = vmatprep.subr.bf16.mxu0 %v4673
    %5943 = vmatpush2.bf16.msra.mxu0 %v4672
    %5944 = vmatprep.mubr.bf16.mxu0 %v5829
    %5945 = vmatmul.mubr.bf16.gmra.mxu0 %v5828
    %v5946 = vpop.f32.mrf.mxu0
    %v5947 = vadd.f32 0.0, %v5946
    %v5948 = vpop.f32.mrf.mxu0
    %v5949 = vadd.f32 0.0, %v5948
    %v5950 = vpop.f32.mrf.mxu0
    %v5951 = vpop.f32.mrf.mxu0
    %5952 = vdwg.mxu0
    %5953 = vmatprep.subr.bf16.mxu0 %v4659
    %5954 = vmatpush1.bf16.msra.mxu0 %v4658
    %5955 = vmatprep.subr.bf16.mxu0 %v4643
    %5956 = vmatpush1.bf16.msra.mxu0 %v4642
    %5957 = vmatprep.subr.bf16.mxu0 %v4627
    %5958 = vmatpush1.bf16.msra.mxu0 %v4626
    %5959 = vmatprep.subr.bf16.mxu0 %v4611
    %5960 = vmatpush1.bf16.msra.mxu0 %v4610
    %5961 = vmatprep.subr.bf16.mxu0 %v4595
    %5962 = vmatpush1.bf16.msra.mxu0 %v4594
    %5963 = vmatprep.subr.bf16.mxu0 %v4579
    %5964 = vmatpush1.bf16.msra.mxu0 %v4578
    %5965 = vmatprep.subr.bf16.mxu0 %v4563
    %5966 = vmatpush1.bf16.msra.mxu0 %v4562
    %5967 = vmatprep.subr.bf16.mxu0 %v4547
    %5968 = vmatpush1.bf16.msra.mxu0 %v4546
    %5969 = vmatprep.subr.bf16.mxu0 %v4787
    %5970 = vmatpush2.bf16.msra.mxu0 %v4786
    %5971 = vmatprep.subr.bf16.mxu0 %v4771
    %5972 = vmatpush2.bf16.msra.mxu0 %v4770
    %5973 = vmatprep.subr.bf16.mxu0 %v4755
    %5974 = vmatpush2.bf16.msra.mxu0 %v4754
    %5975 = vmatprep.subr.bf16.mxu0 %v4739
    %5976 = vmatpush2.bf16.msra.mxu0 %v4738
    %5977 = vmatprep.subr.bf16.mxu0 %v4723
    %5978 = vmatpush2.bf16.msra.mxu0 %v4722
    %5979 = vmatprep.subr.bf16.mxu0 %v4707
    %5980 = vmatpush2.bf16.msra.mxu0 %v4706
    %5981 = vmatprep.subr.bf16.mxu0 %v4691
    %5982 = vmatpush2.bf16.msra.mxu0 %v4690
    %5983 = vmatprep.subr.bf16.mxu0 %v4675
    %5984 = vmatpush2.bf16.msra.mxu0 %v4674
    %5985 = vmatprep.mubr.bf16.mxu0 %v5829
    %5986 = vmatmul.mubr.bf16.gmra.mxu0 %v5828
    %v5987 = vpop.f32.mrf.mxu0
    %v5988 = vadd.f32 0.0, %v5987
    %v5989 = vpop.f32.mrf.mxu0
    %v5990 = vadd.f32 0.0, %v5989
    %v5991 = vpop.f32.mrf.mxu0
    %v5992 = vpop.f32.mrf.mxu0
    %5993 = vdwg.mxu0
    %5994 = vmatprep.subr.bf16.mxu0 %v4661
    %5995 = vmatpush1.bf16.msra.mxu0 %v4660
    %5996 = vmatprep.subr.bf16.mxu0 %v4645
    %5997 = vmatpush1.bf16.msra.mxu0 %v4644
    %5998 = vmatprep.subr.bf16.mxu0 %v4629
    %5999 = vmatpush1.bf16.msra.mxu0 %v4628
    %6000 = vmatprep.subr.bf16.mxu0 %v4613
    %6001 = vmatpush1.bf16.msra.mxu0 %v4612
    %6002 = vmatprep.subr.bf16.mxu0 %v4597
    %6003 = vmatpush1.bf16.msra.mxu0 %v4596
    %6004 = vmatprep.subr.bf16.mxu0 %v4581
    %6005 = vmatpush1.bf16.msra.mxu0 %v4580
    %6006 = vmatprep.subr.bf16.mxu0 %v4565
    %6007 = vmatpush1.bf16.msra.mxu0 %v4564
    %6008 = vmatprep.subr.bf16.mxu0 %v4549
    %6009 = vmatpush1.bf16.msra.mxu0 %v4548
    %6010 = vmatprep.subr.bf16.mxu0 %v4789
    %6011 = vmatpush2.bf16.msra.mxu0 %v4788
    %6012 = vmatprep.subr.bf16.mxu0 %v4773
    %6013 = vmatpush2.bf16.msra.mxu0 %v4772
    %6014 = vmatprep.subr.bf16.mxu0 %v4757
    %6015 = vmatpush2.bf16.msra.mxu0 %v4756
    %6016 = vmatprep.subr.bf16.mxu0 %v4741
    %6017 = vmatpush2.bf16.msra.mxu0 %v4740
    %6018 = vmatprep.subr.bf16.mxu0 %v4725
    %6019 = vmatpush2.bf16.msra.mxu0 %v4724
    %6020 = vmatprep.subr.bf16.mxu0 %v4709
    %6021 = vmatpush2.bf16.msra.mxu0 %v4708
    %6022 = vmatprep.subr.bf16.mxu0 %v4693
    %6023 = vmatpush2.bf16.msra.mxu0 %v4692
    %6024 = vmatprep.subr.bf16.mxu0 %v4677
    %6025 = vmatpush2.bf16.msra.mxu0 %v4676
    %6026 = vmatprep.mubr.bf16.mxu0 %v5829
    %6027 = vmatmul.mubr.bf16.gmra.mxu0 %v5828
    %v6028 = vpop.f32.mrf.mxu0
    %v6029 = vadd.f32 0.0, %v6028
    %v6030 = vpop.f32.mrf.mxu0
    %v6031 = vadd.f32 0.0, %v6030
    %v6032 = vpop.f32.mrf.mxu0
    %v6033 = vpop.f32.mrf.mxu0
    %6034 = vdwg.mxu0
    %6035 = vmatprep.subr.bf16.mxu0 %v4663
    %6036 = vmatpush1.bf16.msra.mxu0 %v4662
    %6037 = vmatprep.subr.bf16.mxu0 %v4647
    %6038 = vmatpush1.bf16.msra.mxu0 %v4646
    %6039 = vmatprep.subr.bf16.mxu0 %v4631
    %6040 = vmatpush1.bf16.msra.mxu0 %v4630
    %6041 = vmatprep.subr.bf16.mxu0 %v4615
    %6042 = vmatpush1.bf16.msra.mxu0 %v4614
    %6043 = vmatprep.subr.bf16.mxu0 %v4599
    %6044 = vmatpush1.bf16.msra.mxu0 %v4598
    %6045 = vmatprep.subr.bf16.mxu0 %v4583
    %6046 = vmatpush1.bf16.msra.mxu0 %v4582
    %6047 = vmatprep.subr.bf16.mxu0 %v4567
    %6048 = vmatpush1.bf16.msra.mxu0 %v4566
    %6049 = vmatprep.subr.bf16.mxu0 %v4551
    %6050 = vmatpush1.bf16.msra.mxu0 %v4550
    %6051 = vmatprep.subr.bf16.mxu0 %v4791
    %6052 = vmatpush2.bf16.msra.mxu0 %v4790
    %6053 = vmatprep.subr.bf16.mxu0 %v4775
    %6054 = vmatpush2.bf16.msra.mxu0 %v4774
    %6055 = vmatprep.subr.bf16.mxu0 %v4759
    %6056 = vmatpush2.bf16.msra.mxu0 %v4758
    %6057 = vmatprep.subr.bf16.mxu0 %v4743
    %6058 = vmatpush2.bf16.msra.mxu0 %v4742
    %6059 = vmatprep.subr.bf16.mxu0 %v4727
    %6060 = vmatpush2.bf16.msra.mxu0 %v4726
    %6061 = vmatprep.subr.bf16.mxu0 %v4711
    %6062 = vmatpush2.bf16.msra.mxu0 %v4710
    %6063 = vmatprep.subr.bf16.mxu0 %v4695
    %6064 = vmatpush2.bf16.msra.mxu0 %v4694
    %6065 = vmatprep.subr.bf16.mxu0 %v4679
    %6066 = vmatpush2.bf16.msra.mxu0 %v4678
    %6067 = vmatprep.mubr.bf16.mxu0 %v5829
    %6068 = vmatmul.mubr.bf16.gmra.mxu0 %v5828
    %v6069 = vpop.f32.mrf.mxu0
    %v6070 = vadd.f32 0.0, %v6069
    %v6071 = vpop.f32.mrf.mxu0
    %v6072 = vadd.f32 0.0, %v6071
    %v6073 = vpop.f32.mrf.mxu0
    %v6074 = vpop.f32.mrf.mxu0
    %6075 = vdwg.mxu0
    %6076 = vmatprep.subr.bf16.mxu0 %v4665
    %6077 = vmatpush1.bf16.msra.mxu0 %v4664
    %6078 = vmatprep.subr.bf16.mxu0 %v4649
    %6079 = vmatpush1.bf16.msra.mxu0 %v4648
    %6080 = vmatprep.subr.bf16.mxu0 %v4633
    %6081 = vmatpush1.bf16.msra.mxu0 %v4632
    %6082 = vmatprep.subr.bf16.mxu0 %v4617
    %6083 = vmatpush1.bf16.msra.mxu0 %v4616
    %6084 = vmatprep.subr.bf16.mxu0 %v4601
    %6085 = vmatpush1.bf16.msra.mxu0 %v4600
    %6086 = vmatprep.subr.bf16.mxu0 %v4585
    %6087 = vmatpush1.bf16.msra.mxu0 %v4584
    %6088 = vmatprep.subr.bf16.mxu0 %v4569
    %6089 = vmatpush1.bf16.msra.mxu0 %v4568
    %6090 = vmatprep.subr.bf16.mxu0 %v4553
    %6091 = vmatpush1.bf16.msra.mxu0 %v4552
    %6092 = vmatprep.subr.bf16.mxu0 %v4793
    %6093 = vmatpush2.bf16.msra.mxu0 %v4792
    %6094 = vmatprep.subr.bf16.mxu0 %v4777
    %6095 = vmatpush2.bf16.msra.mxu0 %v4776
    %6096 = vmatprep.subr.bf16.mxu0 %v4761
    %6097 = vmatpush2.bf16.msra.mxu0 %v4760
    %6098 = vmatprep.subr.bf16.mxu0 %v4745
    %6099 = vmatpush2.bf16.msra.mxu0 %v4744
    %6100 = vmatprep.subr.bf16.mxu0 %v4729
    %6101 = vmatpush2.bf16.msra.mxu0 %v4728
    %6102 = vmatprep.subr.bf16.mxu0 %v4713
    %6103 = vmatpush2.bf16.msra.mxu0 %v4712
    %6104 = vmatprep.subr.bf16.mxu0 %v4697
    %6105 = vmatpush2.bf16.msra.mxu0 %v4696
    %6106 = vmatprep.subr.bf16.mxu0 %v4681
    %6107 = vmatpush2.bf16.msra.mxu0 %v4680
    %6108 = vmatprep.mubr.bf16.mxu0 %v5829
    %6109 = vmatmul.mubr.bf16.gmra.mxu0 %v5828
    %v6110 = vpop.f32.mrf.mxu0
    %v6111 = vadd.f32 0.0, %v6110
    %v6112 = vpop.f32.mrf.mxu0
    %v6113 = vadd.f32 0.0, %v6112
    %v6114 = vpop.f32.mrf.mxu0
    %v6115 = vpop.f32.mrf.mxu0
    %6116 = vdwg.mxu0
    %6117 = vmatprep.subr.bf16.mxu0 %v4667
    %6118 = vmatpush1.bf16.msra.mxu0 %v4666
    %6119 = vmatprep.subr.bf16.mxu0 %v4651
    %6120 = vmatpush1.bf16.msra.mxu0 %v4650
    %6121 = vmatprep.subr.bf16.mxu0 %v4635
    %6122 = vmatpush1.bf16.msra.mxu0 %v4634
    %6123 = vmatprep.subr.bf16.mxu0 %v4619
    %6124 = vmatpush1.bf16.msra.mxu0 %v4618
    %6125 = vmatprep.subr.bf16.mxu0 %v4603
    %6126 = vmatpush1.bf16.msra.mxu0 %v4602
    %6127 = vmatprep.subr.bf16.mxu0 %v4587
    %6128 = vmatpush1.bf16.msra.mxu0 %v4586
    %6129 = vmatprep.subr.bf16.mxu0 %v4571
    %6130 = vmatpush1.bf16.msra.mxu0 %v4570
    %6131 = vmatprep.subr.bf16.mxu0 %v4555
    %6132 = vmatpush1.bf16.msra.mxu0 %v4554
    %6133 = vmatprep.subr.bf16.mxu0 %v4795
    %6134 = vmatpush2.bf16.msra.mxu0 %v4794
    %6135 = vmatprep.subr.bf16.mxu0 %v4779
    %6136 = vmatpush2.bf16.msra.mxu0 %v4778
    %6137 = vmatprep.subr.bf16.mxu0 %v4763
    %6138 = vmatpush2.bf16.msra.mxu0 %v4762
    %6139 = vmatprep.subr.bf16.mxu0 %v4747
    %6140 = vmatpush2.bf16.msra.mxu0 %v4746
    %6141 = vmatprep.subr.bf16.mxu0 %v4731
    %6142 = vmatpush2.bf16.msra.mxu0 %v4730
    %6143 = vmatprep.subr.bf16.mxu0 %v4715
    %6144 = vmatpush2.bf16.msra.mxu0 %v4714
    %6145 = vmatprep.subr.bf16.mxu0 %v4699
    %6146 = vmatpush2.bf16.msra.mxu0 %v4698
    %6147 = vmatprep.subr.bf16.mxu0 %v4683
    %6148 = vmatpush2.bf16.msra.mxu0 %v4682
    %6149 = vmatprep.mubr.bf16.mxu0 %v5829
    %6150 = vmatmul.mubr.bf16.gmra.mxu0 %v5828
    %v6151 = vpop.f32.mrf.mxu0
    %v6152 = vadd.f32 0.0, %v6151
    %v6153 = vpop.f32.mrf.mxu0
    %v6154 = vadd.f32 0.0, %v6153
    %v6155 = vpop.f32.mrf.mxu0
    %v6156 = vpop.f32.mrf.mxu0
    %6157 = vdwg.mxu0
    %v6158 = vld [vmem:[%s3117] sm:$0xff]
    %v6159 = vld [vmem:[%s3117 + $0x8] sm:$0xff]
    %v6160 = vld [vmem:[%s3117 + $0x10] sm:$0xff]
    %v6161 = vld [vmem:[%s3117 + $0x18] sm:$0xff]
    %v6162 = vsel %vm3515, %v5865, %v6029
    %v6163 = vsel %vm3515, %v5867, %v6031
    %v6164 = vsel %vm3515, %v5906, %v6070
    %v6165 = vsel %vm3515, %v5908, %v6072
    %v6166 = vsel %vm3515, %v5947, %v6111
    %v6167 = vsel %vm3515, %v5949, %v6113
    %v6168 = vsel %vm3515, %v5988, %v6152
    %v6169 = vsel %vm3515, %v5990, %v6154
    %v6178 = vcombine.low %v6162, %v6163
    %v6179 = vcombine.low %v6164, %v6165
    %v6180 = vcombine.low %v6166, %v6167
    %v6181 = vcombine.low %v6168, %v6169
    %v6186 = vadd.f32 %v6158, %v6178
    %v6187 = vadd.f32 %v6159, %v6179
    %v6188 = vadd.f32 %v6160, %v6180
    %v6189 = vadd.f32 %v6161, %v6181
    %v6190 = vxor.u32 %v6186, 2147483648
    %v6191 = vmul.f32 %v6190, 1.442695
    %v6192 = vpow.pop %v6191
    %v6193 = vadd.f32 %v6192, 1.0
    %v6194 = vrcp.pop %v6193
    %v6195 = vmul.f32 1.0, %v6194
    %v6196 = vxor.u32 %v6187, 2147483648
    %v6197 = vmul.f32 %v6196, 1.442695
    %v6198 = vpow.pop %v6197
    %v6199 = vadd.f32 %v6198, 1.0
    %v6200 = vrcp.pop %v6199
    %v6201 = vmul.f32 1.0, %v6200
    %v6202 = vtanh.pop %v6188
    %v6203 = vxor.u32 %v6189, 2147483648
    %v6204 = vmul.f32 %v6203, 1.442695
    %v6205 = vpow.pop %v6204
    %v6206 = vadd.f32 %v6205, 1.0
    %v6207 = vrcp.pop %v6206
    %v6208 = vmul.f32 1.0, %v6207
    %v6209 = vmul.f32 %v6201, %v5822
    %v6210 = vmul.f32 %v6195, %v6202
    %v6211 = vadd.f32 %v6209, %v6210
    %v6212 = vtanh.pop %v6211
    %v6213 = vmul.f32 %v6208, %v6212
    %v6215 = vcombine.high %v6213, %v6213
    %v6217 = vpack.c.bf16 %v6213, %v6213
    %v6218 = vpack.c.bf16 %v6215, %v6215
    %6219 = vmatprep.subr.bf16.mxu0 %v4653
    %6220 = vmatpush1.bf16.msra.mxu0 %v4652
    %6221 = vmatprep.subr.bf16.mxu0 %v4637
    %6222 = vmatpush1.bf16.msra.mxu0 %v4636
    %6223 = vmatprep.subr.bf16.mxu0 %v4621
    %6224 = vmatpush1.bf16.msra.mxu0 %v4620
    %6225 = vmatprep.subr.bf16.mxu0 %v4605
    %6226 = vmatpush1.bf16.msra.mxu0 %v4604
    %6227 = vmatprep.subr.bf16.mxu0 %v4589
    %6228 = vmatpush1.bf16.msra.mxu0 %v4588
    %6229 = vmatprep.subr.bf16.mxu0 %v4573
    %6230 = vmatpush1.bf16.msra.mxu0 %v4572
    %6231 = vmatprep.subr.bf16.mxu0 %v4557
    %6232 = vmatpush1.bf16.msra.mxu0 %v4556
    %6233 = vmatprep.subr.bf16.mxu0 %v4541
    %6234 = vmatpush1.bf16.msra.mxu0 %v4540
    %6235 = vmatprep.subr.bf16.mxu0 %v4781
    %6236 = vmatpush2.bf16.msra.mxu0 %v4780
    %6237 = vmatprep.subr.bf16.mxu0 %v4765
    %6238 = vmatpush2.bf16.msra.mxu0 %v4764
    %6239 = vmatprep.subr.bf16.mxu0 %v4749
    %6240 = vmatpush2.bf16.msra.mxu0 %v4748
    %6241 = vmatprep.subr.bf16.mxu0 %v4733
    %6242 = vmatpush2.bf16.msra.mxu0 %v4732
    %6243 = vmatprep.subr.bf16.mxu0 %v4717
    %6244 = vmatpush2.bf16.msra.mxu0 %v4716
    %6245 = vmatprep.subr.bf16.mxu0 %v4701
    %6246 = vmatpush2.bf16.msra.mxu0 %v4700
    %6247 = vmatprep.subr.bf16.mxu0 %v4685
    %6248 = vmatpush2.bf16.msra.mxu0 %v4684
    %6249 = vmatprep.subr.bf16.mxu0 %v4669
    %6250 = vmatpush2.bf16.msra.mxu0 %v4668
    %6251 = vmatprep.mubr.bf16.mxu0 %v6218
    %6252 = vmatmul.mubr.bf16.gmra.mxu0 %v6217
    %v6253 = vpop.f32.mrf.mxu0
    %v6254 = vadd.f32 0.0, %v6253
    %v6255 = vpop.f32.mrf.mxu0
    %v6256 = vadd.f32 0.0, %v6255
    %v6257 = vpop.f32.mrf.mxu0
    %v6258 = vpop.f32.mrf.mxu0
    %6259 = vdwg.mxu0
    %6260 = vmatprep.subr.bf16.mxu0 %v4655
    %6261 = vmatpush1.bf16.msra.mxu0 %v4654
    %6262 = vmatprep.subr.bf16.mxu0 %v4639
    %6263 = vmatpush1.bf16.msra.mxu0 %v4638
    %6264 = vmatprep.subr.bf16.mxu0 %v4623
    %6265 = vmatpush1.bf16.msra.mxu0 %v4622
    %6266 = vmatprep.subr.bf16.mxu0 %v4607
    %6267 = vmatpush1.bf16.msra.mxu0 %v4606
    %6268 = vmatprep.subr.bf16.mxu0 %v4591
    %6269 = vmatpush1.bf16.msra.mxu0 %v4590
    %6270 = vmatprep.subr.bf16.mxu0 %v4575
    %6271 = vmatpush1.bf16.msra.mxu0 %v4574
    %6272 = vmatprep.subr.bf16.mxu0 %v4559
    %6273 = vmatpush1.bf16.msra.mxu0 %v4558
    %6274 = vmatprep.subr.bf16.mxu0 %v4543
    %6275 = vmatpush1.bf16.msra.mxu0 %v4542
    %6276 = vmatprep.subr.bf16.mxu0 %v4783
    %6277 = vmatpush2.bf16.msra.mxu0 %v4782
    %6278 = vmatprep.subr.bf16.mxu0 %v4767
    %6279 = vmatpush2.bf16.msra.mxu0 %v4766
    %6280 = vmatprep.subr.bf16.mxu0 %v4751
    %6281 = vmatpush2.bf16.msra.mxu0 %v4750
    %6282 = vmatprep.subr.bf16.mxu0 %v4735
    %6283 = vmatpush2.bf16.msra.mxu0 %v4734
    %6284 = vmatprep.subr.bf16.mxu0 %v4719
    %6285 = vmatpush2.bf16.msra.mxu0 %v4718
    %6286 = vmatprep.subr.bf16.mxu0 %v4703
    %6287 = vmatpush2.bf16.msra.mxu0 %v4702
    %6288 = vmatprep.subr.bf16.mxu0 %v4687
    %6289 = vmatpush2.bf16.msra.mxu0 %v4686
    %6290 = vmatprep.subr.bf16.mxu0 %v4671
    %6291 = vmatpush2.bf16.msra.mxu0 %v4670
    %6292 = vmatprep.mubr.bf16.mxu0 %v6218
    %6293 = vmatmul.mubr.bf16.gmra.mxu0 %v6217
    %v6294 = vpop.f32.mrf.mxu0
    %v6295 = vadd.f32 0.0, %v6294
    %v6296 = vpop.f32.mrf.mxu0
    %v6297 = vadd.f32 0.0, %v6296
    %v6298 = vpop.f32.mrf.mxu0
    %v6299 = vpop.f32.mrf.mxu0
    %6300 = vdwg.mxu0
    %6301 = vmatprep.subr.bf16.mxu0 %v4657
    %6302 = vmatpush1.bf16.msra.mxu0 %v4656
    %6303 = vmatprep.subr.bf16.mxu0 %v4641
    %6304 = vmatpush1.bf16.msra.mxu0 %v4640
    %6305 = vmatprep.subr.bf16.mxu0 %v4625
    %6306 = vmatpush1.bf16.msra.mxu0 %v4624
    %6307 = vmatprep.subr.bf16.mxu0 %v4609
    %6308 = vmatpush1.bf16.msra.mxu0 %v4608
    %6309 = vmatprep.subr.bf16.mxu0 %v4593
    %6310 = vmatpush1.bf16.msra.mxu0 %v4592
    %6311 = vmatprep.subr.bf16.mxu0 %v4577
    %6312 = vmatpush1.bf16.msra.mxu0 %v4576
    %6313 = vmatprep.subr.bf16.mxu0 %v4561
    %6314 = vmatpush1.bf16.msra.mxu0 %v4560
    %6315 = vmatprep.subr.bf16.mxu0 %v4545
    %6316 = vmatpush1.bf16.msra.mxu0 %v4544
    %6317 = vmatprep.subr.bf16.mxu0 %v4785
    %6318 = vmatpush2.bf16.msra.mxu0 %v4784
    %6319 = vmatprep.subr.bf16.mxu0 %v4769
    %6320 = vmatpush2.bf16.msra.mxu0 %v4768
    %6321 = vmatprep.subr.bf16.mxu0 %v4753
    %6322 = vmatpush2.bf16.msra.mxu0 %v4752
    %6323 = vmatprep.subr.bf16.mxu0 %v4737
    %6324 = vmatpush2.bf16.msra.mxu0 %v4736
    %6325 = vmatprep.subr.bf16.mxu0 %v4721
    %6326 = vmatpush2.bf16.msra.mxu0 %v4720
    %6327 = vmatprep.subr.bf16.mxu0 %v4705
    %6328 = vmatpush2.bf16.msra.mxu0 %v4704
    %6329 = vmatprep.subr.bf16.mxu0 %v4689
    %6330 = vmatpush2.bf16.msra.mxu0 %v4688
    %6331 = vmatprep.subr.bf16.mxu0 %v4673
    %6332 = vmatpush2.bf16.msra.mxu0 %v4672
    %6333 = vmatprep.mubr.bf16.mxu0 %v6218
    %6334 = vmatmul.mubr.bf16.gmra.mxu0 %v6217
    %v6335 = vpop.f32.mrf.mxu0
    %v6336 = vadd.f32 0.0, %v6335
    %v6337 = vpop.f32.mrf.mxu0
    %v6338 = vadd.f32 0.0, %v6337
    %v6339 = vpop.f32.mrf.mxu0
    %v6340 = vpop.f32.mrf.mxu0
    %6341 = vdwg.mxu0
    %6342 = vmatprep.subr.bf16.mxu0 %v4659
    %6343 = vmatpush1.bf16.msra.mxu0 %v4658
    %6344 = vmatprep.subr.bf16.mxu0 %v4643
    %6345 = vmatpush1.bf16.msra.mxu0 %v4642
    %6346 = vmatprep.subr.bf16.mxu0 %v4627
    %6347 = vmatpush1.bf16.msra.mxu0 %v4626
    %6348 = vmatprep.subr.bf16.mxu0 %v4611
    %6349 = vmatpush1.bf16.msra.mxu0 %v4610
    %6350 = vmatprep.subr.bf16.mxu0 %v4595
    %6351 = vmatpush1.bf16.msra.mxu0 %v4594
    %6352 = vmatprep.subr.bf16.mxu0 %v4579
    %6353 = vmatpush1.bf16.msra.mxu0 %v4578
    %6354 = vmatprep.subr.bf16.mxu0 %v4563
    %6355 = vmatpush1.bf16.msra.mxu0 %v4562
    %6356 = vmatprep.subr.bf16.mxu0 %v4547
    %6357 = vmatpush1.bf16.msra.mxu0 %v4546
    %6358 = vmatprep.subr.bf16.mxu0 %v4787
    %6359 = vmatpush2.bf16.msra.mxu0 %v4786
    %6360 = vmatprep.subr.bf16.mxu0 %v4771
    %6361 = vmatpush2.bf16.msra.mxu0 %v4770
    %6362 = vmatprep.subr.bf16.mxu0 %v4755
    %6363 = vmatpush2.bf16.msra.mxu0 %v4754
    %6364 = vmatprep.subr.bf16.mxu0 %v4739
    %6365 = vmatpush2.bf16.msra.mxu0 %v4738
    %6366 = vmatprep.subr.bf16.mxu0 %v4723
    %6367 = vmatpush2.bf16.msra.mxu0 %v4722
    %6368 = vmatprep.subr.bf16.mxu0 %v4707
    %6369 = vmatpush2.bf16.msra.mxu0 %v4706
    %6370 = vmatprep.subr.bf16.mxu0 %v4691
    %6371 = vmatpush2.bf16.msra.mxu0 %v4690
    %6372 = vmatprep.subr.bf16.mxu0 %v4675
    %6373 = vmatpush2.bf16.msra.mxu0 %v4674
    %6374 = vmatprep.mubr.bf16.mxu0 %v6218
    %6375 = vmatmul.mubr.bf16.gmra.mxu0 %v6217
    %v6376 = vpop.f32.mrf.mxu0
    %v6377 = vadd.f32 0.0, %v6376
    %v6378 = vpop.f32.mrf.mxu0
    %v6379 = vadd.f32 0.0, %v6378
    %v6380 = vpop.f32.mrf.mxu0
    %v6381 = vpop.f32.mrf.mxu0
    %6382 = vdwg.mxu0
    %6383 = vmatprep.subr.bf16.mxu0 %v4661
    %6384 = vmatpush1.bf16.msra.mxu0 %v4660
    %6385 = vmatprep.subr.bf16.mxu0 %v4645
    %6386 = vmatpush1.bf16.msra.mxu0 %v4644
    %6387 = vmatprep.subr.bf16.mxu0 %v4629
    %6388 = vmatpush1.bf16.msra.mxu0 %v4628
    %6389 = vmatprep.subr.bf16.mxu0 %v4613
    %6390 = vmatpush1.bf16.msra.mxu0 %v4612
    %6391 = vmatprep.subr.bf16.mxu0 %v4597
    %6392 = vmatpush1.bf16.msra.mxu0 %v4596
    %6393 = vmatprep.subr.bf16.mxu0 %v4581
    %6394 = vmatpush1.bf16.msra.mxu0 %v4580
    %6395 = vmatprep.subr.bf16.mxu0 %v4565
    %6396 = vmatpush1.bf16.msra.mxu0 %v4564
    %6397 = vmatprep.subr.bf16.mxu0 %v4549
    %6398 = vmatpush1.bf16.msra.mxu0 %v4548
    %6399 = vmatprep.subr.bf16.mxu0 %v4789
    %6400 = vmatpush2.bf16.msra.mxu0 %v4788
    %6401 = vmatprep.subr.bf16.mxu0 %v4773
    %6402 = vmatpush2.bf16.msra.mxu0 %v4772
    %6403 = vmatprep.subr.bf16.mxu0 %v4757
    %6404 = vmatpush2.bf16.msra.mxu0 %v4756
    %6405 = vmatprep.subr.bf16.mxu0 %v4741
    %6406 = vmatpush2.bf16.msra.mxu0 %v4740
    %6407 = vmatprep.subr.bf16.mxu0 %v4725
    %6408 = vmatpush2.bf16.msra.mxu0 %v4724
    %6409 = vmatprep.subr.bf16.mxu0 %v4709
    %6410 = vmatpush2.bf16.msra.mxu0 %v4708
    %6411 = vmatprep.subr.bf16.mxu0 %v4693
    %6412 = vmatpush2.bf16.msra.mxu0 %v4692
    %6413 = vmatprep.subr.bf16.mxu0 %v4677
    %6414 = vmatpush2.bf16.msra.mxu0 %v4676
    %6415 = vmatprep.mubr.bf16.mxu0 %v6218
    %6416 = vmatmul.mubr.bf16.gmra.mxu0 %v6217
    %v6417 = vpop.f32.mrf.mxu0
    %v6418 = vadd.f32 0.0, %v6417
    %v6419 = vpop.f32.mrf.mxu0
    %v6420 = vadd.f32 0.0, %v6419
    %v6421 = vpop.f32.mrf.mxu0
    %v6422 = vpop.f32.mrf.mxu0
    %6423 = vdwg.mxu0
    %6424 = vmatprep.subr.bf16.mxu0 %v4663
    %6425 = vmatpush1.bf16.msra.mxu0 %v4662
    %6426 = vmatprep.subr.bf16.mxu0 %v4647
    %6427 = vmatpush1.bf16.msra.mxu0 %v4646
    %6428 = vmatprep.subr.bf16.mxu0 %v4631
    %6429 = vmatpush1.bf16.msra.mxu0 %v4630
    %6430 = vmatprep.subr.bf16.mxu0 %v4615
    %6431 = vmatpush1.bf16.msra.mxu0 %v4614
    %6432 = vmatprep.subr.bf16.mxu0 %v4599
    %6433 = vmatpush1.bf16.msra.mxu0 %v4598
    %6434 = vmatprep.subr.bf16.mxu0 %v4583
    %6435 = vmatpush1.bf16.msra.mxu0 %v4582
    %6436 = vmatprep.subr.bf16.mxu0 %v4567
    %6437 = vmatpush1.bf16.msra.mxu0 %v4566
    %6438 = vmatprep.subr.bf16.mxu0 %v4551
    %6439 = vmatpush1.bf16.msra.mxu0 %v4550
    %6440 = vmatprep.subr.bf16.mxu0 %v4791
    %6441 = vmatpush2.bf16.msra.mxu0 %v4790
    %6442 = vmatprep.subr.bf16.mxu0 %v4775
    %6443 = vmatpush2.bf16.msra.mxu0 %v4774
    %6444 = vmatprep.subr.bf16.mxu0 %v4759
    %6445 = vmatpush2.bf16.msra.mxu0 %v4758
    %6446 = vmatprep.subr.bf16.mxu0 %v4743
    %6447 = vmatpush2.bf16.msra.mxu0 %v4742
    %6448 = vmatprep.subr.bf16.mxu0 %v4727
    %6449 = vmatpush2.bf16.msra.mxu0 %v4726
    %6450 = vmatprep.subr.bf16.mxu0 %v4711
    %6451 = vmatpush2.bf16.msra.mxu0 %v4710
    %6452 = vmatprep.subr.bf16.mxu0 %v4695
    %6453 = vmatpush2.bf16.msra.mxu0 %v4694
    %6454 = vmatprep.subr.bf16.mxu0 %v4679
    %6455 = vmatpush2.bf16.msra.mxu0 %v4678
    %6456 = vmatprep.mubr.bf16.mxu0 %v6218
    %6457 = vmatmul.mubr.bf16.gmra.mxu0 %v6217
    %v6458 = vpop.f32.mrf.mxu0
    %v6459 = vadd.f32 0.0, %v6458
    %v6460 = vpop.f32.mrf.mxu0
    %v6461 = vadd.f32 0.0, %v6460
    %v6462 = vpop.f32.mrf.mxu0
    %v6463 = vpop.f32.mrf.mxu0
    %6464 = vdwg.mxu0
    %6465 = vmatprep.subr.bf16.mxu0 %v4665
    %6466 = vmatpush1.bf16.msra.mxu0 %v4664
    %6467 = vmatprep.subr.bf16.mxu0 %v4649
    %6468 = vmatpush1.bf16.msra.mxu0 %v4648
    %6469 = vmatprep.subr.bf16.mxu0 %v4633
    %6470 = vmatpush1.bf16.msra.mxu0 %v4632
    %6471 = vmatprep.subr.bf16.mxu0 %v4617
    %6472 = vmatpush1.bf16.msra.mxu0 %v4616
    %6473 = vmatprep.subr.bf16.mxu0 %v4601
    %6474 = vmatpush1.bf16.msra.mxu0 %v4600
    %6475 = vmatprep.subr.bf16.mxu0 %v4585
    %6476 = vmatpush1.bf16.msra.mxu0 %v4584
    %6477 = vmatprep.subr.bf16.mxu0 %v4569
    %6478 = vmatpush1.bf16.msra.mxu0 %v4568
    %6479 = vmatprep.subr.bf16.mxu0 %v4553
    %6480 = vmatpush1.bf16.msra.mxu0 %v4552
    %6481 = vmatprep.subr.bf16.mxu0 %v4793
    %6482 = vmatpush2.bf16.msra.mxu0 %v4792
    %6483 = vmatprep.subr.bf16.mxu0 %v4777
    %6484 = vmatpush2.bf16.msra.mxu0 %v4776
    %6485 = vmatprep.subr.bf16.mxu0 %v4761
    %6486 = vmatpush2.bf16.msra.mxu0 %v4760
    %6487 = vmatprep.subr.bf16.mxu0 %v4745
    %6488 = vmatpush2.bf16.msra.mxu0 %v4744
    %6489 = vmatprep.subr.bf16.mxu0 %v4729
    %6490 = vmatpush2.bf16.msra.mxu0 %v4728
    %6491 = vmatprep.subr.bf16.mxu0 %v4713
    %6492 = vmatpush2.bf16.msra.mxu0 %v4712
    %6493 = vmatprep.subr.bf16.mxu0 %v4697
    %6494 = vmatpush2.bf16.msra.mxu0 %v4696
    %6495 = vmatprep.subr.bf16.mxu0 %v4681
    %6496 = vmatpush2.bf16.msra.mxu0 %v4680
    %6497 = vmatprep.mubr.bf16.mxu0 %v6218
    %6498 = vmatmul.mubr.bf16.gmra.mxu0 %v6217
    %v6499 = vpop.f32.mrf.mxu0
    %v6500 = vadd.f32 0.0, %v6499
    %v6501 = vpop.f32.mrf.mxu0
    %v6502 = vadd.f32 0.0, %v6501
    %v6503 = vpop.f32.mrf.mxu0
    %v6504 = vpop.f32.mrf.mxu0
    %6505 = vdwg.mxu0
    %6506 = vmatprep.subr.bf16.mxu0 %v4667
    %6507 = vmatpush1.bf16.msra.mxu0 %v4666
    %6508 = vmatprep.subr.bf16.mxu0 %v4651
    %6509 = vmatpush1.bf16.msra.mxu0 %v4650
    %6510 = vmatprep.subr.bf16.mxu0 %v4635
    %6511 = vmatpush1.bf16.msra.mxu0 %v4634
    %6512 = vmatprep.subr.bf16.mxu0 %v4619
    %6513 = vmatpush1.bf16.msra.mxu0 %v4618
    %6514 = vmatprep.subr.bf16.mxu0 %v4603
    %6515 = vmatpush1.bf16.msra.mxu0 %v4602
    %6516 = vmatprep.subr.bf16.mxu0 %v4587
    %6517 = vmatpush1.bf16.msra.mxu0 %v4586
    %6518 = vmatprep.subr.bf16.mxu0 %v4571
    %6519 = vmatpush1.bf16.msra.mxu0 %v4570
    %6520 = vmatprep.subr.bf16.mxu0 %v4555
    %6521 = vmatpush1.bf16.msra.mxu0 %v4554
    %6522 = vmatprep.subr.bf16.mxu0 %v4795
    %6523 = vmatpush2.bf16.msra.mxu0 %v4794
    %6524 = vmatprep.subr.bf16.mxu0 %v4779
    %6525 = vmatpush2.bf16.msra.mxu0 %v4778
    %6526 = vmatprep.subr.bf16.mxu0 %v4763
    %6527 = vmatpush2.bf16.msra.mxu0 %v4762
    %6528 = vmatprep.subr.bf16.mxu0 %v4747
    %6529 = vmatpush2.bf16.msra.mxu0 %v4746
    %6530 = vmatprep.subr.bf16.mxu0 %v4731
    %6531 = vmatpush2.bf16.msra.mxu0 %v4730
    %6532 = vmatprep.subr.bf16.mxu0 %v4715
    %6533 = vmatpush2.bf16.msra.mxu0 %v4714
    %6534 = vmatprep.subr.bf16.mxu0 %v4699
    %6535 = vmatpush2.bf16.msra.mxu0 %v4698
    %6536 = vmatprep.subr.bf16.mxu0 %v4683
    %6537 = vmatpush2.bf16.msra.mxu0 %v4682
    %6538 = vmatprep.mubr.bf16.mxu0 %v6218
    %6539 = vmatmul.mubr.bf16.gmra.mxu0 %v6217
    %v6540 = vpop.f32.mrf.mxu0
    %v6541 = vadd.f32 0.0, %v6540
    %v6542 = vpop.f32.mrf.mxu0
    %v6543 = vadd.f32 0.0, %v6542
    %v6544 = vpop.f32.mrf.mxu0
    %v6545 = vpop.f32.mrf.mxu0
    %6546 = vdwg.mxu0
    %v6547 = vld [vmem:[%s3178] sm:$0xff]
    %v6548 = vld [vmem:[%s3178 + $0x8] sm:$0xff]
    %v6549 = vld [vmem:[%s3178 + $0x10] sm:$0xff]
    %v6550 = vld [vmem:[%s3178 + $0x18] sm:$0xff]
    %v6551 = vsel %vm3515, %v6254, %v6418
    %v6552 = vsel %vm3515, %v6256, %v6420
    %v6553 = vsel %vm3515, %v6295, %v6459
    %v6554 = vsel %vm3515, %v6297, %v6461
    %v6555 = vsel %vm3515, %v6336, %v6500
    %v6556 = vsel %vm3515, %v6338, %v6502
    %v6557 = vsel %vm3515, %v6377, %v6541
    %v6558 = vsel %vm3515, %v6379, %v6543
    %v6567 = vcombine.low %v6551, %v6552
    %v6568 = vcombine.low %v6553, %v6554
    %v6569 = vcombine.low %v6555, %v6556
    %v6570 = vcombine.low %v6557, %v6558
    %v6575 = vadd.f32 %v6547, %v6567
    %v6576 = vadd.f32 %v6548, %v6568
    %v6577 = vadd.f32 %v6549, %v6569
    %v6578 = vadd.f32 %v6550, %v6570
    %v6579 = vxor.u32 %v6575, 2147483648
    %v6580 = vmul.f32 %v6579, 1.442695
    %v6581 = vpow.pop %v6580
    %v6582 = vadd.f32 %v6581, 1.0
    %v6583 = vrcp.pop %v6582
    %v6584 = vmul.f32 1.0, %v6583
    %v6585 = vxor.u32 %v6576, 2147483648
    %v6586 = vmul.f32 %v6585, 1.442695
    %v6587 = vpow.pop %v6586
    %v6588 = vadd.f32 %v6587, 1.0
    %v6589 = vrcp.pop %v6588
    %v6590 = vmul.f32 1.0, %v6589
    %v6591 = vtanh.pop %v6577
    %v6592 = vxor.u32 %v6578, 2147483648
    %v6593 = vmul.f32 %v6592, 1.442695
    %v6594 = vpow.pop %v6593
    %v6595 = vadd.f32 %v6594, 1.0
    %v6596 = vrcp.pop %v6595
    %v6597 = vmul.f32 1.0, %v6596
    %v6598 = vmul.f32 %v6590, %v6211
    %v6599 = vmul.f32 %v6584, %v6591
    %v6600 = vadd.f32 %v6598, %v6599
    %v6601 = vtanh.pop %v6600
    %v6602 = vmul.f32 %v6597, %v6601
    %v6604 = vcombine.high %v6602, %v6602
    %v6606 = vpack.c.bf16 %v6602, %v6602
    %v6607 = vpack.c.bf16 %v6604, %v6604
    %6608 = vmatprep.subr.bf16.mxu0 %v4653
    %6609 = vmatpush1.bf16.msra.mxu0 %v4652
    %6610 = vmatprep.subr.bf16.mxu0 %v4637
    %6611 = vmatpush1.bf16.msra.mxu0 %v4636
    %6612 = vmatprep.subr.bf16.mxu0 %v4621
    %6613 = vmatpush1.bf16.msra.mxu0 %v4620
    %6614 = vmatprep.subr.bf16.mxu0 %v4605
    %6615 = vmatpush1.bf16.msra.mxu0 %v4604
    %6616 = vmatprep.subr.bf16.mxu0 %v4589
    %6617 = vmatpush1.bf16.msra.mxu0 %v4588
    %6618 = vmatprep.subr.bf16.mxu0 %v4573
    %6619 = vmatpush1.bf16.msra.mxu0 %v4572
    %6620 = vmatprep.subr.bf16.mxu0 %v4557
    %6621 = vmatpush1.bf16.msra.mxu0 %v4556
    %6622 = vmatprep.subr.bf16.mxu0 %v4541
    %6623 = vmatpush1.bf16.msra.mxu0 %v4540
    %6624 = vmatprep.subr.bf16.mxu0 %v4781
    %6625 = vmatpush2.bf16.msra.mxu0 %v4780
    %6626 = vmatprep.subr.bf16.mxu0 %v4765
    %6627 = vmatpush2.bf16.msra.mxu0 %v4764
    %6628 = vmatprep.subr.bf16.mxu0 %v4749
    %6629 = vmatpush2.bf16.msra.mxu0 %v4748
    %6630 = vmatprep.subr.bf16.mxu0 %v4733
    %6631 = vmatpush2.bf16.msra.mxu0 %v4732
    %6632 = vmatprep.subr.bf16.mxu0 %v4717
    %6633 = vmatpush2.bf16.msra.mxu0 %v4716
    %6634 = vmatprep.subr.bf16.mxu0 %v4701
    %6635 = vmatpush2.bf16.msra.mxu0 %v4700
    %6636 = vmatprep.subr.bf16.mxu0 %v4685
    %6637 = vmatpush2.bf16.msra.mxu0 %v4684
    %6638 = vmatprep.subr.bf16.mxu0 %v4669
    %6639 = vmatpush2.bf16.msra.mxu0 %v4668
    %6640 = vmatprep.mubr.bf16.mxu0 %v6607
    %6641 = vmatmul.mubr.bf16.gmra.mxu0 %v6606
    %v6642 = vpop.f32.mrf.mxu0
    %v6643 = vadd.f32 0.0, %v6642
    %v6644 = vpop.f32.mrf.mxu0
    %v6645 = vadd.f32 0.0, %v6644
    %v6646 = vpop.f32.mrf.mxu0
    %v6647 = vpop.f32.mrf.mxu0
    %6648 = vdwg.mxu0
    %6649 = vmatprep.subr.bf16.mxu0 %v4655
    %6650 = vmatpush1.bf16.msra.mxu0 %v4654
    %6651 = vmatprep.subr.bf16.mxu0 %v4639
    %6652 = vmatpush1.bf16.msra.mxu0 %v4638
    %6653 = vmatprep.subr.bf16.mxu0 %v4623
    %6654 = vmatpush1.bf16.msra.mxu0 %v4622
    %6655 = vmatprep.subr.bf16.mxu0 %v4607
    %6656 = vmatpush1.bf16.msra.mxu0 %v4606
    %6657 = vmatprep.subr.bf16.mxu0 %v4591
    %6658 = vmatpush1.bf16.msra.mxu0 %v4590
    %6659 = vmatprep.subr.bf16.mxu0 %v4575
    %6660 = vmatpush1.bf16.msra.mxu0 %v4574
    %6661 = vmatprep.subr.bf16.mxu0 %v4559
    %6662 = vmatpush1.bf16.msra.mxu0 %v4558
    %6663 = vmatprep.subr.bf16.mxu0 %v4543
    %6664 = vmatpush1.bf16.msra.mxu0 %v4542
    %6665 = vmatprep.subr.bf16.mxu0 %v4783
    %6666 = vmatpush2.bf16.msra.mxu0 %v4782
    %6667 = vmatprep.subr.bf16.mxu0 %v4767
    %6668 = vmatpush2.bf16.msra.mxu0 %v4766
    %6669 = vmatprep.subr.bf16.mxu0 %v4751
    %6670 = vmatpush2.bf16.msra.mxu0 %v4750
    %6671 = vmatprep.subr.bf16.mxu0 %v4735
    %6672 = vmatpush2.bf16.msra.mxu0 %v4734
    %6673 = vmatprep.subr.bf16.mxu0 %v4719
    %6674 = vmatpush2.bf16.msra.mxu0 %v4718
    %6675 = vmatprep.subr.bf16.mxu0 %v4703
    %6676 = vmatpush2.bf16.msra.mxu0 %v4702
    %6677 = vmatprep.subr.bf16.mxu0 %v4687
    %6678 = vmatpush2.bf16.msra.mxu0 %v4686
    %6679 = vmatprep.subr.bf16.mxu0 %v4671
    %6680 = vmatpush2.bf16.msra.mxu0 %v4670
    %6681 = vmatprep.mubr.bf16.mxu0 %v6607
    %6682 = vmatmul.mubr.bf16.gmra.mxu0 %v6606
    %v6683 = vpop.f32.mrf.mxu0
    %v6684 = vadd.f32 0.0, %v6683
    %v6685 = vpop.f32.mrf.mxu0
    %v6686 = vadd.f32 0.0, %v6685
    %v6687 = vpop.f32.mrf.mxu0
    %v6688 = vpop.f32.mrf.mxu0
    %6689 = vdwg.mxu0
    %6690 = vmatprep.subr.bf16.mxu0 %v4657
    %6691 = vmatpush1.bf16.msra.mxu0 %v4656
    %6692 = vmatprep.subr.bf16.mxu0 %v4641
    %6693 = vmatpush1.bf16.msra.mxu0 %v4640
    %6694 = vmatprep.subr.bf16.mxu0 %v4625
    %6695 = vmatpush1.bf16.msra.mxu0 %v4624
    %6696 = vmatprep.subr.bf16.mxu0 %v4609
    %6697 = vmatpush1.bf16.msra.mxu0 %v4608
    %6698 = vmatprep.subr.bf16.mxu0 %v4593
    %6699 = vmatpush1.bf16.msra.mxu0 %v4592
    %6700 = vmatprep.subr.bf16.mxu0 %v4577
    %6701 = vmatpush1.bf16.msra.mxu0 %v4576
    %6702 = vmatprep.subr.bf16.mxu0 %v4561
    %6703 = vmatpush1.bf16.msra.mxu0 %v4560
    %6704 = vmatprep.subr.bf16.mxu0 %v4545
    %6705 = vmatpush1.bf16.msra.mxu0 %v4544
    %6706 = vmatprep.subr.bf16.mxu0 %v4785
    %6707 = vmatpush2.bf16.msra.mxu0 %v4784
    %6708 = vmatprep.subr.bf16.mxu0 %v4769
    %6709 = vmatpush2.bf16.msra.mxu0 %v4768
    %6710 = vmatprep.subr.bf16.mxu0 %v4753
    %6711 = vmatpush2.bf16.msra.mxu0 %v4752
    %6712 = vmatprep.subr.bf16.mxu0 %v4737
    %6713 = vmatpush2.bf16.msra.mxu0 %v4736
    %6714 = vmatprep.subr.bf16.mxu0 %v4721
    %6715 = vmatpush2.bf16.msra.mxu0 %v4720
    %6716 = vmatprep.subr.bf16.mxu0 %v4705
    %6717 = vmatpush2.bf16.msra.mxu0 %v4704
    %6718 = vmatprep.subr.bf16.mxu0 %v4689
    %6719 = vmatpush2.bf16.msra.mxu0 %v4688
    %6720 = vmatprep.subr.bf16.mxu0 %v4673
    %6721 = vmatpush2.bf16.msra.mxu0 %v4672
    %6722 = vmatprep.mubr.bf16.mxu0 %v6607
    %6723 = vmatmul.mubr.bf16.gmra.mxu0 %v6606
    %v6724 = vpop.f32.mrf.mxu0
    %v6725 = vadd.f32 0.0, %v6724
    %v6726 = vpop.f32.mrf.mxu0
    %v6727 = vadd.f32 0.0, %v6726
    %v6728 = vpop.f32.mrf.mxu0
    %v6729 = vpop.f32.mrf.mxu0
    %6730 = vdwg.mxu0
    %6731 = vmatprep.subr.bf16.mxu0 %v4659
    %6732 = vmatpush1.bf16.msra.mxu0 %v4658
    %6733 = vmatprep.subr.bf16.mxu0 %v4643
    %6734 = vmatpush1.bf16.msra.mxu0 %v4642
    %6735 = vmatprep.subr.bf16.mxu0 %v4627
    %6736 = vmatpush1.bf16.msra.mxu0 %v4626
    %6737 = vmatprep.subr.bf16.mxu0 %v4611
    %6738 = vmatpush1.bf16.msra.mxu0 %v4610
    %6739 = vmatprep.subr.bf16.mxu0 %v4595
    %6740 = vmatpush1.bf16.msra.mxu0 %v4594
    %6741 = vmatprep.subr.bf16.mxu0 %v4579
    %6742 = vmatpush1.bf16.msra.mxu0 %v4578
    %6743 = vmatprep.subr.bf16.mxu0 %v4563
    %6744 = vmatpush1.bf16.msra.mxu0 %v4562
    %6745 = vmatprep.subr.bf16.mxu0 %v4547
    %6746 = vmatpush1.bf16.msra.mxu0 %v4546
    %6747 = vmatprep.subr.bf16.mxu0 %v4787
    %6748 = vmatpush2.bf16.msra.mxu0 %v4786
    %6749 = vmatprep.subr.bf16.mxu0 %v4771
    %6750 = vmatpush2.bf16.msra.mxu0 %v4770
    %6751 = vmatprep.subr.bf16.mxu0 %v4755
    %6752 = vmatpush2.bf16.msra.mxu0 %v4754
    %6753 = vmatprep.subr.bf16.mxu0 %v4739
    %6754 = vmatpush2.bf16.msra.mxu0 %v4738
    %6755 = vmatprep.subr.bf16.mxu0 %v4723
    %6756 = vmatpush2.bf16.msra.mxu0 %v4722
    %6757 = vmatprep.subr.bf16.mxu0 %v4707
    %6758 = vmatpush2.bf16.msra.mxu0 %v4706
    %6759 = vmatprep.subr.bf16.mxu0 %v4691
    %6760 = vmatpush2.bf16.msra.mxu0 %v4690
    %6761 = vmatprep.subr.bf16.mxu0 %v4675
    %6762 = vmatpush2.bf16.msra.mxu0 %v4674
    %6763 = vmatprep.mubr.bf16.mxu0 %v6607
    %6764 = vmatmul.mubr.bf16.gmra.mxu0 %v6606
    %v6765 = vpop.f32.mrf.mxu0
    %v6766 = vadd.f32 0.0, %v6765
    %v6767 = vpop.f32.mrf.mxu0
    %v6768 = vadd.f32 0.0, %v6767
    %v6769 = vpop.f32.mrf.mxu0
    %v6770 = vpop.f32.mrf.mxu0
    %6771 = vdwg.mxu0
    %6772 = vmatprep.subr.bf16.mxu0 %v4661
    %6773 = vmatpush1.bf16.msra.mxu0 %v4660
    %6774 = vmatprep.subr.bf16.mxu0 %v4645
    %6775 = vmatpush1.bf16.msra.mxu0 %v4644
    %6776 = vmatprep.subr.bf16.mxu0 %v4629
    %6777 = vmatpush1.bf16.msra.mxu0 %v4628
    %6778 = vmatprep.subr.bf16.mxu0 %v4613
    %6779 = vmatpush1.bf16.msra.mxu0 %v4612
    %6780 = vmatprep.subr.bf16.mxu0 %v4597
    %6781 = vmatpush1.bf16.msra.mxu0 %v4596
    %6782 = vmatprep.subr.bf16.mxu0 %v4581
    %6783 = vmatpush1.bf16.msra.mxu0 %v4580
    %6784 = vmatprep.subr.bf16.mxu0 %v4565
    %6785 = vmatpush1.bf16.msra.mxu0 %v4564
    %6786 = vmatprep.subr.bf16.mxu0 %v4549
    %6787 = vmatpush1.bf16.msra.mxu0 %v4548
    %6788 = vmatprep.subr.bf16.mxu0 %v4789
    %6789 = vmatpush2.bf16.msra.mxu0 %v4788
    %6790 = vmatprep.subr.bf16.mxu0 %v4773
    %6791 = vmatpush2.bf16.msra.mxu0 %v4772
    %6792 = vmatprep.subr.bf16.mxu0 %v4757
    %6793 = vmatpush2.bf16.msra.mxu0 %v4756
    %6794 = vmatprep.subr.bf16.mxu0 %v4741
    %6795 = vmatpush2.bf16.msra.mxu0 %v4740
    %6796 = vmatprep.subr.bf16.mxu0 %v4725
    %6797 = vmatpush2.bf16.msra.mxu0 %v4724
    %6798 = vmatprep.subr.bf16.mxu0 %v4709
    %6799 = vmatpush2.bf16.msra.mxu0 %v4708
    %6800 = vmatprep.subr.bf16.mxu0 %v4693
    %6801 = vmatpush2.bf16.msra.mxu0 %v4692
    %6802 = vmatprep.subr.bf16.mxu0 %v4677
    %6803 = vmatpush2.bf16.msra.mxu0 %v4676
    %6804 = vmatprep.mubr.bf16.mxu0 %v6607
    %6805 = vmatmul.mubr.bf16.gmra.mxu0 %v6606
    %v6806 = vpop.f32.mrf.mxu0
    %v6807 = vadd.f32 0.0, %v6806
    %v6808 = vpop.f32.mrf.mxu0
    %v6809 = vadd.f32 0.0, %v6808
    %v6810 = vpop.f32.mrf.mxu0
    %v6811 = vpop.f32.mrf.mxu0
    %6812 = vdwg.mxu0
    %6813 = vmatprep.subr.bf16.mxu0 %v4663
    %6814 = vmatpush1.bf16.msra.mxu0 %v4662
    %6815 = vmatprep.subr.bf16.mxu0 %v4647
    %6816 = vmatpush1.bf16.msra.mxu0 %v4646
    %6817 = vmatprep.subr.bf16.mxu0 %v4631
    %6818 = vmatpush1.bf16.msra.mxu0 %v4630
    %6819 = vmatprep.subr.bf16.mxu0 %v4615
    %6820 = vmatpush1.bf16.msra.mxu0 %v4614
    %6821 = vmatprep.subr.bf16.mxu0 %v4599
    %6822 = vmatpush1.bf16.msra.mxu0 %v4598
    %6823 = vmatprep.subr.bf16.mxu0 %v4583
    %6824 = vmatpush1.bf16.msra.mxu0 %v4582
    %6825 = vmatprep.subr.bf16.mxu0 %v4567
    %6826 = vmatpush1.bf16.msra.mxu0 %v4566
    %6827 = vmatprep.subr.bf16.mxu0 %v4551
    %6828 = vmatpush1.bf16.msra.mxu0 %v4550
    %6829 = vmatprep.subr.bf16.mxu0 %v4791
    %6830 = vmatpush2.bf16.msra.mxu0 %v4790
    %6831 = vmatprep.subr.bf16.mxu0 %v4775
    %6832 = vmatpush2.bf16.msra.mxu0 %v4774
    %6833 = vmatprep.subr.bf16.mxu0 %v4759
    %6834 = vmatpush2.bf16.msra.mxu0 %v4758
    %6835 = vmatprep.subr.bf16.mxu0 %v4743
    %6836 = vmatpush2.bf16.msra.mxu0 %v4742
    %6837 = vmatprep.subr.bf16.mxu0 %v4727
    %6838 = vmatpush2.bf16.msra.mxu0 %v4726
    %6839 = vmatprep.subr.bf16.mxu0 %v4711
    %6840 = vmatpush2.bf16.msra.mxu0 %v4710
    %6841 = vmatprep.subr.bf16.mxu0 %v4695
    %6842 = vmatpush2.bf16.msra.mxu0 %v4694
    %6843 = vmatprep.subr.bf16.mxu0 %v4679
    %6844 = vmatpush2.bf16.msra.mxu0 %v4678
    %6845 = vmatprep.mubr.bf16.mxu0 %v6607
    %6846 = vmatmul.mubr.bf16.gmra.mxu0 %v6606
    %v6847 = vpop.f32.mrf.mxu0
    %v6848 = vadd.f32 0.0, %v6847
    %v6849 = vpop.f32.mrf.mxu0
    %v6850 = vadd.f32 0.0, %v6849
    %v6851 = vpop.f32.mrf.mxu0
    %v6852 = vpop.f32.mrf.mxu0
    %6853 = vdwg.mxu0
    %6854 = vmatprep.subr.bf16.mxu0 %v4665
    %6855 = vmatpush1.bf16.msra.mxu0 %v4664
    %6856 = vmatprep.subr.bf16.mxu0 %v4649
    %6857 = vmatpush1.bf16.msra.mxu0 %v4648
    %6858 = vmatprep.subr.bf16.mxu0 %v4633
    %6859 = vmatpush1.bf16.msra.mxu0 %v4632
    %6860 = vmatprep.subr.bf16.mxu0 %v4617
    %6861 = vmatpush1.bf16.msra.mxu0 %v4616
    %6862 = vmatprep.subr.bf16.mxu0 %v4601
    %6863 = vmatpush1.bf16.msra.mxu0 %v4600
    %6864 = vmatprep.subr.bf16.mxu0 %v4585
    %6865 = vmatpush1.bf16.msra.mxu0 %v4584
    %6866 = vmatprep.subr.bf16.mxu0 %v4569
    %6867 = vmatpush1.bf16.msra.mxu0 %v4568
    %6868 = vmatprep.subr.bf16.mxu0 %v4553
    %6869 = vmatpush1.bf16.msra.mxu0 %v4552
    %6870 = vmatprep.subr.bf16.mxu0 %v4793
    %6871 = vmatpush2.bf16.msra.mxu0 %v4792
    %6872 = vmatprep.subr.bf16.mxu0 %v4777
    %6873 = vmatpush2.bf16.msra.mxu0 %v4776
    %6874 = vmatprep.subr.bf16.mxu0 %v4761
    %6875 = vmatpush2.bf16.msra.mxu0 %v4760
    %6876 = vmatprep.subr.bf16.mxu0 %v4745
    %6877 = vmatpush2.bf16.msra.mxu0 %v4744
    %6878 = vmatprep.subr.bf16.mxu0 %v4729
    %6879 = vmatpush2.bf16.msra.mxu0 %v4728
    %6880 = vmatprep.subr.bf16.mxu0 %v4713
    %6881 = vmatpush2.bf16.msra.mxu0 %v4712
    %6882 = vmatprep.subr.bf16.mxu0 %v4697
    %6883 = vmatpush2.bf16.msra.mxu0 %v4696
    %6884 = vmatprep.subr.bf16.mxu0 %v4681
    %6885 = vmatpush2.bf16.msra.mxu0 %v4680
    %6886 = vmatprep.mubr.bf16.mxu0 %v6607
    %6887 = vmatmul.mubr.bf16.gmra.mxu0 %v6606
    %v6888 = vpop.f32.mrf.mxu0
    %v6889 = vadd.f32 0.0, %v6888
    %v6890 = vpop.f32.mrf.mxu0
    %v6891 = vadd.f32 0.0, %v6890
    %v6892 = vpop.f32.mrf.mxu0
    %v6893 = vpop.f32.mrf.mxu0
    %6894 = vdwg.mxu0
    %6895 = vmatprep.subr.bf16.mxu0 %v4667
    %6896 = vmatpush1.bf16.msra.mxu0 %v4666
    %6897 = vmatprep.subr.bf16.mxu0 %v4651
    %6898 = vmatpush1.bf16.msra.mxu0 %v4650
    %6899 = vmatprep.subr.bf16.mxu0 %v4635
    %6900 = vmatpush1.bf16.msra.mxu0 %v4634
    %6901 = vmatprep.subr.bf16.mxu0 %v4619
    %6902 = vmatpush1.bf16.msra.mxu0 %v4618
    %6903 = vmatprep.subr.bf16.mxu0 %v4603
    %6904 = vmatpush1.bf16.msra.mxu0 %v4602
    %6905 = vmatprep.subr.bf16.mxu0 %v4587
    %6906 = vmatpush1.bf16.msra.mxu0 %v4586
    %6907 = vmatprep.subr.bf16.mxu0 %v4571
    %6908 = vmatpush1.bf16.msra.mxu0 %v4570
    %6909 = vmatprep.subr.bf16.mxu0 %v4555
    %6910 = vmatpush1.bf16.msra.mxu0 %v4554
    %6911 = vmatprep.subr.bf16.mxu0 %v4795
    %6912 = vmatpush2.bf16.msra.mxu0 %v4794
    %6913 = vmatprep.subr.bf16.mxu0 %v4779
    %6914 = vmatpush2.bf16.msra.mxu0 %v4778
    %6915 = vmatprep.subr.bf16.mxu0 %v4763
    %6916 = vmatpush2.bf16.msra.mxu0 %v4762
    %6917 = vmatprep.subr.bf16.mxu0 %v4747
    %6918 = vmatpush2.bf16.msra.mxu0 %v4746
    %6919 = vmatprep.subr.bf16.mxu0 %v4731
    %6920 = vmatpush2.bf16.msra.mxu0 %v4730
    %6921 = vmatprep.subr.bf16.mxu0 %v4715
    %6922 = vmatpush2.bf16.msra.mxu0 %v4714
    %6923 = vmatprep.subr.bf16.mxu0 %v4699
    %6924 = vmatpush2.bf16.msra.mxu0 %v4698
    %6925 = vmatprep.subr.bf16.mxu0 %v4683
    %6926 = vmatpush2.bf16.msra.mxu0 %v4682
    %6927 = vmatprep.mubr.bf16.mxu0 %v6607
    %6928 = vmatmul.mubr.bf16.gmra.mxu0 %v6606
    %v6929 = vpop.f32.mrf.mxu0
    %v6930 = vadd.f32 0.0, %v6929
    %v6931 = vpop.f32.mrf.mxu0
    %v6932 = vadd.f32 0.0, %v6931
    %v6933 = vpop.f32.mrf.mxu0
    %v6934 = vpop.f32.mrf.mxu0
    %6935 = vdwg.mxu0
    %v6936 = vld [vmem:[%s3207] sm:$0xff]
    %v6937 = vld [vmem:[%s3207 + $0x8] sm:$0xff]
    %v6938 = vld [vmem:[%s3207 + $0x10] sm:$0xff]
    %v6939 = vld [vmem:[%s3207 + $0x18] sm:$0xff]
    %v6940 = vsel %vm3515, %v6643, %v6807
    %v6941 = vsel %vm3515, %v6645, %v6809
    %v6942 = vsel %vm3515, %v6684, %v6848
    %v6943 = vsel %vm3515, %v6686, %v6850
    %v6944 = vsel %vm3515, %v6725, %v6889
    %v6945 = vsel %vm3515, %v6727, %v6891
    %v6946 = vsel %vm3515, %v6766, %v6930
    %v6947 = vsel %vm3515, %v6768, %v6932
    %v6956 = vcombine.low %v6940, %v6941
    %v6957 = vcombine.low %v6942, %v6943
    %v6958 = vcombine.low %v6944, %v6945
    %v6959 = vcombine.low %v6946, %v6947
    %v6964 = vadd.f32 %v6936, %v6956
    %v6965 = vadd.f32 %v6937, %v6957
    %v6966 = vadd.f32 %v6938, %v6958
    %v6967 = vadd.f32 %v6939, %v6959
    %v6968 = vxor.u32 %v6964, 2147483648
    %v6969 = vmul.f32 %v6968, 1.442695
    %v6970 = vpow.pop %v6969
    %v6971 = vadd.f32 %v6970, 1.0
    %v6972 = vrcp.pop %v6971
    %v6973 = vmul.f32 1.0, %v6972
    %v6974 = vxor.u32 %v6965, 2147483648
    %v6975 = vmul.f32 %v6974, 1.442695
    %v6976 = vpow.pop %v6975
    %v6977 = vadd.f32 %v6976, 1.0
    %v6978 = vrcp.pop %v6977
    %v6979 = vmul.f32 1.0, %v6978
    %v6980 = vtanh.pop %v6966
    %v6981 = vxor.u32 %v6967, 2147483648
    %v6982 = vmul.f32 %v6981, 1.442695
    %v6983 = vpow.pop %v6982
    %v6984 = vadd.f32 %v6983, 1.0
    %v6985 = vrcp.pop %v6984
    %v6986 = vmul.f32 1.0, %v6985
    %v6987 = vmul.f32 %v6979, %v6600
    %v6988 = vmul.f32 %v6973, %v6980
    %v6989 = vadd.f32 %v6987, %v6988
    %v6990 = vtanh.pop %v6989
    %v6991 = vmul.f32 %v6986, %v6990
    %v6993 = vcombine.high %v6991, %v6991
    %v6995 = vpack.c.bf16 %v6991, %v6991
    %v6996 = vpack.c.bf16 %v6993, %v6993
    %6997 = vmatprep.subr.bf16.mxu0 %v4653
    %6998 = vmatpush1.bf16.msra.mxu0 %v4652
    %6999 = vmatprep.subr.bf16.mxu0 %v4637
    %7000 = vmatpush1.bf16.msra.mxu0 %v4636
    %7001 = vmatprep.subr.bf16.mxu0 %v4621
    %7002 = vmatpush1.bf16.msra.mxu0 %v4620
    %7003 = vmatprep.subr.bf16.mxu0 %v4605
    %7004 = vmatpush1.bf16.msra.mxu0 %v4604
    %7005 = vmatprep.subr.bf16.mxu0 %v4589
    %7006 = vmatpush1.bf16.msra.mxu0 %v4588
    %7007 = vmatprep.subr.bf16.mxu0 %v4573
    %7008 = vmatpush1.bf16.msra.mxu0 %v4572
    %7009 = vmatprep.subr.bf16.mxu0 %v4557
    %7010 = vmatpush1.bf16.msra.mxu0 %v4556
    %7011 = vmatprep.subr.bf16.mxu0 %v4541
    %7012 = vmatpush1.bf16.msra.mxu0 %v4540
    %7013 = vmatprep.subr.bf16.mxu0 %v4781
    %7014 = vmatpush2.bf16.msra.mxu0 %v4780
    %7015 = vmatprep.subr.bf16.mxu0 %v4765
    %7016 = vmatpush2.bf16.msra.mxu0 %v4764
    %7017 = vmatprep.subr.bf16.mxu0 %v4749
    %7018 = vmatpush2.bf16.msra.mxu0 %v4748
    %7019 = vmatprep.subr.bf16.mxu0 %v4733
    %7020 = vmatpush2.bf16.msra.mxu0 %v4732
    %7021 = vmatprep.subr.bf16.mxu0 %v4717
    %7022 = vmatpush2.bf16.msra.mxu0 %v4716
    %7023 = vmatprep.subr.bf16.mxu0 %v4701
    %7024 = vmatpush2.bf16.msra.mxu0 %v4700
    %7025 = vmatprep.subr.bf16.mxu0 %v4685
    %7026 = vmatpush2.bf16.msra.mxu0 %v4684
    %7027 = vmatprep.subr.bf16.mxu0 %v4669
    %7028 = vmatpush2.bf16.msra.mxu0 %v4668
    %7029 = vmatprep.mubr.bf16.mxu0 %v6996
    %7030 = vmatmul.mubr.bf16.gmra.mxu0 %v6995
    %v7031 = vpop.f32.mrf.mxu0
    %v7032 = vadd.f32 0.0, %v7031
    %v7033 = vpop.f32.mrf.mxu0
    %v7034 = vadd.f32 0.0, %v7033
    %v7035 = vpop.f32.mrf.mxu0
    %v7036 = vpop.f32.mrf.mxu0
    %7037 = vdwg.mxu0
    %7038 = vmatprep.subr.bf16.mxu0 %v4655
    %7039 = vmatpush1.bf16.msra.mxu0 %v4654
    %7040 = vmatprep.subr.bf16.mxu0 %v4639
    %7041 = vmatpush1.bf16.msra.mxu0 %v4638
    %7042 = vmatprep.subr.bf16.mxu0 %v4623
    %7043 = vmatpush1.bf16.msra.mxu0 %v4622
    %7044 = vmatprep.subr.bf16.mxu0 %v4607
    %7045 = vmatpush1.bf16.msra.mxu0 %v4606
    %7046 = vmatprep.subr.bf16.mxu0 %v4591
    %7047 = vmatpush1.bf16.msra.mxu0 %v4590
    %7048 = vmatprep.subr.bf16.mxu0 %v4575
    %7049 = vmatpush1.bf16.msra.mxu0 %v4574
    %7050 = vmatprep.subr.bf16.mxu0 %v4559
    %7051 = vmatpush1.bf16.msra.mxu0 %v4558
    %7052 = vmatprep.subr.bf16.mxu0 %v4543
    %7053 = vmatpush1.bf16.msra.mxu0 %v4542
    %7054 = vmatprep.subr.bf16.mxu0 %v4783
    %7055 = vmatpush2.bf16.msra.mxu0 %v4782
    %7056 = vmatprep.subr.bf16.mxu0 %v4767
    %7057 = vmatpush2.bf16.msra.mxu0 %v4766
    %7058 = vmatprep.subr.bf16.mxu0 %v4751
    %7059 = vmatpush2.bf16.msra.mxu0 %v4750
    %7060 = vmatprep.subr.bf16.mxu0 %v4735
    %7061 = vmatpush2.bf16.msra.mxu0 %v4734
    %7062 = vmatprep.subr.bf16.mxu0 %v4719
    %7063 = vmatpush2.bf16.msra.mxu0 %v4718
    %7064 = vmatprep.subr.bf16.mxu0 %v4703
    %7065 = vmatpush2.bf16.msra.mxu0 %v4702
    %7066 = vmatprep.subr.bf16.mxu0 %v4687
    %7067 = vmatpush2.bf16.msra.mxu0 %v4686
    %7068 = vmatprep.subr.bf16.mxu0 %v4671
    %7069 = vmatpush2.bf16.msra.mxu0 %v4670
    %7070 = vmatprep.mubr.bf16.mxu0 %v6996
    %7071 = vmatmul.mubr.bf16.gmra.mxu0 %v6995
    %v7072 = vpop.f32.mrf.mxu0
    %v7073 = vadd.f32 0.0, %v7072
    %v7074 = vpop.f32.mrf.mxu0
    %v7075 = vadd.f32 0.0, %v7074
    %v7076 = vpop.f32.mrf.mxu0
    %v7077 = vpop.f32.mrf.mxu0
    %7078 = vdwg.mxu0
    %7079 = vmatprep.subr.bf16.mxu0 %v4657
    %7080 = vmatpush1.bf16.msra.mxu0 %v4656
    %7081 = vmatprep.subr.bf16.mxu0 %v4641
    %7082 = vmatpush1.bf16.msra.mxu0 %v4640
    %7083 = vmatprep.subr.bf16.mxu0 %v4625
    %7084 = vmatpush1.bf16.msra.mxu0 %v4624
    %7085 = vmatprep.subr.bf16.mxu0 %v4609
    %7086 = vmatpush1.bf16.msra.mxu0 %v4608
    %7087 = vmatprep.subr.bf16.mxu0 %v4593
    %7088 = vmatpush1.bf16.msra.mxu0 %v4592
    %7089 = vmatprep.subr.bf16.mxu0 %v4577
    %7090 = vmatpush1.bf16.msra.mxu0 %v4576
    %7091 = vmatprep.subr.bf16.mxu0 %v4561
    %7092 = vmatpush1.bf16.msra.mxu0 %v4560
    %7093 = vmatprep.subr.bf16.mxu0 %v4545
    %7094 = vmatpush1.bf16.msra.mxu0 %v4544
    %7095 = vmatprep.subr.bf16.mxu0 %v4785
    %7096 = vmatpush2.bf16.msra.mxu0 %v4784
    %7097 = vmatprep.subr.bf16.mxu0 %v4769
    %7098 = vmatpush2.bf16.msra.mxu0 %v4768
    %7099 = vmatprep.subr.bf16.mxu0 %v4753
    %7100 = vmatpush2.bf16.msra.mxu0 %v4752
    %7101 = vmatprep.subr.bf16.mxu0 %v4737
    %7102 = vmatpush2.bf16.msra.mxu0 %v4736
    %7103 = vmatprep.subr.bf16.mxu0 %v4721
    %7104 = vmatpush2.bf16.msra.mxu0 %v4720
    %7105 = vmatprep.subr.bf16.mxu0 %v4705
    %7106 = vmatpush2.bf16.msra.mxu0 %v4704
    %7107 = vmatprep.subr.bf16.mxu0 %v4689
    %7108 = vmatpush2.bf16.msra.mxu0 %v4688
    %7109 = vmatprep.subr.bf16.mxu0 %v4673
    %7110 = vmatpush2.bf16.msra.mxu0 %v4672
    %7111 = vmatprep.mubr.bf16.mxu0 %v6996
    %7112 = vmatmul.mubr.bf16.gmra.mxu0 %v6995
    %v7113 = vpop.f32.mrf.mxu0
    %v7114 = vadd.f32 0.0, %v7113
    %v7115 = vpop.f32.mrf.mxu0
    %v7116 = vadd.f32 0.0, %v7115
    %v7117 = vpop.f32.mrf.mxu0
    %v7118 = vpop.f32.mrf.mxu0
    %7119 = vdwg.mxu0
    %7120 = vmatprep.subr.bf16.mxu0 %v4659
    %7121 = vmatpush1.bf16.msra.mxu0 %v4658
    %7122 = vmatprep.subr.bf16.mxu0 %v4643
    %7123 = vmatpush1.bf16.msra.mxu0 %v4642
    %7124 = vmatprep.subr.bf16.mxu0 %v4627
    %7125 = vmatpush1.bf16.msra.mxu0 %v4626
    %7126 = vmatprep.subr.bf16.mxu0 %v4611
    %7127 = vmatpush1.bf16.msra.mxu0 %v4610
    %7128 = vmatprep.subr.bf16.mxu0 %v4595
    %7129 = vmatpush1.bf16.msra.mxu0 %v4594
    %7130 = vmatprep.subr.bf16.mxu0 %v4579
    %7131 = vmatpush1.bf16.msra.mxu0 %v4578
    %7132 = vmatprep.subr.bf16.mxu0 %v4563
    %7133 = vmatpush1.bf16.msra.mxu0 %v4562
    %7134 = vmatprep.subr.bf16.mxu0 %v4547
    %7135 = vmatpush1.bf16.msra.mxu0 %v4546
    %7136 = vmatprep.subr.bf16.mxu0 %v4787
    %7137 = vmatpush2.bf16.msra.mxu0 %v4786
    %7138 = vmatprep.subr.bf16.mxu0 %v4771
    %7139 = vmatpush2.bf16.msra.mxu0 %v4770
    %7140 = vmatprep.subr.bf16.mxu0 %v4755
    %7141 = vmatpush2.bf16.msra.mxu0 %v4754
    %7142 = vmatprep.subr.bf16.mxu0 %v4739
    %7143 = vmatpush2.bf16.msra.mxu0 %v4738
    %7144 = vmatprep.subr.bf16.mxu0 %v4723
    %7145 = vmatpush2.bf16.msra.mxu0 %v4722
    %7146 = vmatprep.subr.bf16.mxu0 %v4707
    %7147 = vmatpush2.bf16.msra.mxu0 %v4706
    %7148 = vmatprep.subr.bf16.mxu0 %v4691
    %7149 = vmatpush2.bf16.msra.mxu0 %v4690
    %7150 = vmatprep.subr.bf16.mxu0 %v4675
    %7151 = vmatpush2.bf16.msra.mxu0 %v4674
    %7152 = vmatprep.mubr.bf16.mxu0 %v6996
    %7153 = vmatmul.mubr.bf16.gmra.mxu0 %v6995
    %v7154 = vpop.f32.mrf.mxu0
    %v7155 = vadd.f32 0.0, %v7154
    %v7156 = vpop.f32.mrf.mxu0
    %v7157 = vadd.f32 0.0, %v7156
    %v7158 = vpop.f32.mrf.mxu0
    %v7159 = vpop.f32.mrf.mxu0
    %7160 = vdwg.mxu0
    %7161 = vmatprep.subr.bf16.mxu0 %v4661
    %7162 = vmatpush1.bf16.msra.mxu0 %v4660
    %7163 = vmatprep.subr.bf16.mxu0 %v4645
    %7164 = vmatpush1.bf16.msra.mxu0 %v4644
    %7165 = vmatprep.subr.bf16.mxu0 %v4629
    %7166 = vmatpush1.bf16.msra.mxu0 %v4628
    %7167 = vmatprep.subr.bf16.mxu0 %v4613
    %7168 = vmatpush1.bf16.msra.mxu0 %v4612
    %7169 = vmatprep.subr.bf16.mxu0 %v4597
    %7170 = vmatpush1.bf16.msra.mxu0 %v4596
    %7171 = vmatprep.subr.bf16.mxu0 %v4581
    %7172 = vmatpush1.bf16.msra.mxu0 %v4580
    %7173 = vmatprep.subr.bf16.mxu0 %v4565
    %7174 = vmatpush1.bf16.msra.mxu0 %v4564
    %7175 = vmatprep.subr.bf16.mxu0 %v4549
    %7176 = vmatpush1.bf16.msra.mxu0 %v4548
    %7177 = vmatprep.subr.bf16.mxu0 %v4789
    %7178 = vmatpush2.bf16.msra.mxu0 %v4788
    %7179 = vmatprep.subr.bf16.mxu0 %v4773
    %7180 = vmatpush2.bf16.msra.mxu0 %v4772
    %7181 = vmatprep.subr.bf16.mxu0 %v4757
    %7182 = vmatpush2.bf16.msra.mxu0 %v4756
    %7183 = vmatprep.subr.bf16.mxu0 %v4741
    %7184 = vmatpush2.bf16.msra.mxu0 %v4740
    %7185 = vmatprep.subr.bf16.mxu0 %v4725
    %7186 = vmatpush2.bf16.msra.mxu0 %v4724
    %7187 = vmatprep.subr.bf16.mxu0 %v4709
    %7188 = vmatpush2.bf16.msra.mxu0 %v4708
    %7189 = vmatprep.subr.bf16.mxu0 %v4693
    %7190 = vmatpush2.bf16.msra.mxu0 %v4692
    %7191 = vmatprep.subr.bf16.mxu0 %v4677
    %7192 = vmatpush2.bf16.msra.mxu0 %v4676
    %7193 = vmatprep.mubr.bf16.mxu0 %v6996
    %7194 = vmatmul.mubr.bf16.gmra.mxu0 %v6995
    %v7195 = vpop.f32.mrf.mxu0
    %v7196 = vadd.f32 0.0, %v7195
    %v7197 = vpop.f32.mrf.mxu0
    %v7198 = vadd.f32 0.0, %v7197
    %v7199 = vpop.f32.mrf.mxu0
    %v7200 = vpop.f32.mrf.mxu0
    %7201 = vdwg.mxu0
    %7202 = vmatprep.subr.bf16.mxu0 %v4663
    %7203 = vmatpush1.bf16.msra.mxu0 %v4662
    %7204 = vmatprep.subr.bf16.mxu0 %v4647
    %7205 = vmatpush1.bf16.msra.mxu0 %v4646
    %7206 = vmatprep.subr.bf16.mxu0 %v4631
    %7207 = vmatpush1.bf16.msra.mxu0 %v4630
    %7208 = vmatprep.subr.bf16.mxu0 %v4615
    %7209 = vmatpush1.bf16.msra.mxu0 %v4614
    %7210 = vmatprep.subr.bf16.mxu0 %v4599
    %7211 = vmatpush1.bf16.msra.mxu0 %v4598
    %7212 = vmatprep.subr.bf16.mxu0 %v4583
    %7213 = vmatpush1.bf16.msra.mxu0 %v4582
    %7214 = vmatprep.subr.bf16.mxu0 %v4567
    %7215 = vmatpush1.bf16.msra.mxu0 %v4566
    %7216 = vmatprep.subr.bf16.mxu0 %v4551
    %7217 = vmatpush1.bf16.msra.mxu0 %v4550
    %7218 = vmatprep.subr.bf16.mxu0 %v4791
    %7219 = vmatpush2.bf16.msra.mxu0 %v4790
    %7220 = vmatprep.subr.bf16.mxu0 %v4775
    %7221 = vmatpush2.bf16.msra.mxu0 %v4774
    %7222 = vmatprep.subr.bf16.mxu0 %v4759
    %7223 = vmatpush2.bf16.msra.mxu0 %v4758
    %7224 = vmatprep.subr.bf16.mxu0 %v4743
    %7225 = vmatpush2.bf16.msra.mxu0 %v4742
    %7226 = vmatprep.subr.bf16.mxu0 %v4727
    %7227 = vmatpush2.bf16.msra.mxu0 %v4726
    %7228 = vmatprep.subr.bf16.mxu0 %v4711
    %7229 = vmatpush2.bf16.msra.mxu0 %v4710
    %7230 = vmatprep.subr.bf16.mxu0 %v4695
    %7231 = vmatpush2.bf16.msra.mxu0 %v4694
    %7232 = vmatprep.subr.bf16.mxu0 %v4679
    %7233 = vmatpush2.bf16.msra.mxu0 %v4678
    %7234 = vmatprep.mubr.bf16.mxu0 %v6996
    %7235 = vmatmul.mubr.bf16.gmra.mxu0 %v6995
    %v7236 = vpop.f32.mrf.mxu0
    %v7237 = vadd.f32 0.0, %v7236
    %v7238 = vpop.f32.mrf.mxu0
    %v7239 = vadd.f32 0.0, %v7238
    %v7240 = vpop.f32.mrf.mxu0
    %v7241 = vpop.f32.mrf.mxu0
    %7242 = vdwg.mxu0
    %7243 = vmatprep.subr.bf16.mxu0 %v4665
    %7244 = vmatpush1.bf16.msra.mxu0 %v4664
    %7245 = vmatprep.subr.bf16.mxu0 %v4649
    %7246 = vmatpush1.bf16.msra.mxu0 %v4648
    %7247 = vmatprep.subr.bf16.mxu0 %v4633
    %7248 = vmatpush1.bf16.msra.mxu0 %v4632
    %7249 = vmatprep.subr.bf16.mxu0 %v4617
    %7250 = vmatpush1.bf16.msra.mxu0 %v4616
    %7251 = vmatprep.subr.bf16.mxu0 %v4601
    %7252 = vmatpush1.bf16.msra.mxu0 %v4600
    %7253 = vmatprep.subr.bf16.mxu0 %v4585
    %7254 = vmatpush1.bf16.msra.mxu0 %v4584
    %7255 = vmatprep.subr.bf16.mxu0 %v4569
    %7256 = vmatpush1.bf16.msra.mxu0 %v4568
    %7257 = vmatprep.subr.bf16.mxu0 %v4553
    %7258 = vmatpush1.bf16.msra.mxu0 %v4552
    %7259 = vmatprep.subr.bf16.mxu0 %v4793
    %7260 = vmatpush2.bf16.msra.mxu0 %v4792
    %7261 = vmatprep.subr.bf16.mxu0 %v4777
    %7262 = vmatpush2.bf16.msra.mxu0 %v4776
    %7263 = vmatprep.subr.bf16.mxu0 %v4761
    %7264 = vmatpush2.bf16.msra.mxu0 %v4760
    %7265 = vmatprep.subr.bf16.mxu0 %v4745
    %7266 = vmatpush2.bf16.msra.mxu0 %v4744
    %7267 = vmatprep.subr.bf16.mxu0 %v4729
    %7268 = vmatpush2.bf16.msra.mxu0 %v4728
    %7269 = vmatprep.subr.bf16.mxu0 %v4713
    %7270 = vmatpush2.bf16.msra.mxu0 %v4712
    %7271 = vmatprep.subr.bf16.mxu0 %v4697
    %7272 = vmatpush2.bf16.msra.mxu0 %v4696
    %7273 = vmatprep.subr.bf16.mxu0 %v4681
    %7274 = vmatpush2.bf16.msra.mxu0 %v4680
    %7275 = vmatprep.mubr.bf16.mxu0 %v6996
    %7276 = vmatmul.mubr.bf16.gmra.mxu0 %v6995
    %v7277 = vpop.f32.mrf.mxu0
    %v7278 = vadd.f32 0.0, %v7277
    %v7279 = vpop.f32.mrf.mxu0
    %v7280 = vadd.f32 0.0, %v7279
    %v7281 = vpop.f32.mrf.mxu0
    %v7282 = vpop.f32.mrf.mxu0
    %7283 = vdwg.mxu0
    %7284 = vmatprep.subr.bf16.mxu0 %v4667
    %7285 = vmatpush1.bf16.msra.mxu0 %v4666
    %7286 = vmatprep.subr.bf16.mxu0 %v4651
    %7287 = vmatpush1.bf16.msra.mxu0 %v4650
    %7288 = vmatprep.subr.bf16.mxu0 %v4635
    %7289 = vmatpush1.bf16.msra.mxu0 %v4634
    %7290 = vmatprep.subr.bf16.mxu0 %v4619
    %7291 = vmatpush1.bf16.msra.mxu0 %v4618
    %7292 = vmatprep.subr.bf16.mxu0 %v4603
    %7293 = vmatpush1.bf16.msra.mxu0 %v4602
    %7294 = vmatprep.subr.bf16.mxu0 %v4587
    %7295 = vmatpush1.bf16.msra.mxu0 %v4586
    %7296 = vmatprep.subr.bf16.mxu0 %v4571
    %7297 = vmatpush1.bf16.msra.mxu0 %v4570
    %7298 = vmatprep.subr.bf16.mxu0 %v4555
    %7299 = vmatpush1.bf16.msra.mxu0 %v4554
    %7300 = vmatprep.subr.bf16.mxu0 %v4795
    %7301 = vmatpush2.bf16.msra.mxu0 %v4794
    %7302 = vmatprep.subr.bf16.mxu0 %v4779
    %7303 = vmatpush2.bf16.msra.mxu0 %v4778
    %7304 = vmatprep.subr.bf16.mxu0 %v4763
    %7305 = vmatpush2.bf16.msra.mxu0 %v4762
    %7306 = vmatprep.subr.bf16.mxu0 %v4747
    %7307 = vmatpush2.bf16.msra.mxu0 %v4746
    %7308 = vmatprep.subr.bf16.mxu0 %v4731
    %7309 = vmatpush2.bf16.msra.mxu0 %v4730
    %7310 = vmatprep.subr.bf16.mxu0 %v4715
    %7311 = vmatpush2.bf16.msra.mxu0 %v4714
    %7312 = vmatprep.subr.bf16.mxu0 %v4699
    %7313 = vmatpush2.bf16.msra.mxu0 %v4698
    %7314 = vmatprep.subr.bf16.mxu0 %v4683
    %7315 = vmatpush2.bf16.msra.mxu0 %v4682
    %7316 = vmatprep.mubr.bf16.mxu0 %v6996
    %7317 = vmatmul.mubr.bf16.gmra.mxu0 %v6995
    %v7318 = vpop.f32.mrf.mxu0
    %v7319 = vadd.f32 0.0, %v7318
    %v7320 = vpop.f32.mrf.mxu0
    %v7321 = vadd.f32 0.0, %v7320
    %v7322 = vpop.f32.mrf.mxu0
    %v7323 = vpop.f32.mrf.mxu0
    %7324 = vdwg.mxu0
    %v7325 = vld [vmem:[%s3276] sm:$0xff]
    %v7326 = vld [vmem:[%s3276 + $0x8] sm:$0xff]
    %v7327 = vld [vmem:[%s3276 + $0x10] sm:$0xff]
    %v7328 = vld [vmem:[%s3276 + $0x18] sm:$0xff]
    %v7329 = vsel %vm3515, %v7032, %v7196
    %v7330 = vsel %vm3515, %v7034, %v7198
    %v7331 = vsel %vm3515, %v7073, %v7237
    %v7332 = vsel %vm3515, %v7075, %v7239
    %v7333 = vsel %vm3515, %v7114, %v7278
    %v7334 = vsel %vm3515, %v7116, %v7280
    %v7335 = vsel %vm3515, %v7155, %v7319
    %v7336 = vsel %vm3515, %v7157, %v7321
    %v7345 = vcombine.low %v7329, %v7330
    %v7346 = vcombine.low %v7331, %v7332
    %v7347 = vcombine.low %v7333, %v7334
    %v7348 = vcombine.low %v7335, %v7336
    %v7353 = vadd.f32 %v7325, %v7345
    %v7354 = vadd.f32 %v7326, %v7346
    %v7355 = vadd.f32 %v7327, %v7347
    %v7356 = vadd.f32 %v7328, %v7348
    %v7357 = vxor.u32 %v7353, 2147483648
    %v7358 = vmul.f32 %v7357, 1.442695
    %v7359 = vpow.pop %v7358
    %v7360 = vadd.f32 %v7359, 1.0
    %v7361 = vrcp.pop %v7360
    %v7362 = vmul.f32 1.0, %v7361
    %v7363 = vxor.u32 %v7354, 2147483648
    %v7364 = vmul.f32 %v7363, 1.442695
    %v7365 = vpow.pop %v7364
    %v7366 = vadd.f32 %v7365, 1.0
    %v7367 = vrcp.pop %v7366
    %v7368 = vmul.f32 1.0, %v7367
    %v7369 = vtanh.pop %v7355
    %v7370 = vxor.u32 %v7356, 2147483648
    %v7371 = vmul.f32 %v7370, 1.442695
    %v7372 = vpow.pop %v7371
    %v7373 = vadd.f32 %v7372, 1.0
    %v7374 = vrcp.pop %v7373
    %v7375 = vmul.f32 1.0, %v7374
    %v7376 = vmul.f32 %v7368, %v6989
    %v7377 = vmul.f32 %v7362, %v7369
    %v7378 = vadd.f32 %v7376, %v7377
    %v7379 = vtanh.pop %v7378
    %v7380 = vmul.f32 %v7375, %v7379
    %v7382 = vcombine.high %v7380, %v7380
    %v7384 = vpack.c.bf16 %v7380, %v7380
    %v7385 = vpack.c.bf16 %v7382, %v7382
    %7386 = vmatprep.subr.bf16.mxu0 %v4653
    %7387 = vmatpush1.bf16.msra.mxu0 %v4652
    %7388 = vmatprep.subr.bf16.mxu0 %v4637
    %7389 = vmatpush1.bf16.msra.mxu0 %v4636
    %7390 = vmatprep.subr.bf16.mxu0 %v4621
    %7391 = vmatpush1.bf16.msra.mxu0 %v4620
    %7392 = vmatprep.subr.bf16.mxu0 %v4605
    %7393 = vmatpush1.bf16.msra.mxu0 %v4604
    %7394 = vmatprep.subr.bf16.mxu0 %v4589
    %7395 = vmatpush1.bf16.msra.mxu0 %v4588
    %7396 = vmatprep.subr.bf16.mxu0 %v4573
    %7397 = vmatpush1.bf16.msra.mxu0 %v4572
    %7398 = vmatprep.subr.bf16.mxu0 %v4557
    %7399 = vmatpush1.bf16.msra.mxu0 %v4556
    %7400 = vmatprep.subr.bf16.mxu0 %v4541
    %7401 = vmatpush1.bf16.msra.mxu0 %v4540
    %7402 = vmatprep.subr.bf16.mxu0 %v4781
    %7403 = vmatpush2.bf16.msra.mxu0 %v4780
    %7404 = vmatprep.subr.bf16.mxu0 %v4765
    %7405 = vmatpush2.bf16.msra.mxu0 %v4764
    %7406 = vmatprep.subr.bf16.mxu0 %v4749
    %7407 = vmatpush2.bf16.msra.mxu0 %v4748
    %7408 = vmatprep.subr.bf16.mxu0 %v4733
    %7409 = vmatpush2.bf16.msra.mxu0 %v4732
    %7410 = vmatprep.subr.bf16.mxu0 %v4717
    %7411 = vmatpush2.bf16.msra.mxu0 %v4716
    %7412 = vmatprep.subr.bf16.mxu0 %v4701
    %7413 = vmatpush2.bf16.msra.mxu0 %v4700
    %7414 = vmatprep.subr.bf16.mxu0 %v4685
    %7415 = vmatpush2.bf16.msra.mxu0 %v4684
    %7416 = vmatprep.subr.bf16.mxu0 %v4669
    %7417 = vmatpush2.bf16.msra.mxu0 %v4668
    %7418 = vmatprep.mubr.bf16.mxu0 %v7385
    %7419 = vmatmul.mubr.bf16.gmra.mxu0 %v7384
    %v7420 = vpop.f32.mrf.mxu0
    %v7421 = vadd.f32 0.0, %v7420
    %v7422 = vpop.f32.mrf.mxu0
    %v7423 = vadd.f32 0.0, %v7422
    %v7424 = vpop.f32.mrf.mxu0
    %v7425 = vpop.f32.mrf.mxu0
    %7426 = vdwg.mxu0
    %7427 = vmatprep.subr.bf16.mxu0 %v4655
    %7428 = vmatpush1.bf16.msra.mxu0 %v4654
    %7429 = vmatprep.subr.bf16.mxu0 %v4639
    %7430 = vmatpush1.bf16.msra.mxu0 %v4638
    %7431 = vmatprep.subr.bf16.mxu0 %v4623
    %7432 = vmatpush1.bf16.msra.mxu0 %v4622
    %7433 = vmatprep.subr.bf16.mxu0 %v4607
    %7434 = vmatpush1.bf16.msra.mxu0 %v4606
    %7435 = vmatprep.subr.bf16.mxu0 %v4591
    %7436 = vmatpush1.bf16.msra.mxu0 %v4590
    %7437 = vmatprep.subr.bf16.mxu0 %v4575
    %7438 = vmatpush1.bf16.msra.mxu0 %v4574
    %7439 = vmatprep.subr.bf16.mxu0 %v4559
    %7440 = vmatpush1.bf16.msra.mxu0 %v4558
    %7441 = vmatprep.subr.bf16.mxu0 %v4543
    %7442 = vmatpush1.bf16.msra.mxu0 %v4542
    %7443 = vmatprep.subr.bf16.mxu0 %v4783
    %7444 = vmatpush2.bf16.msra.mxu0 %v4782
    %7445 = vmatprep.subr.bf16.mxu0 %v4767
    %7446 = vmatpush2.bf16.msra.mxu0 %v4766
    %7447 = vmatprep.subr.bf16.mxu0 %v4751
    %7448 = vmatpush2.bf16.msra.mxu0 %v4750
    %7449 = vmatprep.subr.bf16.mxu0 %v4735
    %7450 = vmatpush2.bf16.msra.mxu0 %v4734
    %7451 = vmatprep.subr.bf16.mxu0 %v4719
    %7452 = vmatpush2.bf16.msra.mxu0 %v4718
    %7453 = vmatprep.subr.bf16.mxu0 %v4703
    %7454 = vmatpush2.bf16.msra.mxu0 %v4702
    %7455 = vmatprep.subr.bf16.mxu0 %v4687
    %7456 = vmatpush2.bf16.msra.mxu0 %v4686
    %7457 = vmatprep.subr.bf16.mxu0 %v4671
    %7458 = vmatpush2.bf16.msra.mxu0 %v4670
    %7459 = vmatprep.mubr.bf16.mxu0 %v7385
    %7460 = vmatmul.mubr.bf16.gmra.mxu0 %v7384
    %v7461 = vpop.f32.mrf.mxu0
    %v7462 = vadd.f32 0.0, %v7461
    %v7463 = vpop.f32.mrf.mxu0
    %v7464 = vadd.f32 0.0, %v7463
    %v7465 = vpop.f32.mrf.mxu0
    %v7466 = vpop.f32.mrf.mxu0
    %7467 = vdwg.mxu0
    %7468 = vmatprep.subr.bf16.mxu0 %v4657
    %7469 = vmatpush1.bf16.msra.mxu0 %v4656
    %7470 = vmatprep.subr.bf16.mxu0 %v4641
    %7471 = vmatpush1.bf16.msra.mxu0 %v4640
    %7472 = vmatprep.subr.bf16.mxu0 %v4625
    %7473 = vmatpush1.bf16.msra.mxu0 %v4624
    %7474 = vmatprep.subr.bf16.mxu0 %v4609
    %7475 = vmatpush1.bf16.msra.mxu0 %v4608
    %7476 = vmatprep.subr.bf16.mxu0 %v4593
    %7477 = vmatpush1.bf16.msra.mxu0 %v4592
    %7478 = vmatprep.subr.bf16.mxu0 %v4577
    %7479 = vmatpush1.bf16.msra.mxu0 %v4576
    %7480 = vmatprep.subr.bf16.mxu0 %v4561
    %7481 = vmatpush1.bf16.msra.mxu0 %v4560
    %7482 = vmatprep.subr.bf16.mxu0 %v4545
    %7483 = vmatpush1.bf16.msra.mxu0 %v4544
    %7484 = vmatprep.subr.bf16.mxu0 %v4785
    %7485 = vmatpush2.bf16.msra.mxu0 %v4784
    %7486 = vmatprep.subr.bf16.mxu0 %v4769
    %7487 = vmatpush2.bf16.msra.mxu0 %v4768
    %7488 = vmatprep.subr.bf16.mxu0 %v4753
    %7489 = vmatpush2.bf16.msra.mxu0 %v4752
    %7490 = vmatprep.subr.bf16.mxu0 %v4737
    %7491 = vmatpush2.bf16.msra.mxu0 %v4736
    %7492 = vmatprep.subr.bf16.mxu0 %v4721
    %7493 = vmatpush2.bf16.msra.mxu0 %v4720
    %7494 = vmatprep.subr.bf16.mxu0 %v4705
    %7495 = vmatpush2.bf16.msra.mxu0 %v4704
    %7496 = vmatprep.subr.bf16.mxu0 %v4689
    %7497 = vmatpush2.bf16.msra.mxu0 %v4688
    %7498 = vmatprep.subr.bf16.mxu0 %v4673
    %7499 = vmatpush2.bf16.msra.mxu0 %v4672
    %7500 = vmatprep.mubr.bf16.mxu0 %v7385
    %7501 = vmatmul.mubr.bf16.gmra.mxu0 %v7384
    %v7502 = vpop.f32.mrf.mxu0
    %v7503 = vadd.f32 0.0, %v7502
    %v7504 = vpop.f32.mrf.mxu0
    %v7505 = vadd.f32 0.0, %v7504
    %v7506 = vpop.f32.mrf.mxu0
    %v7507 = vpop.f32.mrf.mxu0
    %7508 = vdwg.mxu0
    %7509 = vmatprep.subr.bf16.mxu0 %v4659
    %7510 = vmatpush1.bf16.msra.mxu0 %v4658
    %7511 = vmatprep.subr.bf16.mxu0 %v4643
    %7512 = vmatpush1.bf16.msra.mxu0 %v4642
    %7513 = vmatprep.subr.bf16.mxu0 %v4627
    %7514 = vmatpush1.bf16.msra.mxu0 %v4626
    %7515 = vmatprep.subr.bf16.mxu0 %v4611
    %7516 = vmatpush1.bf16.msra.mxu0 %v4610
    %7517 = vmatprep.subr.bf16.mxu0 %v4595
    %7518 = vmatpush1.bf16.msra.mxu0 %v4594
    %7519 = vmatprep.subr.bf16.mxu0 %v4579
    %7520 = vmatpush1.bf16.msra.mxu0 %v4578
    %7521 = vmatprep.subr.bf16.mxu0 %v4563
    %7522 = vmatpush1.bf16.msra.mxu0 %v4562
    %7523 = vmatprep.subr.bf16.mxu0 %v4547
    %7524 = vmatpush1.bf16.msra.mxu0 %v4546
    %7525 = vmatprep.subr.bf16.mxu0 %v4787
    %7526 = vmatpush2.bf16.msra.mxu0 %v4786
    %7527 = vmatprep.subr.bf16.mxu0 %v4771
    %7528 = vmatpush2.bf16.msra.mxu0 %v4770
    %7529 = vmatprep.subr.bf16.mxu0 %v4755
    %7530 = vmatpush2.bf16.msra.mxu0 %v4754
    %7531 = vmatprep.subr.bf16.mxu0 %v4739
    %7532 = vmatpush2.bf16.msra.mxu0 %v4738
    %7533 = vmatprep.subr.bf16.mxu0 %v4723
    %7534 = vmatpush2.bf16.msra.mxu0 %v4722
    %7535 = vmatprep.subr.bf16.mxu0 %v4707
    %7536 = vmatpush2.bf16.msra.mxu0 %v4706
    %7537 = vmatprep.subr.bf16.mxu0 %v4691
    %7538 = vmatpush2.bf16.msra.mxu0 %v4690
    %7539 = vmatprep.subr.bf16.mxu0 %v4675
    %7540 = vmatpush2.bf16.msra.mxu0 %v4674
    %7541 = vmatprep.mubr.bf16.mxu0 %v7385
    %7542 = vmatmul.mubr.bf16.gmra.mxu0 %v7384
    %v7543 = vpop.f32.mrf.mxu0
    %v7544 = vadd.f32 0.0, %v7543
    %v7545 = vpop.f32.mrf.mxu0
    %v7546 = vadd.f32 0.0, %v7545
    %v7547 = vpop.f32.mrf.mxu0
    %v7548 = vpop.f32.mrf.mxu0
    %7549 = vdwg.mxu0
    %7550 = vmatprep.subr.bf16.mxu0 %v4661
    %7551 = vmatpush1.bf16.msra.mxu0 %v4660
    %7552 = vmatprep.subr.bf16.mxu0 %v4645
    %7553 = vmatpush1.bf16.msra.mxu0 %v4644
    %7554 = vmatprep.subr.bf16.mxu0 %v4629
    %7555 = vmatpush1.bf16.msra.mxu0 %v4628
    %7556 = vmatprep.subr.bf16.mxu0 %v4613
    %7557 = vmatpush1.bf16.msra.mxu0 %v4612
    %7558 = vmatprep.subr.bf16.mxu0 %v4597
    %7559 = vmatpush1.bf16.msra.mxu0 %v4596
    %7560 = vmatprep.subr.bf16.mxu0 %v4581
    %7561 = vmatpush1.bf16.msra.mxu0 %v4580
    %7562 = vmatprep.subr.bf16.mxu0 %v4565
    %7563 = vmatpush1.bf16.msra.mxu0 %v4564
    %7564 = vmatprep.subr.bf16.mxu0 %v4549
    %7565 = vmatpush1.bf16.msra.mxu0 %v4548
    %7566 = vmatprep.subr.bf16.mxu0 %v4789
    %7567 = vmatpush2.bf16.msra.mxu0 %v4788
    %7568 = vmatprep.subr.bf16.mxu0 %v4773
    %7569 = vmatpush2.bf16.msra.mxu0 %v4772
    %7570 = vmatprep.subr.bf16.mxu0 %v4757
    %7571 = vmatpush2.bf16.msra.mxu0 %v4756
    %7572 = vmatprep.subr.bf16.mxu0 %v4741
    %7573 = vmatpush2.bf16.msra.mxu0 %v4740
    %7574 = vmatprep.subr.bf16.mxu0 %v4725
    %7575 = vmatpush2.bf16.msra.mxu0 %v4724
    %7576 = vmatprep.subr.bf16.mxu0 %v4709
    %7577 = vmatpush2.bf16.msra.mxu0 %v4708
    %7578 = vmatprep.subr.bf16.mxu0 %v4693
    %7579 = vmatpush2.bf16.msra.mxu0 %v4692
    %7580 = vmatprep.subr.bf16.mxu0 %v4677
    %7581 = vmatpush2.bf16.msra.mxu0 %v4676
    %7582 = vmatprep.mubr.bf16.mxu0 %v7385
    %7583 = vmatmul.mubr.bf16.gmra.mxu0 %v7384
    %v7584 = vpop.f32.mrf.mxu0
    %v7585 = vadd.f32 0.0, %v7584
    %v7586 = vpop.f32.mrf.mxu0
    %v7587 = vadd.f32 0.0, %v7586
    %v7588 = vpop.f32.mrf.mxu0
    %v7589 = vpop.f32.mrf.mxu0
    %7590 = vdwg.mxu0
    %7591 = vmatprep.subr.bf16.mxu0 %v4663
    %7592 = vmatpush1.bf16.msra.mxu0 %v4662
    %7593 = vmatprep.subr.bf16.mxu0 %v4647
    %7594 = vmatpush1.bf16.msra.mxu0 %v4646
    %7595 = vmatprep.subr.bf16.mxu0 %v4631
    %7596 = vmatpush1.bf16.msra.mxu0 %v4630
    %7597 = vmatprep.subr.bf16.mxu0 %v4615
    %7598 = vmatpush1.bf16.msra.mxu0 %v4614
    %7599 = vmatprep.subr.bf16.mxu0 %v4599
    %7600 = vmatpush1.bf16.msra.mxu0 %v4598
    %7601 = vmatprep.subr.bf16.mxu0 %v4583
    %7602 = vmatpush1.bf16.msra.mxu0 %v4582
    %7603 = vmatprep.subr.bf16.mxu0 %v4567
    %7604 = vmatpush1.bf16.msra.mxu0 %v4566
    %7605 = vmatprep.subr.bf16.mxu0 %v4551
    %7606 = vmatpush1.bf16.msra.mxu0 %v4550
    %7607 = vmatprep.subr.bf16.mxu0 %v4791
    %7608 = vmatpush2.bf16.msra.mxu0 %v4790
    %7609 = vmatprep.subr.bf16.mxu0 %v4775
    %7610 = vmatpush2.bf16.msra.mxu0 %v4774
    %7611 = vmatprep.subr.bf16.mxu0 %v4759
    %7612 = vmatpush2.bf16.msra.mxu0 %v4758
    %7613 = vmatprep.subr.bf16.mxu0 %v4743
    %7614 = vmatpush2.bf16.msra.mxu0 %v4742
    %7615 = vmatprep.subr.bf16.mxu0 %v4727
    %7616 = vmatpush2.bf16.msra.mxu0 %v4726
    %7617 = vmatprep.subr.bf16.mxu0 %v4711
    %7618 = vmatpush2.bf16.msra.mxu0 %v4710
    %7619 = vmatprep.subr.bf16.mxu0 %v4695
    %7620 = vmatpush2.bf16.msra.mxu0 %v4694
    %7621 = vmatprep.subr.bf16.mxu0 %v4679
    %7622 = vmatpush2.bf16.msra.mxu0 %v4678
    %7623 = vmatprep.mubr.bf16.mxu0 %v7385
    %7624 = vmatmul.mubr.bf16.gmra.mxu0 %v7384
    %v7625 = vpop.f32.mrf.mxu0
    %v7626 = vadd.f32 0.0, %v7625
    %v7627 = vpop.f32.mrf.mxu0
    %v7628 = vadd.f32 0.0, %v7627
    %v7629 = vpop.f32.mrf.mxu0
    %v7630 = vpop.f32.mrf.mxu0
    %7631 = vdwg.mxu0
    %7632 = vmatprep.subr.bf16.mxu0 %v4665
    %7633 = vmatpush1.bf16.msra.mxu0 %v4664
    %7634 = vmatprep.subr.bf16.mxu0 %v4649
    %7635 = vmatpush1.bf16.msra.mxu0 %v4648
    %7636 = vmatprep.subr.bf16.mxu0 %v4633
    %7637 = vmatpush1.bf16.msra.mxu0 %v4632
    %7638 = vmatprep.subr.bf16.mxu0 %v4617
    %7639 = vmatpush1.bf16.msra.mxu0 %v4616
    %7640 = vmatprep.subr.bf16.mxu0 %v4601
    %7641 = vmatpush1.bf16.msra.mxu0 %v4600
    %7642 = vmatprep.subr.bf16.mxu0 %v4585
    %7643 = vmatpush1.bf16.msra.mxu0 %v4584
    %7644 = vmatprep.subr.bf16.mxu0 %v4569
    %7645 = vmatpush1.bf16.msra.mxu0 %v4568
    %7646 = vmatprep.subr.bf16.mxu0 %v4553
    %7647 = vmatpush1.bf16.msra.mxu0 %v4552
    %7648 = vmatprep.subr.bf16.mxu0 %v4793
    %7649 = vmatpush2.bf16.msra.mxu0 %v4792
    %7650 = vmatprep.subr.bf16.mxu0 %v4777
    %7651 = vmatpush2.bf16.msra.mxu0 %v4776
    %7652 = vmatprep.subr.bf16.mxu0 %v4761
    %7653 = vmatpush2.bf16.msra.mxu0 %v4760
    %7654 = vmatprep.subr.bf16.mxu0 %v4745
    %7655 = vmatpush2.bf16.msra.mxu0 %v4744
    %7656 = vmatprep.subr.bf16.mxu0 %v4729
    %7657 = vmatpush2.bf16.msra.mxu0 %v4728
    %7658 = vmatprep.subr.bf16.mxu0 %v4713
    %7659 = vmatpush2.bf16.msra.mxu0 %v4712
    %7660 = vmatprep.subr.bf16.mxu0 %v4697
    %7661 = vmatpush2.bf16.msra.mxu0 %v4696
    %7662 = vmatprep.subr.bf16.mxu0 %v4681
    %7663 = vmatpush2.bf16.msra.mxu0 %v4680
    %7664 = vmatprep.mubr.bf16.mxu0 %v7385
    %7665 = vmatmul.mubr.bf16.gmra.mxu0 %v7384
    %v7666 = vpop.f32.mrf.mxu0
    %v7667 = vadd.f32 0.0, %v7666
    %v7668 = vpop.f32.mrf.mxu0
    %v7669 = vadd.f32 0.0, %v7668
    %v7670 = vpop.f32.mrf.mxu0
    %v7671 = vpop.f32.mrf.mxu0
    %7672 = vdwg.mxu0
    %7673 = vmatprep.subr.bf16.mxu0 %v4667
    %7674 = vmatpush1.bf16.msra.mxu0 %v4666
    %7675 = vmatprep.subr.bf16.mxu0 %v4651
    %7676 = vmatpush1.bf16.msra.mxu0 %v4650
    %7677 = vmatprep.subr.bf16.mxu0 %v4635
    %7678 = vmatpush1.bf16.msra.mxu0 %v4634
    %7679 = vmatprep.subr.bf16.mxu0 %v4619
    %7680 = vmatpush1.bf16.msra.mxu0 %v4618
    %7681 = vmatprep.subr.bf16.mxu0 %v4603
    %7682 = vmatpush1.bf16.msra.mxu0 %v4602
    %7683 = vmatprep.subr.bf16.mxu0 %v4587
    %7684 = vmatpush1.bf16.msra.mxu0 %v4586
    %7685 = vmatprep.subr.bf16.mxu0 %v4571
    %7686 = vmatpush1.bf16.msra.mxu0 %v4570
    %7687 = vmatprep.subr.bf16.mxu0 %v4555
    %7688 = vmatpush1.bf16.msra.mxu0 %v4554
    %7689 = vmatprep.subr.bf16.mxu0 %v4795
    %7690 = vmatpush2.bf16.msra.mxu0 %v4794
    %7691 = vmatprep.subr.bf16.mxu0 %v4779
    %7692 = vmatpush2.bf16.msra.mxu0 %v4778
    %7693 = vmatprep.subr.bf16.mxu0 %v4763
    %7694 = vmatpush2.bf16.msra.mxu0 %v4762
    %7695 = vmatprep.subr.bf16.mxu0 %v4747
    %7696 = vmatpush2.bf16.msra.mxu0 %v4746
    %7697 = vmatprep.subr.bf16.mxu0 %v4731
    %7698 = vmatpush2.bf16.msra.mxu0 %v4730
    %7699 = vmatprep.subr.bf16.mxu0 %v4715
    %7700 = vmatpush2.bf16.msra.mxu0 %v4714
    %7701 = vmatprep.subr.bf16.mxu0 %v4699
    %7702 = vmatpush2.bf16.msra.mxu0 %v4698
    %7703 = vmatprep.subr.bf16.mxu0 %v4683
    %7704 = vmatpush2.bf16.msra.mxu0 %v4682
    %7705 = vmatprep.mubr.bf16.mxu0 %v7385
    %7706 = vmatmul.mubr.bf16.gmra.mxu0 %v7384
    %v7707 = vpop.f32.mrf.mxu0
    %v7708 = vadd.f32 0.0, %v7707
    %v7709 = vpop.f32.mrf.mxu0
    %v7710 = vadd.f32 0.0, %v7709
    %v7711 = vpop.f32.mrf.mxu0
    %v7712 = vpop.f32.mrf.mxu0
    %7713 = vdwg.mxu0
    %v7714 = vld [vmem:[%s3345] sm:$0xff]
    %v7715 = vld [vmem:[%s3345 + $0x8] sm:$0xff]
    %v7716 = vld [vmem:[%s3345 + $0x10] sm:$0xff]
    %v7717 = vld [vmem:[%s3345 + $0x18] sm:$0xff]
    %v7718 = vsel %vm3515, %v7421, %v7585
    %v7719 = vsel %vm3515, %v7423, %v7587
    %v7720 = vsel %vm3515, %v7462, %v7626
    %v7721 = vsel %vm3515, %v7464, %v7628
    %v7722 = vsel %vm3515, %v7503, %v7667
    %v7723 = vsel %vm3515, %v7505, %v7669
    %v7724 = vsel %vm3515, %v7544, %v7708
    %v7725 = vsel %vm3515, %v7546, %v7710
    %v7734 = vcombine.low %v7718, %v7719
    %v7735 = vcombine.low %v7720, %v7721
    %v7736 = vcombine.low %v7722, %v7723
    %v7737 = vcombine.low %v7724, %v7725
    %v7742 = vadd.f32 %v7714, %v7734
    %v7743 = vadd.f32 %v7715, %v7735
    %v7744 = vadd.f32 %v7716, %v7736
    %v7745 = vadd.f32 %v7717, %v7737
    %v7746 = vxor.u32 %v7742, 2147483648
    %v7747 = vmul.f32 %v7746, 1.442695
    %v7748 = vpow.pop %v7747
    %v7749 = vadd.f32 %v7748, 1.0
    %v7750 = vrcp.pop %v7749
    %v7751 = vmul.f32 1.0, %v7750
    %v7752 = vxor.u32 %v7743, 2147483648
    %v7753 = vmul.f32 %v7752, 1.442695
    %v7754 = vpow.pop %v7753
    %v7755 = vadd.f32 %v7754, 1.0
    %v7756 = vrcp.pop %v7755
    %v7757 = vmul.f32 1.0, %v7756
    %v7758 = vtanh.pop %v7744
    %v7759 = vxor.u32 %v7745, 2147483648
    %v7760 = vmul.f32 %v7759, 1.442695
    %v7761 = vpow.pop %v7760
    %v7762 = vadd.f32 %v7761, 1.0
    %v7763 = vrcp.pop %v7762
    %v7764 = vmul.f32 1.0, %v7763
    %v7765 = vmul.f32 %v7757, %v7378
    %v7766 = vmul.f32 %v7751, %v7758
    %v7767 = vadd.f32 %v7765, %v7766
    %v7768 = vtanh.pop %v7767
    %v7769 = vmul.f32 %v7764, %v7768
    %v7771 = vcombine.high %v7769, %v7769
    %v7773 = vpack.c.bf16 %v7769, %v7769
    %v7774 = vpack.c.bf16 %v7771, %v7771
    %7775 = vmatprep.subr.bf16.mxu0 %v4653
    %7776 = vmatpush1.bf16.msra.mxu0 %v4652
    %7777 = vmatprep.subr.bf16.mxu0 %v4637
    %7778 = vmatpush1.bf16.msra.mxu0 %v4636
    %7779 = vmatprep.subr.bf16.mxu0 %v4621
    %7780 = vmatpush1.bf16.msra.mxu0 %v4620
    %7781 = vmatprep.subr.bf16.mxu0 %v4605
    %7782 = vmatpush1.bf16.msra.mxu0 %v4604
    %7783 = vmatprep.subr.bf16.mxu0 %v4589
    %7784 = vmatpush1.bf16.msra.mxu0 %v4588
    %7785 = vmatprep.subr.bf16.mxu0 %v4573
    %7786 = vmatpush1.bf16.msra.mxu0 %v4572
    %7787 = vmatprep.subr.bf16.mxu0 %v4557
    %7788 = vmatpush1.bf16.msra.mxu0 %v4556
    %7789 = vmatprep.subr.bf16.mxu0 %v4541
    %7790 = vmatpush1.bf16.msra.mxu0 %v4540
    %7791 = vmatprep.subr.bf16.mxu0 %v4781
    %7792 = vmatpush2.bf16.msra.mxu0 %v4780
    %7793 = vmatprep.subr.bf16.mxu0 %v4765
    %7794 = vmatpush2.bf16.msra.mxu0 %v4764
    %7795 = vmatprep.subr.bf16.mxu0 %v4749
    %7796 = vmatpush2.bf16.msra.mxu0 %v4748
    %7797 = vmatprep.subr.bf16.mxu0 %v4733
    %7798 = vmatpush2.bf16.msra.mxu0 %v4732
    %7799 = vmatprep.subr.bf16.mxu0 %v4717
    %7800 = vmatpush2.bf16.msra.mxu0 %v4716
    %7801 = vmatprep.subr.bf16.mxu0 %v4701
    %7802 = vmatpush2.bf16.msra.mxu0 %v4700
    %7803 = vmatprep.subr.bf16.mxu0 %v4685
    %7804 = vmatpush2.bf16.msra.mxu0 %v4684
    %7805 = vmatprep.subr.bf16.mxu0 %v4669
    %7806 = vmatpush2.bf16.msra.mxu0 %v4668
    %7807 = vmatprep.mubr.bf16.mxu0 %v7774
    %7808 = vmatmul.mubr.bf16.gmra.mxu0 %v7773
    %v7809 = vpop.f32.mrf.mxu0
    %v7810 = vadd.f32 0.0, %v7809
    %v7811 = vpop.f32.mrf.mxu0
    %v7812 = vadd.f32 0.0, %v7811
    %v7813 = vpop.f32.mrf.mxu0
    %v7814 = vpop.f32.mrf.mxu0
    %7815 = vdwg.mxu0
    %7816 = vmatprep.subr.bf16.mxu0 %v4655
    %7817 = vmatpush1.bf16.msra.mxu0 %v4654
    %7818 = vmatprep.subr.bf16.mxu0 %v4639
    %7819 = vmatpush1.bf16.msra.mxu0 %v4638
    %7820 = vmatprep.subr.bf16.mxu0 %v4623
    %7821 = vmatpush1.bf16.msra.mxu0 %v4622
    %7822 = vmatprep.subr.bf16.mxu0 %v4607
    %7823 = vmatpush1.bf16.msra.mxu0 %v4606
    %7824 = vmatprep.subr.bf16.mxu0 %v4591
    %7825 = vmatpush1.bf16.msra.mxu0 %v4590
    %7826 = vmatprep.subr.bf16.mxu0 %v4575
    %7827 = vmatpush1.bf16.msra.mxu0 %v4574
    %7828 = vmatprep.subr.bf16.mxu0 %v4559
    %7829 = vmatpush1.bf16.msra.mxu0 %v4558
    %7830 = vmatprep.subr.bf16.mxu0 %v4543
    %7831 = vmatpush1.bf16.msra.mxu0 %v4542
    %7832 = vmatprep.subr.bf16.mxu0 %v4783
    %7833 = vmatpush2.bf16.msra.mxu0 %v4782
    %7834 = vmatprep.subr.bf16.mxu0 %v4767
    %7835 = vmatpush2.bf16.msra.mxu0 %v4766
    %7836 = vmatprep.subr.bf16.mxu0 %v4751
    %7837 = vmatpush2.bf16.msra.mxu0 %v4750
    %7838 = vmatprep.subr.bf16.mxu0 %v4735
    %7839 = vmatpush2.bf16.msra.mxu0 %v4734
    %7840 = vmatprep.subr.bf16.mxu0 %v4719
    %7841 = vmatpush2.bf16.msra.mxu0 %v4718
    %7842 = vmatprep.subr.bf16.mxu0 %v4703
    %7843 = vmatpush2.bf16.msra.mxu0 %v4702
    %7844 = vmatprep.subr.bf16.mxu0 %v4687
    %7845 = vmatpush2.bf16.msra.mxu0 %v4686
    %7846 = vmatprep.subr.bf16.mxu0 %v4671
    %7847 = vmatpush2.bf16.msra.mxu0 %v4670
    %7848 = vmatprep.mubr.bf16.mxu0 %v7774
    %7849 = vmatmul.mubr.bf16.gmra.mxu0 %v7773
    %v7850 = vpop.f32.mrf.mxu0
    %v7851 = vadd.f32 0.0, %v7850
    %v7852 = vpop.f32.mrf.mxu0
    %v7853 = vadd.f32 0.0, %v7852
    %v7854 = vpop.f32.mrf.mxu0
    %v7855 = vpop.f32.mrf.mxu0
    %7856 = vdwg.mxu0
    %7857 = vmatprep.subr.bf16.mxu0 %v4657
    %7858 = vmatpush1.bf16.msra.mxu0 %v4656
    %7859 = vmatprep.subr.bf16.mxu0 %v4641
    %7860 = vmatpush1.bf16.msra.mxu0 %v4640
    %7861 = vmatprep.subr.bf16.mxu0 %v4625
    %7862 = vmatpush1.bf16.msra.mxu0 %v4624
    %7863 = vmatprep.subr.bf16.mxu0 %v4609
    %7864 = vmatpush1.bf16.msra.mxu0 %v4608
    %7865 = vmatprep.subr.bf16.mxu0 %v4593
    %7866 = vmatpush1.bf16.msra.mxu0 %v4592
    %7867 = vmatprep.subr.bf16.mxu0 %v4577
    %7868 = vmatpush1.bf16.msra.mxu0 %v4576
    %7869 = vmatprep.subr.bf16.mxu0 %v4561
    %7870 = vmatpush1.bf16.msra.mxu0 %v4560
    %7871 = vmatprep.subr.bf16.mxu0 %v4545
    %7872 = vmatpush1.bf16.msra.mxu0 %v4544
    %7873 = vmatprep.subr.bf16.mxu0 %v4785
    %7874 = vmatpush2.bf16.msra.mxu0 %v4784
    %7875 = vmatprep.subr.bf16.mxu0 %v4769
    %7876 = vmatpush2.bf16.msra.mxu0 %v4768
    %7877 = vmatprep.subr.bf16.mxu0 %v4753
    %7878 = vmatpush2.bf16.msra.mxu0 %v4752
    %7879 = vmatprep.subr.bf16.mxu0 %v4737
    %7880 = vmatpush2.bf16.msra.mxu0 %v4736
    %7881 = vmatprep.subr.bf16.mxu0 %v4721
    %7882 = vmatpush2.bf16.msra.mxu0 %v4720
    %7883 = vmatprep.subr.bf16.mxu0 %v4705
    %7884 = vmatpush2.bf16.msra.mxu0 %v4704
    %7885 = vmatprep.subr.bf16.mxu0 %v4689
    %7886 = vmatpush2.bf16.msra.mxu0 %v4688
    %7887 = vmatprep.subr.bf16.mxu0 %v4673
    %7888 = vmatpush2.bf16.msra.mxu0 %v4672
    %7889 = vmatprep.mubr.bf16.mxu0 %v7774
    %7890 = vmatmul.mubr.bf16.gmra.mxu0 %v7773
    %v7891 = vpop.f32.mrf.mxu0
    %v7892 = vadd.f32 0.0, %v7891
    %v7893 = vpop.f32.mrf.mxu0
    %v7894 = vadd.f32 0.0, %v7893
    %v7895 = vpop.f32.mrf.mxu0
    %v7896 = vpop.f32.mrf.mxu0
    %7897 = vdwg.mxu0
    %7898 = vmatprep.subr.bf16.mxu0 %v4659
    %7899 = vmatpush1.bf16.msra.mxu0 %v4658
    %7900 = vmatprep.subr.bf16.mxu0 %v4643
    %7901 = vmatpush1.bf16.msra.mxu0 %v4642
    %7902 = vmatprep.subr.bf16.mxu0 %v4627
    %7903 = vmatpush1.bf16.msra.mxu0 %v4626
    %7904 = vmatprep.subr.bf16.mxu0 %v4611
    %7905 = vmatpush1.bf16.msra.mxu0 %v4610
    %7906 = vmatprep.subr.bf16.mxu0 %v4595
    %7907 = vmatpush1.bf16.msra.mxu0 %v4594
    %7908 = vmatprep.subr.bf16.mxu0 %v4579
    %7909 = vmatpush1.bf16.msra.mxu0 %v4578
    %7910 = vmatprep.subr.bf16.mxu0 %v4563
    %7911 = vmatpush1.bf16.msra.mxu0 %v4562
    %7912 = vmatprep.subr.bf16.mxu0 %v4547
    %7913 = vmatpush1.bf16.msra.mxu0 %v4546
    %7914 = vmatprep.subr.bf16.mxu0 %v4787
    %7915 = vmatpush2.bf16.msra.mxu0 %v4786
    %7916 = vmatprep.subr.bf16.mxu0 %v4771
    %7917 = vmatpush2.bf16.msra.mxu0 %v4770
    %7918 = vmatprep.subr.bf16.mxu0 %v4755
    %7919 = vmatpush2.bf16.msra.mxu0 %v4754
    %7920 = vmatprep.subr.bf16.mxu0 %v4739
    %7921 = vmatpush2.bf16.msra.mxu0 %v4738
    %7922 = vmatprep.subr.bf16.mxu0 %v4723
    %7923 = vmatpush2.bf16.msra.mxu0 %v4722
    %7924 = vmatprep.subr.bf16.mxu0 %v4707
    %7925 = vmatpush2.bf16.msra.mxu0 %v4706
    %7926 = vmatprep.subr.bf16.mxu0 %v4691
    %7927 = vmatpush2.bf16.msra.mxu0 %v4690
    %7928 = vmatprep.subr.bf16.mxu0 %v4675
    %7929 = vmatpush2.bf16.msra.mxu0 %v4674
    %7930 = vmatprep.mubr.bf16.mxu0 %v7774
    %7931 = vmatmul.mubr.bf16.gmra.mxu0 %v7773
    %v7932 = vpop.f32.mrf.mxu0
    %v7933 = vadd.f32 0.0, %v7932
    %v7934 = vpop.f32.mrf.mxu0
    %v7935 = vadd.f32 0.0, %v7934
    %v7936 = vpop.f32.mrf.mxu0
    %v7937 = vpop.f32.mrf.mxu0
    %7938 = vdwg.mxu0
    %7939 = vmatprep.subr.bf16.mxu0 %v4661
    %7940 = vmatpush1.bf16.msra.mxu0 %v4660
    %7941 = vmatprep.subr.bf16.mxu0 %v4645
    %7942 = vmatpush1.bf16.msra.mxu0 %v4644
    %7943 = vmatprep.subr.bf16.mxu0 %v4629
    %7944 = vmatpush1.bf16.msra.mxu0 %v4628
    %7945 = vmatprep.subr.bf16.mxu0 %v4613
    %7946 = vmatpush1.bf16.msra.mxu0 %v4612
    %7947 = vmatprep.subr.bf16.mxu0 %v4597
    %7948 = vmatpush1.bf16.msra.mxu0 %v4596
    %7949 = vmatprep.subr.bf16.mxu0 %v4581
    %7950 = vmatpush1.bf16.msra.mxu0 %v4580
    %7951 = vmatprep.subr.bf16.mxu0 %v4565
    %7952 = vmatpush1.bf16.msra.mxu0 %v4564
    %7953 = vmatprep.subr.bf16.mxu0 %v4549
    %7954 = vmatpush1.bf16.msra.mxu0 %v4548
    %7955 = vmatprep.subr.bf16.mxu0 %v4789
    %7956 = vmatpush2.bf16.msra.mxu0 %v4788
    %7957 = vmatprep.subr.bf16.mxu0 %v4773
    %7958 = vmatpush2.bf16.msra.mxu0 %v4772
    %7959 = vmatprep.subr.bf16.mxu0 %v4757
    %7960 = vmatpush2.bf16.msra.mxu0 %v4756
    %7961 = vmatprep.subr.bf16.mxu0 %v4741
    %7962 = vmatpush2.bf16.msra.mxu0 %v4740
    %7963 = vmatprep.subr.bf16.mxu0 %v4725
    %7964 = vmatpush2.bf16.msra.mxu0 %v4724
    %7965 = vmatprep.subr.bf16.mxu0 %v4709
    %7966 = vmatpush2.bf16.msra.mxu0 %v4708
    %7967 = vmatprep.subr.bf16.mxu0 %v4693
    %7968 = vmatpush2.bf16.msra.mxu0 %v4692
    %7969 = vmatprep.subr.bf16.mxu0 %v4677
    %7970 = vmatpush2.bf16.msra.mxu0 %v4676
    %7971 = vmatprep.mubr.bf16.mxu0 %v7774
    %7972 = vmatmul.mubr.bf16.gmra.mxu0 %v7773
    %v7973 = vpop.f32.mrf.mxu0
    %v7974 = vadd.f32 0.0, %v7973
    %v7975 = vpop.f32.mrf.mxu0
    %v7976 = vadd.f32 0.0, %v7975
    %v7977 = vpop.f32.mrf.mxu0
    %v7978 = vpop.f32.mrf.mxu0
    %7979 = vdwg.mxu0
    %7980 = vmatprep.subr.bf16.mxu0 %v4663
    %7981 = vmatpush1.bf16.msra.mxu0 %v4662
    %7982 = vmatprep.subr.bf16.mxu0 %v4647
    %7983 = vmatpush1.bf16.msra.mxu0 %v4646
    %7984 = vmatprep.subr.bf16.mxu0 %v4631
    %7985 = vmatpush1.bf16.msra.mxu0 %v4630
    %7986 = vmatprep.subr.bf16.mxu0 %v4615
    %7987 = vmatpush1.bf16.msra.mxu0 %v4614
    %7988 = vmatprep.subr.bf16.mxu0 %v4599
    %7989 = vmatpush1.bf16.msra.mxu0 %v4598
    %7990 = vmatprep.subr.bf16.mxu0 %v4583
    %7991 = vmatpush1.bf16.msra.mxu0 %v4582
    %7992 = vmatprep.subr.bf16.mxu0 %v4567
    %7993 = vmatpush1.bf16.msra.mxu0 %v4566
    %7994 = vmatprep.subr.bf16.mxu0 %v4551
    %7995 = vmatpush1.bf16.msra.mxu0 %v4550
    %7996 = vmatprep.subr.bf16.mxu0 %v4791
    %7997 = vmatpush2.bf16.msra.mxu0 %v4790
    %7998 = vmatprep.subr.bf16.mxu0 %v4775
    %7999 = vmatpush2.bf16.msra.mxu0 %v4774
    %8000 = vmatprep.subr.bf16.mxu0 %v4759
    %8001 = vmatpush2.bf16.msra.mxu0 %v4758
    %8002 = vmatprep.subr.bf16.mxu0 %v4743
    %8003 = vmatpush2.bf16.msra.mxu0 %v4742
    %8004 = vmatprep.subr.bf16.mxu0 %v4727
    %8005 = vmatpush2.bf16.msra.mxu0 %v4726
    %8006 = vmatprep.subr.bf16.mxu0 %v4711
    %8007 = vmatpush2.bf16.msra.mxu0 %v4710
    %8008 = vmatprep.subr.bf16.mxu0 %v4695
    %8009 = vmatpush2.bf16.msra.mxu0 %v4694
    %8010 = vmatprep.subr.bf16.mxu0 %v4679
    %8011 = vmatpush2.bf16.msra.mxu0 %v4678
    %8012 = vmatprep.mubr.bf16.mxu0 %v7774
    %8013 = vmatmul.mubr.bf16.gmra.mxu0 %v7773
    %v8014 = vpop.f32.mrf.mxu0
    %v8015 = vadd.f32 0.0, %v8014
    %v8016 = vpop.f32.mrf.mxu0
    %v8017 = vadd.f32 0.0, %v8016
    %v8018 = vpop.f32.mrf.mxu0
    %v8019 = vpop.f32.mrf.mxu0
    %8020 = vdwg.mxu0
    %8021 = vmatprep.subr.bf16.mxu0 %v4665
    %8022 = vmatpush1.bf16.msra.mxu0 %v4664
    %8023 = vmatprep.subr.bf16.mxu0 %v4649
    %8024 = vmatpush1.bf16.msra.mxu0 %v4648
    %8025 = vmatprep.subr.bf16.mxu0 %v4633
    %8026 = vmatpush1.bf16.msra.mxu0 %v4632
    %8027 = vmatprep.subr.bf16.mxu0 %v4617
    %8028 = vmatpush1.bf16.msra.mxu0 %v4616
    %8029 = vmatprep.subr.bf16.mxu0 %v4601
    %8030 = vmatpush1.bf16.msra.mxu0 %v4600
    %8031 = vmatprep.subr.bf16.mxu0 %v4585
    %8032 = vmatpush1.bf16.msra.mxu0 %v4584
    %8033 = vmatprep.subr.bf16.mxu0 %v4569
    %8034 = vmatpush1.bf16.msra.mxu0 %v4568
    %8035 = vmatprep.subr.bf16.mxu0 %v4553
    %8036 = vmatpush1.bf16.msra.mxu0 %v4552
    %8037 = vmatprep.subr.bf16.mxu0 %v4793
    %8038 = vmatpush2.bf16.msra.mxu0 %v4792
    %8039 = vmatprep.subr.bf16.mxu0 %v4777
    %8040 = vmatpush2.bf16.msra.mxu0 %v4776
    %8041 = vmatprep.subr.bf16.mxu0 %v4761
    %8042 = vmatpush2.bf16.msra.mxu0 %v4760
    %8043 = vmatprep.subr.bf16.mxu0 %v4745
    %8044 = vmatpush2.bf16.msra.mxu0 %v4744
    %8045 = vmatprep.subr.bf16.mxu0 %v4729
    %8046 = vmatpush2.bf16.msra.mxu0 %v4728
    %8047 = vmatprep.subr.bf16.mxu0 %v4713
    %8048 = vmatpush2.bf16.msra.mxu0 %v4712
    %8049 = vmatprep.subr.bf16.mxu0 %v4697
    %8050 = vmatpush2.bf16.msra.mxu0 %v4696
    %8051 = vmatprep.subr.bf16.mxu0 %v4681
    %8052 = vmatpush2.bf16.msra.mxu0 %v4680
    %8053 = vmatprep.mubr.bf16.mxu0 %v7774
    %8054 = vmatmul.mubr.bf16.gmra.mxu0 %v7773
    %v8055 = vpop.f32.mrf.mxu0
    %v8056 = vadd.f32 0.0, %v8055
    %v8057 = vpop.f32.mrf.mxu0
    %v8058 = vadd.f32 0.0, %v8057
    %v8059 = vpop.f32.mrf.mxu0
    %v8060 = vpop.f32.mrf.mxu0
    %8061 = vdwg.mxu0
    %8062 = vmatprep.subr.bf16.mxu0 %v4667
    %8063 = vmatpush1.bf16.msra.mxu0 %v4666
    %8064 = vmatprep.subr.bf16.mxu0 %v4651
    %8065 = vmatpush1.bf16.msra.mxu0 %v4650
    %8066 = vmatprep.subr.bf16.mxu0 %v4635
    %8067 = vmatpush1.bf16.msra.mxu0 %v4634
    %8068 = vmatprep.subr.bf16.mxu0 %v4619
    %8069 = vmatpush1.bf16.msra.mxu0 %v4618
    %8070 = vmatprep.subr.bf16.mxu0 %v4603
    %8071 = vmatpush1.bf16.msra.mxu0 %v4602
    %8072 = vmatprep.subr.bf16.mxu0 %v4587
    %8073 = vmatpush1.bf16.msra.mxu0 %v4586
    %8074 = vmatprep.subr.bf16.mxu0 %v4571
    %8075 = vmatpush1.bf16.msra.mxu0 %v4570
    %8076 = vmatprep.subr.bf16.mxu0 %v4555
    %8077 = vmatpush1.bf16.msra.mxu0 %v4554
    %8078 = vmatprep.subr.bf16.mxu0 %v4795
    %8079 = vmatpush2.bf16.msra.mxu0 %v4794
    %8080 = vmatprep.subr.bf16.mxu0 %v4779
    %8081 = vmatpush2.bf16.msra.mxu0 %v4778
    %8082 = vmatprep.subr.bf16.mxu0 %v4763
    %8083 = vmatpush2.bf16.msra.mxu0 %v4762
    %8084 = vmatprep.subr.bf16.mxu0 %v4747
    %8085 = vmatpush2.bf16.msra.mxu0 %v4746
    %8086 = vmatprep.subr.bf16.mxu0 %v4731
    %8087 = vmatpush2.bf16.msra.mxu0 %v4730
    %8088 = vmatprep.subr.bf16.mxu0 %v4715
    %8089 = vmatpush2.bf16.msra.mxu0 %v4714
    %8090 = vmatprep.subr.bf16.mxu0 %v4699
    %8091 = vmatpush2.bf16.msra.mxu0 %v4698
    %8092 = vmatprep.subr.bf16.mxu0 %v4683
    %8093 = vmatpush2.bf16.msra.mxu0 %v4682
    %8094 = vmatprep.mubr.bf16.mxu0 %v7774
    %8095 = vmatmul.mubr.bf16.gmra.mxu0 %v7773
    %v8096 = vpop.f32.mrf.mxu0
    %v8097 = vadd.f32 0.0, %v8096
    %v8098 = vpop.f32.mrf.mxu0
    %v8099 = vadd.f32 0.0, %v8098
    %v8100 = vpop.f32.mrf.mxu0
    %v8101 = vpop.f32.mrf.mxu0
    %8102 = vdwg.mxu0
    %v8103 = vld [vmem:[%s3406] sm:$0xff]
    %v8104 = vld [vmem:[%s3406 + $0x8] sm:$0xff]
    %v8105 = vld [vmem:[%s3406 + $0x10] sm:$0xff]
    %v8106 = vld [vmem:[%s3406 + $0x18] sm:$0xff]
    %v8107 = vsel %vm3515, %v7810, %v7974
    %v8108 = vsel %vm3515, %v7812, %v7976
    %v8109 = vsel %vm3515, %v7851, %v8015
    %v8110 = vsel %vm3515, %v7853, %v8017
    %v8111 = vsel %vm3515, %v7892, %v8056
    %v8112 = vsel %vm3515, %v7894, %v8058
    %v8113 = vsel %vm3515, %v7933, %v8097
    %v8114 = vsel %vm3515, %v7935, %v8099
    %v8123 = vcombine.low %v8107, %v8108
    %v8124 = vcombine.low %v8109, %v8110
    %v8125 = vcombine.low %v8111, %v8112
    %v8126 = vcombine.low %v8113, %v8114
    %v8131 = vadd.f32 %v8103, %v8123
    %v8132 = vadd.f32 %v8104, %v8124
    %v8133 = vadd.f32 %v8105, %v8125
    %v8134 = vadd.f32 %v8106, %v8126
    %v8135 = vxor.u32 %v8131, 2147483648
    %v8136 = vmul.f32 %v8135, 1.442695
    %v8137 = vpow.pop %v8136
    %v8138 = vadd.f32 %v8137, 1.0
    %v8139 = vrcp.pop %v8138
    %v8140 = vmul.f32 1.0, %v8139
    %v8141 = vxor.u32 %v8132, 2147483648
    %v8142 = vmul.f32 %v8141, 1.442695
    %v8143 = vpow.pop %v8142
    %v8144 = vadd.f32 %v8143, 1.0
    %v8145 = vrcp.pop %v8144
    %v8146 = vmul.f32 1.0, %v8145
    %v8147 = vtanh.pop %v8133
    %v8148 = vxor.u32 %v8134, 2147483648
    %v8149 = vmul.f32 %v8148, 1.442695
    %v8150 = vpow.pop %v8149
    %v8151 = vadd.f32 %v8150, 1.0
    %v8152 = vrcp.pop %v8151
    %v8153 = vmul.f32 1.0, %v8152
    %v8154 = vmul.f32 %v8146, %v7767
    %v8155 = vmul.f32 %v8140, %v8147
    %v8156 = vadd.f32 %v8154, %v8155
    %v8157 = vtanh.pop %v8156
    %v8158 = vmul.f32 %v8153, %v8157
    %v8160 = vcombine.high %v8158, %v8158
    %v8162 = vpack.c.bf16 %v8158, %v8158
    %v8163 = vpack.c.bf16 %v8160, %v8160
    %8164 = vmatprep.subr.bf16.mxu0 %v4653
    %8165 = vmatpush1.bf16.msra.mxu0 %v4652
    %8166 = vmatprep.subr.bf16.mxu0 %v4637
    %8167 = vmatpush1.bf16.msra.mxu0 %v4636
    %8168 = vmatprep.subr.bf16.mxu0 %v4621
    %8169 = vmatpush1.bf16.msra.mxu0 %v4620
    %8170 = vmatprep.subr.bf16.mxu0 %v4605
    %8171 = vmatpush1.bf16.msra.mxu0 %v4604
    %8172 = vmatprep.subr.bf16.mxu0 %v4589
    %8173 = vmatpush1.bf16.msra.mxu0 %v4588
    %8174 = vmatprep.subr.bf16.mxu0 %v4573
    %8175 = vmatpush1.bf16.msra.mxu0 %v4572
    %8176 = vmatprep.subr.bf16.mxu0 %v4557
    %8177 = vmatpush1.bf16.msra.mxu0 %v4556
    %8178 = vmatprep.subr.bf16.mxu0 %v4541
    %8179 = vmatpush1.bf16.msra.mxu0 %v4540
    %8180 = vmatprep.subr.bf16.mxu0 %v4781
    %8181 = vmatpush2.bf16.msra.mxu0 %v4780
    %8182 = vmatprep.subr.bf16.mxu0 %v4765
    %8183 = vmatpush2.bf16.msra.mxu0 %v4764
    %8184 = vmatprep.subr.bf16.mxu0 %v4749
    %8185 = vmatpush2.bf16.msra.mxu0 %v4748
    %8186 = vmatprep.subr.bf16.mxu0 %v4733
    %8187 = vmatpush2.bf16.msra.mxu0 %v4732
    %8188 = vmatprep.subr.bf16.mxu0 %v4717
    %8189 = vmatpush2.bf16.msra.mxu0 %v4716
    %8190 = vmatprep.subr.bf16.mxu0 %v4701
    %8191 = vmatpush2.bf16.msra.mxu0 %v4700
    %8192 = vmatprep.subr.bf16.mxu0 %v4685
    %8193 = vmatpush2.bf16.msra.mxu0 %v4684
    %8194 = vmatprep.subr.bf16.mxu0 %v4669
    %8195 = vmatpush2.bf16.msra.mxu0 %v4668
    %8196 = vmatprep.mubr.bf16.mxu0 %v8163
    %8197 = vmatmul.mubr.bf16.gmra.mxu0 %v8162
    %v8198 = vpop.f32.mrf.mxu0
    %v8199 = vadd.f32 0.0, %v8198
    %v8200 = vpop.f32.mrf.mxu0
    %v8201 = vadd.f32 0.0, %v8200
    %v8202 = vpop.f32.mrf.mxu0
    %v8203 = vpop.f32.mrf.mxu0
    %8204 = vdwg.mxu0
    %8205 = vmatprep.subr.bf16.mxu0 %v4655
    %8206 = vmatpush1.bf16.msra.mxu0 %v4654
    %8207 = vmatprep.subr.bf16.mxu0 %v4639
    %8208 = vmatpush1.bf16.msra.mxu0 %v4638
    %8209 = vmatprep.subr.bf16.mxu0 %v4623
    %8210 = vmatpush1.bf16.msra.mxu0 %v4622
    %8211 = vmatprep.subr.bf16.mxu0 %v4607
    %8212 = vmatpush1.bf16.msra.mxu0 %v4606
    %8213 = vmatprep.subr.bf16.mxu0 %v4591
    %8214 = vmatpush1.bf16.msra.mxu0 %v4590
    %8215 = vmatprep.subr.bf16.mxu0 %v4575
    %8216 = vmatpush1.bf16.msra.mxu0 %v4574
    %8217 = vmatprep.subr.bf16.mxu0 %v4559
    %8218 = vmatpush1.bf16.msra.mxu0 %v4558
    %8219 = vmatprep.subr.bf16.mxu0 %v4543
    %8220 = vmatpush1.bf16.msra.mxu0 %v4542
    %8221 = vmatprep.subr.bf16.mxu0 %v4783
    %8222 = vmatpush2.bf16.msra.mxu0 %v4782
    %8223 = vmatprep.subr.bf16.mxu0 %v4767
    %8224 = vmatpush2.bf16.msra.mxu0 %v4766
    %8225 = vmatprep.subr.bf16.mxu0 %v4751
    %8226 = vmatpush2.bf16.msra.mxu0 %v4750
    %8227 = vmatprep.subr.bf16.mxu0 %v4735
    %8228 = vmatpush2.bf16.msra.mxu0 %v4734
    %8229 = vmatprep.subr.bf16.mxu0 %v4719
    %8230 = vmatpush2.bf16.msra.mxu0 %v4718
    %8231 = vmatprep.subr.bf16.mxu0 %v4703
    %8232 = vmatpush2.bf16.msra.mxu0 %v4702
    %8233 = vmatprep.subr.bf16.mxu0 %v4687
    %8234 = vmatpush2.bf16.msra.mxu0 %v4686
    %8235 = vmatprep.subr.bf16.mxu0 %v4671
    %8236 = vmatpush2.bf16.msra.mxu0 %v4670
    %8237 = vmatprep.mubr.bf16.mxu0 %v8163
    %8238 = vmatmul.mubr.bf16.gmra.mxu0 %v8162
    %v8239 = vpop.f32.mrf.mxu0
    %v8240 = vadd.f32 0.0, %v8239
    %v8241 = vpop.f32.mrf.mxu0
    %v8242 = vadd.f32 0.0, %v8241
    %v8243 = vpop.f32.mrf.mxu0
    %v8244 = vpop.f32.mrf.mxu0
    %8245 = vdwg.mxu0
    %8246 = vmatprep.subr.bf16.mxu0 %v4657
    %8247 = vmatpush1.bf16.msra.mxu0 %v4656
    %8248 = vmatprep.subr.bf16.mxu0 %v4641
    %8249 = vmatpush1.bf16.msra.mxu0 %v4640
    %8250 = vmatprep.subr.bf16.mxu0 %v4625
    %8251 = vmatpush1.bf16.msra.mxu0 %v4624
    %8252 = vmatprep.subr.bf16.mxu0 %v4609
    %8253 = vmatpush1.bf16.msra.mxu0 %v4608
    %8254 = vmatprep.subr.bf16.mxu0 %v4593
    %8255 = vmatpush1.bf16.msra.mxu0 %v4592
    %8256 = vmatprep.subr.bf16.mxu0 %v4577
    %8257 = vmatpush1.bf16.msra.mxu0 %v4576
    %8258 = vmatprep.subr.bf16.mxu0 %v4561
    %8259 = vmatpush1.bf16.msra.mxu0 %v4560
    %8260 = vmatprep.subr.bf16.mxu0 %v4545
    %8261 = vmatpush1.bf16.msra.mxu0 %v4544
    %8262 = vmatprep.subr.bf16.mxu0 %v4785
    %8263 = vmatpush2.bf16.msra.mxu0 %v4784
    %8264 = vmatprep.subr.bf16.mxu0 %v4769
    %8265 = vmatpush2.bf16.msra.mxu0 %v4768
    %8266 = vmatprep.subr.bf16.mxu0 %v4753
    %8267 = vmatpush2.bf16.msra.mxu0 %v4752
    %8268 = vmatprep.subr.bf16.mxu0 %v4737
    %8269 = vmatpush2.bf16.msra.mxu0 %v4736
    %8270 = vmatprep.subr.bf16.mxu0 %v4721
    %8271 = vmatpush2.bf16.msra.mxu0 %v4720
    %8272 = vmatprep.subr.bf16.mxu0 %v4705
    %8273 = vmatpush2.bf16.msra.mxu0 %v4704
    %8274 = vmatprep.subr.bf16.mxu0 %v4689
    %8275 = vmatpush2.bf16.msra.mxu0 %v4688
    %8276 = vmatprep.subr.bf16.mxu0 %v4673
    %8277 = vmatpush2.bf16.msra.mxu0 %v4672
    %8278 = vmatprep.mubr.bf16.mxu0 %v8163
    %8279 = vmatmul.mubr.bf16.gmra.mxu0 %v8162
    %v8280 = vpop.f32.mrf.mxu0
    %v8281 = vadd.f32 0.0, %v8280
    %v8282 = vpop.f32.mrf.mxu0
    %v8283 = vadd.f32 0.0, %v8282
    %v8284 = vpop.f32.mrf.mxu0
    %v8285 = vpop.f32.mrf.mxu0
    %8286 = vdwg.mxu0
    %8287 = vmatprep.subr.bf16.mxu0 %v4659
    %8288 = vmatpush1.bf16.msra.mxu0 %v4658
    %8289 = vmatprep.subr.bf16.mxu0 %v4643
    %8290 = vmatpush1.bf16.msra.mxu0 %v4642
    %8291 = vmatprep.subr.bf16.mxu0 %v4627
    %8292 = vmatpush1.bf16.msra.mxu0 %v4626
    %8293 = vmatprep.subr.bf16.mxu0 %v4611
    %8294 = vmatpush1.bf16.msra.mxu0 %v4610
    %8295 = vmatprep.subr.bf16.mxu0 %v4595
    %8296 = vmatpush1.bf16.msra.mxu0 %v4594
    %8297 = vmatprep.subr.bf16.mxu0 %v4579
    %8298 = vmatpush1.bf16.msra.mxu0 %v4578
    %8299 = vmatprep.subr.bf16.mxu0 %v4563
    %8300 = vmatpush1.bf16.msra.mxu0 %v4562
    %8301 = vmatprep.subr.bf16.mxu0 %v4547
    %8302 = vmatpush1.bf16.msra.mxu0 %v4546
    %8303 = vmatprep.subr.bf16.mxu0 %v4787
    %8304 = vmatpush2.bf16.msra.mxu0 %v4786
    %8305 = vmatprep.subr.bf16.mxu0 %v4771
    %8306 = vmatpush2.bf16.msra.mxu0 %v4770
    %8307 = vmatprep.subr.bf16.mxu0 %v4755
    %8308 = vmatpush2.bf16.msra.mxu0 %v4754
    %8309 = vmatprep.subr.bf16.mxu0 %v4739
    %8310 = vmatpush2.bf16.msra.mxu0 %v4738
    %8311 = vmatprep.subr.bf16.mxu0 %v4723
    %8312 = vmatpush2.bf16.msra.mxu0 %v4722
    %8313 = vmatprep.subr.bf16.mxu0 %v4707
    %8314 = vmatpush2.bf16.msra.mxu0 %v4706
    %8315 = vmatprep.subr.bf16.mxu0 %v4691
    %8316 = vmatpush2.bf16.msra.mxu0 %v4690
    %8317 = vmatprep.subr.bf16.mxu0 %v4675
    %8318 = vmatpush2.bf16.msra.mxu0 %v4674
    %8319 = vmatprep.mubr.bf16.mxu0 %v8163
    %8320 = vmatmul.mubr.bf16.gmra.mxu0 %v8162
    %v8321 = vpop.f32.mrf.mxu0
    %v8322 = vadd.f32 0.0, %v8321
    %v8323 = vpop.f32.mrf.mxu0
    %v8324 = vadd.f32 0.0, %v8323
    %v8325 = vpop.f32.mrf.mxu0
    %v8326 = vpop.f32.mrf.mxu0
    %8327 = vdwg.mxu0
    %8328 = vmatprep.subr.bf16.mxu0 %v4661
    %8329 = vmatpush1.bf16.msra.mxu0 %v4660
    %8330 = vmatprep.subr.bf16.mxu0 %v4645
    %8331 = vmatpush1.bf16.msra.mxu0 %v4644
    %8332 = vmatprep.subr.bf16.mxu0 %v4629
    %8333 = vmatpush1.bf16.msra.mxu0 %v4628
    %8334 = vmatprep.subr.bf16.mxu0 %v4613
    %8335 = vmatpush1.bf16.msra.mxu0 %v4612
    %8336 = vmatprep.subr.bf16.mxu0 %v4597
    %8337 = vmatpush1.bf16.msra.mxu0 %v4596
    %8338 = vmatprep.subr.bf16.mxu0 %v4581
    %8339 = vmatpush1.bf16.msra.mxu0 %v4580
    %8340 = vmatprep.subr.bf16.mxu0 %v4565
    %8341 = vmatpush1.bf16.msra.mxu0 %v4564
    %8342 = vmatprep.subr.bf16.mxu0 %v4549
    %8343 = vmatpush1.bf16.msra.mxu0 %v4548
    %8344 = vmatprep.subr.bf16.mxu0 %v4789
    %8345 = vmatpush2.bf16.msra.mxu0 %v4788
    %8346 = vmatprep.subr.bf16.mxu0 %v4773
    %8347 = vmatpush2.bf16.msra.mxu0 %v4772
    %8348 = vmatprep.subr.bf16.mxu0 %v4757
    %8349 = vmatpush2.bf16.msra.mxu0 %v4756
    %8350 = vmatprep.subr.bf16.mxu0 %v4741
    %8351 = vmatpush2.bf16.msra.mxu0 %v4740
    %8352 = vmatprep.subr.bf16.mxu0 %v4725
    %8353 = vmatpush2.bf16.msra.mxu0 %v4724
    %8354 = vmatprep.subr.bf16.mxu0 %v4709
    %8355 = vmatpush2.bf16.msra.mxu0 %v4708
    %8356 = vmatprep.subr.bf16.mxu0 %v4693
    %8357 = vmatpush2.bf16.msra.mxu0 %v4692
    %8358 = vmatprep.subr.bf16.mxu0 %v4677
    %8359 = vmatpush2.bf16.msra.mxu0 %v4676
    %8360 = vmatprep.mubr.bf16.mxu0 %v8163
    %8361 = vmatmul.mubr.bf16.gmra.mxu0 %v8162
    %v8362 = vpop.f32.mrf.mxu0
    %v8363 = vadd.f32 0.0, %v8362
    %v8364 = vpop.f32.mrf.mxu0
    %v8365 = vadd.f32 0.0, %v8364
    %v8366 = vpop.f32.mrf.mxu0
    %v8367 = vpop.f32.mrf.mxu0
    %8368 = vdwg.mxu0
    %8369 = vmatprep.subr.bf16.mxu0 %v4663
    %8370 = vmatpush1.bf16.msra.mxu0 %v4662
    %8371 = vmatprep.subr.bf16.mxu0 %v4647
    %8372 = vmatpush1.bf16.msra.mxu0 %v4646
    %8373 = vmatprep.subr.bf16.mxu0 %v4631
    %8374 = vmatpush1.bf16.msra.mxu0 %v4630
    %8375 = vmatprep.subr.bf16.mxu0 %v4615
    %8376 = vmatpush1.bf16.msra.mxu0 %v4614
    %8377 = vmatprep.subr.bf16.mxu0 %v4599
    %8378 = vmatpush1.bf16.msra.mxu0 %v4598
    %8379 = vmatprep.subr.bf16.mxu0 %v4583
    %8380 = vmatpush1.bf16.msra.mxu0 %v4582
    %8381 = vmatprep.subr.bf16.mxu0 %v4567
    %8382 = vmatpush1.bf16.msra.mxu0 %v4566
    %8383 = vmatprep.subr.bf16.mxu0 %v4551
    %8384 = vmatpush1.bf16.msra.mxu0 %v4550
    %8385 = vmatprep.subr.bf16.mxu0 %v4791
    %8386 = vmatpush2.bf16.msra.mxu0 %v4790
    %8387 = vmatprep.subr.bf16.mxu0 %v4775
    %8388 = vmatpush2.bf16.msra.mxu0 %v4774
    %8389 = vmatprep.subr.bf16.mxu0 %v4759
    %8390 = vmatpush2.bf16.msra.mxu0 %v4758
    %8391 = vmatprep.subr.bf16.mxu0 %v4743
    %8392 = vmatpush2.bf16.msra.mxu0 %v4742
    %8393 = vmatprep.subr.bf16.mxu0 %v4727
    %8394 = vmatpush2.bf16.msra.mxu0 %v4726
    %8395 = vmatprep.subr.bf16.mxu0 %v4711
    %8396 = vmatpush2.bf16.msra.mxu0 %v4710
    %8397 = vmatprep.subr.bf16.mxu0 %v4695
    %8398 = vmatpush2.bf16.msra.mxu0 %v4694
    %8399 = vmatprep.subr.bf16.mxu0 %v4679
    %8400 = vmatpush2.bf16.msra.mxu0 %v4678
    %8401 = vmatprep.mubr.bf16.mxu0 %v8163
    %8402 = vmatmul.mubr.bf16.gmra.mxu0 %v8162
    %v8403 = vpop.f32.mrf.mxu0
    %v8404 = vadd.f32 0.0, %v8403
    %v8405 = vpop.f32.mrf.mxu0
    %v8406 = vadd.f32 0.0, %v8405
    %v8407 = vpop.f32.mrf.mxu0
    %v8408 = vpop.f32.mrf.mxu0
    %8409 = vdwg.mxu0
    %8410 = vmatprep.subr.bf16.mxu0 %v4665
    %8411 = vmatpush1.bf16.msra.mxu0 %v4664
    %8412 = vmatprep.subr.bf16.mxu0 %v4649
    %8413 = vmatpush1.bf16.msra.mxu0 %v4648
    %8414 = vmatprep.subr.bf16.mxu0 %v4633
    %8415 = vmatpush1.bf16.msra.mxu0 %v4632
    %8416 = vmatprep.subr.bf16.mxu0 %v4617
    %8417 = vmatpush1.bf16.msra.mxu0 %v4616
    %8418 = vmatprep.subr.bf16.mxu0 %v4601
    %8419 = vmatpush1.bf16.msra.mxu0 %v4600
    %8420 = vmatprep.subr.bf16.mxu0 %v4585
    %8421 = vmatpush1.bf16.msra.mxu0 %v4584
    %8422 = vmatprep.subr.bf16.mxu0 %v4569
    %8423 = vmatpush1.bf16.msra.mxu0 %v4568
    %8424 = vmatprep.subr.bf16.mxu0 %v4553
    %8425 = vmatpush1.bf16.msra.mxu0 %v4552
    %8426 = vmatprep.subr.bf16.mxu0 %v4793
    %8427 = vmatpush2.bf16.msra.mxu0 %v4792
    %8428 = vmatprep.subr.bf16.mxu0 %v4777
    %8429 = vmatpush2.bf16.msra.mxu0 %v4776
    %8430 = vmatprep.subr.bf16.mxu0 %v4761
    %8431 = vmatpush2.bf16.msra.mxu0 %v4760
    %8432 = vmatprep.subr.bf16.mxu0 %v4745
    %8433 = vmatpush2.bf16.msra.mxu0 %v4744
    %8434 = vmatprep.subr.bf16.mxu0 %v4729
    %8435 = vmatpush2.bf16.msra.mxu0 %v4728
    %8436 = vmatprep.subr.bf16.mxu0 %v4713
    %8437 = vmatpush2.bf16.msra.mxu0 %v4712
    %8438 = vmatprep.subr.bf16.mxu0 %v4697
    %8439 = vmatpush2.bf16.msra.mxu0 %v4696
    %8440 = vmatprep.subr.bf16.mxu0 %v4681
    %8441 = vmatpush2.bf16.msra.mxu0 %v4680
    %8442 = vmatprep.mubr.bf16.mxu0 %v8163
    %8443 = vmatmul.mubr.bf16.gmra.mxu0 %v8162
    %v8444 = vpop.f32.mrf.mxu0
    %v8445 = vadd.f32 0.0, %v8444
    %v8446 = vpop.f32.mrf.mxu0
    %v8447 = vadd.f32 0.0, %v8446
    %v8448 = vpop.f32.mrf.mxu0
    %v8449 = vpop.f32.mrf.mxu0
    %8450 = vdwg.mxu0
    %8451 = vmatprep.subr.bf16.mxu0 %v4667
    %8452 = vmatpush1.bf16.msra.mxu0 %v4666
    %8453 = vmatprep.subr.bf16.mxu0 %v4651
    %8454 = vmatpush1.bf16.msra.mxu0 %v4650
    %8455 = vmatprep.subr.bf16.mxu0 %v4635
    %8456 = vmatpush1.bf16.msra.mxu0 %v4634
    %8457 = vmatprep.subr.bf16.mxu0 %v4619
    %8458 = vmatpush1.bf16.msra.mxu0 %v4618
    %8459 = vmatprep.subr.bf16.mxu0 %v4603
    %8460 = vmatpush1.bf16.msra.mxu0 %v4602
    %8461 = vmatprep.subr.bf16.mxu0 %v4587
    %8462 = vmatpush1.bf16.msra.mxu0 %v4586
    %8463 = vmatprep.subr.bf16.mxu0 %v4571
    %8464 = vmatpush1.bf16.msra.mxu0 %v4570
    %8465 = vmatprep.subr.bf16.mxu0 %v4555
    %8466 = vmatpush1.bf16.msra.mxu0 %v4554
    %8467 = vmatprep.subr.bf16.mxu0 %v4795
    %8468 = vmatpush2.bf16.msra.mxu0 %v4794
    %8469 = vmatprep.subr.bf16.mxu0 %v4779
    %8470 = vmatpush2.bf16.msra.mxu0 %v4778
    %8471 = vmatprep.subr.bf16.mxu0 %v4763
    %8472 = vmatpush2.bf16.msra.mxu0 %v4762
    %8473 = vmatprep.subr.bf16.mxu0 %v4747
    %8474 = vmatpush2.bf16.msra.mxu0 %v4746
    %8475 = vmatprep.subr.bf16.mxu0 %v4731
    %8476 = vmatpush2.bf16.msra.mxu0 %v4730
    %8477 = vmatprep.subr.bf16.mxu0 %v4715
    %8478 = vmatpush2.bf16.msra.mxu0 %v4714
    %8479 = vmatprep.subr.bf16.mxu0 %v4699
    %8480 = vmatpush2.bf16.msra.mxu0 %v4698
    %8481 = vmatprep.subr.bf16.mxu0 %v4683
    %8482 = vmatpush2.bf16.msra.mxu0 %v4682
    %8483 = vmatprep.mubr.bf16.mxu0 %v8163
    %8484 = vmatmul.mubr.bf16.gmra.mxu0 %v8162
    %v8485 = vpop.f32.mrf.mxu0
    %v8486 = vadd.f32 0.0, %v8485
    %v8487 = vpop.f32.mrf.mxu0
    %v8488 = vadd.f32 0.0, %v8487
    %v8489 = vpop.f32.mrf.mxu0
    %v8490 = vpop.f32.mrf.mxu0
    %8491 = vdwg.mxu0
    %v8492 = vld [vmem:[%s3435] sm:$0xff]
    %v8493 = vld [vmem:[%s3435 + $0x8] sm:$0xff]
    %v8494 = vld [vmem:[%s3435 + $0x10] sm:$0xff]
    %v8495 = vld [vmem:[%s3435 + $0x18] sm:$0xff]
    %v8496 = vsel %vm3515, %v8199, %v8363
    %v8497 = vsel %vm3515, %v8201, %v8365
    %v8498 = vsel %vm3515, %v8240, %v8404
    %v8499 = vsel %vm3515, %v8242, %v8406
    %v8500 = vsel %vm3515, %v8281, %v8445
    %v8501 = vsel %vm3515, %v8283, %v8447
    %v8502 = vsel %vm3515, %v8322, %v8486
    %v8503 = vsel %vm3515, %v8324, %v8488
    %v8512 = vcombine.low %v8496, %v8497
    %v8513 = vcombine.low %v8498, %v8499
    %v8514 = vcombine.low %v8500, %v8501
    %v8515 = vcombine.low %v8502, %v8503
    %v8520 = vadd.f32 %v8492, %v8512
    %v8521 = vadd.f32 %v8493, %v8513
    %v8522 = vadd.f32 %v8494, %v8514
    %v8523 = vadd.f32 %v8495, %v8515
    %v8524 = vxor.u32 %v8520, 2147483648
    %v8525 = vmul.f32 %v8524, 1.442695
    %v8526 = vpow.pop %v8525
    %v8527 = vadd.f32 %v8526, 1.0
    %v8528 = vrcp.pop %v8527
    %v8529 = vmul.f32 1.0, %v8528
    %v8530 = vxor.u32 %v8521, 2147483648
    %v8531 = vmul.f32 %v8530, 1.442695
    %v8532 = vpow.pop %v8531
    %v8533 = vadd.f32 %v8532, 1.0
    %v8534 = vrcp.pop %v8533
    %v8535 = vmul.f32 1.0, %v8534
    %v8536 = vtanh.pop %v8522
    %v8537 = vxor.u32 %v8523, 2147483648
    %v8538 = vmul.f32 %v8537, 1.442695
    %v8539 = vpow.pop %v8538
    %v8540 = vadd.f32 %v8539, 1.0
    %v8541 = vrcp.pop %v8540
    %v8542 = vmul.f32 1.0, %v8541
    %v8543 = vmul.f32 %v8535, %v8156
    %v8544 = vmul.f32 %v8529, %v8536
    %v8545 = vadd.f32 %v8543, %v8544
    %v8546 = vtanh.pop %v8545
    %v8547 = vmul.f32 %v8542, %v8546
    %v8549 = vcombine.high %v8547, %v8547
    %v8551 = vpack.c.bf16 %v8547, %v8547
    %v8552 = vpack.c.bf16 %v8549, %v8549
    %8553 = vmatprep.subr.bf16.mxu0 %v4653
    %8554 = vmatpush1.bf16.msra.mxu0 %v4652
    %8555 = vmatprep.subr.bf16.mxu0 %v4637
    %8556 = vmatpush1.bf16.msra.mxu0 %v4636
    %8557 = vmatprep.subr.bf16.mxu0 %v4621
    %8558 = vmatpush1.bf16.msra.mxu0 %v4620
    %8559 = vmatprep.subr.bf16.mxu0 %v4605
    %8560 = vmatpush1.bf16.msra.mxu0 %v4604
    %8561 = vmatprep.subr.bf16.mxu0 %v4589
    %8562 = vmatpush1.bf16.msra.mxu0 %v4588
    %8563 = vmatprep.subr.bf16.mxu0 %v4573
    %8564 = vmatpush1.bf16.msra.mxu0 %v4572
    %8565 = vmatprep.subr.bf16.mxu0 %v4557
    %8566 = vmatpush1.bf16.msra.mxu0 %v4556
    %8567 = vmatprep.subr.bf16.mxu0 %v4541
    %8568 = vmatpush1.bf16.msra.mxu0 %v4540
    %8569 = vmatprep.subr.bf16.mxu0 %v4781
    %8570 = vmatpush2.bf16.msra.mxu0 %v4780
    %8571 = vmatprep.subr.bf16.mxu0 %v4765
    %8572 = vmatpush2.bf16.msra.mxu0 %v4764
    %8573 = vmatprep.subr.bf16.mxu0 %v4749
    %8574 = vmatpush2.bf16.msra.mxu0 %v4748
    %8575 = vmatprep.subr.bf16.mxu0 %v4733
    %8576 = vmatpush2.bf16.msra.mxu0 %v4732
    %8577 = vmatprep.subr.bf16.mxu0 %v4717
    %8578 = vmatpush2.bf16.msra.mxu0 %v4716
    %8579 = vmatprep.subr.bf16.mxu0 %v4701
    %8580 = vmatpush2.bf16.msra.mxu0 %v4700
    %8581 = vmatprep.subr.bf16.mxu0 %v4685
    %8582 = vmatpush2.bf16.msra.mxu0 %v4684
    %8583 = vmatprep.subr.bf16.mxu0 %v4669
    %8584 = vmatpush2.bf16.msra.mxu0 %v4668
    %8585 = vmatprep.mubr.bf16.mxu0 %v8552
    %8586 = vmatmul.mubr.bf16.gmra.mxu0 %v8551
    %v8587 = vpop.f32.mrf.mxu0
    %v8588 = vadd.f32 0.0, %v8587
    %v8589 = vpop.f32.mrf.mxu0
    %v8590 = vadd.f32 0.0, %v8589
    %v8591 = vpop.f32.mrf.mxu0
    %v8592 = vpop.f32.mrf.mxu0
    %8593 = vdwg.mxu0
    %8594 = vmatprep.subr.bf16.mxu0 %v4655
    %8595 = vmatpush1.bf16.msra.mxu0 %v4654
    %8596 = vmatprep.subr.bf16.mxu0 %v4639
    %8597 = vmatpush1.bf16.msra.mxu0 %v4638
    %8598 = vmatprep.subr.bf16.mxu0 %v4623
    %8599 = vmatpush1.bf16.msra.mxu0 %v4622
    %8600 = vmatprep.subr.bf16.mxu0 %v4607
    %8601 = vmatpush1.bf16.msra.mxu0 %v4606
    %8602 = vmatprep.subr.bf16.mxu0 %v4591
    %8603 = vmatpush1.bf16.msra.mxu0 %v4590
    %8604 = vmatprep.subr.bf16.mxu0 %v4575
    %8605 = vmatpush1.bf16.msra.mxu0 %v4574
    %8606 = vmatprep.subr.bf16.mxu0 %v4559
    %8607 = vmatpush1.bf16.msra.mxu0 %v4558
    %8608 = vmatprep.subr.bf16.mxu0 %v4543
    %8609 = vmatpush1.bf16.msra.mxu0 %v4542
    %8610 = vmatprep.subr.bf16.mxu0 %v4783
    %8611 = vmatpush2.bf16.msra.mxu0 %v4782
    %8612 = vmatprep.subr.bf16.mxu0 %v4767
    %8613 = vmatpush2.bf16.msra.mxu0 %v4766
    %8614 = vmatprep.subr.bf16.mxu0 %v4751
    %8615 = vmatpush2.bf16.msra.mxu0 %v4750
    %8616 = vmatprep.subr.bf16.mxu0 %v4735
    %8617 = vmatpush2.bf16.msra.mxu0 %v4734
    %8618 = vmatprep.subr.bf16.mxu0 %v4719
    %8619 = vmatpush2.bf16.msra.mxu0 %v4718
    %8620 = vmatprep.subr.bf16.mxu0 %v4703
    %8621 = vmatpush2.bf16.msra.mxu0 %v4702
    %8622 = vmatprep.subr.bf16.mxu0 %v4687
    %8623 = vmatpush2.bf16.msra.mxu0 %v4686
    %8624 = vmatprep.subr.bf16.mxu0 %v4671
    %8625 = vmatpush2.bf16.msra.mxu0 %v4670
    %8626 = vmatprep.mubr.bf16.mxu0 %v8552
    %8627 = vmatmul.mubr.bf16.gmra.mxu0 %v8551
    %v8628 = vpop.f32.mrf.mxu0
    %v8629 = vadd.f32 0.0, %v8628
    %v8630 = vpop.f32.mrf.mxu0
    %v8631 = vadd.f32 0.0, %v8630
    %v8632 = vpop.f32.mrf.mxu0
    %v8633 = vpop.f32.mrf.mxu0
    %8634 = vdwg.mxu0
    %8635 = vmatprep.subr.bf16.mxu0 %v4657
    %8636 = vmatpush1.bf16.msra.mxu0 %v4656
    %8637 = vmatprep.subr.bf16.mxu0 %v4641
    %8638 = vmatpush1.bf16.msra.mxu0 %v4640
    %8639 = vmatprep.subr.bf16.mxu0 %v4625
    %8640 = vmatpush1.bf16.msra.mxu0 %v4624
    %8641 = vmatprep.subr.bf16.mxu0 %v4609
    %8642 = vmatpush1.bf16.msra.mxu0 %v4608
    %8643 = vmatprep.subr.bf16.mxu0 %v4593
    %8644 = vmatpush1.bf16.msra.mxu0 %v4592
    %8645 = vmatprep.subr.bf16.mxu0 %v4577
    %8646 = vmatpush1.bf16.msra.mxu0 %v4576
    %8647 = vmatprep.subr.bf16.mxu0 %v4561
    %8648 = vmatpush1.bf16.msra.mxu0 %v4560
    %8649 = vmatprep.subr.bf16.mxu0 %v4545
    %8650 = vmatpush1.bf16.msra.mxu0 %v4544
    %8651 = vmatprep.subr.bf16.mxu0 %v4785
    %8652 = vmatpush2.bf16.msra.mxu0 %v4784
    %8653 = vmatprep.subr.bf16.mxu0 %v4769
    %8654 = vmatpush2.bf16.msra.mxu0 %v4768
    %8655 = vmatprep.subr.bf16.mxu0 %v4753
    %8656 = vmatpush2.bf16.msra.mxu0 %v4752
    %8657 = vmatprep.subr.bf16.mxu0 %v4737
    %8658 = vmatpush2.bf16.msra.mxu0 %v4736
    %8659 = vmatprep.subr.bf16.mxu0 %v4721
    %8660 = vmatpush2.bf16.msra.mxu0 %v4720
    %8661 = vmatprep.subr.bf16.mxu0 %v4705
    %8662 = vmatpush2.bf16.msra.mxu0 %v4704
    %8663 = vmatprep.subr.bf16.mxu0 %v4689
    %8664 = vmatpush2.bf16.msra.mxu0 %v4688
    %8665 = vmatprep.subr.bf16.mxu0 %v4673
    %8666 = vmatpush2.bf16.msra.mxu0 %v4672
    %8667 = vmatprep.mubr.bf16.mxu0 %v8552
    %8668 = vmatmul.mubr.bf16.gmra.mxu0 %v8551
    %v8669 = vpop.f32.mrf.mxu0
    %v8670 = vadd.f32 0.0, %v8669
    %v8671 = vpop.f32.mrf.mxu0
    %v8672 = vadd.f32 0.0, %v8671
    %v8673 = vpop.f32.mrf.mxu0
    %v8674 = vpop.f32.mrf.mxu0
    %8675 = vdwg.mxu0
    %8676 = vmatprep.subr.bf16.mxu0 %v4659
    %8677 = vmatpush1.bf16.msra.mxu0 %v4658
    %8678 = vmatprep.subr.bf16.mxu0 %v4643
    %8679 = vmatpush1.bf16.msra.mxu0 %v4642
    %8680 = vmatprep.subr.bf16.mxu0 %v4627
    %8681 = vmatpush1.bf16.msra.mxu0 %v4626
    %8682 = vmatprep.subr.bf16.mxu0 %v4611
    %8683 = vmatpush1.bf16.msra.mxu0 %v4610
    %8684 = vmatprep.subr.bf16.mxu0 %v4595
    %8685 = vmatpush1.bf16.msra.mxu0 %v4594
    %8686 = vmatprep.subr.bf16.mxu0 %v4579
    %8687 = vmatpush1.bf16.msra.mxu0 %v4578
    %8688 = vmatprep.subr.bf16.mxu0 %v4563
    %8689 = vmatpush1.bf16.msra.mxu0 %v4562
    %8690 = vmatprep.subr.bf16.mxu0 %v4547
    %8691 = vmatpush1.bf16.msra.mxu0 %v4546
    %8692 = vmatprep.subr.bf16.mxu0 %v4787
    %8693 = vmatpush2.bf16.msra.mxu0 %v4786
    %8694 = vmatprep.subr.bf16.mxu0 %v4771
    %8695 = vmatpush2.bf16.msra.mxu0 %v4770
    %8696 = vmatprep.subr.bf16.mxu0 %v4755
    %8697 = vmatpush2.bf16.msra.mxu0 %v4754
    %8698 = vmatprep.subr.bf16.mxu0 %v4739
    %8699 = vmatpush2.bf16.msra.mxu0 %v4738
    %8700 = vmatprep.subr.bf16.mxu0 %v4723
    %8701 = vmatpush2.bf16.msra.mxu0 %v4722
    %8702 = vmatprep.subr.bf16.mxu0 %v4707
    %8703 = vmatpush2.bf16.msra.mxu0 %v4706
    %8704 = vmatprep.subr.bf16.mxu0 %v4691
    %8705 = vmatpush2.bf16.msra.mxu0 %v4690
    %8706 = vmatprep.subr.bf16.mxu0 %v4675
    %8707 = vmatpush2.bf16.msra.mxu0 %v4674
    %8708 = vmatprep.mubr.bf16.mxu0 %v8552
    %8709 = vmatmul.mubr.bf16.gmra.mxu0 %v8551
    %v8710 = vpop.f32.mrf.mxu0
    %v8711 = vadd.f32 0.0, %v8710
    %v8712 = vpop.f32.mrf.mxu0
    %v8713 = vadd.f32 0.0, %v8712
    %v8714 = vpop.f32.mrf.mxu0
    %v8715 = vpop.f32.mrf.mxu0
    %8716 = vdwg.mxu0
    %8717 = vmatprep.subr.bf16.mxu0 %v4661
    %8718 = vmatpush1.bf16.msra.mxu0 %v4660
    %8719 = vmatprep.subr.bf16.mxu0 %v4645
    %8720 = vmatpush1.bf16.msra.mxu0 %v4644
    %8721 = vmatprep.subr.bf16.mxu0 %v4629
    %8722 = vmatpush1.bf16.msra.mxu0 %v4628
    %8723 = vmatprep.subr.bf16.mxu0 %v4613
    %8724 = vmatpush1.bf16.msra.mxu0 %v4612
    %8725 = vmatprep.subr.bf16.mxu0 %v4597
    %8726 = vmatpush1.bf16.msra.mxu0 %v4596
    %8727 = vmatprep.subr.bf16.mxu0 %v4581
    %8728 = vmatpush1.bf16.msra.mxu0 %v4580
    %8729 = vmatprep.subr.bf16.mxu0 %v4565
    %8730 = vmatpush1.bf16.msra.mxu0 %v4564
    %8731 = vmatprep.subr.bf16.mxu0 %v4549
    %8732 = vmatpush1.bf16.msra.mxu0 %v4548
    %8733 = vmatprep.subr.bf16.mxu0 %v4789
    %8734 = vmatpush2.bf16.msra.mxu0 %v4788
    %8735 = vmatprep.subr.bf16.mxu0 %v4773
    %8736 = vmatpush2.bf16.msra.mxu0 %v4772
    %8737 = vmatprep.subr.bf16.mxu0 %v4757
    %8738 = vmatpush2.bf16.msra.mxu0 %v4756
    %8739 = vmatprep.subr.bf16.mxu0 %v4741
    %8740 = vmatpush2.bf16.msra.mxu0 %v4740
    %8741 = vmatprep.subr.bf16.mxu0 %v4725
    %8742 = vmatpush2.bf16.msra.mxu0 %v4724
    %8743 = vmatprep.subr.bf16.mxu0 %v4709
    %8744 = vmatpush2.bf16.msra.mxu0 %v4708
    %8745 = vmatprep.subr.bf16.mxu0 %v4693
    %8746 = vmatpush2.bf16.msra.mxu0 %v4692
    %8747 = vmatprep.subr.bf16.mxu0 %v4677
    %8748 = vmatpush2.bf16.msra.mxu0 %v4676
    %8749 = vmatprep.mubr.bf16.mxu0 %v8552
    %8750 = vmatmul.mubr.bf16.gmra.mxu0 %v8551
    %v8751 = vpop.f32.mrf.mxu0
    %v8752 = vadd.f32 0.0, %v8751
    %v8753 = vpop.f32.mrf.mxu0
    %v8754 = vadd.f32 0.0, %v8753
    %v8755 = vpop.f32.mrf.mxu0
    %v8756 = vpop.f32.mrf.mxu0
    %8757 = vdwg.mxu0
    %8758 = vmatprep.subr.bf16.mxu0 %v4663
    %8759 = vmatpush1.bf16.msra.mxu0 %v4662
    %8760 = vmatprep.subr.bf16.mxu0 %v4647
    %8761 = vmatpush1.bf16.msra.mxu0 %v4646
    %8762 = vmatprep.subr.bf16.mxu0 %v4631
    %8763 = vmatpush1.bf16.msra.mxu0 %v4630
    %8764 = vmatprep.subr.bf16.mxu0 %v4615
    %8765 = vmatpush1.bf16.msra.mxu0 %v4614
    %8766 = vmatprep.subr.bf16.mxu0 %v4599
    %8767 = vmatpush1.bf16.msra.mxu0 %v4598
    %8768 = vmatprep.subr.bf16.mxu0 %v4583
    %8769 = vmatpush1.bf16.msra.mxu0 %v4582
    %8770 = vmatprep.subr.bf16.mxu0 %v4567
    %8771 = vmatpush1.bf16.msra.mxu0 %v4566
    %8772 = vmatprep.subr.bf16.mxu0 %v4551
    %8773 = vmatpush1.bf16.msra.mxu0 %v4550
    %8774 = vmatprep.subr.bf16.mxu0 %v4791
    %8775 = vmatpush2.bf16.msra.mxu0 %v4790
    %8776 = vmatprep.subr.bf16.mxu0 %v4775
    %8777 = vmatpush2.bf16.msra.mxu0 %v4774
    %8778 = vmatprep.subr.bf16.mxu0 %v4759
    %8779 = vmatpush2.bf16.msra.mxu0 %v4758
    %8780 = vmatprep.subr.bf16.mxu0 %v4743
    %8781 = vmatpush2.bf16.msra.mxu0 %v4742
    %8782 = vmatprep.subr.bf16.mxu0 %v4727
    %8783 = vmatpush2.bf16.msra.mxu0 %v4726
    %8784 = vmatprep.subr.bf16.mxu0 %v4711
    %8785 = vmatpush2.bf16.msra.mxu0 %v4710
    %8786 = vmatprep.subr.bf16.mxu0 %v4695
    %8787 = vmatpush2.bf16.msra.mxu0 %v4694
    %8788 = vmatprep.subr.bf16.mxu0 %v4679
    %8789 = vmatpush2.bf16.msra.mxu0 %v4678
    %8790 = vmatprep.mubr.bf16.mxu0 %v8552
    %8791 = vmatmul.mubr.bf16.gmra.mxu0 %v8551
    %v8792 = vpop.f32.mrf.mxu0
    %v8793 = vadd.f32 0.0, %v8792
    %v8794 = vpop.f32.mrf.mxu0
    %v8795 = vadd.f32 0.0, %v8794
    %v8796 = vpop.f32.mrf.mxu0
    %v8797 = vpop.f32.mrf.mxu0
    %8798 = vdwg.mxu0
    %8799 = vmatprep.subr.bf16.mxu0 %v4665
    %8800 = vmatpush1.bf16.msra.mxu0 %v4664
    %8801 = vmatprep.subr.bf16.mxu0 %v4649
    %8802 = vmatpush1.bf16.msra.mxu0 %v4648
    %8803 = vmatprep.subr.bf16.mxu0 %v4633
    %8804 = vmatpush1.bf16.msra.mxu0 %v4632
    %8805 = vmatprep.subr.bf16.mxu0 %v4617
    %8806 = vmatpush1.bf16.msra.mxu0 %v4616
    %8807 = vmatprep.subr.bf16.mxu0 %v4601
    %8808 = vmatpush1.bf16.msra.mxu0 %v4600
    %8809 = vmatprep.subr.bf16.mxu0 %v4585
    %8810 = vmatpush1.bf16.msra.mxu0 %v4584
    %8811 = vmatprep.subr.bf16.mxu0 %v4569
    %8812 = vmatpush1.bf16.msra.mxu0 %v4568
    %8813 = vmatprep.subr.bf16.mxu0 %v4553
    %8814 = vmatpush1.bf16.msra.mxu0 %v4552
    %8815 = vmatprep.subr.bf16.mxu0 %v4793
    %8816 = vmatpush2.bf16.msra.mxu0 %v4792
    %8817 = vmatprep.subr.bf16.mxu0 %v4777
    %8818 = vmatpush2.bf16.msra.mxu0 %v4776
    %8819 = vmatprep.subr.bf16.mxu0 %v4761
    %8820 = vmatpush2.bf16.msra.mxu0 %v4760
    %8821 = vmatprep.subr.bf16.mxu0 %v4745
    %8822 = vmatpush2.bf16.msra.mxu0 %v4744
    %8823 = vmatprep.subr.bf16.mxu0 %v4729
    %8824 = vmatpush2.bf16.msra.mxu0 %v4728
    %8825 = vmatprep.subr.bf16.mxu0 %v4713
    %8826 = vmatpush2.bf16.msra.mxu0 %v4712
    %8827 = vmatprep.subr.bf16.mxu0 %v4697
    %8828 = vmatpush2.bf16.msra.mxu0 %v4696
    %8829 = vmatprep.subr.bf16.mxu0 %v4681
    %8830 = vmatpush2.bf16.msra.mxu0 %v4680
    %8831 = vmatprep.mubr.bf16.mxu0 %v8552
    %8832 = vmatmul.mubr.bf16.gmra.mxu0 %v8551
    %v8833 = vpop.f32.mrf.mxu0
    %v8834 = vadd.f32 0.0, %v8833
    %v8835 = vpop.f32.mrf.mxu0
    %v8836 = vadd.f32 0.0, %v8835
    %v8837 = vpop.f32.mrf.mxu0
    %v8838 = vpop.f32.mrf.mxu0
    %8839 = vdwg.mxu0
    %8840 = vmatprep.subr.bf16.mxu0 %v4667
    %8841 = vmatpush1.bf16.msra.mxu0 %v4666
    %8842 = vmatprep.subr.bf16.mxu0 %v4651
    %8843 = vmatpush1.bf16.msra.mxu0 %v4650
    %8844 = vmatprep.subr.bf16.mxu0 %v4635
    %8845 = vmatpush1.bf16.msra.mxu0 %v4634
    %8846 = vmatprep.subr.bf16.mxu0 %v4619
    %8847 = vmatpush1.bf16.msra.mxu0 %v4618
    %8848 = vmatprep.subr.bf16.mxu0 %v4603
    %8849 = vmatpush1.bf16.msra.mxu0 %v4602
    %8850 = vmatprep.subr.bf16.mxu0 %v4587
    %8851 = vmatpush1.bf16.msra.mxu0 %v4586
    %8852 = vmatprep.subr.bf16.mxu0 %v4571
    %8853 = vmatpush1.bf16.msra.mxu0 %v4570
    %8854 = vmatprep.subr.bf16.mxu0 %v4555
    %8855 = vmatpush1.bf16.msra.mxu0 %v4554
    %8856 = vmatprep.subr.bf16.mxu0 %v4795
    %8857 = vmatpush2.bf16.msra.mxu0 %v4794
    %8858 = vmatprep.subr.bf16.mxu0 %v4779
    %8859 = vmatpush2.bf16.msra.mxu0 %v4778
    %8860 = vmatprep.subr.bf16.mxu0 %v4763
    %8861 = vmatpush2.bf16.msra.mxu0 %v4762
    %8862 = vmatprep.subr.bf16.mxu0 %v4747
    %8863 = vmatpush2.bf16.msra.mxu0 %v4746
    %8864 = vmatprep.subr.bf16.mxu0 %v4731
    %8865 = vmatpush2.bf16.msra.mxu0 %v4730
    %8866 = vmatprep.subr.bf16.mxu0 %v4715
    %8867 = vmatpush2.bf16.msra.mxu0 %v4714
    %8868 = vmatprep.subr.bf16.mxu0 %v4699
    %8869 = vmatpush2.bf16.msra.mxu0 %v4698
    %8870 = vmatprep.subr.bf16.mxu0 %v4683
    %8871 = vmatpush2.bf16.msra.mxu0 %v4682
    %8872 = vmatprep.mubr.bf16.mxu0 %v8552
    %8873 = vmatmul.mubr.bf16.gmra.mxu0 %v8551
    %v8874 = vpop.f32.mrf.mxu0
    %v8875 = vadd.f32 0.0, %v8874
    %v8876 = vpop.f32.mrf.mxu0
    %v8877 = vadd.f32 0.0, %v8876
    %v8878 = vpop.f32.mrf.mxu0
    %v8879 = vpop.f32.mrf.mxu0
    %8880 = vdwg.mxu0
    %v8881 = vld [vmem:[%s3504] sm:$0xff]
    %v8882 = vld [vmem:[%s3504 + $0x8] sm:$0xff]
    %v8883 = vld [vmem:[%s3504 + $0x10] sm:$0xff]
    %v8884 = vld [vmem:[%s3504 + $0x18] sm:$0xff]
    %v8885 = vsel %vm3515, %v8588, %v8752
    %v8886 = vsel %vm3515, %v8590, %v8754
    %v8887 = vsel %vm3515, %v8629, %v8793
    %v8888 = vsel %vm3515, %v8631, %v8795
    %v8889 = vsel %vm3515, %v8670, %v8834
    %v8890 = vsel %vm3515, %v8672, %v8836
    %v8891 = vsel %vm3515, %v8711, %v8875
    %v8892 = vsel %vm3515, %v8713, %v8877
    %v8901 = vcombine.low %v8885, %v8886
    %v8902 = vcombine.low %v8887, %v8888
    %v8903 = vcombine.low %v8889, %v8890
    %v8904 = vcombine.low %v8891, %v8892
    %v8909 = vadd.f32 %v8881, %v8901
    %v8910 = vadd.f32 %v8882, %v8902
    %v8911 = vadd.f32 %v8883, %v8903
    %v8912 = vadd.f32 %v8884, %v8904
    %v8913 = vxor.u32 %v8909, 2147483648
    %v8914 = vmul.f32 %v8913, 1.442695
    %v8915 = vpow.pop %v8914
    %v8916 = vadd.f32 %v8915, 1.0
    %v8917 = vrcp.pop %v8916
    %v8918 = vmul.f32 1.0, %v8917
    %v8919 = vxor.u32 %v8910, 2147483648
    %v8920 = vmul.f32 %v8919, 1.442695
    %v8921 = vpow.pop %v8920
    %v8922 = vadd.f32 %v8921, 1.0
    %v8923 = vrcp.pop %v8922
    %v8924 = vmul.f32 1.0, %v8923
    %v8925 = vtanh.pop %v8911
    %v8926 = vxor.u32 %v8912, 2147483648
    %v8927 = vmul.f32 %v8926, 1.442695
    %v8928 = vpow.pop %v8927
    %v8929 = vadd.f32 %v8928, 1.0
    %v8930 = vrcp.pop %v8929
    %v8931 = vmul.f32 1.0, %v8930
    %v8932 = vmul.f32 %v8924, %v8545
    %v8933 = vmul.f32 %v8918, %v8925
    %v8934 = vadd.f32 %v8932, %v8933
    %v8935 = vtanh.pop %v8934
    %v8936 = vmul.f32 %v8931, %v8935
    %s8937 = smul.u32 4, 64
    %s8938 = smul.u32 %s8937, 2
    %s8939 = sshll.u32 %s8938, 4
    %8940 = dma.done %s587, %s8939
    %s8941 = smul.u32 %s3509, 1
    %s8942 = sshll.u32 %s8941, 4
    %8943 = dma.done %s757, %s8942
    %v8945 = vcombine.high %v8936, %v8936
    %v8947 = vrot.slane %v8936, 2
    %v8948 = vrot.slane %v8945, 2
    %v8951 = vpack.c.bf16 %v8936, %v8936
    %v8952 = vpack.c.bf16 %v8945, %v8945
    %v8953 = vpack.c.bf16 %v8947, %v8947
    %v8954 = vpack.c.bf16 %v8948, %v8948
    %v8955 = vld [vmem:[#allocation4] sm:$0xff]
    %v8956 = vld [vmem:[#allocation4 + $0x8] sm:$0xff]
    %v8957 = vld [vmem:[#allocation4 + $0x10] sm:$0xff]
    %v8958 = vld [vmem:[#allocation4 + $0x18] sm:$0xff]
    %v8959 = vld [vmem:[#allocation4 + $0x20] sm:$0xff]
    %v8960 = vld [vmem:[#allocation4 + $0x28] sm:$0xff]
    %v8961 = vld [vmem:[#allocation4 + $0x30] sm:$0xff]
    %v8962 = vld [vmem:[#allocation4 + $0x38] sm:$0xff]
    %v8963 = vld [vmem:[#allocation4 + $0x40] sm:$0xff]
    %v8964 = vld [vmem:[#allocation4 + $0x48] sm:$0xff]
    %v8965 = vld [vmem:[#allocation4 + $0x50] sm:$0xff]
    %v8966 = vld [vmem:[#allocation4 + $0x58] sm:$0xff]
    %v8967 = vld [vmem:[#allocation4 + $0x60] sm:$0xff]
    %v8968 = vld [vmem:[#allocation4 + $0x68] sm:$0xff]
    %v8969 = vld [vmem:[#allocation4 + $0x70] sm:$0xff]
    %v8970 = vld [vmem:[#allocation4 + $0x78] sm:$0xff]
    %v8971 = vld [vmem:[#allocation4 + $0x80] sm:$0xff]
    %v8972 = vld [vmem:[#allocation4 + $0x88] sm:$0xff]
    %v8973 = vld [vmem:[#allocation4 + $0x90] sm:$0xff]
    %v8974 = vld [vmem:[#allocation4 + $0x98] sm:$0xff]
    %v8975 = vld [vmem:[#allocation4 + $0xa0] sm:$0xff]
    %v8976 = vld [vmem:[#allocation4 + $0xa8] sm:$0xff]
    %v8977 = vld [vmem:[#allocation4 + $0xb0] sm:$0xff]
    %v8978 = vld [vmem:[#allocation4 + $0xb8] sm:$0xff]
    %v8979 = vld [vmem:[#allocation4 + $0xc0] sm:$0xff]
    %v8980 = vld [vmem:[#allocation4 + $0xc8] sm:$0xff]
    %v8981 = vld [vmem:[#allocation4 + $0xd0] sm:$0xff]
    %v8982 = vld [vmem:[#allocation4 + $0xd8] sm:$0xff]
    %v8983 = vld [vmem:[#allocation4 + $0xe0] sm:$0xff]
    %v8984 = vld [vmem:[#allocation4 + $0xe8] sm:$0xff]
    %v8985 = vld [vmem:[#allocation4 + $0xf0] sm:$0xff]
    %v8986 = vld [vmem:[#allocation4 + $0xf8] sm:$0xff]
    %v8987 = vld [vmem:[#allocation4 + $0x100] sm:$0xff]
    %v8988 = vld [vmem:[#allocation4 + $0x108] sm:$0xff]
    %v8989 = vld [vmem:[#allocation4 + $0x110] sm:$0xff]
    %v8990 = vld [vmem:[#allocation4 + $0x118] sm:$0xff]
    %v8991 = vld [vmem:[#allocation4 + $0x120] sm:$0xff]
    %v8992 = vld [vmem:[#allocation4 + $0x128] sm:$0xff]
    %v8993 = vld [vmem:[#allocation4 + $0x130] sm:$0xff]
    %v8994 = vld [vmem:[#allocation4 + $0x138] sm:$0xff]
    %v8995 = vld [vmem:[#allocation4 + $0x140] sm:$0xff]
    %v8996 = vld [vmem:[#allocation4 + $0x148] sm:$0xff]
    %v8997 = vld [vmem:[#allocation4 + $0x150] sm:$0xff]
    %v8998 = vld [vmem:[#allocation4 + $0x158] sm:$0xff]
    %v8999 = vld [vmem:[#allocation4 + $0x160] sm:$0xff]
    %v9000 = vld [vmem:[#allocation4 + $0x168] sm:$0xff]
    %v9001 = vld [vmem:[#allocation4 + $0x170] sm:$0xff]
    %v9002 = vld [vmem:[#allocation4 + $0x178] sm:$0xff]
    %v9003 = vld [vmem:[#allocation4 + $0x180] sm:$0xff]
    %v9004 = vld [vmem:[#allocation4 + $0x188] sm:$0xff]
    %v9005 = vld [vmem:[#allocation4 + $0x190] sm:$0xff]
    %v9006 = vld [vmem:[#allocation4 + $0x198] sm:$0xff]
    %v9007 = vld [vmem:[#allocation4 + $0x1a0] sm:$0xff]
    %v9008 = vld [vmem:[#allocation4 + $0x1a8] sm:$0xff]
    %v9009 = vld [vmem:[#allocation4 + $0x1b0] sm:$0xff]
    %v9010 = vld [vmem:[#allocation4 + $0x1b8] sm:$0xff]
    %v9011 = vld [vmem:[#allocation4 + $0x1c0] sm:$0xff]
    %v9012 = vld [vmem:[#allocation4 + $0x1c8] sm:$0xff]
    %v9013 = vld [vmem:[#allocation4 + $0x1d0] sm:$0xff]
    %v9014 = vld [vmem:[#allocation4 + $0x1d8] sm:$0xff]
    %v9015 = vld [vmem:[#allocation4 + $0x1e0] sm:$0xff]
    %v9016 = vld [vmem:[#allocation4 + $0x1e8] sm:$0xff]
    %v9017 = vld [vmem:[#allocation4 + $0x1f0] sm:$0xff]
    %v9018 = vld [vmem:[#allocation4 + $0x1f8] sm:$0xff]
    %v9019 = vld [vmem:[%s9] sm:$0x3]
    %v9021 = vlaneseq
    %v9022 = vshrl.u32 %v9021, 7
    %v9023 = vsub.s32 0, %v9022
    %v9024 = vrot.slane %v9019, %v9023
    %v9025 = vlaneseq
    %v9026 = vshrl.u32 %v9025, 7
    %v9027 = vsub.s32 1, %v9026
    %v9028 = vrot.slane %v9019, %v9027
    %v9095 = vunpack.c.l.b16 %v8955
    %v9096 = vunpack.c.h.b16 %v8955
    %v9097 = vunpack.c.l.b16 %v8956
    %v9098 = vunpack.c.h.b16 %v8956
    %v9099 = vunpack.c.l.b16 %v8957
    %v9100 = vunpack.c.h.b16 %v8957
    %v9101 = vunpack.c.l.b16 %v8958
    %v9102 = vunpack.c.h.b16 %v8958
    %v9103 = vunpack.c.l.b16 %v8959
    %v9104 = vunpack.c.h.b16 %v8959
    %v9105 = vunpack.c.l.b16 %v8960
    %v9106 = vunpack.c.h.b16 %v8960
    %v9107 = vunpack.c.l.b16 %v8961
    %v9108 = vunpack.c.h.b16 %v8961
    %v9109 = vunpack.c.l.b16 %v8962
    %v9110 = vunpack.c.h.b16 %v8962
    %v9111 = vunpack.c.l.b16 %v8963
    %v9112 = vunpack.c.h.b16 %v8963
    %v9113 = vunpack.c.l.b16 %v8964
    %v9114 = vunpack.c.h.b16 %v8964
    %v9115 = vunpack.c.l.b16 %v8965
    %v9116 = vunpack.c.h.b16 %v8965
    %v9117 = vunpack.c.l.b16 %v8966
    %v9118 = vunpack.c.h.b16 %v8966
    %v9119 = vunpack.c.l.b16 %v8967
    %v9120 = vunpack.c.h.b16 %v8967
    %v9121 = vunpack.c.l.b16 %v8968
    %v9122 = vunpack.c.h.b16 %v8968
    %v9123 = vunpack.c.l.b16 %v8969
    %v9124 = vunpack.c.h.b16 %v8969
    %v9125 = vunpack.c.l.b16 %v8970
    %v9126 = vunpack.c.h.b16 %v8970
    %v9127 = vunpack.c.l.b16 %v8971
    %v9128 = vunpack.c.h.b16 %v8971
    %v9129 = vunpack.c.l.b16 %v8972
    %v9130 = vunpack.c.h.b16 %v8972
    %v9131 = vunpack.c.l.b16 %v8973
    %v9132 = vunpack.c.h.b16 %v8973
    %v9133 = vunpack.c.l.b16 %v8974
    %v9134 = vunpack.c.h.b16 %v8974
    %v9135 = vunpack.c.l.b16 %v8975
    %v9136 = vunpack.c.h.b16 %v8975
    %v9137 = vunpack.c.l.b16 %v8976
    %v9138 = vunpack.c.h.b16 %v8976
    %v9139 = vunpack.c.l.b16 %v8977
    %v9140 = vunpack.c.h.b16 %v8977
    %v9141 = vunpack.c.l.b16 %v8978
    %v9142 = vunpack.c.h.b16 %v8978
    %v9143 = vunpack.c.l.b16 %v8979
    %v9144 = vunpack.c.h.b16 %v8979
    %v9145 = vunpack.c.l.b16 %v8980
    %v9146 = vunpack.c.h.b16 %v8980
    %v9147 = vunpack.c.l.b16 %v8981
    %v9148 = vunpack.c.h.b16 %v8981
    %v9149 = vunpack.c.l.b16 %v8982
    %v9150 = vunpack.c.h.b16 %v8982
    %v9151 = vunpack.c.l.b16 %v8983
    %v9152 = vunpack.c.h.b16 %v8983
    %v9153 = vunpack.c.l.b16 %v8984
    %v9154 = vunpack.c.h.b16 %v8984
    %v9155 = vunpack.c.l.b16 %v8985
    %v9156 = vunpack.c.h.b16 %v8985
    %v9157 = vunpack.c.l.b16 %v8986
    %v9158 = vunpack.c.h.b16 %v8986
    %v9159 = vunpack.c.l.b16 %v8987
    %v9160 = vunpack.c.h.b16 %v8987
    %v9161 = vunpack.c.l.b16 %v8988
    %v9162 = vunpack.c.h.b16 %v8988
    %v9163 = vunpack.c.l.b16 %v8989
    %v9164 = vunpack.c.h.b16 %v8989
    %v9165 = vunpack.c.l.b16 %v8990
    %v9166 = vunpack.c.h.b16 %v8990
    %v9167 = vunpack.c.l.b16 %v8991
    %v9168 = vunpack.c.h.b16 %v8991
    %v9169 = vunpack.c.l.b16 %v8992
    %v9170 = vunpack.c.h.b16 %v8992
    %v9171 = vunpack.c.l.b16 %v8993
    %v9172 = vunpack.c.h.b16 %v8993
    %v9173 = vunpack.c.l.b16 %v8994
    %v9174 = vunpack.c.h.b16 %v8994
    %v9175 = vunpack.c.l.b16 %v8995
    %v9176 = vunpack.c.h.b16 %v8995
    %v9177 = vunpack.c.l.b16 %v8996
    %v9178 = vunpack.c.h.b16 %v8996
    %v9179 = vunpack.c.l.b16 %v8997
    %v9180 = vunpack.c.h.b16 %v8997
    %v9181 = vunpack.c.l.b16 %v8998
    %v9182 = vunpack.c.h.b16 %v8998
    %v9183 = vunpack.c.l.b16 %v8999
    %v9184 = vunpack.c.h.b16 %v8999
    %v9185 = vunpack.c.l.b16 %v9000
    %v9186 = vunpack.c.h.b16 %v9000
    %v9187 = vunpack.c.l.b16 %v9001
    %v9188 = vunpack.c.h.b16 %v9001
    %v9189 = vunpack.c.l.b16 %v9002
    %v9190 = vunpack.c.h.b16 %v9002
    %v9191 = vunpack.c.l.b16 %v9003
    %v9192 = vunpack.c.h.b16 %v9003
    %v9193 = vunpack.c.l.b16 %v9004
    %v9194 = vunpack.c.h.b16 %v9004
    %v9195 = vunpack.c.l.b16 %v9005
    %v9196 = vunpack.c.h.b16 %v9005
    %v9197 = vunpack.c.l.b16 %v9006
    %v9198 = vunpack.c.h.b16 %v9006
    %v9199 = vunpack.c.l.b16 %v9007
    %v9200 = vunpack.c.h.b16 %v9007
    %v9201 = vunpack.c.l.b16 %v9008
    %v9202 = vunpack.c.h.b16 %v9008
    %v9203 = vunpack.c.l.b16 %v9009
    %v9204 = vunpack.c.h.b16 %v9009
    %v9205 = vunpack.c.l.b16 %v9010
    %v9206 = vunpack.c.h.b16 %v9010
    %v9207 = vunpack.c.l.b16 %v9011
    %v9208 = vunpack.c.h.b16 %v9011
    %v9209 = vunpack.c.l.b16 %v9012
    %v9210 = vunpack.c.h.b16 %v9012
    %v9211 = vunpack.c.l.b16 %v9013
    %v9212 = vunpack.c.h.b16 %v9013
    %v9213 = vunpack.c.l.b16 %v9014
    %v9214 = vunpack.c.h.b16 %v9014
    %v9215 = vunpack.c.l.b16 %v9015
    %v9216 = vunpack.c.h.b16 %v9015
    %v9217 = vunpack.c.l.b16 %v9016
    %v9218 = vunpack.c.h.b16 %v9016
    %v9219 = vunpack.c.l.b16 %v9017
    %v9220 = vunpack.c.h.b16 %v9017
    %v9221 = vunpack.c.l.b16 %v9018
    %v9222 = vunpack.c.h.b16 %v9018
    %v9223 = vpack.c.b16 %v9097, %v9095
    %v9224 = vpack.c.b16 %v9098, %v9096
    %v9225 = vpack.c.b16 %v9101, %v9099
    %v9226 = vpack.c.b16 %v9102, %v9100
    %v9227 = vpack.c.b16 %v9105, %v9103
    %v9228 = vpack.c.b16 %v9106, %v9104
    %v9229 = vpack.c.b16 %v9109, %v9107
    %v9230 = vpack.c.b16 %v9110, %v9108
    %v9231 = vpack.c.b16 %v9113, %v9111
    %v9232 = vpack.c.b16 %v9114, %v9112
    %v9233 = vpack.c.b16 %v9117, %v9115
    %v9234 = vpack.c.b16 %v9118, %v9116
    %v9235 = vpack.c.b16 %v9121, %v9119
    %v9236 = vpack.c.b16 %v9122, %v9120
    %v9237 = vpack.c.b16 %v9125, %v9123
    %v9238 = vpack.c.b16 %v9126, %v9124
    %v9239 = vpack.c.b16 %v9129, %v9127
    %v9240 = vpack.c.b16 %v9130, %v9128
    %v9241 = vpack.c.b16 %v9133, %v9131
    %v9242 = vpack.c.b16 %v9134, %v9132
    %v9243 = vpack.c.b16 %v9137, %v9135
    %v9244 = vpack.c.b16 %v9138, %v9136
    %v9245 = vpack.c.b16 %v9141, %v9139
    %v9246 = vpack.c.b16 %v9142, %v9140
    %v9247 = vpack.c.b16 %v9145, %v9143
    %v9248 = vpack.c.b16 %v9146, %v9144
    %v9249 = vpack.c.b16 %v9149, %v9147
    %v9250 = vpack.c.b16 %v9150, %v9148
    %v9251 = vpack.c.b16 %v9153, %v9151
    %v9252 = vpack.c.b16 %v9154, %v9152
    %v9253 = vpack.c.b16 %v9157, %v9155
    %v9254 = vpack.c.b16 %v9158, %v9156
    %v9255 = vpack.c.b16 %v9161, %v9159
    %v9256 = vpack.c.b16 %v9162, %v9160
    %v9257 = vpack.c.b16 %v9165, %v9163
    %v9258 = vpack.c.b16 %v9166, %v9164
    %v9259 = vpack.c.b16 %v9169, %v9167
    %v9260 = vpack.c.b16 %v9170, %v9168
    %v9261 = vpack.c.b16 %v9173, %v9171
    %v9262 = vpack.c.b16 %v9174, %v9172
    %v9263 = vpack.c.b16 %v9177, %v9175
    %v9264 = vpack.c.b16 %v9178, %v9176
    %v9265 = vpack.c.b16 %v9181, %v9179
    %v9266 = vpack.c.b16 %v9182, %v9180
    %v9267 = vpack.c.b16 %v9185, %v9183
    %v9268 = vpack.c.b16 %v9186, %v9184
    %v9269 = vpack.c.b16 %v9189, %v9187
    %v9270 = vpack.c.b16 %v9190, %v9188
    %v9271 = vpack.c.b16 %v9193, %v9191
    %v9272 = vpack.c.b16 %v9194, %v9192
    %v9273 = vpack.c.b16 %v9197, %v9195
    %v9274 = vpack.c.b16 %v9198, %v9196
    %v9275 = vpack.c.b16 %v9201, %v9199
    %v9276 = vpack.c.b16 %v9202, %v9200
    %v9277 = vpack.c.b16 %v9205, %v9203
    %v9278 = vpack.c.b16 %v9206, %v9204
    %v9279 = vpack.c.b16 %v9209, %v9207
    %v9280 = vpack.c.b16 %v9210, %v9208
    %v9281 = vpack.c.b16 %v9213, %v9211
    %v9282 = vpack.c.b16 %v9214, %v9212
    %v9283 = vpack.c.b16 %v9217, %v9215
    %v9284 = vpack.c.b16 %v9218, %v9216
    %v9285 = vpack.c.b16 %v9221, %v9219
    %v9286 = vpack.c.b16 %v9222, %v9220
    %9351 = vmatprep.subr.bf16.mxu0 %v9238
    %9352 = vmatpush1.bf16.msra.mxu0 %v9237
    %9353 = vmatprep.subr.bf16.mxu0 %v9236
    %9354 = vmatpush1.bf16.msra.mxu0 %v9235
    %9355 = vmatprep.subr.bf16.mxu0 %v9234
    %9356 = vmatpush1.bf16.msra.mxu0 %v9233
    %9357 = vmatprep.subr.bf16.mxu0 %v9232
    %9358 = vmatpush1.bf16.msra.mxu0 %v9231
    %9359 = vmatprep.subr.bf16.mxu0 %v9230
    %9360 = vmatpush1.bf16.msra.mxu0 %v9229
    %9361 = vmatprep.subr.bf16.mxu0 %v9228
    %9362 = vmatpush1.bf16.msra.mxu0 %v9227
    %9363 = vmatprep.subr.bf16.mxu0 %v9226
    %9364 = vmatpush1.bf16.msra.mxu0 %v9225
    %9365 = vmatprep.subr.bf16.mxu0 %v9224
    %9366 = vmatpush1.bf16.msra.mxu0 %v9223
    %9367 = vmatprep.subr.bf16.mxu0 %v9254
    %9368 = vmatpush2.bf16.msra.mxu0 %v9253
    %9369 = vmatprep.subr.bf16.mxu0 %v9252
    %9370 = vmatpush2.bf16.msra.mxu0 %v9251
    %9371 = vmatprep.subr.bf16.mxu0 %v9250
    %9372 = vmatpush2.bf16.msra.mxu0 %v9249
    %9373 = vmatprep.subr.bf16.mxu0 %v9248
    %9374 = vmatpush2.bf16.msra.mxu0 %v9247
    %9375 = vmatprep.subr.bf16.mxu0 %v9246
    %9376 = vmatpush2.bf16.msra.mxu0 %v9245
    %9377 = vmatprep.subr.bf16.mxu0 %v9244
    %9378 = vmatpush2.bf16.msra.mxu0 %v9243
    %9379 = vmatprep.subr.bf16.mxu0 %v9242
    %9380 = vmatpush2.bf16.msra.mxu0 %v9241
    %9381 = vmatprep.subr.bf16.mxu0 %v9240
    %9382 = vmatpush2.bf16.msra.mxu0 %v9239
    %9383 = vmatprep.mubr.bf16.mxu0 %v8952
    %9384 = vmatmul.mubr.bf16.gmra.mxu0 %v8951
    %v9385 = vpop.f32.mrf.mxu0
    %v9386 = vadd.f32 %v9024, %v9385
    %v9387 = vpop.f32.mrf.mxu0
    %v9388 = vadd.f32 %v9028, %v9387
    %v9389 = vpop.f32.mrf.mxu0
    %v9390 = vpop.f32.mrf.mxu0
    %9391 = vdwg.mxu0
    %9392 = vmatprep.subr.bf16.mxu0 %v9270
    %9393 = vmatpush1.bf16.msra.mxu0 %v9269
    %9394 = vmatprep.subr.bf16.mxu0 %v9268
    %9395 = vmatpush1.bf16.msra.mxu0 %v9267
    %9396 = vmatprep.subr.bf16.mxu0 %v9266
    %9397 = vmatpush1.bf16.msra.mxu0 %v9265
    %9398 = vmatprep.subr.bf16.mxu0 %v9264
    %9399 = vmatpush1.bf16.msra.mxu0 %v9263
    %9400 = vmatprep.subr.bf16.mxu0 %v9262
    %9401 = vmatpush1.bf16.msra.mxu0 %v9261
    %9402 = vmatprep.subr.bf16.mxu0 %v9260
    %9403 = vmatpush1.bf16.msra.mxu0 %v9259
    %9404 = vmatprep.subr.bf16.mxu0 %v9258
    %9405 = vmatpush1.bf16.msra.mxu0 %v9257
    %9406 = vmatprep.subr.bf16.mxu0 %v9256
    %9407 = vmatpush1.bf16.msra.mxu0 %v9255
    %9408 = vmatprep.subr.bf16.mxu0 %v9286
    %9409 = vmatpush2.bf16.msra.mxu0 %v9285
    %9410 = vmatprep.subr.bf16.mxu0 %v9284
    %9411 = vmatpush2.bf16.msra.mxu0 %v9283
    %9412 = vmatprep.subr.bf16.mxu0 %v9282
    %9413 = vmatpush2.bf16.msra.mxu0 %v9281
    %9414 = vmatprep.subr.bf16.mxu0 %v9280
    %9415 = vmatpush2.bf16.msra.mxu0 %v9279
    %9416 = vmatprep.subr.bf16.mxu0 %v9278
    %9417 = vmatpush2.bf16.msra.mxu0 %v9277
    %9418 = vmatprep.subr.bf16.mxu0 %v9276
    %9419 = vmatpush2.bf16.msra.mxu0 %v9275
    %9420 = vmatprep.subr.bf16.mxu0 %v9274
    %9421 = vmatpush2.bf16.msra.mxu0 %v9273
    %9422 = vmatprep.subr.bf16.mxu0 %v9272
    %9423 = vmatpush2.bf16.msra.mxu0 %v9271
    %9424 = vmatprep.mubr.bf16.mxu0 %v8954
    %9425 = vmatmul.mubr.bf16.gmra.mxu0 %v8953
    %v9426 = vpop.f32.mrf.mxu0
    %v9427 = vadd.f32 %v9386, %v9426
    %v9428 = vpop.f32.mrf.mxu0
    %v9429 = vadd.f32 %v9388, %v9428
    %v9430 = vpop.f32.mrf.mxu0
    %v9431 = vpop.f32.mrf.mxu0
    %9432 = vdwg.mxu0
    %vm9433 = vcmp.ge.f32.partialorder %v9427, 0.0
    %vm9434 = vcmp.ge.f32.partialorder %v9429, 0.0
    %v9435 = vmul.f32 %v9427, 0.01
    %v9436 = vmul.f32 %v9429, 0.01
    %v9437 = vsel %vm9433, %v9427, %v9435
    %v9438 = vsel %vm9434, %v9429, %v9436
    %v9439 = vpack.c.bf16 %v9437, %v9437
    %v9440 = vpack.c.bf16 %v9438, %v9438
    %v9441 = vld [vmem:[#allocation5] sm:$0xf]
    %v9442 = vld [vmem:[#allocation5 + $0x4] sm:$0xf]
    %v9443 = vld [vmem:[#allocation5 + $0x8] sm:$0xf]
    %v9444 = vld [vmem:[#allocation5 + $0xc] sm:$0xf]
    %v9445 = vld [vmem:[#allocation5 + $0x10] sm:$0xf]
    %v9446 = vld [vmem:[#allocation5 + $0x14] sm:$0xf]
    %v9447 = vld [vmem:[#allocation5 + $0x18] sm:$0xf]
    %v9448 = vld [vmem:[#allocation5 + $0x1c] sm:$0xf]
    %v9449 = vld [vmem:[#allocation5 + $0x20] sm:$0xf]
    %v9450 = vld [vmem:[#allocation5 + $0x24] sm:$0xf]
    %v9451 = vld [vmem:[#allocation5 + $0x28] sm:$0xf]
    %v9452 = vld [vmem:[#allocation5 + $0x2c] sm:$0xf]
    %v9453 = vld [vmem:[#allocation5 + $0x30] sm:$0xf]
    %v9454 = vld [vmem:[#allocation5 + $0x34] sm:$0xf]
    %v9455 = vld [vmem:[#allocation5 + $0x38] sm:$0xf]
    %v9456 = vld [vmem:[#allocation5 + $0x3c] sm:$0xf]
    %v9457 = vld [vmem:[#allocation5 + $0x40] sm:$0xf]
    %v9458 = vld [vmem:[#allocation5 + $0x44] sm:$0xf]
    %v9459 = vld [vmem:[#allocation5 + $0x48] sm:$0xf]
    %v9460 = vld [vmem:[#allocation5 + $0x4c] sm:$0xf]
    %v9461 = vld [vmem:[#allocation5 + $0x50] sm:$0xf]
    %v9462 = vld [vmem:[#allocation5 + $0x54] sm:$0xf]
    %v9463 = vld [vmem:[#allocation5 + $0x58] sm:$0xf]
    %v9464 = vld [vmem:[#allocation5 + $0x5c] sm:$0xf]
    %v9465 = vld [vmem:[#allocation5 + $0x60] sm:$0xf]
    %v9466 = vld [vmem:[#allocation5 + $0x64] sm:$0xf]
    %v9467 = vld [vmem:[#allocation5 + $0x68] sm:$0xf]
    %v9468 = vld [vmem:[#allocation5 + $0x6c] sm:$0xf]
    %v9469 = vld [vmem:[#allocation5 + $0x70] sm:$0xf]
    %v9470 = vld [vmem:[#allocation5 + $0x74] sm:$0xf]
    %v9471 = vld [vmem:[#allocation5 + $0x78] sm:$0xf]
    %v9472 = vld [vmem:[#allocation5 + $0x7c] sm:$0xf]
    %v9473 = vld [vmem:[%s10] sm:$0x1]
    %v9475 = vlaneseq
    %v9476 = vshrl.u32 %v9475, 7
    %v9477 = vsub.s32 0, %v9476
    %v9478 = vrot.slane %v9473, %v9477
    %v9512 = vunpack.c.l.b16 %v9441
    %v9513 = vunpack.c.l.b16 %v9442
    %v9514 = vunpack.c.l.b16 %v9443
    %v9515 = vunpack.c.l.b16 %v9444
    %v9516 = vunpack.c.l.b16 %v9445
    %v9517 = vunpack.c.l.b16 %v9446
    %v9518 = vunpack.c.l.b16 %v9447
    %v9519 = vunpack.c.l.b16 %v9448
    %v9520 = vunpack.c.l.b16 %v9449
    %v9521 = vunpack.c.l.b16 %v9450
    %v9522 = vunpack.c.l.b16 %v9451
    %v9523 = vunpack.c.l.b16 %v9452
    %v9524 = vunpack.c.l.b16 %v9453
    %v9525 = vunpack.c.l.b16 %v9454
    %v9526 = vunpack.c.l.b16 %v9455
    %v9527 = vunpack.c.l.b16 %v9456
    %v9528 = vunpack.c.l.b16 %v9457
    %v9529 = vunpack.c.l.b16 %v9458
    %v9530 = vunpack.c.l.b16 %v9459
    %v9531 = vunpack.c.l.b16 %v9460
    %v9532 = vunpack.c.l.b16 %v9461
    %v9533 = vunpack.c.l.b16 %v9462
    %v9534 = vunpack.c.l.b16 %v9463
    %v9535 = vunpack.c.l.b16 %v9464
    %v9536 = vunpack.c.l.b16 %v9465
    %v9537 = vunpack.c.l.b16 %v9466
    %v9538 = vunpack.c.l.b16 %v9467
    %v9539 = vunpack.c.l.b16 %v9468
    %v9540 = vunpack.c.l.b16 %v9469
    %v9541 = vunpack.c.l.b16 %v9470
    %v9542 = vunpack.c.l.b16 %v9471
    %v9543 = vunpack.c.l.b16 %v9472
    %v9544 = vpack.c.b16 %v9513, %v9512
    %v9545 = vpack.c.b16 %v9515, %v9514
    %v9546 = vpack.c.b16 %v9517, %v9516
    %v9547 = vpack.c.b16 %v9519, %v9518
    %v9548 = vpack.c.b16 %v9521, %v9520
    %v9549 = vpack.c.b16 %v9523, %v9522
    %v9550 = vpack.c.b16 %v9525, %v9524
    %v9551 = vpack.c.b16 %v9527, %v9526
    %v9552 = vpack.c.b16 %v9529, %v9528
    %v9553 = vpack.c.b16 %v9531, %v9530
    %v9554 = vpack.c.b16 %v9533, %v9532
    %v9555 = vpack.c.b16 %v9535, %v9534
    %v9556 = vpack.c.b16 %v9537, %v9536
    %v9557 = vpack.c.b16 %v9539, %v9538
    %v9558 = vpack.c.b16 %v9541, %v9540
    %v9559 = vpack.c.b16 %v9543, %v9542
    %9576 = vmatprep.subr.bf16.mxu0 0
    %9577 = vmatpush1.bf16.msra.mxu0 %v9551
    %9578 = vmatprep.subr.bf16.mxu0 0
    %9579 = vmatpush1.bf16.msra.mxu0 %v9550
    %9580 = vmatprep.subr.bf16.mxu0 0
    %9581 = vmatpush1.bf16.msra.mxu0 %v9549
    %9582 = vmatprep.subr.bf16.mxu0 0
    %9583 = vmatpush1.bf16.msra.mxu0 %v9548
    %9584 = vmatprep.subr.bf16.mxu0 0
    %9585 = vmatpush1.bf16.msra.mxu0 %v9547
    %9586 = vmatprep.subr.bf16.mxu0 0
    %9587 = vmatpush1.bf16.msra.mxu0 %v9546
    %9588 = vmatprep.subr.bf16.mxu0 0
    %9589 = vmatpush1.bf16.msra.mxu0 %v9545
    %9590 = vmatprep.subr.bf16.mxu0 0
    %9591 = vmatpush1.bf16.msra.mxu0 %v9544
    %9592 = vmatprep.subr.bf16.mxu0 0
    %9593 = vmatpush2.bf16.msra.mxu0 %v9559
    %9594 = vmatprep.subr.bf16.mxu0 0
    %9595 = vmatpush2.bf16.msra.mxu0 %v9558
    %9596 = vmatprep.subr.bf16.mxu0 0
    %9597 = vmatpush2.bf16.msra.mxu0 %v9557
    %9598 = vmatprep.subr.bf16.mxu0 0
    %9599 = vmatpush2.bf16.msra.mxu0 %v9556
    %9600 = vmatprep.subr.bf16.mxu0 0
    %9601 = vmatpush2.bf16.msra.mxu0 %v9555
    %9602 = vmatprep.subr.bf16.mxu0 0
    %9603 = vmatpush2.bf16.msra.mxu0 %v9554
    %9604 = vmatprep.subr.bf16.mxu0 0
    %9605 = vmatpush2.bf16.msra.mxu0 %v9553
    %9606 = vmatprep.subr.bf16.mxu0 0
    %9607 = vmatpush2.bf16.msra.mxu0 %v9552
    %9608 = vmatprep.mubr.bf16.mxu0 %v9440
    %9609 = vmatmul.mubr.bf16.gmra.mxu0 %v9439
    %v9610 = vpop.f32.mrf.mxu0
    %v9611 = vadd.f32 %v9478, %v9610
    %v9612 = vpop.f32.mrf.mxu0
    %v9613 = vpop.f32.mrf.mxu0
    %v9614 = vpop.f32.mrf.mxu0
    %9615 = vdwg.mxu0
    %9616 = vst [vmem:[#allocation7] sm:$0x3] %v9611
    // Predicated region
    $region136: #{forward.1} parent=1 // pred_check
      _
    $region137: #{forward.1} parent=1 // pred_check_branch
      %9618 = sbr.rel (0) target = $region139
    $region138: #{forward.1} parent=1 // pred_region
      %s9620 = ssub.s32 32, 32
      %9621 = vsyncadd [#allocation8], %s9620
      %s9623 = sshll.u32 [#allocation7], 4
      %s9624 = int_to_ptr.vmem [resolvable:$true] %s9623
      %9626 = dma.vmem_to_hbm [thread:$0]  %s9624, 32, %s11, [#allocation8]
    $region139: #{forward.1} parent=1 // pred_fallthru
      _
    // Predicated region
    $region140: #{forward.1} parent=1 // pred_check
      _
    $region141: #{forward.1} parent=1 // pred_check_branch
      %9628 = sbr.rel (0) target = $region143
    $region142: #{forward.1} parent=1 // pred_region
      %9629 = dma.done [#allocation8], 32
    $region143: #{forward.1} parent=1 // pred_fallthru
      _
    %9630 = vsyncpa [#allocation8], 1
  %9631 = vsyncmov [#allocation6]
  %s9632 = vpop.sfrf %9631
  %p9633 = scmp.eq.s32.totalorder %s9632, 0
  %p9634 = pneg %p9633
  %9636 = shalt.err (%p9634)
  %s9637 = scalar_lea.sflag [#allocation6], 1
  %9638 = vsyncmov %s9637
  %s9639 = vpop.sfrf %9638
  %p9640 = scmp.eq.s32.totalorder %s9639, 0
  %p9641 = pneg %p9640
  %9643 = shalt.err (%p9641)
  %s9644 = scalar_lea.sflag [#allocation6], 2
  %9645 = vsyncmov %s9644
  %s9646 = vpop.sfrf %9645
  %p9647 = scmp.eq.s32.totalorder %s9646, 0
  %p9648 = pneg %p9647
  %9650 = shalt.err (%p9648)

</llo_original>
